<compile_context>
chip_gen: v5e
topology: v5e:2x2
jax: 0.10.0
libtpu: 0.0.40
codegen_flags: <defaults>
</compile_context>

<pallas_src>
import jax
import jax.numpy as jnp
from jax.experimental import pallas as pl
from jax.experimental.pallas import tpu as pltpu


# ---------------------------------------------------------------------------
# Pallas kernels
# ---------------------------------------------------------------------------
def _conv_in_lrelu_kernel(p_ref, w_ref, g_ref, b_ref, o_ref):
    # p_ref: (HW, K) bf16   w_ref: (K, Cout) bf16
    # g_ref/b_ref: (1, Cout) f32            o_ref: (HW, Cout) bf16
    acc = jnp.dot(p_ref[...], w_ref[...],
                  preferred_element_type=jnp.float32)          # MXU, f32 acc
    mean = jnp.mean(acc, axis=0, keepdims=True)                # per-channel
    cen = acc - mean
    var = jnp.mean(cen * cen, axis=0, keepdims=True)           # biased var
    scale = g_ref[...] * jax.lax.rsqrt(var + 1e-5)             # EUP rsqrt
    y = cen * scale + b_ref[...]
    y = jnp.maximum(y, 0.2 * y)                                # LeakyReLU(0.2)
    o_ref[...] = y.astype(o_ref.dtype)


def _conv_in_lrelu_head_kernel(p_ref, w_ref, g_ref, b_ref, hw_ref, hb_ref,
                               o_ref):
    # Conv4 + InstanceNorm + LeakyReLU + Linear(4096,1) + sigmoid, per image.
    # p_ref: (16, 4096) bf16   w_ref: (4096, 256) bf16
    # hw_ref: (16, 256) f32 (head weight permuted to match (hw, c) layout)
    # hb_ref: (1, 1) f32       o_ref: (1, 1) f32
    acc = jnp.dot(p_ref[...], w_ref[...],
                  preferred_element_type=jnp.float32)          # (16, 256)
    mean = jnp.mean(acc, axis=0, keepdims=True)
    cen = acc - mean
    var = jnp.mean(cen * cen, axis=0, keepdims=True)
    scale = g_ref[...] * jax.lax.rsqrt(var + 1e-5)
    y = cen * scale + b_ref[...]
    y = jnp.maximum(y, 0.2 * y)
    z = jnp.sum(y * hw_ref[...], keepdims=True) + hb_ref[...]  # (1, 1)
    o_ref[...] = jax.nn.sigmoid(z)


# ---------------------------------------------------------------------------
# XLA-side glue (no compute): patch extraction in bf16
# ---------------------------------------------------------------------------
def _im2col(x_nhwc, k=4, s=2, p=1):
    """(B,H,W,C) -> (B, OH*OW, k*k*C) patches via pure strided slicing."""
    B, H, W, C = x_nhwc.shape
    OH = (H + 2 * p - k) // s + 1
    OW = (W + 2 * p - k) // s + 1
    xp = jnp.pad(x_nhwc, ((0, 0), (p, p), (p, p), (0, 0)))
    cols = [xp[:, kh:kh + s * OH:s, kw:kw + s * OW:s, :]
            for kh in range(k) for kw in range(k)]
    patches = jnp.stack(cols, axis=3)                  # (B, OH, OW, k*k, C)
    return patches.reshape(B, OH * OW, k * k * C), OH, OW


def _weight_2d(w):
    """(Cout, Cin, KH, KW) -> (KH*KW*Cin, Cout) bf16, matching patch layout."""
    Cout = w.shape[0]
    return jnp.transpose(w, (2, 3, 1, 0)).reshape(-1, Cout).astype(jnp.bfloat16)


# ---------------------------------------------------------------------------
# Fused layer wrappers
# ---------------------------------------------------------------------------
def conv_block(x_nhwc, w, gamma, beta):
    """Conv2d(k=4,s=2,p=1, no bias) + InstanceNorm2d(affine) + LeakyReLU(0.2).

    One pallas_call, gridded over batch with full per-image blocks.
    Conv bias is omitted: InstanceNorm's mean subtraction cancels it exactly.
    """
    B = x_nhwc.shape[0]
    Cout = w.shape[0]
    patches, OH, OW = _im2col(x_nhwc)                  # (B, HW, K) bf16
    HW = OH * OW
    K = patches.shape[-1]
    w2d = _weight_2d(w)                                # (K, Cout) bf16

    y = pl.pallas_call(
        _conv_in_lrelu_kernel,
        out_shape=jax.ShapeDtypeStruct((B, HW, Cout), jnp.bfloat16),
        grid=(B,),
        in_specs=[
            pl.BlockSpec((None, HW, K), lambda b: (b, 0, 0)),
            pl.BlockSpec((K, Cout), lambda b: (0, 0)),
            pl.BlockSpec((1, Cout), lambda b: (0, 0)),
            pl.BlockSpec((1, Cout), lambda b: (0, 0)),
        ],
        out_specs=pl.BlockSpec((None, HW, Cout), lambda b: (b, 0, 0)),
        compiler_params=pltpu.CompilerParams(
            dimension_semantics=("parallel",)),
    )(patches, w2d,
      gamma.reshape(1, Cout).astype(jnp.float32),
      beta.reshape(1, Cout).astype(jnp.float32))
    return y.reshape(B, OH, OW, Cout)


def conv_head_block(x_nhwc, w, gamma, beta, out_w, out_b):
    """Conv4 block with the Linear(4096,1)+sigmoid head fused in."""
    B = x_nhwc.shape[0]
    Cout = w.shape[0]                                  # 256
    patches, OH, OW = _im2col(x_nhwc)                  # (B, 16, 4096) bf16
    HW = OH * OW                                       # 16
    K = patches.shape[-1]
    w2d = _weight_2d(w)

    # torch flattens NCHW: feature index f = c*HW + hw.  Our layout is
    # y[hw, c], so permute the head weight once (compile-time layout math).
    head_w = out_w.reshape(Cout, HW).T.astype(jnp.float32)   # (HW, Cout)

    out = pl.pallas_call(
        _conv_in_lrelu_head_kernel,
        out_shape=jax.ShapeDtypeStruct((B, 1, 1), jnp.float32),
        grid=(B,),
        in_specs=[
            pl.BlockSpec((None, HW, K), lambda b: (b, 0, 0)),
            pl.BlockSpec((K, Cout), lambda b: (0, 0)),
            pl.BlockSpec((1, Cout), lambda b: (0, 0)),
            pl.BlockSpec((1, Cout), lambda b: (0, 0)),
            pl.BlockSpec((HW, Cout), lambda b: (0, 0)),
            pl.BlockSpec((1, 1), lambda b: (0, 0)),
        ],
        out_specs=pl.BlockSpec((None, 1, 1), lambda b: (b, 0, 0)),
        compiler_params=pltpu.CompilerParams(
            dimension_semantics=("parallel",)),
    )(patches, w2d,
      gamma.reshape(1, Cout).astype(jnp.float32),
      beta.reshape(1, Cout).astype(jnp.float32),
      head_w, out_b.reshape(1, 1).astype(jnp.float32))
    return out.reshape(B, 1)


# ---------------------------------------------------------------------------
# Full module
# ---------------------------------------------------------------------------
def init_params(key):
    """Deterministic synthetic parameters with the shapes of D.__init__."""
    shapes = {
        "c1_w": (64, 3, 4, 4), "c1_b": (64,),
        "n1_g": (64,), "n1_b": (64,),
        "c2_w": (128, 64, 4, 4), "c2_b": (128,),
        "n2_g": (128,), "n2_b": (128,),
        "c3_w": (256, 128, 4, 4), "c3_b": (256,),
        "n3_g": (256,), "n3_b": (256,),
        "c4_w": (256, 256, 4, 4), "c4_b": (256,),
        "n4_g": (256,), "n4_b": (256,),
        "out_w": (1, 4096), "out_b": (),
    }
    params = {}
    keys = jax.random.split(key, len(shapes))
    for k_, (name, shp) in zip(keys, sorted(shapes.items())):
        if name.endswith("_g"):                              # norm gamma -> 1
            params[name] = jnp.ones(shp, jnp.float32)
        elif name.endswith("_b") and name.startswith("n"):   # norm beta -> 0
            params[name] = jnp.zeros(shp, jnp.float32)
        else:
            params[name] = 0.05 * jax.random.normal(k_, shp, jnp.float32)
    # Note: conv biases (c*_b) are kept for parameter-set fidelity but are not
    # used in the forward pass: InstanceNorm cancels a per-channel constant.
    return params


@jax.jit
def d_forward(params, x_nchw):
    # PyTorch NCHW -> NHWC (channels on the lane axis), bf16 matmul operands.
    x = jnp.transpose(x_nchw, (0, 2, 3, 1)).astype(jnp.bfloat16)
    # Pad Cin 3 -> 4 so conv1's contraction dim K = 4*4*4 = 64 while keeping
    # the (largest-HW) conv1 patch tensor half the size of a 128-wide pad.
    x = jnp.pad(x, ((0, 0), (0, 0), (0, 0), (0, 1)))
    w1 = jnp.pad(params["c1_w"], ((0, 0), (0, 1), (0, 0), (0, 0)))

    x = conv_block(x, w1, params["n1_g"], params["n1_b"])
    x = conv_block(x, params["c2_w"], params["n2_g"], params["n2_b"])
    x = conv_block(x, params["c3_w"], params["n3_g"], params["n3_b"])
    # Conv4 + norm + LeakyReLU + Linear(4096,1) + sigmoid, fully fused.
    return conv_head_block(x, params["c4_w"], params["n4_g"], params["n4_b"],
                           params["out_w"], params["out_b"])


if __name__ == "__main__":
    key = jax.random.PRNGKey(0)
    k_param, k_x = jax.random.split(key)
    params = init_params(k_param)
    # Spatial size must be 64x64 so the flatten produces 4096 features.
    x = jax.random.normal(k_x, (2, 3, 64, 64), jnp.float32)
    out = d_forward(params, x)
    jax.block_until_ready(out)
    assert out.shape == (2, 1)
    assert bool(jnp.all(jnp.isfinite(out)))
    assert bool(jnp.all((out >= 0.0) & (out <= 1.0)))
    print("KERNEL_OK")
</pallas_src>

<mosaic_0001>
module attributes {stable_mosaic.version = 11 : i64} {
  func.func @_conv_in_lrelu_kernel(%arg0: i32, %arg1: memref<1x1024x64xbf16, #tpu.memory_space<vmem>>, %arg2: memref<64x64xbf16, #tpu.memory_space<vmem>>, %arg3: memref<1x64xf32, #tpu.memory_space<vmem>>, %arg4: memref<1x64xf32, #tpu.memory_space<vmem>>, %arg5: memref<1x1024x64xbf16, #tpu.memory_space<vmem>>) attributes {dimension_semantics = [#tpu.dimension_semantics<parallel>], iteration_bounds = array<i64: 2>, scalar_prefetch = 0 : i64, scratch_operands = 0 : i64, tpu.core_type = #tpu.core_type<tc>, window_params = [{transform_indices = @transform_0, window_bounds = array<i64: 1, 1024, 64>}, {pipeline_mode = #tpu.pipeline_mode<synchronous>, transform_indices = @transform_1, window_bounds = array<i64: 64, 64>}, {pipeline_mode = #tpu.pipeline_mode<synchronous>, transform_indices = @transform_2, window_bounds = array<i64: 1, 64>}, {pipeline_mode = #tpu.pipeline_mode<synchronous>, transform_indices = @transform_3, window_bounds = array<i64: 1, 64>}, {transform_indices = @transform_4, window_bounds = array<i64: 1, 1024, 64>}]} {
    %c0 = arith.constant 0 : index
    %c0_0 = arith.constant 0 : index
    %c0_1 = arith.constant 0 : index
    %0 = vector.load %arg1[%c0, %c0_0, %c0_1] : memref<1x1024x64xbf16, #tpu.memory_space<vmem>>, vector<1x1024x64xbf16>
    %1 = vector.shape_cast %0 : vector<1x1024x64xbf16> to vector<1024x64xbf16>
    %c0_2 = arith.constant 0 : index
    %c0_3 = arith.constant 0 : index
    %2 = vector.load %arg2[%c0_2, %c0_3] : memref<64x64xbf16, #tpu.memory_space<vmem>>, vector<64x64xbf16>
    %cst = arith.constant dense<0.000000e+00> : vector<1024x64xf32>
    %3 = tpu.matmul %1, %2, %cst {dimension_numbers = #tpu.dot_dimension_numbers<[1], [0], [0], [1], [0, 0, 1, 1], [], []>} : vector<1024x64xbf16>, vector<64x64xbf16>, vector<1024x64xf32> -> vector<1024x64xf32>
    %cst_4 = arith.constant dense<0.000000e+00> : vector<64xf32>
    %4 = vector.multi_reduction <add>, %3, %cst_4 [0] : vector<1024x64xf32> to vector<64xf32>
    %5 = vector.shape_cast %4 : vector<64xf32> to vector<1x64xf32>
    %cst_5 = arith.constant 1.024000e+03 : f32
    %6 = vector.broadcast %cst_5 : f32 to vector<1x64xf32>
    %7 = arith.divf %5, %6 : vector<1x64xf32>
    %8 = vector.broadcast %7 : vector<1x64xf32> to vector<1024x64xf32>
    %9 = arith.subf %3, %8 : vector<1024x64xf32>
    %10 = arith.mulf %9, %9 : vector<1024x64xf32>
    %cst_6 = arith.constant dense<0.000000e+00> : vector<64xf32>
    %11 = vector.multi_reduction <add>, %10, %cst_6 [0] : vector<1024x64xf32> to vector<64xf32>
    %12 = vector.shape_cast %11 : vector<64xf32> to vector<1x64xf32>
    %cst_7 = arith.constant 1.024000e+03 : f32
    %13 = vector.broadcast %cst_7 : f32 to vector<1x64xf32>
    %14 = arith.divf %12, %13 : vector<1x64xf32>
    %c0_8 = arith.constant 0 : index
    %c0_9 = arith.constant 0 : index
    %15 = vector.load %arg3[%c0_8, %c0_9] : memref<1x64xf32, #tpu.memory_space<vmem>>, vector<1x64xf32>
    %cst_10 = arith.constant 9.99999974E-6 : f32
    %16 = vector.broadcast %cst_10 : f32 to vector<1x64xf32>
    %17 = arith.addf %14, %16 : vector<1x64xf32>
    %18 = math.rsqrt %17 : vector<1x64xf32>
    %19 = arith.mulf %15, %18 : vector<1x64xf32>
    %20 = vector.broadcast %19 : vector<1x64xf32> to vector<1024x64xf32>
    %21 = arith.mulf %9, %20 : vector<1024x64xf32>
    %c0_11 = arith.constant 0 : index
    %c0_12 = arith.constant 0 : index
    %22 = vector.load %arg4[%c0_11, %c0_12] : memref<1x64xf32, #tpu.memory_space<vmem>>, vector<1x64xf32>
    %23 = vector.broadcast %22 : vector<1x64xf32> to vector<1024x64xf32>
    %24 = arith.addf %21, %23 : vector<1024x64xf32>
    %cst_13 = arith.constant 2.000000e-01 : f32
    %25 = vector.broadcast %cst_13 : f32 to vector<1024x64xf32>
    %26 = arith.mulf %25, %24 : vector<1024x64xf32>
    %27 = arith.maximumf %24, %26 : vector<1024x64xf32>
    %28 = arith.truncf %27 : vector<1024x64xf32> to vector<1024x64xbf16>
    %c0_14 = arith.constant 0 : index
    %c0_15 = arith.constant 0 : index
    %c0_16 = arith.constant 0 : index
    %29 = vector.load %arg5[%c0_14, %c0_15, %c0_16] : memref<1x1024x64xbf16, #tpu.memory_space<vmem>>, vector<1x1024x64xbf16>
    %30 = vector.shape_cast %29 : vector<1x1024x64xbf16> to vector<1024x64xbf16>
    %31 = vector.shape_cast %28 : vector<1024x64xbf16> to vector<1x1024x64xbf16>
    tpu.vector_store %arg5[%c0_14, %c0_15, %c0_16], %31 {strides = array<i32>} : memref<1x1024x64xbf16, #tpu.memory_space<vmem>>, vector<1x1024x64xbf16>,
    return
  }
  func.func @transform_0(%arg0: i32) -> (i32, i32, i32) {
    %c0_i32 = arith.constant 0 : i32
    %c0_i32_0 = arith.constant 0 : i32
    %c0_i32_1 = arith.constant 0 : i32
    return %arg0, %c0_i32, %c0_i32_0 : i32, i32, i32
  }
  func.func @transform_1(%arg0: i32) -> (i32, i32) {
    %c0_i32 = arith.constant 0 : i32
    %c0_i32_0 = arith.constant 0 : i32
    %c0_i32_1 = arith.constant 0 : i32
    return %c0_i32, %c0_i32_0 : i32, i32
  }
  func.func @transform_2(%arg0: i32) -> (i32, i32) {
    %c0_i32 = arith.constant 0 : i32
    %c0_i32_0 = arith.constant 0 : i32
    %c0_i32_1 = arith.constant 0 : i32
    return %c0_i32, %c0_i32_0 : i32, i32
  }
  func.func @transform_3(%arg0: i32) -> (i32, i32) {
    %c0_i32 = arith.constant 0 : i32
    %c0_i32_0 = arith.constant 0 : i32
    %c0_i32_1 = arith.constant 0 : i32
    return %c0_i32, %c0_i32_0 : i32, i32
  }
  func.func @transform_4(%arg0: i32) -> (i32, i32, i32) {
    %c0_i32 = arith.constant 0 : i32
    %c0_i32_0 = arith.constant 0 : i32
    %c0_i32_1 = arith.constant 0 : i32
    return %arg0, %c0_i32, %c0_i32_0 : i32, i32, i32
  }
}

module attributes {stable_mosaic.version = 11 : i64} {
  func.func @_conv_in_lrelu_kernel(%arg0: i32, %arg1: memref<1x256x1024xbf16, #tpu.memory_space<vmem>>, %arg2: memref<1024x128xbf16, #tpu.memory_space<vmem>>, %arg3: memref<1x128xf32, #tpu.memory_space<vmem>>, %arg4: memref<1x128xf32, #tpu.memory_space<vmem>>, %arg5: memref<1x256x128xbf16, #tpu.memory_space<vmem>>) attributes {dimension_semantics = [#tpu.dimension_semantics<parallel>], iteration_bounds = array<i64: 2>, scalar_prefetch = 0 : i64, scratch_operands = 0 : i64, tpu.core_type = #tpu.core_type<tc>, window_params = [{transform_indices = @transform_0, window_bounds = array<i64: 1, 256, 1024>}, {pipeline_mode = #tpu.pipeline_mode<synchronous>, transform_indices = @transform_1, window_bounds = array<i64: 1024, 128>}, {pipeline_mode = #tpu.pipeline_mode<synchronous>, transform_indices = @transform_2, window_bounds = array<i64: 1, 128>}, {pipeline_mode = #tpu.pipeline_mode<synchronous>, transform_indices = @transform_3, window_bounds = array<i64: 1, 128>}, {transform_indices = @transform_4, window_bounds = array<i64: 1, 256, 128>}]} {
    %c0 = arith.constant 0 : index
    %c0_0 = arith.constant 0 : index
    %c0_1 = arith.constant 0 : index
    %0 = vector.load %arg1[%c0, %c0_0, %c0_1] : memref<1x256x1024xbf16, #tpu.memory_space<vmem>>, vector<1x256x1024xbf16>
    %1 = vector.shape_cast %0 : vector<1x256x1024xbf16> to vector<256x1024xbf16>
    %c0_2 = arith.constant 0 : index
    %c0_3 = arith.constant 0 : index
    %2 = vector.load %arg2[%c0_2, %c0_3] : memref<1024x128xbf16, #tpu.memory_space<vmem>>, vector<1024x128xbf16>
    %cst = arith.constant dense<0.000000e+00> : vector<256x128xf32>
    %3 = tpu.matmul %1, %2, %cst {dimension_numbers = #tpu.dot_dimension_numbers<[1], [0], [0], [1], [0, 0, 1, 1], [], []>} : vector<256x1024xbf16>, vector<1024x128xbf16>, vector<256x128xf32> -> vector<256x128xf32>
    %cst_4 = arith.constant dense<0.000000e+00> : vector<128xf32>
    %4 = vector.multi_reduction <add>, %3, %cst_4 [0] : vector<256x128xf32> to vector<128xf32>
    %5 = vector.shape_cast %4 : vector<128xf32> to vector<1x128xf32>
    %cst_5 = arith.constant 2.560000e+02 : f32
    %6 = vector.broadcast %cst_5 : f32 to vector<1x128xf32>
    %7 = arith.divf %5, %6 : vector<1x128xf32>
    %8 = vector.broadcast %7 : vector<1x128xf32> to vector<256x128xf32>
    %9 = arith.subf %3, %8 : vector<256x128xf32>
    %10 = arith.mulf %9, %9 : vector<256x128xf32>
    %cst_6 = arith.constant dense<0.000000e+00> : vector<128xf32>
    %11 = vector.multi_reduction <add>, %10, %cst_6 [0] : vector<256x128xf32> to vector<128xf32>
    %12 = vector.shape_cast %11 : vector<128xf32> to vector<1x128xf32>
    %cst_7 = arith.constant 2.560000e+02 : f32
    %13 = vector.broadcast %cst_7 : f32 to vector<1x128xf32>
    %14 = arith.divf %12, %13 : vector<1x128xf32>
    %c0_8 = arith.constant 0 : index
    %c0_9 = arith.constant 0 : index
    %15 = vector.load %arg3[%c0_8, %c0_9] : memref<1x128xf32, #tpu.memory_space<vmem>>, vector<1x128xf32>
    %cst_10 = arith.constant 9.99999974E-6 : f32
    %16 = vector.broadcast %cst_10 : f32 to vector<1x128xf32>
    %17 = arith.addf %14, %16 : vector<1x128xf32>
    %18 = math.rsqrt %17 : vector<1x128xf32>
    %19 = arith.mulf %15, %18 : vector<1x128xf32>
    %20 = vector.broadcast %19 : vector<1x128xf32> to vector<256x128xf32>
    %21 = arith.mulf %9, %20 : vector<256x128xf32>
    %c0_11 = arith.constant 0 : index
    %c0_12 = arith.constant 0 : index
    %22 = vector.load %arg4[%c0_11, %c0_12] : memref<1x128xf32, #tpu.memory_space<vmem>>, vector<1x128xf32>
    %23 = vector.broadcast %22 : vector<1x128xf32> to vector<256x128xf32>
    %24 = arith.addf %21, %23 : vector<256x128xf32>
    %cst_13 = arith.constant 2.000000e-01 : f32
    %25 = vector.broadcast %cst_13 : f32 to vector<256x128xf32>
    %26 = arith.mulf %25, %24 : vector<256x128xf32>
    %27 = arith.maximumf %24, %26 : vector<256x128xf32>
    %28 = arith.truncf %27 : vector<256x128xf32> to vector<256x128xbf16>
    %c0_14 = arith.constant 0 : index
    %c0_15 = arith.constant 0 : index
    %c0_16 = arith.constant 0 : index
    %29 = vector.load %arg5[%c0_14, %c0_15, %c0_16] : memref<1x256x128xbf16, #tpu.memory_space<vmem>>, vector<1x256x128xbf16>
    %30 = vector.shape_cast %29 : vector<1x256x128xbf16> to vector<256x128xbf16>
    %31 = vector.shape_cast %28 : vector<256x128xbf16> to vector<1x256x128xbf16>
    tpu.vector_store %arg5[%c0_14, %c0_15, %c0_16], %31 {strides = array<i32>} : memref<1x256x128xbf16, #tpu.memory_space<vmem>>, vector<1x256x128xbf16>,
    return
  }
  func.func @transform_0(%arg0: i32) -> (i32, i32, i32) {
    %c0_i32 = arith.constant 0 : i32
    %c0_i32_0 = arith.constant 0 : i32
    %c0_i32_1 = arith.constant 0 : i32
    return %arg0, %c0_i32, %c0_i32_0 : i32, i32, i32
  }
  func.func @transform_1(%arg0: i32) -> (i32, i32) {
    %c0_i32 = arith.constant 0 : i32
    %c0_i32_0 = arith.constant 0 : i32
    %c0_i32_1 = arith.constant 0 : i32
    return %c0_i32, %c0_i32_0 : i32, i32
  }
  func.func @transform_2(%arg0: i32) -> (i32, i32) {
    %c0_i32 = arith.constant 0 : i32
    %c0_i32_0 = arith.constant 0 : i32
    %c0_i32_1 = arith.constant 0 : i32
    return %c0_i32, %c0_i32_0 : i32, i32
  }
  func.func @transform_3(%arg0: i32) -> (i32, i32) {
    %c0_i32 = arith.constant 0 : i32
    %c0_i32_0 = arith.constant 0 : i32
    %c0_i32_1 = arith.constant 0 : i32
    return %c0_i32, %c0_i32_0 : i32, i32
  }
  func.func @transform_4(%arg0: i32) -> (i32, i32, i32) {
    %c0_i32 = arith.constant 0 : i32
    %c0_i32_0 = arith.constant 0 : i32
    %c0_i32_1 = arith.constant 0 : i32
    return %arg0, %c0_i32, %c0_i32_0 : i32, i32, i32
  }
}

module attributes {stable_mosaic.version = 11 : i64} {
  func.func @_conv_in_lrelu_kernel(%arg0: i32, %arg1: memref<1x64x2048xbf16, #tpu.memory_space<vmem>>, %arg2: memref<2048x256xbf16, #tpu.memory_space<vmem>>, %arg3: memref<1x256xf32, #tpu.memory_space<vmem>>, %arg4: memref<1x256xf32, #tpu.memory_space<vmem>>, %arg5: memref<1x64x256xbf16, #tpu.memory_space<vmem>>) attributes {dimension_semantics = [#tpu.dimension_semantics<parallel>], iteration_bounds = array<i64: 2>, scalar_prefetch = 0 : i64, scratch_operands = 0 : i64, tpu.core_type = #tpu.core_type<tc>, window_params = [{transform_indices = @transform_0, window_bounds = array<i64: 1, 64, 2048>}, {pipeline_mode = #tpu.pipeline_mode<synchronous>, transform_indices = @transform_1, window_bounds = array<i64: 2048, 256>}, {pipeline_mode = #tpu.pipeline_mode<synchronous>, transform_indices = @transform_2, window_bounds = array<i64: 1, 256>}, {pipeline_mode = #tpu.pipeline_mode<synchronous>, transform_indices = @transform_3, window_bounds = array<i64: 1, 256>}, {transform_indices = @transform_4, window_bounds = array<i64: 1, 64, 256>}]} {
    %c0 = arith.constant 0 : index
    %c0_0 = arith.constant 0 : index
    %c0_1 = arith.constant 0 : index
    %0 = vector.load %arg1[%c0, %c0_0, %c0_1] : memref<1x64x2048xbf16, #tpu.memory_space<vmem>>, vector<1x64x2048xbf16>
    %1 = vector.shape_cast %0 : vector<1x64x2048xbf16> to vector<64x2048xbf16>
    %c0_2 = arith.constant 0 : index
    %c0_3 = arith.constant 0 : index
    %2 = vector.load %arg2[%c0_2, %c0_3] : memref<2048x256xbf16, #tpu.memory_space<vmem>>, vector<2048x256xbf16>
    %cst = arith.constant dense<0.000000e+00> : vector<64x256xf32>
    %3 = tpu.matmul %1, %2, %cst {dimension_numbers = #tpu.dot_dimension_numbers<[1], [0], [0], [1], [0, 0, 1, 1], [], []>} : vector<64x2048xbf16>, vector<2048x256xbf16>, vector<64x256xf32> -> vector<64x256xf32>
    %cst_4 = arith.constant dense<0.000000e+00> : vector<256xf32>
    %4 = vector.multi_reduction <add>, %3, %cst_4 [0] : vector<64x256xf32> to vector<256xf32>
    %5 = vector.shape_cast %4 : vector<256xf32> to vector<1x256xf32>
    %cst_5 = arith.constant 6.400000e+01 : f32
    %6 = vector.broadcast %cst_5 : f32 to vector<1x256xf32>
    %7 = arith.divf %5, %6 : vector<1x256xf32>
    %8 = vector.broadcast %7 : vector<1x256xf32> to vector<64x256xf32>
    %9 = arith.subf %3, %8 : vector<64x256xf32>
    %10 = arith.mulf %9, %9 : vector<64x256xf32>
    %cst_6 = arith.constant dense<0.000000e+00> : vector<256xf32>
    %11 = vector.multi_reduction <add>, %10, %cst_6 [0] : vector<64x256xf32> to vector<256xf32>
    %12 = vector.shape_cast %11 : vector<256xf32> to vector<1x256xf32>
    %cst_7 = arith.constant 6.400000e+01 : f32
    %13 = vector.broadcast %cst_7 : f32 to vector<1x256xf32>
    %14 = arith.divf %12, %13 : vector<1x256xf32>
    %c0_8 = arith.constant 0 : index
    %c0_9 = arith.constant 0 : index
    %15 = vector.load %arg3[%c0_8, %c0_9] : memref<1x256xf32, #tpu.memory_space<vmem>>, vector<1x256xf32>
    %cst_10 = arith.constant 9.99999974E-6 : f32
    %16 = vector.broadcast %cst_10 : f32 to vector<1x256xf32>
    %17 = arith.addf %14, %16 : vector<1x256xf32>
    %18 = math.rsqrt %17 : vector<1x256xf32>
    %19 = arith.mulf %15, %18 : vector<1x256xf32>
    %20 = vector.broadcast %19 : vector<1x256xf32> to vector<64x256xf32>
    %21 = arith.mulf %9, %20 : vector<64x256xf32>
    %c0_11 = arith.constant 0 : index
    %c0_12 = arith.constant 0 : index
    %22 = vector.load %arg4[%c0_11, %c0_12] : memref<1x256xf32, #tpu.memory_space<vmem>>, vector<1x256xf32>
    %23 = vector.broadcast %22 : vector<1x256xf32> to vector<64x256xf32>
    %24 = arith.addf %21, %23 : vector<64x256xf32>
    %cst_13 = arith.constant 2.000000e-01 : f32
    %25 = vector.broadcast %cst_13 : f32 to vector<64x256xf32>
    %26 = arith.mulf %25, %24 : vector<64x256xf32>
    %27 = arith.maximumf %24, %26 : vector<64x256xf32>
    %28 = arith.truncf %27 : vector<64x256xf32> to vector<64x256xbf16>
    %c0_14 = arith.constant 0 : index
    %c0_15 = arith.constant 0 : index
    %c0_16 = arith.constant 0 : index
    %29 = vector.load %arg5[%c0_14, %c0_15, %c0_16] : memref<1x64x256xbf16, #tpu.memory_space<vmem>>, vector<1x64x256xbf16>
    %30 = vector.shape_cast %29 : vector<1x64x256xbf16> to vector<64x256xbf16>
    %31 = vector.shape_cast %28 : vector<64x256xbf16> to vector<1x64x256xbf16>
    tpu.vector_store %arg5[%c0_14, %c0_15, %c0_16], %31 {strides = array<i32>} : memref<1x64x256xbf16, #tpu.memory_space<vmem>>, vector<1x64x256xbf16>,
    return
  }
  func.func @transform_0(%arg0: i32) -> (i32, i32, i32) {
    %c0_i32 = arith.constant 0 : i32
    %c0_i32_0 = arith.constant 0 : i32
    %c0_i32_1 = arith.constant 0 : i32
    return %arg0, %c0_i32, %c0_i32_0 : i32, i32, i32
  }
  func.func @transform_1(%arg0: i32) -> (i32, i32) {
    %c0_i32 = arith.constant 0 : i32
    %c0_i32_0 = arith.constant 0 : i32
    %c0_i32_1 = arith.constant 0 : i32
    return %c0_i32, %c0_i32_0 : i32, i32
  }
  func.func @transform_2(%arg0: i32) -> (i32, i32) {
    %c0_i32 = arith.constant 0 : i32
    %c0_i32_0 = arith.constant 0 : i32
    %c0_i32_1 = arith.constant 0 : i32
    return %c0_i32, %c0_i32_0 : i32, i32
  }
  func.func @transform_3(%arg0: i32) -> (i32, i32) {
    %c0_i32 = arith.constant 0 : i32
    %c0_i32_0 = arith.constant 0 : i32
    %c0_i32_1 = arith.constant 0 : i32
    return %c0_i32, %c0_i32_0 : i32, i32
  }
  func.func @transform_4(%arg0: i32) -> (i32, i32, i32) {
    %c0_i32 = arith.constant 0 : i32
    %c0_i32_0 = arith.constant 0 : i32
    %c0_i32_1 = arith.constant 0 : i32
    return %arg0, %c0_i32, %c0_i32_0 : i32, i32, i32
  }
}

module attributes {stable_mosaic.version = 11 : i64} {
  func.func @_conv_in_lrelu_head_kernel(%arg0: i32, %arg1: memref<1x16x4096xbf16, #tpu.memory_space<vmem>>, %arg2: memref<4096x256xbf16, #tpu.memory_space<vmem>>, %arg3: memref<1x256xf32, #tpu.memory_space<vmem>>, %arg4: memref<1x256xf32, #tpu.memory_space<vmem>>, %arg5: memref<16x256xf32, #tpu.memory_space<vmem>>, %arg6: memref<1x1xf32, #tpu.memory_space<vmem>>, %arg7: memref<1x1x1xf32, #tpu.memory_space<vmem>>) attributes {dimension_semantics = [#tpu.dimension_semantics<parallel>], iteration_bounds = array<i64: 2>, scalar_prefetch = 0 : i64, scratch_operands = 0 : i64, tpu.core_type = #tpu.core_type<tc>, window_params = [{transform_indices = @transform_0, window_bounds = array<i64: 1, 16, 4096>}, {pipeline_mode = #tpu.pipeline_mode<synchronous>, transform_indices = @transform_1, window_bounds = array<i64: 4096, 256>}, {pipeline_mode = #tpu.pipeline_mode<synchronous>, transform_indices = @transform_2, window_bounds = array<i64: 1, 256>}, {pipeline_mode = #tpu.pipeline_mode<synchronous>, transform_indices = @transform_3, window_bounds = array<i64: 1, 256>}, {pipeline_mode = #tpu.pipeline_mode<synchronous>, transform_indices = @transform_4, window_bounds = array<i64: 16, 256>}, {pipeline_mode = #tpu.pipeline_mode<synchronous>, transform_indices = @transform_5, window_bounds = array<i64: 1, 1>}, {transform_indices = @transform_6, window_bounds = array<i64: 1, 1, 1>}]} {
    %c0 = arith.constant 0 : index
    %c0_0 = arith.constant 0 : index
    %c0_1 = arith.constant 0 : index
    %0 = vector.load %arg1[%c0, %c0_0, %c0_1] : memref<1x16x4096xbf16, #tpu.memory_space<vmem>>, vector<1x16x4096xbf16>
    %1 = vector.shape_cast %0 : vector<1x16x4096xbf16> to vector<16x4096xbf16>
    %c0_2 = arith.constant 0 : index
    %c0_3 = arith.constant 0 : index
    %2 = vector.load %arg2[%c0_2, %c0_3] : memref<4096x256xbf16, #tpu.memory_space<vmem>>, vector<4096x256xbf16>
    %cst = arith.constant dense<0.000000e+00> : vector<16x256xf32>
    %3 = tpu.matmul %1, %2, %cst {dimension_numbers = #tpu.dot_dimension_numbers<[1], [0], [0], [1], [0, 0, 1, 1], [], []>} : vector<16x4096xbf16>, vector<4096x256xbf16>, vector<16x256xf32> -> vector<16x256xf32>
    %cst_4 = arith.constant dense<0.000000e+00> : vector<256xf32>
    %4 = vector.multi_reduction <add>, %3, %cst_4 [0] : vector<16x256xf32> to vector<256xf32>
    %5 = vector.shape_cast %4 : vector<256xf32> to vector<1x256xf32>
    %cst_5 = arith.constant 1.600000e+01 : f32
    %6 = vector.broadcast %cst_5 : f32 to vector<1x256xf32>
    %7 = arith.divf %5, %6 : vector<1x256xf32>
    %8 = vector.broadcast %7 : vector<1x256xf32> to vector<16x256xf32>
    %9 = arith.subf %3, %8 : vector<16x256xf32>
    %10 = arith.mulf %9, %9 : vector<16x256xf32>
    %cst_6 = arith.constant dense<0.000000e+00> : vector<256xf32>
    %11 = vector.multi_reduction <add>, %10, %cst_6 [0] : vector<16x256xf32> to vector<256xf32>
    %12 = vector.shape_cast %11 : vector<256xf32> to vector<1x256xf32>
    %cst_7 = arith.constant 1.600000e+01 : f32
    %13 = vector.broadcast %cst_7 : f32 to vector<1x256xf32>
    %14 = arith.divf %12, %13 : vector<1x256xf32>
    %c0_8 = arith.constant 0 : index
    %c0_9 = arith.constant 0 : index
    %15 = vector.load %arg3[%c0_8, %c0_9] : memref<1x256xf32, #tpu.memory_space<vmem>>, vector<1x256xf32>
    %cst_10 = arith.constant 9.99999974E-6 : f32
    %16 = vector.broadcast %cst_10 : f32 to vector<1x256xf32>
    %17 = arith.addf %14, %16 : vector<1x256xf32>
    %18 = math.rsqrt %17 : vector<1x256xf32>
    %19 = arith.mulf %15, %18 : vector<1x256xf32>
    %20 = vector.broadcast %19 : vector<1x256xf32> to vector<16x256xf32>
    %21 = arith.mulf %9, %20 : vector<16x256xf32>
    %c0_11 = arith.constant 0 : index
    %c0_12 = arith.constant 0 : index
    %22 = vector.load %arg4[%c0_11, %c0_12] : memref<1x256xf32, #tpu.memory_space<vmem>>, vector<1x256xf32>
    %23 = vector.broadcast %22 : vector<1x256xf32> to vector<16x256xf32>
    %24 = arith.addf %21, %23 : vector<16x256xf32>
    %cst_13 = arith.constant 2.000000e-01 : f32
    %25 = vector.broadcast %cst_13 : f32 to vector<16x256xf32>
    %26 = arith.mulf %25, %24 : vector<16x256xf32>
    %27 = arith.maximumf %24, %26 : vector<16x256xf32>
    %c0_14 = arith.constant 0 : index
    %c0_15 = arith.constant 0 : index
    %28 = vector.load %arg5[%c0_14, %c0_15] : memref<16x256xf32, #tpu.memory_space<vmem>>, vector<16x256xf32>
    %29 = arith.mulf %27, %28 : vector<16x256xf32>
    %30 = vector.shape_cast %29 : vector<16x256xf32> to vector<1x16x256xf32>
    %cst_16 = arith.constant dense<0.000000e+00> : vector<1xf32>
    %31 = vector.multi_reduction <add>, %30, %cst_16 [1, 2] : vector<1x16x256xf32> to vector<1xf32>
    %32 = vector.shape_cast %31 : vector<1xf32> to vector<1x1x1xf32>
    %33 = vector.extract %32[0, 0, 0] : f32 from vector<1x1x1xf32>
    %34 = vector.broadcast %33 : f32 to vector<1x1xf32>
    %c0_17 = arith.constant 0 : index
    %c0_18 = arith.constant 0 : index
    %35 = vector.load %arg6[%c0_17, %c0_18] : memref<1x1xf32, #tpu.memory_space<vmem>>, vector<1x1xf32>
    %36 = arith.addf %34, %35 : vector<1x1xf32>
    %37 = arith.negf %36 : vector<1x1xf32>
    %38 = math.exp %37 : vector<1x1xf32>
    %cst_19 = arith.constant 1.000000e+00 : f32
    %39 = vector.broadcast %cst_19 : f32 to vector<1x1xf32>
    %40 = arith.addf %39, %38 : vector<1x1xf32>
    %41 = arith.divf %39, %40 : vector<1x1xf32>
    %c0_20 = arith.constant 0 : index
    %c0_21 = arith.constant 0 : index
    %c0_22 = arith.constant 0 : index
    %42 = vector.load %arg7[%c0_20, %c0_21, %c0_22] : memref<1x1x1xf32, #tpu.memory_space<vmem>>, vector<1x1x1xf32>
    %43 = vector.shape_cast %42 : vector<1x1x1xf32> to vector<1x1xf32>
    %44 = vector.shape_cast %41 : vector<1x1xf32> to vector<1x1x1xf32>
    tpu.vector_store %arg7[%c0_20, %c0_21, %c0_22], %44 {strides = array<i32>} : memref<1x1x1xf32, #tpu.memory_space<vmem>>, vector<1x1x1xf32>,
    return
  }
  func.func @transform_0(%arg0: i32) -> (i32, i32, i32) {
    %c0_i32 = arith.constant 0 : i32
    %c0_i32_0 = arith.constant 0 : i32
    %c0_i32_1 = arith.constant 0 : i32
    return %arg0, %c0_i32, %c0_i32_0 : i32, i32, i32
  }
  func.func @transform_1(%arg0: i32) -> (i32, i32) {
    %c0_i32 = arith.constant 0 : i32
    %c0_i32_0 = arith.constant 0 : i32
    %c0_i32_1 = arith.constant 0 : i32
    return %c0_i32, %c0_i32_0 : i32, i32
  }
  func.func @transform_2(%arg0: i32) -> (i32, i32) {
    %c0_i32 = arith.constant 0 : i32
    %c0_i32_0 = arith.constant 0 : i32
    %c0_i32_1 = arith.constant 0 : i32
    return %c0_i32, %c0_i32_0 : i32, i32
  }
  func.func @transform_3(%arg0: i32) -> (i32, i32) {
    %c0_i32 = arith.constant 0 : i32
    %c0_i32_0 = arith.constant 0 : i32
    %c0_i32_1 = arith.constant 0 : i32
    return %c0_i32, %c0_i32_0 : i32, i32
  }
  func.func @transform_4(%arg0: i32) -> (i32, i32) {
    %c0_i32 = arith.constant 0 : i32
    %c0_i32_0 = arith.constant 0 : i32
    %c0_i32_1 = arith.constant 0 : i32
    return %c0_i32, %c0_i32_0 : i32, i32
  }
  func.func @transform_5(%arg0: i32) -> (i32, i32) {
    %c0_i32 = arith.constant 0 : i32
    %c0_i32_0 = arith.constant 0 : i32
    %c0_i32_1 = arith.constant 0 : i32
    return %c0_i32, %c0_i32_0 : i32, i32
  }
  func.func @transform_6(%arg0: i32) -> (i32, i32, i32) {
    %c0_i32 = arith.constant 0 : i32
    %c0_i32_0 = arith.constant 0 : i32
    %c0_i32_1 = arith.constant 0 : i32
    return %arg0, %c0_i32, %c0_i32_0 : i32, i32, i32
  }
}

</mosaic_0001>

<llo_original>
// kernel: d_forward.4
$region0: #{d_forward.4}
  #allocation0 [shape = 'u32[]', space=smem, size = 0x4, offset = 0x4, fixed_abs, tag = 'smem constant byte address 0x4 - core index']
  #allocation1 [shape = 'u32[72,128]{1,0:T(1,128)}', space=vmem, size = 0x9000, scoped, tag = 'internal scratch']
  %s0 = inlined_call_operand.vmem [shape: bf16[2,1024,64], index: 0, kind: input, shape index: {}]
  %s1 = inlined_call_operand.vmem [shape: bf16[64,64], index: 1, kind: input, shape index: {}]
  %s2 = inlined_call_operand.vmem [shape: f32[1,64], index: 2, kind: input, shape index: {}]
  %s3 = inlined_call_operand.vmem [shape: f32[1,64], index: 3, kind: input, shape index: {}]
  %s4 = inlined_call_operand.vmem [shape: bf16[2,1024,64], index: 4, kind: output, shape index: {}]
  %s5 = sld [smem:[#allocation0]]
  $region49: #{d_forward.4} parent=0
    _
  %s7 = ssub.s32 1, %s5
  %s8 = scalar_select 0, %s7, %s5
  loop: start=0, step=1, limit=4
  $region2: #{d_forward.4} parent=0 // loop_pre_header
    _
  $region3: #{d_forward.4} parent=0 // loop_header
    %s10 = sphi 0, %s14
    %p11 = scmp.ge.s32.totalorder %s10, 4
    %s20 = sphi 0, %s22
    %s23 = sphi 0, %s20
    %s24 = sphi 0, %s23
    %s40 = sphi 0, %s24
    %s44 = sphi 0, %s44
    %s46 = sphi 0, %s44
    %s47 = sphi 0, %s46
    %s61 = sphi 0, %s47
    %s65 = sphi 0, %s65
    %s67 = sphi 0, %s65
    %s68 = sphi 0, %s67
    %s82 = sphi 0, %s68
    %s86 = sphi 0, %s86
    %s88 = sphi 0, %s86
    %s89 = sphi 0, %s88
    %s103 = sphi 0, %s89
    %s109 = sphi 0, %s111
    %s112 = sphi 0, %s109
    %s113 = sphi 0, %s112
    %s129 = sphi 0, %s113
  $region4: #{d_forward.4} parent=0 // loop_header_branch
    %13 = sbr.rel (%p11) target = $region8
  $region5: #{d_forward.4} parent=0 // loop_body
    %s15 = ssub.s32 %s10, 1
    %s16 = ssub.s32 %s10, 2
    %s17 = sadd.s32 %s10, 1
    %s18 = ssub.s32 %s10, %s17
    %p19 = scmp.eq.s32.totalorder %s18, 0
    %s21 = sadd.s32 %s20, 1
    %s22 = scalar_select %p19, %s20, %s21
    %p25 = pneg %p19
    %p26 = scmp.eq.s32.totalorder %s10, 1
    %p27 = por %p25, %p26
    %p28 = scmp.ne.s32.totalorder %s20, %s23
    %p29 = scmp.eq.s32.totalorder %s10, 0
    %p30 = por %p28, %p29
    %p31 = scmp.ne.s32.totalorder %s20, %s23
    %p32 = scmp.eq.s32.totalorder %s15, 1
    %p33 = por %p31, %p32
    %p34 = scmp.ne.s32.totalorder %s23, %s24
    %p35 = scmp.eq.s32.totalorder %s15, 0
    %p36 = por %p34, %p35
    %p37 = scmp.ne.s32.totalorder %s23, %s24
    %p38 = scmp.eq.s32.totalorder %s16, 1
    %p39 = por %p37, %p38
    %p41 = scmp.ne.s32.totalorder %s24, %s40
    %p42 = scmp.eq.s32.totalorder %s16, 0
    %p43 = por %p41, %p42
    %s45 = sadd.s32 %s44, 1
    %p48 = scmp.eq.s32.totalorder %s10, 1
    %p49 = scmp.ne.s32.totalorder %s44, %s46
    %p50 = scmp.eq.s32.totalorder %s10, 0
    %p51 = por %p49, %p50
    %p52 = scmp.ne.s32.totalorder %s44, %s46
    %p53 = scmp.eq.s32.totalorder %s15, 1
    %p54 = por %p52, %p53
    %p55 = scmp.ne.s32.totalorder %s46, %s47
    %p56 = scmp.eq.s32.totalorder %s15, 0
    %p57 = por %p55, %p56
    %p58 = scmp.ne.s32.totalorder %s46, %s47
    %p59 = scmp.eq.s32.totalorder %s16, 1
    %p60 = por %p58, %p59
    %p62 = scmp.ne.s32.totalorder %s47, %s61
    %p63 = scmp.eq.s32.totalorder %s16, 0
    %p64 = por %p62, %p63
    %s66 = sadd.s32 %s65, 1
    %p69 = scmp.eq.s32.totalorder %s10, 1
    %p70 = scmp.ne.s32.totalorder %s65, %s67
    %p71 = scmp.eq.s32.totalorder %s10, 0
    %p72 = por %p70, %p71
    %p73 = scmp.ne.s32.totalorder %s65, %s67
    %p74 = scmp.eq.s32.totalorder %s15, 1
    %p75 = por %p73, %p74
    %p76 = scmp.ne.s32.totalorder %s67, %s68
    %p77 = scmp.eq.s32.totalorder %s15, 0
    %p78 = por %p76, %p77
    %p79 = scmp.ne.s32.totalorder %s67, %s68
    %p80 = scmp.eq.s32.totalorder %s16, 1
    %p81 = por %p79, %p80
    %p83 = scmp.ne.s32.totalorder %s68, %s82
    %p84 = scmp.eq.s32.totalorder %s16, 0
    %p85 = por %p83, %p84
    %s87 = sadd.s32 %s86, 1
    %p90 = scmp.eq.s32.totalorder %s10, 1
    %p91 = scmp.ne.s32.totalorder %s86, %s88
    %p92 = scmp.eq.s32.totalorder %s10, 0
    %p93 = por %p91, %p92
    %p94 = scmp.ne.s32.totalorder %s86, %s88
    %p95 = scmp.eq.s32.totalorder %s15, 1
    %p96 = por %p94, %p95
    %p97 = scmp.ne.s32.totalorder %s88, %s89
    %p98 = scmp.eq.s32.totalorder %s15, 0
    %p99 = por %p97, %p98
    %p100 = scmp.ne.s32.totalorder %s88, %s89
    %p101 = scmp.eq.s32.totalorder %s16, 1
    %p102 = por %p100, %p101
    %p104 = scmp.ne.s32.totalorder %s89, %s103
    %p105 = scmp.eq.s32.totalorder %s16, 0
    %p106 = por %p104, %p105
    %s107 = ssub.s32 %s10, %s17
    %p108 = scmp.eq.s32.totalorder %s107, 0
    %s110 = sadd.s32 %s109, 1
    %s111 = scalar_select %p108, %s109, %s110
    %p114 = pneg %p108
    %p115 = scmp.eq.s32.totalorder %s10, 1
    %p116 = por %p114, %p115
    %p117 = scmp.ne.s32.totalorder %s109, %s112
    %p118 = scmp.eq.s32.totalorder %s10, 0
    %p119 = por %p117, %p118
    %p120 = scmp.ne.s32.totalorder %s109, %s112
    %p121 = scmp.eq.s32.totalorder %s15, 1
    %p122 = por %p120, %p121
    %p123 = scmp.ne.s32.totalorder %s112, %s113
    %p124 = scmp.eq.s32.totalorder %s15, 0
    %p125 = por %p123, %p124
    %p126 = scmp.ne.s32.totalorder %s112, %s113
    %p127 = scmp.eq.s32.totalorder %s16, 1
    %p128 = por %p126, %p127
    %p130 = scmp.ne.s32.totalorder %s113, %s129
    %p131 = scmp.eq.s32.totalorder %s16, 0
    %p132 = por %p130, %p131
    %p133 = scmp.le.s32.totalorder 1, %s10
    %p134 = scmp.lt.s32.totalorder %s10, 3
    %p135 = pnand %p133, %p134
    %p136 = pneg %p135
    // Predicated region
    $region9: #{d_forward.4} parent=5 // pred_check
      _
    $region10: #{d_forward.4} parent=5 // pred_check_branch
      %138 = sbr.rel (%p135) target = $region12
    $region11: #{d_forward.4} parent=5 // pred_region
      %s139 = ssub.s32 %s10, 1
      // Predicated region
      $region13: #{d_forward.4} parent=11 // pred_check
        %p140 = pneg %p57
      $region14: #{d_forward.4} parent=11 // pred_check_branch
        %142 = sbr.rel (%p140) target = $region16
      $region15: #{d_forward.4} parent=11 // pred_region
        _
      $region16: #{d_forward.4} parent=11 // pred_fallthru
        _
      // Predicated region
      $region17: #{d_forward.4} parent=11 // pred_check
        %p143 = pneg %p78
      $region18: #{d_forward.4} parent=11 // pred_check_branch
        %145 = sbr.rel (%p143) target = $region20
      $region19: #{d_forward.4} parent=11 // pred_region
        _
      $region20: #{d_forward.4} parent=11 // pred_fallthru
        _
      // Predicated region
      $region21: #{d_forward.4} parent=11 // pred_check
        %p146 = pneg %p99
      $region22: #{d_forward.4} parent=11 // pred_check_branch
        %148 = sbr.rel (%p146) target = $region24
      $region23: #{d_forward.4} parent=11 // pred_region
        _
      $region24: #{d_forward.4} parent=11 // pred_fallthru
        _
    $region12: #{d_forward.4} parent=5 // pred_fallthru
      _
    %p149 = scmp.lt.s32.totalorder %s10, 2
    // Predicated region
    $region25: #{d_forward.4} parent=5 // pred_check
      %p150 = pneg %p149
    $region26: #{d_forward.4} parent=5 // pred_check_branch
      %152 = sbr.rel (%p150) target = $region28
    $region27: #{d_forward.4} parent=5 // pred_region
      // Predicated region
      $region29: #{d_forward.4} parent=27 // pred_check
        %p153 = pneg %p30
      $region30: #{d_forward.4} parent=27 // pred_check_branch
        %155 = sbr.rel (%p153) target = $region32
      $region31: #{d_forward.4} parent=27 // pred_region
        %p156 = scmp.lt.s32.totalorder %s10, 1
        %s157 = scalar_select %p156, %s10, 1
        %s158 = smul.addr %s157, 128
        %s159 = smul.addr %s158, 4
        %s160 = scalar_lea.vmem %s0, %s159
      $region32: #{d_forward.4} parent=27 // pred_fallthru
        _
    $region28: #{d_forward.4} parent=5 // pred_fallthru
      _
    %p161 = scmp.le.s32.totalorder 1, %s10
    %p162 = scmp.lt.s32.totalorder %s10, 3
    %p163 = pnand %p161, %p162
    %p164 = pneg %p163
    // Predicated region
    $region33: #{d_forward.4} parent=5 // pred_check
      _
    $region34: #{d_forward.4} parent=5 // pred_check_branch
      %166 = sbr.rel (%p163) target = $region36
    $region35: #{d_forward.4} parent=5 // pred_region
      %s167 = ssub.s32 %s10, 1
      %p168 = scmp.lt.s32.totalorder %s15, 1
      %s169 = scalar_select %p168, %s15, 1
      %s170 = smul.addr %s169, 128
      %s171 = smul.addr %s170, 4
      %s172 = scalar_lea.vmem %s0, %s171
      %p173 = pneg %p36
      %p174 = pneg %p33
      %p175 = pneg %p57
      %p176 = pneg %p54
      %p177 = pneg %p78
      %p178 = pneg %p75
      %p179 = pneg %p99
      %p180 = pneg %p96
      %p181 = pneg %p125
      %p182 = pneg %p122
      %p183 = scmp.lt.s32.totalorder %s15, 1
      %s184 = scalar_select %p183, %s15, 1
      %s185 = smul.addr %s184, 128
      %s186 = smul.addr %s185, 4
      %s187 = scalar_lea.vmem %s4, %s186
      %p188 = scmp.lt.s32.totalorder %s15, 1
      %s189 = scalar_select %p188, %s15, 1
      %s190 = smul.addr %s189, 128
      %s191 = smul.addr %s190, 4
      %s192 = scalar_lea.vmem %s0, %s191
      %p193 = scmp.lt.s32.totalorder %s15, 1
      %s194 = scalar_select %p193, %s15, 1
      %s195 = smul.addr %s194, 128
      %s196 = smul.addr %s195, 4
      %s197 = scalar_lea.vmem %s4, %s196
      %v199 = vld [vmem:[%s192] sm:$0xf]
      %v200 = vld [vmem:[%s192 + $0x4] sm:$0xf]
      %v201 = vld [vmem:[%s192 + $0x8] sm:$0xf]
      %v202 = vld [vmem:[%s192 + $0xc] sm:$0xf]
      %v203 = vld [vmem:[%s192 + $0x10] sm:$0xf]
      %v204 = vld [vmem:[%s192 + $0x14] sm:$0xf]
      %v205 = vld [vmem:[%s192 + $0x18] sm:$0xf]
      %v206 = vld [vmem:[%s192 + $0x1c] sm:$0xf]
      %v207 = vld [vmem:[%s192 + $0x20] sm:$0xf]
      %v208 = vld [vmem:[%s192 + $0x24] sm:$0xf]
      %v209 = vld [vmem:[%s192 + $0x28] sm:$0xf]
      %v210 = vld [vmem:[%s192 + $0x2c] sm:$0xf]
      %v211 = vld [vmem:[%s192 + $0x30] sm:$0xf]
      %v212 = vld [vmem:[%s192 + $0x34] sm:$0xf]
      %v213 = vld [vmem:[%s192 + $0x38] sm:$0xf]
      %v214 = vld [vmem:[%s192 + $0x3c] sm:$0xf]
      %v215 = vld [vmem:[%s192 + $0x40] sm:$0xf]
      %v216 = vld [vmem:[%s192 + $0x44] sm:$0xf]
      %v217 = vld [vmem:[%s192 + $0x48] sm:$0xf]
      %v218 = vld [vmem:[%s192 + $0x4c] sm:$0xf]
      %v219 = vld [vmem:[%s192 + $0x50] sm:$0xf]
      %v220 = vld [vmem:[%s192 + $0x54] sm:$0xf]
      %v221 = vld [vmem:[%s192 + $0x58] sm:$0xf]
      %v222 = vld [vmem:[%s192 + $0x5c] sm:$0xf]
      %v223 = vld [vmem:[%s192 + $0x60] sm:$0xf]
      %v224 = vld [vmem:[%s192 + $0x64] sm:$0xf]
      %v225 = vld [vmem:[%s192 + $0x68] sm:$0xf]
      %v226 = vld [vmem:[%s192 + $0x6c] sm:$0xf]
      %v227 = vld [vmem:[%s192 + $0x70] sm:$0xf]
      %v228 = vld [vmem:[%s192 + $0x74] sm:$0xf]
      %v229 = vld [vmem:[%s192 + $0x78] sm:$0xf]
      %v230 = vld [vmem:[%s192 + $0x7c] sm:$0xf]
      %v231 = vld [vmem:[%s192 + $0x80] sm:$0xf]
      %v232 = vld [vmem:[%s192 + $0x84] sm:$0xf]
      %v233 = vld [vmem:[%s192 + $0x88] sm:$0xf]
      %v234 = vld [vmem:[%s192 + $0x8c] sm:$0xf]
      %v235 = vld [vmem:[%s192 + $0x90] sm:$0xf]
      %v236 = vld [vmem:[%s192 + $0x94] sm:$0xf]
      %v237 = vld [vmem:[%s192 + $0x98] sm:$0xf]
      %v238 = vld [vmem:[%s192 + $0x9c] sm:$0xf]
      %v239 = vld [vmem:[%s192 + $0xa0] sm:$0xf]
      %v240 = vld [vmem:[%s192 + $0xa4] sm:$0xf]
      %v241 = vld [vmem:[%s192 + $0xa8] sm:$0xf]
      %v242 = vld [vmem:[%s192 + $0xac] sm:$0xf]
      %v243 = vld [vmem:[%s192 + $0xb0] sm:$0xf]
      %v244 = vld [vmem:[%s192 + $0xb4] sm:$0xf]
      %v245 = vld [vmem:[%s192 + $0xb8] sm:$0xf]
      %v246 = vld [vmem:[%s192 + $0xbc] sm:$0xf]
      %v247 = vld [vmem:[%s192 + $0xc0] sm:$0xf]
      %v248 = vld [vmem:[%s192 + $0xc4] sm:$0xf]
      %v249 = vld [vmem:[%s192 + $0xc8] sm:$0xf]
      %v250 = vld [vmem:[%s192 + $0xcc] sm:$0xf]
      %v251 = vld [vmem:[%s192 + $0xd0] sm:$0xf]
      %v252 = vld [vmem:[%s192 + $0xd4] sm:$0xf]
      %v253 = vld [vmem:[%s192 + $0xd8] sm:$0xf]
      %v254 = vld [vmem:[%s192 + $0xdc] sm:$0xf]
      %v255 = vld [vmem:[%s192 + $0xe0] sm:$0xf]
      %v256 = vld [vmem:[%s192 + $0xe4] sm:$0xf]
      %v257 = vld [vmem:[%s192 + $0xe8] sm:$0xf]
      %v258 = vld [vmem:[%s192 + $0xec] sm:$0xf]
      %v259 = vld [vmem:[%s192 + $0xf0] sm:$0xf]
      %v260 = vld [vmem:[%s192 + $0xf4] sm:$0xf]
      %v261 = vld [vmem:[%s192 + $0xf8] sm:$0xf]
      %v262 = vld [vmem:[%s192 + $0xfc] sm:$0xf]
      %v263 = vld [vmem:[%s192 + $0x100] sm:$0xf]
      %v264 = vld [vmem:[%s192 + $0x104] sm:$0xf]
      %v265 = vld [vmem:[%s192 + $0x108] sm:$0xf]
      %v266 = vld [vmem:[%s192 + $0x10c] sm:$0xf]
      %v267 = vld [vmem:[%s192 + $0x110] sm:$0xf]
      %v268 = vld [vmem:[%s192 + $0x114] sm:$0xf]
      %v269 = vld [vmem:[%s192 + $0x118] sm:$0xf]
      %v270 = vld [vmem:[%s192 + $0x11c] sm:$0xf]
      %v271 = vld [vmem:[%s192 + $0x120] sm:$0xf]
      %v272 = vld [vmem:[%s192 + $0x124] sm:$0xf]
      %v273 = vld [vmem:[%s192 + $0x128] sm:$0xf]
      %v274 = vld [vmem:[%s192 + $0x12c] sm:$0xf]
      %v275 = vld [vmem:[%s192 + $0x130] sm:$0xf]
      %v276 = vld [vmem:[%s192 + $0x134] sm:$0xf]
      %v277 = vld [vmem:[%s192 + $0x138] sm:$0xf]
      %v278 = vld [vmem:[%s192 + $0x13c] sm:$0xf]
      %v279 = vld [vmem:[%s192 + $0x140] sm:$0xf]
      %v280 = vld [vmem:[%s192 + $0x144] sm:$0xf]
      %v281 = vld [vmem:[%s192 + $0x148] sm:$0xf]
      %v282 = vld [vmem:[%s192 + $0x14c] sm:$0xf]
      %v283 = vld [vmem:[%s192 + $0x150] sm:$0xf]
      %v284 = vld [vmem:[%s192 + $0x154] sm:$0xf]
      %v285 = vld [vmem:[%s192 + $0x158] sm:$0xf]
      %v286 = vld [vmem:[%s192 + $0x15c] sm:$0xf]
      %v287 = vld [vmem:[%s192 + $0x160] sm:$0xf]
      %v288 = vld [vmem:[%s192 + $0x164] sm:$0xf]
      %v289 = vld [vmem:[%s192 + $0x168] sm:$0xf]
      %v290 = vld [vmem:[%s192 + $0x16c] sm:$0xf]
      %v291 = vld [vmem:[%s192 + $0x170] sm:$0xf]
      %v292 = vld [vmem:[%s192 + $0x174] sm:$0xf]
      %v293 = vld [vmem:[%s192 + $0x178] sm:$0xf]
      %v294 = vld [vmem:[%s192 + $0x17c] sm:$0xf]
      %v295 = vld [vmem:[%s192 + $0x180] sm:$0xf]
      %v296 = vld [vmem:[%s192 + $0x184] sm:$0xf]
      %v297 = vld [vmem:[%s192 + $0x188] sm:$0xf]
      %v298 = vld [vmem:[%s192 + $0x18c] sm:$0xf]
      %v299 = vld [vmem:[%s192 + $0x190] sm:$0xf]
      %v300 = vld [vmem:[%s192 + $0x194] sm:$0xf]
      %v301 = vld [vmem:[%s192 + $0x198] sm:$0xf]
      %v302 = vld [vmem:[%s192 + $0x19c] sm:$0xf]
      %v303 = vld [vmem:[%s192 + $0x1a0] sm:$0xf]
      %v304 = vld [vmem:[%s192 + $0x1a4] sm:$0xf]
      %v305 = vld [vmem:[%s192 + $0x1a8] sm:$0xf]
      %v306 = vld [vmem:[%s192 + $0x1ac] sm:$0xf]
      %v307 = vld [vmem:[%s192 + $0x1b0] sm:$0xf]
      %v308 = vld [vmem:[%s192 + $0x1b4] sm:$0xf]
      %v309 = vld [vmem:[%s192 + $0x1b8] sm:$0xf]
      %v310 = vld [vmem:[%s192 + $0x1bc] sm:$0xf]
      %v311 = vld [vmem:[%s192 + $0x1c0] sm:$0xf]
      %v312 = vld [vmem:[%s192 + $0x1c4] sm:$0xf]
      %v313 = vld [vmem:[%s192 + $0x1c8] sm:$0xf]
      %v314 = vld [vmem:[%s192 + $0x1cc] sm:$0xf]
      %v315 = vld [vmem:[%s192 + $0x1d0] sm:$0xf]
      %v316 = vld [vmem:[%s192 + $0x1d4] sm:$0xf]
      %v317 = vld [vmem:[%s192 + $0x1d8] sm:$0xf]
      %v318 = vld [vmem:[%s192 + $0x1dc] sm:$0xf]
      %v319 = vld [vmem:[%s192 + $0x1e0] sm:$0xf]
      %v320 = vld [vmem:[%s192 + $0x1e4] sm:$0xf]
      %v321 = vld [vmem:[%s192 + $0x1e8] sm:$0xf]
      %v322 = vld [vmem:[%s192 + $0x1ec] sm:$0xf]
      %v323 = vld [vmem:[%s192 + $0x1f0] sm:$0xf]
      %v324 = vld [vmem:[%s192 + $0x1f4] sm:$0xf]
      %v325 = vld [vmem:[%s192 + $0x1f8] sm:$0xf]
      %v326 = vld [vmem:[%s192 + $0x1fc] sm:$0xf]
      %v327 = vld [vmem:[%s1] sm:$0xf]
      %v328 = vld [vmem:[%s1 + $0x4] sm:$0xf]
      %v329 = vld [vmem:[%s1 + $0x8] sm:$0xf]
      %v330 = vld [vmem:[%s1 + $0xc] sm:$0xf]
      %v331 = vld [vmem:[%s1 + $0x10] sm:$0xf]
      %v332 = vld [vmem:[%s1 + $0x14] sm:$0xf]
      %v333 = vld [vmem:[%s1 + $0x18] sm:$0xf]
      %v334 = vld [vmem:[%s1 + $0x1c] sm:$0xf]
      %v463 = vunpack.c.l.b16 %v199
      %v464 = vunpack.c.l.b16 %v200
      %v465 = vunpack.c.l.b16 %v201
      %v466 = vunpack.c.l.b16 %v202
      %v467 = vunpack.c.l.b16 %v203
      %v468 = vunpack.c.l.b16 %v204
      %v469 = vunpack.c.l.b16 %v205
      %v470 = vunpack.c.l.b16 %v206
      %v471 = vunpack.c.l.b16 %v207
      %v472 = vunpack.c.l.b16 %v208
      %v473 = vunpack.c.l.b16 %v209
      %v474 = vunpack.c.l.b16 %v210
      %v475 = vunpack.c.l.b16 %v211
      %v476 = vunpack.c.l.b16 %v212
      %v477 = vunpack.c.l.b16 %v213
      %v478 = vunpack.c.l.b16 %v214
      %v479 = vunpack.c.l.b16 %v215
      %v480 = vunpack.c.l.b16 %v216
      %v481 = vunpack.c.l.b16 %v217
      %v482 = vunpack.c.l.b16 %v218
      %v483 = vunpack.c.l.b16 %v219
      %v484 = vunpack.c.l.b16 %v220
      %v485 = vunpack.c.l.b16 %v221
      %v486 = vunpack.c.l.b16 %v222
      %v487 = vunpack.c.l.b16 %v223
      %v488 = vunpack.c.l.b16 %v224
      %v489 = vunpack.c.l.b16 %v225
      %v490 = vunpack.c.l.b16 %v226
      %v491 = vunpack.c.l.b16 %v227
      %v492 = vunpack.c.l.b16 %v228
      %v493 = vunpack.c.l.b16 %v229
      %v494 = vunpack.c.l.b16 %v230
      %v495 = vunpack.c.l.b16 %v231
      %v496 = vunpack.c.l.b16 %v232
      %v497 = vunpack.c.l.b16 %v233
      %v498 = vunpack.c.l.b16 %v234
      %v499 = vunpack.c.l.b16 %v235
      %v500 = vunpack.c.l.b16 %v236
      %v501 = vunpack.c.l.b16 %v237
      %v502 = vunpack.c.l.b16 %v238
      %v503 = vunpack.c.l.b16 %v239
      %v504 = vunpack.c.l.b16 %v240
      %v505 = vunpack.c.l.b16 %v241
      %v506 = vunpack.c.l.b16 %v242
      %v507 = vunpack.c.l.b16 %v243
      %v508 = vunpack.c.l.b16 %v244
      %v509 = vunpack.c.l.b16 %v245
      %v510 = vunpack.c.l.b16 %v246
      %v511 = vunpack.c.l.b16 %v247
      %v512 = vunpack.c.l.b16 %v248
      %v513 = vunpack.c.l.b16 %v249
      %v514 = vunpack.c.l.b16 %v250
      %v515 = vunpack.c.l.b16 %v251
      %v516 = vunpack.c.l.b16 %v252
      %v517 = vunpack.c.l.b16 %v253
      %v518 = vunpack.c.l.b16 %v254
      %v519 = vunpack.c.l.b16 %v255
      %v520 = vunpack.c.l.b16 %v256
      %v521 = vunpack.c.l.b16 %v257
      %v522 = vunpack.c.l.b16 %v258
      %v523 = vunpack.c.l.b16 %v259
      %v524 = vunpack.c.l.b16 %v260
      %v525 = vunpack.c.l.b16 %v261
      %v526 = vunpack.c.l.b16 %v262
      %v527 = vunpack.c.l.b16 %v263
      %v528 = vunpack.c.l.b16 %v264
      %v529 = vunpack.c.l.b16 %v265
      %v530 = vunpack.c.l.b16 %v266
      %v531 = vunpack.c.l.b16 %v267
      %v532 = vunpack.c.l.b16 %v268
      %v533 = vunpack.c.l.b16 %v269
      %v534 = vunpack.c.l.b16 %v270
      %v535 = vunpack.c.l.b16 %v271
      %v536 = vunpack.c.l.b16 %v272
      %v537 = vunpack.c.l.b16 %v273
      %v538 = vunpack.c.l.b16 %v274
      %v539 = vunpack.c.l.b16 %v275
      %v540 = vunpack.c.l.b16 %v276
      %v541 = vunpack.c.l.b16 %v277
      %v542 = vunpack.c.l.b16 %v278
      %v543 = vunpack.c.l.b16 %v279
      %v544 = vunpack.c.l.b16 %v280
      %v545 = vunpack.c.l.b16 %v281
      %v546 = vunpack.c.l.b16 %v282
      %v547 = vunpack.c.l.b16 %v283
      %v548 = vunpack.c.l.b16 %v284
      %v549 = vunpack.c.l.b16 %v285
      %v550 = vunpack.c.l.b16 %v286
      %v551 = vunpack.c.l.b16 %v287
      %v552 = vunpack.c.l.b16 %v288
      %v553 = vunpack.c.l.b16 %v289
      %v554 = vunpack.c.l.b16 %v290
      %v555 = vunpack.c.l.b16 %v291
      %v556 = vunpack.c.l.b16 %v292
      %v557 = vunpack.c.l.b16 %v293
      %v558 = vunpack.c.l.b16 %v294
      %v559 = vunpack.c.l.b16 %v295
      %v560 = vunpack.c.l.b16 %v296
      %v561 = vunpack.c.l.b16 %v297
      %v562 = vunpack.c.l.b16 %v298
      %v563 = vunpack.c.l.b16 %v299
      %v564 = vunpack.c.l.b16 %v300
      %v565 = vunpack.c.l.b16 %v301
      %v566 = vunpack.c.l.b16 %v302
      %v567 = vunpack.c.l.b16 %v303
      %v568 = vunpack.c.l.b16 %v304
      %v569 = vunpack.c.l.b16 %v305
      %v570 = vunpack.c.l.b16 %v306
      %v571 = vunpack.c.l.b16 %v307
      %v572 = vunpack.c.l.b16 %v308
      %v573 = vunpack.c.l.b16 %v309
      %v574 = vunpack.c.l.b16 %v310
      %v575 = vunpack.c.l.b16 %v311
      %v576 = vunpack.c.l.b16 %v312
      %v577 = vunpack.c.l.b16 %v313
      %v578 = vunpack.c.l.b16 %v314
      %v579 = vunpack.c.l.b16 %v315
      %v580 = vunpack.c.l.b16 %v316
      %v581 = vunpack.c.l.b16 %v317
      %v582 = vunpack.c.l.b16 %v318
      %v583 = vunpack.c.l.b16 %v319
      %v584 = vunpack.c.l.b16 %v320
      %v585 = vunpack.c.l.b16 %v321
      %v586 = vunpack.c.l.b16 %v322
      %v587 = vunpack.c.l.b16 %v323
      %v588 = vunpack.c.l.b16 %v324
      %v589 = vunpack.c.l.b16 %v325
      %v590 = vunpack.c.l.b16 %v326
      %v591 = vpack.c.b16 %v464, %v463
      %v592 = vpack.c.b16 %v466, %v465
      %v593 = vpack.c.b16 %v468, %v467
      %v594 = vpack.c.b16 %v470, %v469
      %v595 = vpack.c.b16 %v472, %v471
      %v596 = vpack.c.b16 %v474, %v473
      %v597 = vpack.c.b16 %v476, %v475
      %v598 = vpack.c.b16 %v478, %v477
      %v599 = vpack.c.b16 %v480, %v479
      %v600 = vpack.c.b16 %v482, %v481
      %v601 = vpack.c.b16 %v484, %v483
      %v602 = vpack.c.b16 %v486, %v485
      %v603 = vpack.c.b16 %v488, %v487
      %v604 = vpack.c.b16 %v490, %v489
      %v605 = vpack.c.b16 %v492, %v491
      %v606 = vpack.c.b16 %v494, %v493
      %v607 = vpack.c.b16 %v496, %v495
      %v608 = vpack.c.b16 %v498, %v497
      %v609 = vpack.c.b16 %v500, %v499
      %v610 = vpack.c.b16 %v502, %v501
      %v611 = vpack.c.b16 %v504, %v503
      %v612 = vpack.c.b16 %v506, %v505
      %v613 = vpack.c.b16 %v508, %v507
      %v614 = vpack.c.b16 %v510, %v509
      %v615 = vpack.c.b16 %v512, %v511
      %v616 = vpack.c.b16 %v514, %v513
      %v617 = vpack.c.b16 %v516, %v515
      %v618 = vpack.c.b16 %v518, %v517
      %v619 = vpack.c.b16 %v520, %v519
      %v620 = vpack.c.b16 %v522, %v521
      %v621 = vpack.c.b16 %v524, %v523
      %v622 = vpack.c.b16 %v526, %v525
      %v623 = vpack.c.b16 %v528, %v527
      %v624 = vpack.c.b16 %v530, %v529
      %v625 = vpack.c.b16 %v532, %v531
      %v626 = vpack.c.b16 %v534, %v533
      %v627 = vpack.c.b16 %v536, %v535
      %v628 = vpack.c.b16 %v538, %v537
      %v629 = vpack.c.b16 %v540, %v539
      %v630 = vpack.c.b16 %v542, %v541
      %v631 = vpack.c.b16 %v544, %v543
      %v632 = vpack.c.b16 %v546, %v545
      %v633 = vpack.c.b16 %v548, %v547
      %v634 = vpack.c.b16 %v550, %v549
      %v635 = vpack.c.b16 %v552, %v551
      %v636 = vpack.c.b16 %v554, %v553
      %v637 = vpack.c.b16 %v556, %v555
      %v638 = vpack.c.b16 %v558, %v557
      %v639 = vpack.c.b16 %v560, %v559
      %v640 = vpack.c.b16 %v562, %v561
      %v641 = vpack.c.b16 %v564, %v563
      %v642 = vpack.c.b16 %v566, %v565
      %v643 = vpack.c.b16 %v568, %v567
      %v644 = vpack.c.b16 %v570, %v569
      %v645 = vpack.c.b16 %v572, %v571
      %v646 = vpack.c.b16 %v574, %v573
      %v647 = vpack.c.b16 %v576, %v575
      %v648 = vpack.c.b16 %v578, %v577
      %v649 = vpack.c.b16 %v580, %v579
      %v650 = vpack.c.b16 %v582, %v581
      %v651 = vpack.c.b16 %v584, %v583
      %v652 = vpack.c.b16 %v586, %v585
      %v653 = vpack.c.b16 %v588, %v587
      %v654 = vpack.c.b16 %v590, %v589
      %v663 = vunpack.c.l.b16 %v327
      %v664 = vunpack.c.l.b16 %v328
      %v665 = vunpack.c.l.b16 %v329
      %v666 = vunpack.c.l.b16 %v330
      %v667 = vunpack.c.l.b16 %v331
      %v668 = vunpack.c.l.b16 %v332
      %v669 = vunpack.c.l.b16 %v333
      %v670 = vunpack.c.l.b16 %v334
      %v671 = vpack.c.b16 %v664, %v663
      %v672 = vpack.c.b16 %v666, %v665
      %v673 = vpack.c.b16 %v668, %v667
      %v674 = vpack.c.b16 %v670, %v669
      %vm679 = vcmask 523264
      %v681 = vsel %vm679, %v591, 0
      %v684 = vsel %vm679, %v592, 0
      %v687 = vsel %vm679, %v593, 0
      %v690 = vsel %vm679, %v594, 0
      %v693 = vsel %vm679, %v595, 0
      %v696 = vsel %vm679, %v596, 0
      %v699 = vsel %vm679, %v597, 0
      %v702 = vsel %vm679, %v598, 0
      %v705 = vsel %vm679, %v599, 0
      %v708 = vsel %vm679, %v600, 0
      %v711 = vsel %vm679, %v601, 0
      %v714 = vsel %vm679, %v602, 0
      %v717 = vsel %vm679, %v603, 0
      %v720 = vsel %vm679, %v604, 0
      %v723 = vsel %vm679, %v605, 0
      %v726 = vsel %vm679, %v606, 0
      %v729 = vsel %vm679, %v607, 0
      %v732 = vsel %vm679, %v608, 0
      %v735 = vsel %vm679, %v609, 0
      %v738 = vsel %vm679, %v610, 0
      %v741 = vsel %vm679, %v611, 0
      %v744 = vsel %vm679, %v612, 0
      %v747 = vsel %vm679, %v613, 0
      %v750 = vsel %vm679, %v614, 0
      %v753 = vsel %vm679, %v615, 0
      %v756 = vsel %vm679, %v616, 0
      %v759 = vsel %vm679, %v617, 0
      %v762 = vsel %vm679, %v618, 0
      %v765 = vsel %vm679, %v619, 0
      %v768 = vsel %vm679, %v620, 0
      %v771 = vsel %vm679, %v621, 0
      %v774 = vsel %vm679, %v622, 0
      %v777 = vsel %vm679, %v623, 0
      %v780 = vsel %vm679, %v624, 0
      %v783 = vsel %vm679, %v625, 0
      %v786 = vsel %vm679, %v626, 0
      %v789 = vsel %vm679, %v627, 0
      %v792 = vsel %vm679, %v628, 0
      %v795 = vsel %vm679, %v629, 0
      %v798 = vsel %vm679, %v630, 0
      %v801 = vsel %vm679, %v631, 0
      %v804 = vsel %vm679, %v632, 0
      %v807 = vsel %vm679, %v633, 0
      %v810 = vsel %vm679, %v634, 0
      %v813 = vsel %vm679, %v635, 0
      %v816 = vsel %vm679, %v636, 0
      %v819 = vsel %vm679, %v637, 0
      %v822 = vsel %vm679, %v638, 0
      %v825 = vsel %vm679, %v639, 0
      %v828 = vsel %vm679, %v640, 0
      %v831 = vsel %vm679, %v641, 0
      %v834 = vsel %vm679, %v642, 0
      %v837 = vsel %vm679, %v643, 0
      %v840 = vsel %vm679, %v644, 0
      %v843 = vsel %vm679, %v645, 0
      %v846 = vsel %vm679, %v646, 0
      %v849 = vsel %vm679, %v647, 0
      %v852 = vsel %vm679, %v648, 0
      %v855 = vsel %vm679, %v649, 0
      %v858 = vsel %vm679, %v650, 0
      %v861 = vsel %vm679, %v651, 0
      %v864 = vsel %vm679, %v652, 0
      %v867 = vsel %vm679, %v653, 0
      %v870 = vsel %vm679, %v654, 0
      %872 = vmatpush.bf16.msra.mxu0 0
      %873 = vmatpush.bf16.msra.mxu0 0
      %874 = vmatpush.bf16.msra.mxu0 0
      %875 = vmatpush.bf16.msra.mxu0 0
      %876 = vmatpush.bf16.msra.mxu0 %v674
      %877 = vmatpush.bf16.msra.mxu0 %v673
      %878 = vmatpush.bf16.msra.mxu0 %v672
      %879 = vmatpush.bf16.msra.mxu0 %v671
      %880 = vmatmul.bf16.gmra.mxu0 %v681
      %v881 = vpop.f32.mrf.mxu0
      %v882 = vadd.f32 0.0, %v881
      %v883 = vpop.f32.mrf.mxu0
      %v884 = vadd.f32 0.0, %v883
      %885 = vmatmul.bf16.gmra.mxu0 %v684
      %v886 = vpop.f32.mrf.mxu0
      %v887 = vadd.f32 0.0, %v886
      %v888 = vpop.f32.mrf.mxu0
      %v889 = vadd.f32 0.0, %v888
      %890 = vmatmul.bf16.gmra.mxu0 %v687
      %v891 = vpop.f32.mrf.mxu0
      %v892 = vadd.f32 0.0, %v891
      %v893 = vpop.f32.mrf.mxu0
      %v894 = vadd.f32 0.0, %v893
      %895 = vmatmul.bf16.gmra.mxu0 %v690
      %v896 = vpop.f32.mrf.mxu0
      %v897 = vadd.f32 0.0, %v896
      %v898 = vpop.f32.mrf.mxu0
      %v899 = vadd.f32 0.0, %v898
      %900 = vmatmul.bf16.gmra.mxu0 %v693
      %v901 = vpop.f32.mrf.mxu0
      %v902 = vadd.f32 0.0, %v901
      %v903 = vpop.f32.mrf.mxu0
      %v904 = vadd.f32 0.0, %v903
      %905 = vmatmul.bf16.gmra.mxu0 %v696
      %v906 = vpop.f32.mrf.mxu0
      %v907 = vadd.f32 0.0, %v906
      %v908 = vpop.f32.mrf.mxu0
      %v909 = vadd.f32 0.0, %v908
      %910 = vmatmul.bf16.gmra.mxu0 %v699
      %v911 = vpop.f32.mrf.mxu0
      %v912 = vadd.f32 0.0, %v911
      %v913 = vpop.f32.mrf.mxu0
      %v914 = vadd.f32 0.0, %v913
      %915 = vmatmul.bf16.gmra.mxu0 %v702
      %v916 = vpop.f32.mrf.mxu0
      %v917 = vadd.f32 0.0, %v916
      %v918 = vpop.f32.mrf.mxu0
      %v919 = vadd.f32 0.0, %v918
      %920 = vmatmul.bf16.gmra.mxu0 %v705
      %v921 = vpop.f32.mrf.mxu0
      %v922 = vadd.f32 0.0, %v921
      %v923 = vpop.f32.mrf.mxu0
      %v924 = vadd.f32 0.0, %v923
      %925 = vmatmul.bf16.gmra.mxu0 %v708
      %v926 = vpop.f32.mrf.mxu0
      %v927 = vadd.f32 0.0, %v926
      %v928 = vpop.f32.mrf.mxu0
      %v929 = vadd.f32 0.0, %v928
      %930 = vmatmul.bf16.gmra.mxu0 %v711
      %v931 = vpop.f32.mrf.mxu0
      %v932 = vadd.f32 0.0, %v931
      %v933 = vpop.f32.mrf.mxu0
      %v934 = vadd.f32 0.0, %v933
      %935 = vmatmul.bf16.gmra.mxu0 %v714
      %v936 = vpop.f32.mrf.mxu0
      %v937 = vadd.f32 0.0, %v936
      %v938 = vpop.f32.mrf.mxu0
      %v939 = vadd.f32 0.0, %v938
      %940 = vmatmul.bf16.gmra.mxu0 %v717
      %v941 = vpop.f32.mrf.mxu0
      %v942 = vadd.f32 0.0, %v941
      %v943 = vpop.f32.mrf.mxu0
      %v944 = vadd.f32 0.0, %v943
      %945 = vmatmul.bf16.gmra.mxu0 %v720
      %v946 = vpop.f32.mrf.mxu0
      %v947 = vadd.f32 0.0, %v946
      %v948 = vpop.f32.mrf.mxu0
      %v949 = vadd.f32 0.0, %v948
      %950 = vmatmul.bf16.gmra.mxu0 %v723
      %v951 = vpop.f32.mrf.mxu0
      %v952 = vadd.f32 0.0, %v951
      %v953 = vpop.f32.mrf.mxu0
      %v954 = vadd.f32 0.0, %v953
      %955 = vmatmul.bf16.gmra.mxu0 %v726
      %v956 = vpop.f32.mrf.mxu0
      %v957 = vadd.f32 0.0, %v956
      %v958 = vpop.f32.mrf.mxu0
      %v959 = vadd.f32 0.0, %v958
      %960 = vmatmul.bf16.gmra.mxu0 %v729
      %v961 = vpop.f32.mrf.mxu0
      %v962 = vadd.f32 0.0, %v961
      %v963 = vpop.f32.mrf.mxu0
      %v964 = vadd.f32 0.0, %v963
      %965 = vmatmul.bf16.gmra.mxu0 %v732
      %v966 = vpop.f32.mrf.mxu0
      %v967 = vadd.f32 0.0, %v966
      %v968 = vpop.f32.mrf.mxu0
      %v969 = vadd.f32 0.0, %v968
      %970 = vmatmul.bf16.gmra.mxu0 %v735
      %v971 = vpop.f32.mrf.mxu0
      %v972 = vadd.f32 0.0, %v971
      %v973 = vpop.f32.mrf.mxu0
      %v974 = vadd.f32 0.0, %v973
      %975 = vmatmul.bf16.gmra.mxu0 %v738
      %v976 = vpop.f32.mrf.mxu0
      %v977 = vadd.f32 0.0, %v976
      %v978 = vpop.f32.mrf.mxu0
      %v979 = vadd.f32 0.0, %v978
      %980 = vmatmul.bf16.gmra.mxu0 %v741
      %v981 = vpop.f32.mrf.mxu0
      %v982 = vadd.f32 0.0, %v981
      %v983 = vpop.f32.mrf.mxu0
      %v984 = vadd.f32 0.0, %v983
      %985 = vmatmul.bf16.gmra.mxu0 %v744
      %v986 = vpop.f32.mrf.mxu0
      %v987 = vadd.f32 0.0, %v986
      %v988 = vpop.f32.mrf.mxu0
      %v989 = vadd.f32 0.0, %v988
      %990 = vmatmul.bf16.gmra.mxu0 %v747
      %v991 = vpop.f32.mrf.mxu0
      %v992 = vadd.f32 0.0, %v991
      %v993 = vpop.f32.mrf.mxu0
      %v994 = vadd.f32 0.0, %v993
      %995 = vmatmul.bf16.gmra.mxu0 %v750
      %v996 = vpop.f32.mrf.mxu0
      %v997 = vadd.f32 0.0, %v996
      %v998 = vpop.f32.mrf.mxu0
      %v999 = vadd.f32 0.0, %v998
      %1000 = vmatmul.bf16.gmra.mxu0 %v753
      %v1001 = vpop.f32.mrf.mxu0
      %v1002 = vadd.f32 0.0, %v1001
      %v1003 = vpop.f32.mrf.mxu0
      %v1004 = vadd.f32 0.0, %v1003
      %1005 = vmatmul.bf16.gmra.mxu0 %v756
      %v1006 = vpop.f32.mrf.mxu0
      %v1007 = vadd.f32 0.0, %v1006
      %v1008 = vpop.f32.mrf.mxu0
      %v1009 = vadd.f32 0.0, %v1008
      %1010 = vmatmul.bf16.gmra.mxu0 %v759
      %v1011 = vpop.f32.mrf.mxu0
      %v1012 = vadd.f32 0.0, %v1011
      %v1013 = vpop.f32.mrf.mxu0
      %v1014 = vadd.f32 0.0, %v1013
      %1015 = vmatmul.bf16.gmra.mxu0 %v762
      %v1016 = vpop.f32.mrf.mxu0
      %v1017 = vadd.f32 0.0, %v1016
      %v1018 = vpop.f32.mrf.mxu0
      %v1019 = vadd.f32 0.0, %v1018
      %1020 = vmatmul.bf16.gmra.mxu0 %v765
      %v1021 = vpop.f32.mrf.mxu0
      %v1022 = vadd.f32 0.0, %v1021
      %v1023 = vpop.f32.mrf.mxu0
      %v1024 = vadd.f32 0.0, %v1023
      %1025 = vmatmul.bf16.gmra.mxu0 %v768
      %v1026 = vpop.f32.mrf.mxu0
      %v1027 = vadd.f32 0.0, %v1026
      %v1028 = vpop.f32.mrf.mxu0
      %v1029 = vadd.f32 0.0, %v1028
      %1030 = vmatmul.bf16.gmra.mxu0 %v771
      %v1031 = vpop.f32.mrf.mxu0
      %v1032 = vadd.f32 0.0, %v1031
      %v1033 = vpop.f32.mrf.mxu0
      %v1034 = vadd.f32 0.0, %v1033
      %1035 = vmatmul.bf16.gmra.mxu0 %v774
      %v1036 = vpop.f32.mrf.mxu0
      %v1037 = vadd.f32 0.0, %v1036
      %v1038 = vpop.f32.mrf.mxu0
      %v1039 = vadd.f32 0.0, %v1038
      %1040 = vmatmul.bf16.gmra.mxu0 %v777
      %v1041 = vpop.f32.mrf.mxu0
      %v1042 = vadd.f32 0.0, %v1041
      %v1043 = vpop.f32.mrf.mxu0
      %v1044 = vadd.f32 0.0, %v1043
      %1045 = vmatmul.bf16.gmra.mxu0 %v780
      %v1046 = vpop.f32.mrf.mxu0
      %v1047 = vadd.f32 0.0, %v1046
      %v1048 = vpop.f32.mrf.mxu0
      %v1049 = vadd.f32 0.0, %v1048
      %1050 = vmatmul.bf16.gmra.mxu0 %v783
      %v1051 = vpop.f32.mrf.mxu0
      %v1052 = vadd.f32 0.0, %v1051
      %v1053 = vpop.f32.mrf.mxu0
      %v1054 = vadd.f32 0.0, %v1053
      %1055 = vmatmul.bf16.gmra.mxu0 %v786
      %v1056 = vpop.f32.mrf.mxu0
      %v1057 = vadd.f32 0.0, %v1056
      %v1058 = vpop.f32.mrf.mxu0
      %v1059 = vadd.f32 0.0, %v1058
      %1060 = vmatmul.bf16.gmra.mxu0 %v789
      %v1061 = vpop.f32.mrf.mxu0
      %v1062 = vadd.f32 0.0, %v1061
      %v1063 = vpop.f32.mrf.mxu0
      %v1064 = vadd.f32 0.0, %v1063
      %1065 = vmatmul.bf16.gmra.mxu0 %v792
      %v1066 = vpop.f32.mrf.mxu0
      %v1067 = vadd.f32 0.0, %v1066
      %v1068 = vpop.f32.mrf.mxu0
      %v1069 = vadd.f32 0.0, %v1068
      %1070 = vmatmul.bf16.gmra.mxu0 %v795
      %v1071 = vpop.f32.mrf.mxu0
      %v1072 = vadd.f32 0.0, %v1071
      %v1073 = vpop.f32.mrf.mxu0
      %v1074 = vadd.f32 0.0, %v1073
      %1075 = vmatmul.bf16.gmra.mxu0 %v798
      %v1076 = vpop.f32.mrf.mxu0
      %v1077 = vadd.f32 0.0, %v1076
      %v1078 = vpop.f32.mrf.mxu0
      %v1079 = vadd.f32 0.0, %v1078
      %1080 = vmatmul.bf16.gmra.mxu0 %v801
      %v1081 = vpop.f32.mrf.mxu0
      %v1082 = vadd.f32 0.0, %v1081
      %v1083 = vpop.f32.mrf.mxu0
      %v1084 = vadd.f32 0.0, %v1083
      %1085 = vmatmul.bf16.gmra.mxu0 %v804
      %v1086 = vpop.f32.mrf.mxu0
      %v1087 = vadd.f32 0.0, %v1086
      %v1088 = vpop.f32.mrf.mxu0
      %v1089 = vadd.f32 0.0, %v1088
      %1090 = vmatmul.bf16.gmra.mxu0 %v807
      %v1091 = vpop.f32.mrf.mxu0
      %v1092 = vadd.f32 0.0, %v1091
      %v1093 = vpop.f32.mrf.mxu0
      %v1094 = vadd.f32 0.0, %v1093
      %1095 = vmatmul.bf16.gmra.mxu0 %v810
      %v1096 = vpop.f32.mrf.mxu0
      %v1097 = vadd.f32 0.0, %v1096
      %v1098 = vpop.f32.mrf.mxu0
      %v1099 = vadd.f32 0.0, %v1098
      %1100 = vmatmul.bf16.gmra.mxu0 %v813
      %v1101 = vpop.f32.mrf.mxu0
      %v1102 = vadd.f32 0.0, %v1101
      %v1103 = vpop.f32.mrf.mxu0
      %v1104 = vadd.f32 0.0, %v1103
      %1105 = vmatmul.bf16.gmra.mxu0 %v816
      %v1106 = vpop.f32.mrf.mxu0
      %v1107 = vadd.f32 0.0, %v1106
      %v1108 = vpop.f32.mrf.mxu0
      %v1109 = vadd.f32 0.0, %v1108
      %1110 = vmatmul.bf16.gmra.mxu0 %v819
      %v1111 = vpop.f32.mrf.mxu0
      %v1112 = vadd.f32 0.0, %v1111
      %v1113 = vpop.f32.mrf.mxu0
      %v1114 = vadd.f32 0.0, %v1113
      %1115 = vmatmul.bf16.gmra.mxu0 %v822
      %v1116 = vpop.f32.mrf.mxu0
      %v1117 = vadd.f32 0.0, %v1116
      %v1118 = vpop.f32.mrf.mxu0
      %v1119 = vadd.f32 0.0, %v1118
      %1120 = vmatmul.bf16.gmra.mxu0 %v825
      %v1121 = vpop.f32.mrf.mxu0
      %v1122 = vadd.f32 0.0, %v1121
      %v1123 = vpop.f32.mrf.mxu0
      %v1124 = vadd.f32 0.0, %v1123
      %1125 = vmatmul.bf16.gmra.mxu0 %v828
      %v1126 = vpop.f32.mrf.mxu0
      %v1127 = vadd.f32 0.0, %v1126
      %v1128 = vpop.f32.mrf.mxu0
      %v1129 = vadd.f32 0.0, %v1128
      %1130 = vmatmul.bf16.gmra.mxu0 %v831
      %v1131 = vpop.f32.mrf.mxu0
      %v1132 = vadd.f32 0.0, %v1131
      %v1133 = vpop.f32.mrf.mxu0
      %v1134 = vadd.f32 0.0, %v1133
      %1135 = vmatmul.bf16.gmra.mxu0 %v834
      %v1136 = vpop.f32.mrf.mxu0
      %v1137 = vadd.f32 0.0, %v1136
      %v1138 = vpop.f32.mrf.mxu0
      %v1139 = vadd.f32 0.0, %v1138
      %1140 = vmatmul.bf16.gmra.mxu0 %v837
      %v1141 = vpop.f32.mrf.mxu0
      %v1142 = vadd.f32 0.0, %v1141
      %v1143 = vpop.f32.mrf.mxu0
      %v1144 = vadd.f32 0.0, %v1143
      %1145 = vmatmul.bf16.gmra.mxu0 %v840
      %v1146 = vpop.f32.mrf.mxu0
      %v1147 = vadd.f32 0.0, %v1146
      %v1148 = vpop.f32.mrf.mxu0
      %v1149 = vadd.f32 0.0, %v1148
      %1150 = vmatmul.bf16.gmra.mxu0 %v843
      %v1151 = vpop.f32.mrf.mxu0
      %v1152 = vadd.f32 0.0, %v1151
      %v1153 = vpop.f32.mrf.mxu0
      %v1154 = vadd.f32 0.0, %v1153
      %1155 = vmatmul.bf16.gmra.mxu0 %v846
      %v1156 = vpop.f32.mrf.mxu0
      %v1157 = vadd.f32 0.0, %v1156
      %v1158 = vpop.f32.mrf.mxu0
      %v1159 = vadd.f32 0.0, %v1158
      %1160 = vmatmul.bf16.gmra.mxu0 %v849
      %v1161 = vpop.f32.mrf.mxu0
      %v1162 = vadd.f32 0.0, %v1161
      %v1163 = vpop.f32.mrf.mxu0
      %v1164 = vadd.f32 0.0, %v1163
      %1165 = vmatmul.bf16.gmra.mxu0 %v852
      %v1166 = vpop.f32.mrf.mxu0
      %v1167 = vadd.f32 0.0, %v1166
      %v1168 = vpop.f32.mrf.mxu0
      %v1169 = vadd.f32 0.0, %v1168
      %1170 = vmatmul.bf16.gmra.mxu0 %v855
      %v1171 = vpop.f32.mrf.mxu0
      %v1172 = vadd.f32 0.0, %v1171
      %v1173 = vpop.f32.mrf.mxu0
      %v1174 = vadd.f32 0.0, %v1173
      %1175 = vmatmul.bf16.gmra.mxu0 %v858
      %v1176 = vpop.f32.mrf.mxu0
      %v1177 = vadd.f32 0.0, %v1176
      %v1178 = vpop.f32.mrf.mxu0
      %v1179 = vadd.f32 0.0, %v1178
      %1180 = vmatmul.bf16.gmra.mxu0 %v861
      %v1181 = vpop.f32.mrf.mxu0
      %v1182 = vadd.f32 0.0, %v1181
      %v1183 = vpop.f32.mrf.mxu0
      %v1184 = vadd.f32 0.0, %v1183
      %1185 = vmatmul.bf16.gmra.mxu0 %v864
      %v1186 = vpop.f32.mrf.mxu0
      %v1187 = vadd.f32 0.0, %v1186
      %v1188 = vpop.f32.mrf.mxu0
      %v1189 = vadd.f32 0.0, %v1188
      %1190 = vmatmul.bf16.gmra.mxu0 %v867
      %v1191 = vpop.f32.mrf.mxu0
      %v1192 = vadd.f32 0.0, %v1191
      %v1193 = vpop.f32.mrf.mxu0
      %v1194 = vadd.f32 0.0, %v1193
      %1195 = vmatmul.bf16.gmra.mxu0 %v870
      %v1196 = vpop.f32.mrf.mxu0
      %v1197 = vadd.f32 0.0, %v1196
      %v1198 = vpop.f32.mrf.mxu0
      %v1199 = vadd.f32 0.0, %v1198
      %1200 = vdwg.mxu0
      %v1201 = vsel %vm679, %v882, 0.0
      %v1202 = vsel %vm679, %v884, 0.0
      %v1203 = vadd.f32 %v1201, %v1202
      %v1204 = vsel %vm679, %v887, 0.0
      %v1205 = vadd.f32 %v1203, %v1204
      %v1206 = vsel %vm679, %v889, 0.0
      %v1207 = vadd.f32 %v1205, %v1206
      %v1208 = vsel %vm679, %v892, 0.0
      %v1209 = vadd.f32 %v1207, %v1208
      %v1210 = vsel %vm679, %v894, 0.0
      %v1211 = vadd.f32 %v1209, %v1210
      %v1212 = vsel %vm679, %v897, 0.0
      %v1213 = vadd.f32 %v1211, %v1212
      %v1214 = vsel %vm679, %v899, 0.0
      %v1215 = vadd.f32 %v1213, %v1214
      %v1216 = vsel %vm679, %v902, 0.0
      %v1217 = vadd.f32 %v1215, %v1216
      %v1218 = vsel %vm679, %v904, 0.0
      %v1219 = vadd.f32 %v1217, %v1218
      %v1220 = vsel %vm679, %v907, 0.0
      %v1221 = vadd.f32 %v1219, %v1220
      %v1222 = vsel %vm679, %v909, 0.0
      %v1223 = vadd.f32 %v1221, %v1222
      %v1224 = vsel %vm679, %v912, 0.0
      %v1225 = vadd.f32 %v1223, %v1224
      %v1226 = vsel %vm679, %v914, 0.0
      %v1227 = vadd.f32 %v1225, %v1226
      %v1228 = vsel %vm679, %v917, 0.0
      %v1229 = vadd.f32 %v1227, %v1228
      %v1230 = vsel %vm679, %v919, 0.0
      %v1231 = vadd.f32 %v1229, %v1230
      %v1232 = vsel %vm679, %v922, 0.0
      %v1233 = vadd.f32 %v1231, %v1232
      %v1234 = vsel %vm679, %v924, 0.0
      %v1235 = vadd.f32 %v1233, %v1234
      %v1236 = vsel %vm679, %v927, 0.0
      %v1237 = vadd.f32 %v1235, %v1236
      %v1238 = vsel %vm679, %v929, 0.0
      %v1239 = vadd.f32 %v1237, %v1238
      %v1240 = vsel %vm679, %v932, 0.0
      %v1241 = vadd.f32 %v1239, %v1240
      %v1242 = vsel %vm679, %v934, 0.0
      %v1243 = vadd.f32 %v1241, %v1242
      %v1244 = vsel %vm679, %v937, 0.0
      %v1245 = vadd.f32 %v1243, %v1244
      %v1246 = vsel %vm679, %v939, 0.0
      %v1247 = vadd.f32 %v1245, %v1246
      %v1248 = vsel %vm679, %v942, 0.0
      %v1249 = vadd.f32 %v1247, %v1248
      %v1250 = vsel %vm679, %v944, 0.0
      %v1251 = vadd.f32 %v1249, %v1250
      %v1252 = vsel %vm679, %v947, 0.0
      %v1253 = vadd.f32 %v1251, %v1252
      %v1254 = vsel %vm679, %v949, 0.0
      %v1255 = vadd.f32 %v1253, %v1254
      %v1256 = vsel %vm679, %v952, 0.0
      %v1257 = vadd.f32 %v1255, %v1256
      %v1258 = vsel %vm679, %v954, 0.0
      %v1259 = vadd.f32 %v1257, %v1258
      %v1260 = vsel %vm679, %v957, 0.0
      %v1261 = vadd.f32 %v1259, %v1260
      %v1262 = vsel %vm679, %v959, 0.0
      %v1263 = vadd.f32 %v1261, %v1262
      %v1264 = vsel %vm679, %v962, 0.0
      %v1265 = vadd.f32 %v1263, %v1264
      %v1266 = vsel %vm679, %v964, 0.0
      %v1267 = vadd.f32 %v1265, %v1266
      %v1268 = vsel %vm679, %v967, 0.0
      %v1269 = vadd.f32 %v1267, %v1268
      %v1270 = vsel %vm679, %v969, 0.0
      %v1271 = vadd.f32 %v1269, %v1270
      %v1272 = vsel %vm679, %v972, 0.0
      %v1273 = vadd.f32 %v1271, %v1272
      %v1274 = vsel %vm679, %v974, 0.0
      %v1275 = vadd.f32 %v1273, %v1274
      %v1276 = vsel %vm679, %v977, 0.0
      %v1277 = vadd.f32 %v1275, %v1276
      %v1278 = vsel %vm679, %v979, 0.0
      %v1279 = vadd.f32 %v1277, %v1278
      %v1280 = vsel %vm679, %v982, 0.0
      %v1281 = vadd.f32 %v1279, %v1280
      %v1282 = vsel %vm679, %v984, 0.0
      %v1283 = vadd.f32 %v1281, %v1282
      %v1284 = vsel %vm679, %v987, 0.0
      %v1285 = vadd.f32 %v1283, %v1284
      %v1286 = vsel %vm679, %v989, 0.0
      %v1287 = vadd.f32 %v1285, %v1286
      %v1288 = vsel %vm679, %v992, 0.0
      %v1289 = vadd.f32 %v1287, %v1288
      %v1290 = vsel %vm679, %v994, 0.0
      %v1291 = vadd.f32 %v1289, %v1290
      %v1292 = vsel %vm679, %v997, 0.0
      %v1293 = vadd.f32 %v1291, %v1292
      %v1294 = vsel %vm679, %v999, 0.0
      %v1295 = vadd.f32 %v1293, %v1294
      %v1296 = vsel %vm679, %v1002, 0.0
      %v1297 = vadd.f32 %v1295, %v1296
      %v1298 = vsel %vm679, %v1004, 0.0
      %v1299 = vadd.f32 %v1297, %v1298
      %v1300 = vsel %vm679, %v1007, 0.0
      %v1301 = vadd.f32 %v1299, %v1300
      %v1302 = vsel %vm679, %v1009, 0.0
      %v1303 = vadd.f32 %v1301, %v1302
      %v1304 = vsel %vm679, %v1012, 0.0
      %v1305 = vadd.f32 %v1303, %v1304
      %v1306 = vsel %vm679, %v1014, 0.0
      %v1307 = vadd.f32 %v1305, %v1306
      %v1308 = vsel %vm679, %v1017, 0.0
      %v1309 = vadd.f32 %v1307, %v1308
      %v1310 = vsel %vm679, %v1019, 0.0
      %v1311 = vadd.f32 %v1309, %v1310
      %v1312 = vsel %vm679, %v1022, 0.0
      %v1313 = vadd.f32 %v1311, %v1312
      %v1314 = vsel %vm679, %v1024, 0.0
      %v1315 = vadd.f32 %v1313, %v1314
      %v1316 = vsel %vm679, %v1027, 0.0
      %v1317 = vadd.f32 %v1315, %v1316
      %v1318 = vsel %vm679, %v1029, 0.0
      %v1319 = vadd.f32 %v1317, %v1318
      %v1320 = vsel %vm679, %v1032, 0.0
      %v1321 = vadd.f32 %v1319, %v1320
      %v1322 = vsel %vm679, %v1034, 0.0
      %v1323 = vadd.f32 %v1321, %v1322
      %v1324 = vsel %vm679, %v1037, 0.0
      %v1325 = vadd.f32 %v1323, %v1324
      %v1326 = vsel %vm679, %v1039, 0.0
      %v1327 = vadd.f32 %v1325, %v1326
      %v1328 = vsel %vm679, %v1042, 0.0
      %v1329 = vadd.f32 %v1327, %v1328
      %v1330 = vsel %vm679, %v1044, 0.0
      %v1331 = vadd.f32 %v1329, %v1330
      %v1332 = vsel %vm679, %v1047, 0.0
      %v1333 = vadd.f32 %v1331, %v1332
      %v1334 = vsel %vm679, %v1049, 0.0
      %v1335 = vadd.f32 %v1333, %v1334
      %v1336 = vsel %vm679, %v1052, 0.0
      %v1337 = vadd.f32 %v1335, %v1336
      %v1338 = vsel %vm679, %v1054, 0.0
      %v1339 = vadd.f32 %v1337, %v1338
      %v1340 = vsel %vm679, %v1057, 0.0
      %v1341 = vadd.f32 %v1339, %v1340
      %v1342 = vsel %vm679, %v1059, 0.0
      %v1343 = vadd.f32 %v1341, %v1342
      %v1344 = vsel %vm679, %v1062, 0.0
      %v1345 = vadd.f32 %v1343, %v1344
      %v1346 = vsel %vm679, %v1064, 0.0
      %v1347 = vadd.f32 %v1345, %v1346
      %v1348 = vsel %vm679, %v1067, 0.0
      %v1349 = vadd.f32 %v1347, %v1348
      %v1350 = vsel %vm679, %v1069, 0.0
      %v1351 = vadd.f32 %v1349, %v1350
      %v1352 = vsel %vm679, %v1072, 0.0
      %v1353 = vadd.f32 %v1351, %v1352
      %v1354 = vsel %vm679, %v1074, 0.0
      %v1355 = vadd.f32 %v1353, %v1354
      %v1356 = vsel %vm679, %v1077, 0.0
      %v1357 = vadd.f32 %v1355, %v1356
      %v1358 = vsel %vm679, %v1079, 0.0
      %v1359 = vadd.f32 %v1357, %v1358
      %v1360 = vsel %vm679, %v1082, 0.0
      %v1361 = vadd.f32 %v1359, %v1360
      %v1362 = vsel %vm679, %v1084, 0.0
      %v1363 = vadd.f32 %v1361, %v1362
      %v1364 = vsel %vm679, %v1087, 0.0
      %v1365 = vadd.f32 %v1363, %v1364
      %v1366 = vsel %vm679, %v1089, 0.0
      %v1367 = vadd.f32 %v1365, %v1366
      %v1368 = vsel %vm679, %v1092, 0.0
      %v1369 = vadd.f32 %v1367, %v1368
      %v1370 = vsel %vm679, %v1094, 0.0
      %v1371 = vadd.f32 %v1369, %v1370
      %v1372 = vsel %vm679, %v1097, 0.0
      %v1373 = vadd.f32 %v1371, %v1372
      %v1374 = vsel %vm679, %v1099, 0.0
      %v1375 = vadd.f32 %v1373, %v1374
      %v1376 = vsel %vm679, %v1102, 0.0
      %v1377 = vadd.f32 %v1375, %v1376
      %v1378 = vsel %vm679, %v1104, 0.0
      %v1379 = vadd.f32 %v1377, %v1378
      %v1380 = vsel %vm679, %v1107, 0.0
      %v1381 = vadd.f32 %v1379, %v1380
      %v1382 = vsel %vm679, %v1109, 0.0
      %v1383 = vadd.f32 %v1381, %v1382
      %v1384 = vsel %vm679, %v1112, 0.0
      %v1385 = vadd.f32 %v1383, %v1384
      %v1386 = vsel %vm679, %v1114, 0.0
      %v1387 = vadd.f32 %v1385, %v1386
      %v1388 = vsel %vm679, %v1117, 0.0
      %v1389 = vadd.f32 %v1387, %v1388
      %v1390 = vsel %vm679, %v1119, 0.0
      %v1391 = vadd.f32 %v1389, %v1390
      %v1392 = vsel %vm679, %v1122, 0.0
      %v1393 = vadd.f32 %v1391, %v1392
      %v1394 = vsel %vm679, %v1124, 0.0
      %v1395 = vadd.f32 %v1393, %v1394
      %v1396 = vsel %vm679, %v1127, 0.0
      %v1397 = vadd.f32 %v1395, %v1396
      %v1398 = vsel %vm679, %v1129, 0.0
      %v1399 = vadd.f32 %v1397, %v1398
      %v1400 = vsel %vm679, %v1132, 0.0
      %v1401 = vadd.f32 %v1399, %v1400
      %v1402 = vsel %vm679, %v1134, 0.0
      %v1403 = vadd.f32 %v1401, %v1402
      %v1404 = vsel %vm679, %v1137, 0.0
      %v1405 = vadd.f32 %v1403, %v1404
      %v1406 = vsel %vm679, %v1139, 0.0
      %v1407 = vadd.f32 %v1405, %v1406
      %v1408 = vsel %vm679, %v1142, 0.0
      %v1409 = vadd.f32 %v1407, %v1408
      %v1410 = vsel %vm679, %v1144, 0.0
      %v1411 = vadd.f32 %v1409, %v1410
      %v1412 = vsel %vm679, %v1147, 0.0
      %v1413 = vadd.f32 %v1411, %v1412
      %v1414 = vsel %vm679, %v1149, 0.0
      %v1415 = vadd.f32 %v1413, %v1414
      %v1416 = vsel %vm679, %v1152, 0.0
      %v1417 = vadd.f32 %v1415, %v1416
      %v1418 = vsel %vm679, %v1154, 0.0
      %v1419 = vadd.f32 %v1417, %v1418
      %v1420 = vsel %vm679, %v1157, 0.0
      %v1421 = vadd.f32 %v1419, %v1420
      %v1422 = vsel %vm679, %v1159, 0.0
      %v1423 = vadd.f32 %v1421, %v1422
      %v1424 = vsel %vm679, %v1162, 0.0
      %v1425 = vadd.f32 %v1423, %v1424
      %v1426 = vsel %vm679, %v1164, 0.0
      %v1427 = vadd.f32 %v1425, %v1426
      %v1428 = vsel %vm679, %v1167, 0.0
      %v1429 = vadd.f32 %v1427, %v1428
      %v1430 = vsel %vm679, %v1169, 0.0
      %v1431 = vadd.f32 %v1429, %v1430
      %v1432 = vsel %vm679, %v1172, 0.0
      %v1433 = vadd.f32 %v1431, %v1432
      %v1434 = vsel %vm679, %v1174, 0.0
      %v1435 = vadd.f32 %v1433, %v1434
      %v1436 = vsel %vm679, %v1177, 0.0
      %v1437 = vadd.f32 %v1435, %v1436
      %v1438 = vsel %vm679, %v1179, 0.0
      %v1439 = vadd.f32 %v1437, %v1438
      %v1440 = vsel %vm679, %v1182, 0.0
      %v1441 = vadd.f32 %v1439, %v1440
      %v1442 = vsel %vm679, %v1184, 0.0
      %v1443 = vadd.f32 %v1441, %v1442
      %v1444 = vsel %vm679, %v1187, 0.0
      %v1445 = vadd.f32 %v1443, %v1444
      %v1446 = vsel %vm679, %v1189, 0.0
      %v1447 = vadd.f32 %v1445, %v1446
      %v1448 = vsel %vm679, %v1192, 0.0
      %v1449 = vadd.f32 %v1447, %v1448
      %v1450 = vsel %vm679, %v1194, 0.0
      %v1451 = vadd.f32 %v1449, %v1450
      %v1452 = vsel %vm679, %v1197, 0.0
      %v1453 = vadd.f32 %v1451, %v1452
      %v1454 = vsel %vm679, %v1199, 0.0
      %v1455 = vadd.f32 %v1453, %v1454
      %v1456 = vrot.slane %v1455, 4
      %v1457 = vadd.f32 %v1455, %v1456
      %v1458 = vrot.slane %v1457, 2
      %v1459 = vadd.f32 %v1457, %v1458
      %v1460 = vrot.slane %v1459, 1
      %v1461 = vadd.f32 %v1459, %v1460
      %v1462 = vrcp.pop 1024.0
      %v1463 = vmul.f32 1024.0, %v1462
      %v1464 = vsub.f32 1.0, %v1463
      %v1465 = vmul.f32 %v1462, %v1464
      %v1466 = vadd.f32 %v1462, %v1465
      %vm1467 = vweird.f32 %v1462
      %v1468 = vsel %vm1467, %v1462, %v1466
      %v1469 = vmul.f32 %v1461, %v1468
      %v1470 = vsub.f32 %v882, %v1469
      %v1471 = vsub.f32 %v884, %v1469
      %v1472 = vsub.f32 %v887, %v1469
      %v1473 = vsub.f32 %v889, %v1469
      %v1474 = vsub.f32 %v892, %v1469
      %v1475 = vsub.f32 %v894, %v1469
      %v1476 = vsub.f32 %v897, %v1469
      %v1477 = vsub.f32 %v899, %v1469
      %v1478 = vsub.f32 %v902, %v1469
      %v1479 = vsub.f32 %v904, %v1469
      %v1480 = vsub.f32 %v907, %v1469
      %v1481 = vsub.f32 %v909, %v1469
      %v1482 = vsub.f32 %v912, %v1469
      %v1483 = vsub.f32 %v914, %v1469
      %v1484 = vsub.f32 %v917, %v1469
      %v1485 = vsub.f32 %v919, %v1469
      %v1486 = vsub.f32 %v922, %v1469
      %v1487 = vsub.f32 %v924, %v1469
      %v1488 = vsub.f32 %v927, %v1469
      %v1489 = vsub.f32 %v929, %v1469
      %v1490 = vsub.f32 %v932, %v1469
      %v1491 = vsub.f32 %v934, %v1469
      %v1492 = vsub.f32 %v937, %v1469
      %v1493 = vsub.f32 %v939, %v1469
      %v1494 = vsub.f32 %v942, %v1469
      %v1495 = vsub.f32 %v944, %v1469
      %v1496 = vsub.f32 %v947, %v1469
      %v1497 = vsub.f32 %v949, %v1469
      %v1498 = vsub.f32 %v952, %v1469
      %v1499 = vsub.f32 %v954, %v1469
      %v1500 = vsub.f32 %v957, %v1469
      %v1501 = vsub.f32 %v959, %v1469
      %v1502 = vsub.f32 %v962, %v1469
      %v1503 = vsub.f32 %v964, %v1469
      %v1504 = vsub.f32 %v967, %v1469
      %v1505 = vsub.f32 %v969, %v1469
      %v1506 = vsub.f32 %v972, %v1469
      %v1507 = vsub.f32 %v974, %v1469
      %v1508 = vsub.f32 %v977, %v1469
      %v1509 = vsub.f32 %v979, %v1469
      %v1510 = vsub.f32 %v982, %v1469
      %v1511 = vsub.f32 %v984, %v1469
      %v1512 = vsub.f32 %v987, %v1469
      %v1513 = vsub.f32 %v989, %v1469
      %v1514 = vsub.f32 %v992, %v1469
      %v1515 = vsub.f32 %v994, %v1469
      %v1516 = vsub.f32 %v997, %v1469
      %v1517 = vsub.f32 %v999, %v1469
      %v1518 = vsub.f32 %v1002, %v1469
      %v1519 = vsub.f32 %v1004, %v1469
      %v1520 = vsub.f32 %v1007, %v1469
      %v1521 = vsub.f32 %v1009, %v1469
      %v1522 = vsub.f32 %v1012, %v1469
      %v1523 = vsub.f32 %v1014, %v1469
      %v1524 = vsub.f32 %v1017, %v1469
      %v1525 = vsub.f32 %v1019, %v1469
      %v1526 = vsub.f32 %v1022, %v1469
      %v1527 = vsub.f32 %v1024, %v1469
      %v1528 = vsub.f32 %v1027, %v1469
      %v1529 = vsub.f32 %v1029, %v1469
      %v1530 = vsub.f32 %v1032, %v1469
      %v1531 = vsub.f32 %v1034, %v1469
      %v1532 = vsub.f32 %v1037, %v1469
      %v1533 = vsub.f32 %v1039, %v1469
      %v1534 = vsub.f32 %v1042, %v1469
      %v1535 = vsub.f32 %v1044, %v1469
      %v1536 = vsub.f32 %v1047, %v1469
      %v1537 = vsub.f32 %v1049, %v1469
      %v1538 = vsub.f32 %v1052, %v1469
      %v1539 = vsub.f32 %v1054, %v1469
      %v1540 = vsub.f32 %v1057, %v1469
      %v1541 = vsub.f32 %v1059, %v1469
      %v1542 = vsub.f32 %v1062, %v1469
      %v1543 = vsub.f32 %v1064, %v1469
      %v1544 = vsub.f32 %v1067, %v1469
      %v1545 = vsub.f32 %v1069, %v1469
      %v1546 = vsub.f32 %v1072, %v1469
      %v1547 = vsub.f32 %v1074, %v1469
      %v1548 = vsub.f32 %v1077, %v1469
      %v1549 = vsub.f32 %v1079, %v1469
      %v1550 = vsub.f32 %v1082, %v1469
      %v1551 = vsub.f32 %v1084, %v1469
      %v1552 = vsub.f32 %v1087, %v1469
      %v1553 = vsub.f32 %v1089, %v1469
      %v1554 = vsub.f32 %v1092, %v1469
      %v1555 = vsub.f32 %v1094, %v1469
      %v1556 = vsub.f32 %v1097, %v1469
      %v1557 = vsub.f32 %v1099, %v1469
      %v1558 = vsub.f32 %v1102, %v1469
      %v1559 = vsub.f32 %v1104, %v1469
      %v1560 = vsub.f32 %v1107, %v1469
      %v1561 = vsub.f32 %v1109, %v1469
      %v1562 = vsub.f32 %v1112, %v1469
      %v1563 = vsub.f32 %v1114, %v1469
      %v1564 = vsub.f32 %v1117, %v1469
      %v1565 = vsub.f32 %v1119, %v1469
      %v1566 = vsub.f32 %v1122, %v1469
      %v1567 = vsub.f32 %v1124, %v1469
      %v1568 = vsub.f32 %v1127, %v1469
      %v1569 = vsub.f32 %v1129, %v1469
      %v1570 = vsub.f32 %v1132, %v1469
      %v1571 = vsub.f32 %v1134, %v1469
      %v1572 = vsub.f32 %v1137, %v1469
      %v1573 = vsub.f32 %v1139, %v1469
      %v1574 = vsub.f32 %v1142, %v1469
      %v1575 = vsub.f32 %v1144, %v1469
      %v1576 = vsub.f32 %v1147, %v1469
      %v1577 = vsub.f32 %v1149, %v1469
      %v1578 = vsub.f32 %v1152, %v1469
      %v1579 = vsub.f32 %v1154, %v1469
      %v1580 = vsub.f32 %v1157, %v1469
      %v1581 = vsub.f32 %v1159, %v1469
      %v1582 = vsub.f32 %v1162, %v1469
      %v1583 = vsub.f32 %v1164, %v1469
      %v1584 = vsub.f32 %v1167, %v1469
      %v1585 = vsub.f32 %v1169, %v1469
      %v1586 = vsub.f32 %v1172, %v1469
      %v1587 = vsub.f32 %v1174, %v1469
      %v1588 = vsub.f32 %v1177, %v1469
      %v1589 = vsub.f32 %v1179, %v1469
      %v1590 = vsub.f32 %v1182, %v1469
      %v1591 = vsub.f32 %v1184, %v1469
      %v1592 = vsub.f32 %v1187, %v1469
      %v1593 = vsub.f32 %v1189, %v1469
      %v1594 = vsub.f32 %v1192, %v1469
      %v1595 = vsub.f32 %v1194, %v1469
      %v1596 = vsub.f32 %v1197, %v1469
      %v1597 = vsub.f32 %v1199, %v1469
      %v1598 = vmul.f32 %v1470, %v1470
      %v1599 = vmul.f32 %v1471, %v1471
      %v1600 = vmul.f32 %v1472, %v1472
      %v1601 = vmul.f32 %v1473, %v1473
      %v1602 = vmul.f32 %v1474, %v1474
      %v1603 = vmul.f32 %v1475, %v1475
      %v1604 = vmul.f32 %v1476, %v1476
      %v1605 = vmul.f32 %v1477, %v1477
      %v1606 = vmul.f32 %v1478, %v1478
      %v1607 = vmul.f32 %v1479, %v1479
      %v1608 = vmul.f32 %v1480, %v1480
      %v1609 = vmul.f32 %v1481, %v1481
      %v1610 = vmul.f32 %v1482, %v1482
      %v1611 = vmul.f32 %v1483, %v1483
      %v1612 = vmul.f32 %v1484, %v1484
      %v1613 = vmul.f32 %v1485, %v1485
      %v1614 = vmul.f32 %v1486, %v1486
      %v1615 = vmul.f32 %v1487, %v1487
      %v1616 = vmul.f32 %v1488, %v1488
      %v1617 = vmul.f32 %v1489, %v1489
      %v1618 = vmul.f32 %v1490, %v1490
      %v1619 = vmul.f32 %v1491, %v1491
      %v1620 = vmul.f32 %v1492, %v1492
      %v1621 = vmul.f32 %v1493, %v1493
      %v1622 = vmul.f32 %v1494, %v1494
      %v1623 = vmul.f32 %v1495, %v1495
      %v1624 = vmul.f32 %v1496, %v1496
      %v1625 = vmul.f32 %v1497, %v1497
      %v1626 = vmul.f32 %v1498, %v1498
      %v1627 = vmul.f32 %v1499, %v1499
      %v1628 = vmul.f32 %v1500, %v1500
      %v1629 = vmul.f32 %v1501, %v1501
      %v1630 = vmul.f32 %v1502, %v1502
      %v1631 = vmul.f32 %v1503, %v1503
      %v1632 = vmul.f32 %v1504, %v1504
      %v1633 = vmul.f32 %v1505, %v1505
      %v1634 = vmul.f32 %v1506, %v1506
      %v1635 = vmul.f32 %v1507, %v1507
      %v1636 = vmul.f32 %v1508, %v1508
      %v1637 = vmul.f32 %v1509, %v1509
      %v1638 = vmul.f32 %v1510, %v1510
      %v1639 = vmul.f32 %v1511, %v1511
      %v1640 = vmul.f32 %v1512, %v1512
      %v1641 = vmul.f32 %v1513, %v1513
      %v1642 = vmul.f32 %v1514, %v1514
      %v1643 = vmul.f32 %v1515, %v1515
      %v1644 = vmul.f32 %v1516, %v1516
      %v1645 = vmul.f32 %v1517, %v1517
      %v1646 = vmul.f32 %v1518, %v1518
      %v1647 = vmul.f32 %v1519, %v1519
      %v1648 = vmul.f32 %v1520, %v1520
      %v1649 = vmul.f32 %v1521, %v1521
      %v1650 = vmul.f32 %v1522, %v1522
      %v1651 = vmul.f32 %v1523, %v1523
      %v1652 = vmul.f32 %v1524, %v1524
      %v1653 = vmul.f32 %v1525, %v1525
      %v1654 = vmul.f32 %v1526, %v1526
      %v1655 = vmul.f32 %v1527, %v1527
      %v1656 = vmul.f32 %v1528, %v1528
      %v1657 = vmul.f32 %v1529, %v1529
      %v1658 = vmul.f32 %v1530, %v1530
      %v1659 = vmul.f32 %v1531, %v1531
      %v1660 = vmul.f32 %v1532, %v1532
      %v1661 = vmul.f32 %v1533, %v1533
      %v1662 = vmul.f32 %v1534, %v1534
      %v1663 = vmul.f32 %v1535, %v1535
      %v1664 = vmul.f32 %v1536, %v1536
      %v1665 = vmul.f32 %v1537, %v1537
      %v1666 = vmul.f32 %v1538, %v1538
      %v1667 = vmul.f32 %v1539, %v1539
      %v1668 = vmul.f32 %v1540, %v1540
      %v1669 = vmul.f32 %v1541, %v1541
      %v1670 = vmul.f32 %v1542, %v1542
      %v1671 = vmul.f32 %v1543, %v1543
      %v1672 = vmul.f32 %v1544, %v1544
      %v1673 = vmul.f32 %v1545, %v1545
      %v1674 = vmul.f32 %v1546, %v1546
      %v1675 = vmul.f32 %v1547, %v1547
      %v1676 = vmul.f32 %v1548, %v1548
      %v1677 = vmul.f32 %v1549, %v1549
      %v1678 = vmul.f32 %v1550, %v1550
      %v1679 = vmul.f32 %v1551, %v1551
      %v1680 = vmul.f32 %v1552, %v1552
      %v1681 = vmul.f32 %v1553, %v1553
      %v1682 = vmul.f32 %v1554, %v1554
      %v1683 = vmul.f32 %v1555, %v1555
      %v1684 = vmul.f32 %v1556, %v1556
      %v1685 = vmul.f32 %v1557, %v1557
      %v1686 = vmul.f32 %v1558, %v1558
      %v1687 = vmul.f32 %v1559, %v1559
      %v1688 = vmul.f32 %v1560, %v1560
      %v1689 = vmul.f32 %v1561, %v1561
      %v1690 = vmul.f32 %v1562, %v1562
      %v1691 = vmul.f32 %v1563, %v1563
      %v1692 = vmul.f32 %v1564, %v1564
      %v1693 = vmul.f32 %v1565, %v1565
      %v1694 = vmul.f32 %v1566, %v1566
      %v1695 = vmul.f32 %v1567, %v1567
      %v1696 = vmul.f32 %v1568, %v1568
      %v1697 = vmul.f32 %v1569, %v1569
      %v1698 = vmul.f32 %v1570, %v1570
      %v1699 = vmul.f32 %v1571, %v1571
      %v1700 = vmul.f32 %v1572, %v1572
      %v1701 = vmul.f32 %v1573, %v1573
      %v1702 = vmul.f32 %v1574, %v1574
      %v1703 = vmul.f32 %v1575, %v1575
      %v1704 = vmul.f32 %v1576, %v1576
      %v1705 = vmul.f32 %v1577, %v1577
      %v1706 = vmul.f32 %v1578, %v1578
      %v1707 = vmul.f32 %v1579, %v1579
      %v1708 = vmul.f32 %v1580, %v1580
      %v1709 = vmul.f32 %v1581, %v1581
      %v1710 = vmul.f32 %v1582, %v1582
      %v1711 = vmul.f32 %v1583, %v1583
      %v1712 = vmul.f32 %v1584, %v1584
      %v1713 = vmul.f32 %v1585, %v1585
      %v1714 = vmul.f32 %v1586, %v1586
      %v1715 = vmul.f32 %v1587, %v1587
      %v1716 = vmul.f32 %v1588, %v1588
      %v1717 = vmul.f32 %v1589, %v1589
      %v1718 = vmul.f32 %v1590, %v1590
      %v1719 = vmul.f32 %v1591, %v1591
      %v1720 = vmul.f32 %v1592, %v1592
      %v1721 = vmul.f32 %v1593, %v1593
      %v1722 = vmul.f32 %v1594, %v1594
      %v1723 = vmul.f32 %v1595, %v1595
      %v1724 = vmul.f32 %v1596, %v1596
      %v1725 = vmul.f32 %v1597, %v1597
      %v1726 = vsel %vm679, %v1598, 0.0
      %v1727 = vsel %vm679, %v1599, 0.0
      %v1728 = vadd.f32 %v1726, %v1727
      %v1729 = vsel %vm679, %v1600, 0.0
      %v1730 = vadd.f32 %v1728, %v1729
      %v1731 = vsel %vm679, %v1601, 0.0
      %v1732 = vadd.f32 %v1730, %v1731
      %v1733 = vsel %vm679, %v1602, 0.0
      %v1734 = vadd.f32 %v1732, %v1733
      %v1735 = vsel %vm679, %v1603, 0.0
      %v1736 = vadd.f32 %v1734, %v1735
      %v1737 = vsel %vm679, %v1604, 0.0
      %v1738 = vadd.f32 %v1736, %v1737
      %v1739 = vsel %vm679, %v1605, 0.0
      %v1740 = vadd.f32 %v1738, %v1739
      %v1741 = vsel %vm679, %v1606, 0.0
      %v1742 = vadd.f32 %v1740, %v1741
      %v1743 = vsel %vm679, %v1607, 0.0
      %v1744 = vadd.f32 %v1742, %v1743
      %v1745 = vsel %vm679, %v1608, 0.0
      %v1746 = vadd.f32 %v1744, %v1745
      %v1747 = vsel %vm679, %v1609, 0.0
      %v1748 = vadd.f32 %v1746, %v1747
      %v1749 = vsel %vm679, %v1610, 0.0
      %v1750 = vadd.f32 %v1748, %v1749
      %v1751 = vsel %vm679, %v1611, 0.0
      %v1752 = vadd.f32 %v1750, %v1751
      %v1753 = vsel %vm679, %v1612, 0.0
      %v1754 = vadd.f32 %v1752, %v1753
      %v1755 = vsel %vm679, %v1613, 0.0
      %v1756 = vadd.f32 %v1754, %v1755
      %v1757 = vsel %vm679, %v1614, 0.0
      %v1758 = vadd.f32 %v1756, %v1757
      %v1759 = vsel %vm679, %v1615, 0.0
      %v1760 = vadd.f32 %v1758, %v1759
      %v1761 = vsel %vm679, %v1616, 0.0
      %v1762 = vadd.f32 %v1760, %v1761
      %v1763 = vsel %vm679, %v1617, 0.0
      %v1764 = vadd.f32 %v1762, %v1763
      %v1765 = vsel %vm679, %v1618, 0.0
      %v1766 = vadd.f32 %v1764, %v1765
      %v1767 = vsel %vm679, %v1619, 0.0
      %v1768 = vadd.f32 %v1766, %v1767
      %v1769 = vsel %vm679, %v1620, 0.0
      %v1770 = vadd.f32 %v1768, %v1769
      %v1771 = vsel %vm679, %v1621, 0.0
      %v1772 = vadd.f32 %v1770, %v1771
      %v1773 = vsel %vm679, %v1622, 0.0
      %v1774 = vadd.f32 %v1772, %v1773
      %v1775 = vsel %vm679, %v1623, 0.0
      %v1776 = vadd.f32 %v1774, %v1775
      %v1777 = vsel %vm679, %v1624, 0.0
      %v1778 = vadd.f32 %v1776, %v1777
      %v1779 = vsel %vm679, %v1625, 0.0
      %v1780 = vadd.f32 %v1778, %v1779
      %v1781 = vsel %vm679, %v1626, 0.0
      %v1782 = vadd.f32 %v1780, %v1781
      %v1783 = vsel %vm679, %v1627, 0.0
      %v1784 = vadd.f32 %v1782, %v1783
      %v1785 = vsel %vm679, %v1628, 0.0
      %v1786 = vadd.f32 %v1784, %v1785
      %v1787 = vsel %vm679, %v1629, 0.0
      %v1788 = vadd.f32 %v1786, %v1787
      %v1789 = vsel %vm679, %v1630, 0.0
      %v1790 = vadd.f32 %v1788, %v1789
      %v1791 = vsel %vm679, %v1631, 0.0
      %v1792 = vadd.f32 %v1790, %v1791
      %v1793 = vsel %vm679, %v1632, 0.0
      %v1794 = vadd.f32 %v1792, %v1793
      %v1795 = vsel %vm679, %v1633, 0.0
      %v1796 = vadd.f32 %v1794, %v1795
      %v1797 = vsel %vm679, %v1634, 0.0
      %v1798 = vadd.f32 %v1796, %v1797
      %v1799 = vsel %vm679, %v1635, 0.0
      %v1800 = vadd.f32 %v1798, %v1799
      %v1801 = vsel %vm679, %v1636, 0.0
      %v1802 = vadd.f32 %v1800, %v1801
      %v1803 = vsel %vm679, %v1637, 0.0
      %v1804 = vadd.f32 %v1802, %v1803
      %v1805 = vsel %vm679, %v1638, 0.0
      %v1806 = vadd.f32 %v1804, %v1805
      %v1807 = vsel %vm679, %v1639, 0.0
      %v1808 = vadd.f32 %v1806, %v1807
      %v1809 = vsel %vm679, %v1640, 0.0
      %v1810 = vadd.f32 %v1808, %v1809
      %v1811 = vsel %vm679, %v1641, 0.0
      %v1812 = vadd.f32 %v1810, %v1811
      %v1813 = vsel %vm679, %v1642, 0.0
      %v1814 = vadd.f32 %v1812, %v1813
      %v1815 = vsel %vm679, %v1643, 0.0
      %v1816 = vadd.f32 %v1814, %v1815
      %v1817 = vsel %vm679, %v1644, 0.0
      %v1818 = vadd.f32 %v1816, %v1817
      %v1819 = vsel %vm679, %v1645, 0.0
      %v1820 = vadd.f32 %v1818, %v1819
      %v1821 = vsel %vm679, %v1646, 0.0
      %v1822 = vadd.f32 %v1820, %v1821
      %v1823 = vsel %vm679, %v1647, 0.0
      %v1824 = vadd.f32 %v1822, %v1823
      %v1825 = vsel %vm679, %v1648, 0.0
      %v1826 = vadd.f32 %v1824, %v1825
      %v1827 = vsel %vm679, %v1649, 0.0
      %v1828 = vadd.f32 %v1826, %v1827
      %v1829 = vsel %vm679, %v1650, 0.0
      %v1830 = vadd.f32 %v1828, %v1829
      %v1831 = vsel %vm679, %v1651, 0.0
      %v1832 = vadd.f32 %v1830, %v1831
      %v1833 = vsel %vm679, %v1652, 0.0
      %v1834 = vadd.f32 %v1832, %v1833
      %v1835 = vsel %vm679, %v1653, 0.0
      %v1836 = vadd.f32 %v1834, %v1835
      %v1837 = vsel %vm679, %v1654, 0.0
      %v1838 = vadd.f32 %v1836, %v1837
      %v1839 = vsel %vm679, %v1655, 0.0
      %v1840 = vadd.f32 %v1838, %v1839
      %v1841 = vsel %vm679, %v1656, 0.0
      %v1842 = vadd.f32 %v1840, %v1841
      %v1843 = vsel %vm679, %v1657, 0.0
      %v1844 = vadd.f32 %v1842, %v1843
      %v1845 = vsel %vm679, %v1658, 0.0
      %v1846 = vadd.f32 %v1844, %v1845
      %v1847 = vsel %vm679, %v1659, 0.0
      %v1848 = vadd.f32 %v1846, %v1847
      %v1849 = vsel %vm679, %v1660, 0.0
      %v1850 = vadd.f32 %v1848, %v1849
      %v1851 = vsel %vm679, %v1661, 0.0
      %v1852 = vadd.f32 %v1850, %v1851
      %v1853 = vsel %vm679, %v1662, 0.0
      %v1854 = vadd.f32 %v1852, %v1853
      %v1855 = vsel %vm679, %v1663, 0.0
      %v1856 = vadd.f32 %v1854, %v1855
      %v1857 = vsel %vm679, %v1664, 0.0
      %v1858 = vadd.f32 %v1856, %v1857
      %v1859 = vsel %vm679, %v1665, 0.0
      %v1860 = vadd.f32 %v1858, %v1859
      %v1861 = vsel %vm679, %v1666, 0.0
      %v1862 = vadd.f32 %v1860, %v1861
      %v1863 = vsel %vm679, %v1667, 0.0
      %v1864 = vadd.f32 %v1862, %v1863
      %v1865 = vsel %vm679, %v1668, 0.0
      %v1866 = vadd.f32 %v1864, %v1865
      %v1867 = vsel %vm679, %v1669, 0.0
      %v1868 = vadd.f32 %v1866, %v1867
      %v1869 = vsel %vm679, %v1670, 0.0
      %v1870 = vadd.f32 %v1868, %v1869
      %v1871 = vsel %vm679, %v1671, 0.0
      %v1872 = vadd.f32 %v1870, %v1871
      %v1873 = vsel %vm679, %v1672, 0.0
      %v1874 = vadd.f32 %v1872, %v1873
      %v1875 = vsel %vm679, %v1673, 0.0
      %v1876 = vadd.f32 %v1874, %v1875
      %v1877 = vsel %vm679, %v1674, 0.0
      %v1878 = vadd.f32 %v1876, %v1877
      %v1879 = vsel %vm679, %v1675, 0.0
      %v1880 = vadd.f32 %v1878, %v1879
      %v1881 = vsel %vm679, %v1676, 0.0
      %v1882 = vadd.f32 %v1880, %v1881
      %v1883 = vsel %vm679, %v1677, 0.0
      %v1884 = vadd.f32 %v1882, %v1883
      %v1885 = vsel %vm679, %v1678, 0.0
      %v1886 = vadd.f32 %v1884, %v1885
      %v1887 = vsel %vm679, %v1679, 0.0
      %v1888 = vadd.f32 %v1886, %v1887
      %v1889 = vsel %vm679, %v1680, 0.0
      %v1890 = vadd.f32 %v1888, %v1889
      %v1891 = vsel %vm679, %v1681, 0.0
      %v1892 = vadd.f32 %v1890, %v1891
      %v1893 = vsel %vm679, %v1682, 0.0
      %v1894 = vadd.f32 %v1892, %v1893
      %v1895 = vsel %vm679, %v1683, 0.0
      %v1896 = vadd.f32 %v1894, %v1895
      %v1897 = vsel %vm679, %v1684, 0.0
      %v1898 = vadd.f32 %v1896, %v1897
      %v1899 = vsel %vm679, %v1685, 0.0
      %v1900 = vadd.f32 %v1898, %v1899
      %v1901 = vsel %vm679, %v1686, 0.0
      %v1902 = vadd.f32 %v1900, %v1901
      %v1903 = vsel %vm679, %v1687, 0.0
      %v1904 = vadd.f32 %v1902, %v1903
      %v1905 = vsel %vm679, %v1688, 0.0
      %v1906 = vadd.f32 %v1904, %v1905
      %v1907 = vsel %vm679, %v1689, 0.0
      %v1908 = vadd.f32 %v1906, %v1907
      %v1909 = vsel %vm679, %v1690, 0.0
      %v1910 = vadd.f32 %v1908, %v1909
      %v1911 = vsel %vm679, %v1691, 0.0
      %v1912 = vadd.f32 %v1910, %v1911
      %v1913 = vsel %vm679, %v1692, 0.0
      %v1914 = vadd.f32 %v1912, %v1913
      %v1915 = vsel %vm679, %v1693, 0.0
      %v1916 = vadd.f32 %v1914, %v1915
      %v1917 = vsel %vm679, %v1694, 0.0
      %v1918 = vadd.f32 %v1916, %v1917
      %v1919 = vsel %vm679, %v1695, 0.0
      %v1920 = vadd.f32 %v1918, %v1919
      %v1921 = vsel %vm679, %v1696, 0.0
      %v1922 = vadd.f32 %v1920, %v1921
      %v1923 = vsel %vm679, %v1697, 0.0
      %v1924 = vadd.f32 %v1922, %v1923
      %v1925 = vsel %vm679, %v1698, 0.0
      %v1926 = vadd.f32 %v1924, %v1925
      %v1927 = vsel %vm679, %v1699, 0.0
      %v1928 = vadd.f32 %v1926, %v1927
      %v1929 = vsel %vm679, %v1700, 0.0
      %v1930 = vadd.f32 %v1928, %v1929
      %v1931 = vsel %vm679, %v1701, 0.0
      %v1932 = vadd.f32 %v1930, %v1931
      %v1933 = vsel %vm679, %v1702, 0.0
      %v1934 = vadd.f32 %v1932, %v1933
      %v1935 = vsel %vm679, %v1703, 0.0
      %v1936 = vadd.f32 %v1934, %v1935
      %v1937 = vsel %vm679, %v1704, 0.0
      %v1938 = vadd.f32 %v1936, %v1937
      %v1939 = vsel %vm679, %v1705, 0.0
      %v1940 = vadd.f32 %v1938, %v1939
      %v1941 = vsel %vm679, %v1706, 0.0
      %v1942 = vadd.f32 %v1940, %v1941
      %v1943 = vsel %vm679, %v1707, 0.0
      %v1944 = vadd.f32 %v1942, %v1943
      %v1945 = vsel %vm679, %v1708, 0.0
      %v1946 = vadd.f32 %v1944, %v1945
      %v1947 = vsel %vm679, %v1709, 0.0
      %v1948 = vadd.f32 %v1946, %v1947
      %v1949 = vsel %vm679, %v1710, 0.0
      %v1950 = vadd.f32 %v1948, %v1949
      %v1951 = vsel %vm679, %v1711, 0.0
      %v1952 = vadd.f32 %v1950, %v1951
      %v1953 = vsel %vm679, %v1712, 0.0
      %v1954 = vadd.f32 %v1952, %v1953
      %v1955 = vsel %vm679, %v1713, 0.0
      %v1956 = vadd.f32 %v1954, %v1955
      %v1957 = vsel %vm679, %v1714, 0.0
      %v1958 = vadd.f32 %v1956, %v1957
      %v1959 = vsel %vm679, %v1715, 0.0
      %v1960 = vadd.f32 %v1958, %v1959
      %v1961 = vsel %vm679, %v1716, 0.0
      %v1962 = vadd.f32 %v1960, %v1961
      %v1963 = vsel %vm679, %v1717, 0.0
      %v1964 = vadd.f32 %v1962, %v1963
      %v1965 = vsel %vm679, %v1718, 0.0
      %v1966 = vadd.f32 %v1964, %v1965
      %v1967 = vsel %vm679, %v1719, 0.0
      %v1968 = vadd.f32 %v1966, %v1967
      %v1969 = vsel %vm679, %v1720, 0.0
      %v1970 = vadd.f32 %v1968, %v1969
      %v1971 = vsel %vm679, %v1721, 0.0
      %v1972 = vadd.f32 %v1970, %v1971
      %v1973 = vsel %vm679, %v1722, 0.0
      %v1974 = vadd.f32 %v1972, %v1973
      %v1975 = vsel %vm679, %v1723, 0.0
      %v1976 = vadd.f32 %v1974, %v1975
      %v1977 = vsel %vm679, %v1724, 0.0
      %v1978 = vadd.f32 %v1976, %v1977
      %v1979 = vsel %vm679, %v1725, 0.0
      %v1980 = vadd.f32 %v1978, %v1979
      %v1981 = vrot.slane %v1980, 4
      %v1982 = vadd.f32 %v1980, %v1981
      %v1983 = vrot.slane %v1982, 2
      %v1984 = vadd.f32 %v1982, %v1983
      %v1985 = vrot.slane %v1984, 1
      %v1986 = vadd.f32 %v1984, %v1985
      %v1987 = vmul.f32 %v1986, %v1468
      %v1988 = vld [vmem:[%s2] sm:$0x1]
      %v1989 = vadd.f32 %v1987, 1e-05
      %v1990 = vrsqrt.pop %v1989
      %v1991 = vmul.f32 %v1990, %v1989
      %v1992 = vmul.f32 %v1991, %v1990
      %v1993 = vmul.f32 0.5, %v1992
      %v1994 = vsub.f32 1.5, %v1993
      %v1995 = vmul.f32 %v1990, %v1994
      %vm1996 = vweird.f32 %v1989
      %vm1997 = vweird.f32 %v1990
      %vm1998 = vmor %vm1996, %vm1997
      %v1999 = vsel %vm1998, %v1990, %v1995
      %v2000 = vmul.f32 %v1988, %v1999
      %v2002 = vperm.slane %v2000, 0
      %v2004 = vmul.f32 %v1470, %v2002
      %v2005 = vmul.f32 %v1471, %v2002
      %v2006 = vmul.f32 %v1472, %v2002
      %v2007 = vmul.f32 %v1473, %v2002
      %v2008 = vmul.f32 %v1474, %v2002
      %v2009 = vmul.f32 %v1475, %v2002
      %v2010 = vmul.f32 %v1476, %v2002
      %v2011 = vmul.f32 %v1477, %v2002
      %v2012 = vmul.f32 %v1478, %v2002
      %v2013 = vmul.f32 %v1479, %v2002
      %v2014 = vmul.f32 %v1480, %v2002
      %v2015 = vmul.f32 %v1481, %v2002
      %v2016 = vmul.f32 %v1482, %v2002
      %v2017 = vmul.f32 %v1483, %v2002
      %v2018 = vmul.f32 %v1484, %v2002
      %v2019 = vmul.f32 %v1485, %v2002
      %v2020 = vmul.f32 %v1486, %v2002
      %v2021 = vmul.f32 %v1487, %v2002
      %v2022 = vmul.f32 %v1488, %v2002
      %v2023 = vmul.f32 %v1489, %v2002
      %v2024 = vmul.f32 %v1490, %v2002
      %v2025 = vmul.f32 %v1491, %v2002
      %v2026 = vmul.f32 %v1492, %v2002
      %v2027 = vmul.f32 %v1493, %v2002
      %v2028 = vmul.f32 %v1494, %v2002
      %v2029 = vmul.f32 %v1495, %v2002
      %v2030 = vmul.f32 %v1496, %v2002
      %v2031 = vmul.f32 %v1497, %v2002
      %v2032 = vmul.f32 %v1498, %v2002
      %v2033 = vmul.f32 %v1499, %v2002
      %v2034 = vmul.f32 %v1500, %v2002
      %v2035 = vmul.f32 %v1501, %v2002
      %v2036 = vmul.f32 %v1502, %v2002
      %v2037 = vmul.f32 %v1503, %v2002
      %v2038 = vmul.f32 %v1504, %v2002
      %v2039 = vmul.f32 %v1505, %v2002
      %v2040 = vmul.f32 %v1506, %v2002
      %v2041 = vmul.f32 %v1507, %v2002
      %v2042 = vmul.f32 %v1508, %v2002
      %v2043 = vmul.f32 %v1509, %v2002
      %v2044 = vmul.f32 %v1510, %v2002
      %v2045 = vmul.f32 %v1511, %v2002
      %v2046 = vmul.f32 %v1512, %v2002
      %v2047 = vmul.f32 %v1513, %v2002
      %v2048 = vmul.f32 %v1514, %v2002
      %v2049 = vmul.f32 %v1515, %v2002
      %v2050 = vmul.f32 %v1516, %v2002
      %v2051 = vmul.f32 %v1517, %v2002
      %v2052 = vmul.f32 %v1518, %v2002
      %v2053 = vmul.f32 %v1519, %v2002
      %v2054 = vmul.f32 %v1520, %v2002
      %v2055 = vmul.f32 %v1521, %v2002
      %v2056 = vmul.f32 %v1522, %v2002
      %v2057 = vmul.f32 %v1523, %v2002
      %v2058 = vmul.f32 %v1524, %v2002
      %v2059 = vmul.f32 %v1525, %v2002
      %v2060 = vmul.f32 %v1526, %v2002
      %v2061 = vmul.f32 %v1527, %v2002
      %v2062 = vmul.f32 %v1528, %v2002
      %v2063 = vmul.f32 %v1529, %v2002
      %v2064 = vmul.f32 %v1530, %v2002
      %v2065 = vmul.f32 %v1531, %v2002
      %v2066 = vmul.f32 %v1532, %v2002
      %v2067 = vmul.f32 %v1533, %v2002
      %v2068 = vmul.f32 %v1534, %v2002
      %v2069 = vmul.f32 %v1535, %v2002
      %v2070 = vmul.f32 %v1536, %v2002
      %v2071 = vmul.f32 %v1537, %v2002
      %v2072 = vmul.f32 %v1538, %v2002
      %v2073 = vmul.f32 %v1539, %v2002
      %v2074 = vmul.f32 %v1540, %v2002
      %v2075 = vmul.f32 %v1541, %v2002
      %v2076 = vmul.f32 %v1542, %v2002
      %v2077 = vmul.f32 %v1543, %v2002
      %v2078 = vmul.f32 %v1544, %v2002
      %v2079 = vmul.f32 %v1545, %v2002
      %v2080 = vmul.f32 %v1546, %v2002
      %v2081 = vmul.f32 %v1547, %v2002
      %v2082 = vmul.f32 %v1548, %v2002
      %v2083 = vmul.f32 %v1549, %v2002
      %v2084 = vmul.f32 %v1550, %v2002
      %v2085 = vmul.f32 %v1551, %v2002
      %v2086 = vmul.f32 %v1552, %v2002
      %v2087 = vmul.f32 %v1553, %v2002
      %v2088 = vmul.f32 %v1554, %v2002
      %v2089 = vmul.f32 %v1555, %v2002
      %v2090 = vmul.f32 %v1556, %v2002
      %v2091 = vmul.f32 %v1557, %v2002
      %v2092 = vmul.f32 %v1558, %v2002
      %v2093 = vmul.f32 %v1559, %v2002
      %v2094 = vmul.f32 %v1560, %v2002
      %v2095 = vmul.f32 %v1561, %v2002
      %v2096 = vmul.f32 %v1562, %v2002
      %v2097 = vmul.f32 %v1563, %v2002
      %v2098 = vmul.f32 %v1564, %v2002
      %v2099 = vmul.f32 %v1565, %v2002
      %v2100 = vmul.f32 %v1566, %v2002
      %v2101 = vmul.f32 %v1567, %v2002
      %v2102 = vmul.f32 %v1568, %v2002
      %v2103 = vmul.f32 %v1569, %v2002
      %v2104 = vmul.f32 %v1570, %v2002
      %v2105 = vmul.f32 %v1571, %v2002
      %v2106 = vmul.f32 %v1572, %v2002
      %v2107 = vmul.f32 %v1573, %v2002
      %v2108 = vmul.f32 %v1574, %v2002
      %v2109 = vmul.f32 %v1575, %v2002
      %v2110 = vmul.f32 %v1576, %v2002
      %v2111 = vmul.f32 %v1577, %v2002
      %v2112 = vmul.f32 %v1578, %v2002
      %v2113 = vmul.f32 %v1579, %v2002
      %v2114 = vmul.f32 %v1580, %v2002
      %v2115 = vmul.f32 %v1581, %v2002
      %v2116 = vmul.f32 %v1582, %v2002
      %v2117 = vmul.f32 %v1583, %v2002
      %v2118 = vmul.f32 %v1584, %v2002
      %v2119 = vmul.f32 %v1585, %v2002
      %v2120 = vmul.f32 %v1586, %v2002
      %v2121 = vmul.f32 %v1587, %v2002
      %v2122 = vmul.f32 %v1588, %v2002
      %v2123 = vmul.f32 %v1589, %v2002
      %v2124 = vmul.f32 %v1590, %v2002
      %v2125 = vmul.f32 %v1591, %v2002
      %v2126 = vmul.f32 %v1592, %v2002
      %v2127 = vmul.f32 %v1593, %v2002
      %v2128 = vmul.f32 %v1594, %v2002
      %v2129 = vmul.f32 %v1595, %v2002
      %v2130 = vmul.f32 %v1596, %v2002
      %v2131 = vmul.f32 %v1597, %v2002
      %v2132 = vld [vmem:[%s3] sm:$0x1]
      %v2134 = vperm.slane %v2132, 0
      %v2136 = vadd.f32 %v2004, %v2134
      %v2137 = vadd.f32 %v2005, %v2134
      %v2138 = vadd.f32 %v2006, %v2134
      %v2139 = vadd.f32 %v2007, %v2134
      %v2140 = vadd.f32 %v2008, %v2134
      %v2141 = vadd.f32 %v2009, %v2134
      %v2142 = vadd.f32 %v2010, %v2134
      %v2143 = vadd.f32 %v2011, %v2134
      %v2144 = vadd.f32 %v2012, %v2134
      %v2145 = vadd.f32 %v2013, %v2134
      %v2146 = vadd.f32 %v2014, %v2134
      %v2147 = vadd.f32 %v2015, %v2134
      %v2148 = vadd.f32 %v2016, %v2134
      %v2149 = vadd.f32 %v2017, %v2134
      %v2150 = vadd.f32 %v2018, %v2134
      %v2151 = vadd.f32 %v2019, %v2134
      %v2152 = vadd.f32 %v2020, %v2134
      %v2153 = vadd.f32 %v2021, %v2134
      %v2154 = vadd.f32 %v2022, %v2134
      %v2155 = vadd.f32 %v2023, %v2134
      %v2156 = vadd.f32 %v2024, %v2134
      %v2157 = vadd.f32 %v2025, %v2134
      %v2158 = vadd.f32 %v2026, %v2134
      %v2159 = vadd.f32 %v2027, %v2134
      %v2160 = vadd.f32 %v2028, %v2134
      %v2161 = vadd.f32 %v2029, %v2134
      %v2162 = vadd.f32 %v2030, %v2134
      %v2163 = vadd.f32 %v2031, %v2134
      %v2164 = vadd.f32 %v2032, %v2134
      %v2165 = vadd.f32 %v2033, %v2134
      %v2166 = vadd.f32 %v2034, %v2134
      %v2167 = vadd.f32 %v2035, %v2134
      %v2168 = vadd.f32 %v2036, %v2134
      %v2169 = vadd.f32 %v2037, %v2134
      %v2170 = vadd.f32 %v2038, %v2134
      %v2171 = vadd.f32 %v2039, %v2134
      %v2172 = vadd.f32 %v2040, %v2134
      %v2173 = vadd.f32 %v2041, %v2134
      %v2174 = vadd.f32 %v2042, %v2134
      %v2175 = vadd.f32 %v2043, %v2134
      %v2176 = vadd.f32 %v2044, %v2134
      %v2177 = vadd.f32 %v2045, %v2134
      %v2178 = vadd.f32 %v2046, %v2134
      %v2179 = vadd.f32 %v2047, %v2134
      %v2180 = vadd.f32 %v2048, %v2134
      %v2181 = vadd.f32 %v2049, %v2134
      %v2182 = vadd.f32 %v2050, %v2134
      %v2183 = vadd.f32 %v2051, %v2134
      %v2184 = vadd.f32 %v2052, %v2134
      %v2185 = vadd.f32 %v2053, %v2134
      %v2186 = vadd.f32 %v2054, %v2134
      %v2187 = vadd.f32 %v2055, %v2134
      %v2188 = vadd.f32 %v2056, %v2134
      %v2189 = vadd.f32 %v2057, %v2134
      %v2190 = vadd.f32 %v2058, %v2134
      %v2191 = vadd.f32 %v2059, %v2134
      %v2192 = vadd.f32 %v2060, %v2134
      %v2193 = vadd.f32 %v2061, %v2134
      %v2194 = vadd.f32 %v2062, %v2134
      %v2195 = vadd.f32 %v2063, %v2134
      %v2196 = vadd.f32 %v2064, %v2134
      %v2197 = vadd.f32 %v2065, %v2134
      %v2198 = vadd.f32 %v2066, %v2134
      %v2199 = vadd.f32 %v2067, %v2134
      %v2200 = vadd.f32 %v2068, %v2134
      %v2201 = vadd.f32 %v2069, %v2134
      %v2202 = vadd.f32 %v2070, %v2134
      %v2203 = vadd.f32 %v2071, %v2134
      %v2204 = vadd.f32 %v2072, %v2134
      %v2205 = vadd.f32 %v2073, %v2134
      %v2206 = vadd.f32 %v2074, %v2134
      %v2207 = vadd.f32 %v2075, %v2134
      %v2208 = vadd.f32 %v2076, %v2134
      %v2209 = vadd.f32 %v2077, %v2134
      %v2210 = vadd.f32 %v2078, %v2134
      %v2211 = vadd.f32 %v2079, %v2134
      %v2212 = vadd.f32 %v2080, %v2134
      %v2213 = vadd.f32 %v2081, %v2134
      %v2214 = vadd.f32 %v2082, %v2134
      %v2215 = vadd.f32 %v2083, %v2134
      %v2216 = vadd.f32 %v2084, %v2134
      %v2217 = vadd.f32 %v2085, %v2134
      %v2218 = vadd.f32 %v2086, %v2134
      %v2219 = vadd.f32 %v2087, %v2134
      %v2220 = vadd.f32 %v2088, %v2134
      %v2221 = vadd.f32 %v2089, %v2134
      %v2222 = vadd.f32 %v2090, %v2134
      %v2223 = vadd.f32 %v2091, %v2134
      %v2224 = vadd.f32 %v2092, %v2134
      %v2225 = vadd.f32 %v2093, %v2134
      %v2226 = vadd.f32 %v2094, %v2134
      %v2227 = vadd.f32 %v2095, %v2134
      %v2228 = vadd.f32 %v2096, %v2134
      %v2229 = vadd.f32 %v2097, %v2134
      %v2230 = vadd.f32 %v2098, %v2134
      %v2231 = vadd.f32 %v2099, %v2134
      %v2232 = vadd.f32 %v2100, %v2134
      %v2233 = vadd.f32 %v2101, %v2134
      %v2234 = vadd.f32 %v2102, %v2134
      %v2235 = vadd.f32 %v2103, %v2134
      %v2236 = vadd.f32 %v2104, %v2134
      %v2237 = vadd.f32 %v2105, %v2134
      %v2238 = vadd.f32 %v2106, %v2134
      %v2239 = vadd.f32 %v2107, %v2134
      %v2240 = vadd.f32 %v2108, %v2134
      %v2241 = vadd.f32 %v2109, %v2134
      %v2242 = vadd.f32 %v2110, %v2134
      %v2243 = vadd.f32 %v2111, %v2134
      %v2244 = vadd.f32 %v2112, %v2134
      %v2245 = vadd.f32 %v2113, %v2134
      %v2246 = vadd.f32 %v2114, %v2134
      %v2247 = vadd.f32 %v2115, %v2134
      %v2248 = vadd.f32 %v2116, %v2134
      %v2249 = vadd.f32 %v2117, %v2134
      %v2250 = vadd.f32 %v2118, %v2134
      %v2251 = vadd.f32 %v2119, %v2134
      %v2252 = vadd.f32 %v2120, %v2134
      %v2253 = vadd.f32 %v2121, %v2134
      %v2254 = vadd.f32 %v2122, %v2134
      %v2255 = vadd.f32 %v2123, %v2134
      %v2256 = vadd.f32 %v2124, %v2134
      %v2257 = vadd.f32 %v2125, %v2134
      %v2258 = vadd.f32 %v2126, %v2134
      %v2259 = vadd.f32 %v2127, %v2134
      %v2260 = vadd.f32 %v2128, %v2134
      %v2261 = vadd.f32 %v2129, %v2134
      %v2262 = vadd.f32 %v2130, %v2134
      %v2263 = vadd.f32 %v2131, %v2134
      %v2264 = vmul.f32 %v2136, 0.2
      %v2265 = vmul.f32 %v2137, 0.2
      %v2266 = vmul.f32 %v2138, 0.2
      %v2267 = vmul.f32 %v2139, 0.2
      %v2268 = vmul.f32 %v2140, 0.2
      %v2269 = vmul.f32 %v2141, 0.2
      %v2270 = vmul.f32 %v2142, 0.2
      %v2271 = vmul.f32 %v2143, 0.2
      %v2272 = vmul.f32 %v2144, 0.2
      %v2273 = vmul.f32 %v2145, 0.2
      %v2274 = vmul.f32 %v2146, 0.2
      %v2275 = vmul.f32 %v2147, 0.2
      %v2276 = vmul.f32 %v2148, 0.2
      %v2277 = vmul.f32 %v2149, 0.2
      %v2278 = vmul.f32 %v2150, 0.2
      %v2279 = vmul.f32 %v2151, 0.2
      %v2280 = vmul.f32 %v2152, 0.2
      %v2281 = vmul.f32 %v2153, 0.2
      %v2282 = vmul.f32 %v2154, 0.2
      %v2283 = vmul.f32 %v2155, 0.2
      %v2284 = vmul.f32 %v2156, 0.2
      %v2285 = vmul.f32 %v2157, 0.2
      %v2286 = vmul.f32 %v2158, 0.2
      %v2287 = vmul.f32 %v2159, 0.2
      %v2288 = vmul.f32 %v2160, 0.2
      %v2289 = vmul.f32 %v2161, 0.2
      %v2290 = vmul.f32 %v2162, 0.2
      %v2291 = vmul.f32 %v2163, 0.2
      %v2292 = vmul.f32 %v2164, 0.2
      %v2293 = vmul.f32 %v2165, 0.2
      %v2294 = vmul.f32 %v2166, 0.2
      %v2295 = vmul.f32 %v2167, 0.2
      %v2296 = vmul.f32 %v2168, 0.2
      %v2297 = vmul.f32 %v2169, 0.2
      %v2298 = vmul.f32 %v2170, 0.2
      %v2299 = vmul.f32 %v2171, 0.2
      %v2300 = vmul.f32 %v2172, 0.2
      %v2301 = vmul.f32 %v2173, 0.2
      %v2302 = vmul.f32 %v2174, 0.2
      %v2303 = vmul.f32 %v2175, 0.2
      %v2304 = vmul.f32 %v2176, 0.2
      %v2305 = vmul.f32 %v2177, 0.2
      %v2306 = vmul.f32 %v2178, 0.2
      %v2307 = vmul.f32 %v2179, 0.2
      %v2308 = vmul.f32 %v2180, 0.2
      %v2309 = vmul.f32 %v2181, 0.2
      %v2310 = vmul.f32 %v2182, 0.2
      %v2311 = vmul.f32 %v2183, 0.2
      %v2312 = vmul.f32 %v2184, 0.2
      %v2313 = vmul.f32 %v2185, 0.2
      %v2314 = vmul.f32 %v2186, 0.2
      %v2315 = vmul.f32 %v2187, 0.2
      %v2316 = vmul.f32 %v2188, 0.2
      %v2317 = vmul.f32 %v2189, 0.2
      %v2318 = vmul.f32 %v2190, 0.2
      %v2319 = vmul.f32 %v2191, 0.2
      %v2320 = vmul.f32 %v2192, 0.2
      %v2321 = vmul.f32 %v2193, 0.2
      %v2322 = vmul.f32 %v2194, 0.2
      %v2323 = vmul.f32 %v2195, 0.2
      %v2324 = vmul.f32 %v2196, 0.2
      %v2325 = vmul.f32 %v2197, 0.2
      %v2326 = vmul.f32 %v2198, 0.2
      %v2327 = vmul.f32 %v2199, 0.2
      %v2328 = vmul.f32 %v2200, 0.2
      %v2329 = vmul.f32 %v2201, 0.2
      %v2330 = vmul.f32 %v2202, 0.2
      %v2331 = vmul.f32 %v2203, 0.2
      %v2332 = vmul.f32 %v2204, 0.2
      %v2333 = vmul.f32 %v2205, 0.2
      %v2334 = vmul.f32 %v2206, 0.2
      %v2335 = vmul.f32 %v2207, 0.2
      %v2336 = vmul.f32 %v2208, 0.2
      %v2337 = vmul.f32 %v2209, 0.2
      %v2338 = vmul.f32 %v2210, 0.2
      %v2339 = vmul.f32 %v2211, 0.2
      %v2340 = vmul.f32 %v2212, 0.2
      %v2341 = vmul.f32 %v2213, 0.2
      %v2342 = vmul.f32 %v2214, 0.2
      %v2343 = vmul.f32 %v2215, 0.2
      %v2344 = vmul.f32 %v2216, 0.2
      %v2345 = vmul.f32 %v2217, 0.2
      %v2346 = vmul.f32 %v2218, 0.2
      %v2347 = vmul.f32 %v2219, 0.2
      %v2348 = vmul.f32 %v2220, 0.2
      %v2349 = vmul.f32 %v2221, 0.2
      %v2350 = vmul.f32 %v2222, 0.2
      %v2351 = vmul.f32 %v2223, 0.2
      %v2352 = vmul.f32 %v2224, 0.2
      %v2353 = vmul.f32 %v2225, 0.2
      %v2354 = vmul.f32 %v2226, 0.2
      %v2355 = vmul.f32 %v2227, 0.2
      %v2356 = vmul.f32 %v2228, 0.2
      %v2357 = vmul.f32 %v2229, 0.2
      %v2358 = vmul.f32 %v2230, 0.2
      %v2359 = vmul.f32 %v2231, 0.2
      %v2360 = vmul.f32 %v2232, 0.2
      %v2361 = vmul.f32 %v2233, 0.2
      %v2362 = vmul.f32 %v2234, 0.2
      %v2363 = vmul.f32 %v2235, 0.2
      %v2364 = vmul.f32 %v2236, 0.2
      %v2365 = vmul.f32 %v2237, 0.2
      %v2366 = vmul.f32 %v2238, 0.2
      %v2367 = vmul.f32 %v2239, 0.2
      %v2368 = vmul.f32 %v2240, 0.2
      %v2369 = vmul.f32 %v2241, 0.2
      %v2370 = vmul.f32 %v2242, 0.2
      %v2371 = vmul.f32 %v2243, 0.2
      %v2372 = vmul.f32 %v2244, 0.2
      %v2373 = vmul.f32 %v2245, 0.2
      %v2374 = vmul.f32 %v2246, 0.2
      %v2375 = vmul.f32 %v2247, 0.2
      %v2376 = vmul.f32 %v2248, 0.2
      %v2377 = vmul.f32 %v2249, 0.2
      %v2378 = vmul.f32 %v2250, 0.2
      %v2379 = vmul.f32 %v2251, 0.2
      %v2380 = vmul.f32 %v2252, 0.2
      %v2381 = vmul.f32 %v2253, 0.2
      %v2382 = vmul.f32 %v2254, 0.2
      %v2383 = vmul.f32 %v2255, 0.2
      %v2384 = vmul.f32 %v2256, 0.2
      %v2385 = vmul.f32 %v2257, 0.2
      %v2386 = vmul.f32 %v2258, 0.2
      %v2387 = vmul.f32 %v2259, 0.2
      %v2388 = vmul.f32 %v2260, 0.2
      %v2389 = vmul.f32 %v2261, 0.2
      %v2390 = vmul.f32 %v2262, 0.2
      %v2391 = vmul.f32 %v2263, 0.2
      %v2392 = vmax.f32 %v2136, %v2264
      %v2393 = vmax.f32 %v2137, %v2265
      %v2394 = vmax.f32 %v2138, %v2266
      %v2395 = vmax.f32 %v2139, %v2267
      %v2396 = vmax.f32 %v2140, %v2268
      %v2397 = vmax.f32 %v2141, %v2269
      %v2398 = vmax.f32 %v2142, %v2270
      %v2399 = vmax.f32 %v2143, %v2271
      %v2400 = vmax.f32 %v2144, %v2272
      %v2401 = vmax.f32 %v2145, %v2273
      %v2402 = vmax.f32 %v2146, %v2274
      %v2403 = vmax.f32 %v2147, %v2275
      %v2404 = vmax.f32 %v2148, %v2276
      %v2405 = vmax.f32 %v2149, %v2277
      %v2406 = vmax.f32 %v2150, %v2278
      %v2407 = vmax.f32 %v2151, %v2279
      %v2408 = vmax.f32 %v2152, %v2280
      %v2409 = vmax.f32 %v2153, %v2281
      %v2410 = vmax.f32 %v2154, %v2282
      %v2411 = vmax.f32 %v2155, %v2283
      %v2412 = vmax.f32 %v2156, %v2284
      %v2413 = vmax.f32 %v2157, %v2285
      %v2414 = vmax.f32 %v2158, %v2286
      %v2415 = vmax.f32 %v2159, %v2287
      %v2416 = vmax.f32 %v2160, %v2288
      %v2417 = vmax.f32 %v2161, %v2289
      %v2418 = vmax.f32 %v2162, %v2290
      %v2419 = vmax.f32 %v2163, %v2291
      %v2420 = vmax.f32 %v2164, %v2292
      %v2421 = vmax.f32 %v2165, %v2293
      %v2422 = vmax.f32 %v2166, %v2294
      %v2423 = vmax.f32 %v2167, %v2295
      %v2424 = vmax.f32 %v2168, %v2296
      %v2425 = vmax.f32 %v2169, %v2297
      %v2426 = vmax.f32 %v2170, %v2298
      %v2427 = vmax.f32 %v2171, %v2299
      %v2428 = vmax.f32 %v2172, %v2300
      %v2429 = vmax.f32 %v2173, %v2301
      %v2430 = vmax.f32 %v2174, %v2302
      %v2431 = vmax.f32 %v2175, %v2303
      %v2432 = vmax.f32 %v2176, %v2304
      %v2433 = vmax.f32 %v2177, %v2305
      %v2434 = vmax.f32 %v2178, %v2306
      %v2435 = vmax.f32 %v2179, %v2307
      %v2436 = vmax.f32 %v2180, %v2308
      %v2437 = vmax.f32 %v2181, %v2309
      %v2438 = vmax.f32 %v2182, %v2310
      %v2439 = vmax.f32 %v2183, %v2311
      %v2440 = vmax.f32 %v2184, %v2312
      %v2441 = vmax.f32 %v2185, %v2313
      %v2442 = vmax.f32 %v2186, %v2314
      %v2443 = vmax.f32 %v2187, %v2315
      %v2444 = vmax.f32 %v2188, %v2316
      %v2445 = vmax.f32 %v2189, %v2317
      %v2446 = vmax.f32 %v2190, %v2318
      %v2447 = vmax.f32 %v2191, %v2319
      %v2448 = vmax.f32 %v2192, %v2320
      %v2449 = vmax.f32 %v2193, %v2321
      %v2450 = vmax.f32 %v2194, %v2322
      %v2451 = vmax.f32 %v2195, %v2323
      %v2452 = vmax.f32 %v2196, %v2324
      %v2453 = vmax.f32 %v2197, %v2325
      %v2454 = vmax.f32 %v2198, %v2326
      %v2455 = vmax.f32 %v2199, %v2327
      %v2456 = vmax.f32 %v2200, %v2328
      %v2457 = vmax.f32 %v2201, %v2329
      %v2458 = vmax.f32 %v2202, %v2330
      %v2459 = vmax.f32 %v2203, %v2331
      %v2460 = vmax.f32 %v2204, %v2332
      %v2461 = vmax.f32 %v2205, %v2333
      %v2462 = vmax.f32 %v2206, %v2334
      %v2463 = vmax.f32 %v2207, %v2335
      %v2464 = vmax.f32 %v2208, %v2336
      %v2465 = vmax.f32 %v2209, %v2337
      %v2466 = vmax.f32 %v2210, %v2338
      %v2467 = vmax.f32 %v2211, %v2339
      %v2468 = vmax.f32 %v2212, %v2340
      %v2469 = vmax.f32 %v2213, %v2341
      %v2470 = vmax.f32 %v2214, %v2342
      %v2471 = vmax.f32 %v2215, %v2343
      %v2472 = vmax.f32 %v2216, %v2344
      %v2473 = vmax.f32 %v2217, %v2345
      %v2474 = vmax.f32 %v2218, %v2346
      %v2475 = vmax.f32 %v2219, %v2347
      %v2476 = vmax.f32 %v2220, %v2348
      %v2477 = vmax.f32 %v2221, %v2349
      %v2478 = vmax.f32 %v2222, %v2350
      %v2479 = vmax.f32 %v2223, %v2351
      %v2480 = vmax.f32 %v2224, %v2352
      %v2481 = vmax.f32 %v2225, %v2353
      %v2482 = vmax.f32 %v2226, %v2354
      %v2483 = vmax.f32 %v2227, %v2355
      %v2484 = vmax.f32 %v2228, %v2356
      %v2485 = vmax.f32 %v2229, %v2357
      %v2486 = vmax.f32 %v2230, %v2358
      %v2487 = vmax.f32 %v2231, %v2359
      %v2488 = vmax.f32 %v2232, %v2360
      %v2489 = vmax.f32 %v2233, %v2361
      %v2490 = vmax.f32 %v2234, %v2362
      %v2491 = vmax.f32 %v2235, %v2363
      %v2492 = vmax.f32 %v2236, %v2364
      %v2493 = vmax.f32 %v2237, %v2365
      %v2494 = vmax.f32 %v2238, %v2366
      %v2495 = vmax.f32 %v2239, %v2367
      %v2496 = vmax.f32 %v2240, %v2368
      %v2497 = vmax.f32 %v2241, %v2369
      %v2498 = vmax.f32 %v2242, %v2370
      %v2499 = vmax.f32 %v2243, %v2371
      %v2500 = vmax.f32 %v2244, %v2372
      %v2501 = vmax.f32 %v2245, %v2373
      %v2502 = vmax.f32 %v2246, %v2374
      %v2503 = vmax.f32 %v2247, %v2375
      %v2504 = vmax.f32 %v2248, %v2376
      %v2505 = vmax.f32 %v2249, %v2377
      %v2506 = vmax.f32 %v2250, %v2378
      %v2507 = vmax.f32 %v2251, %v2379
      %v2508 = vmax.f32 %v2252, %v2380
      %v2509 = vmax.f32 %v2253, %v2381
      %v2510 = vmax.f32 %v2254, %v2382
      %v2511 = vmax.f32 %v2255, %v2383
      %v2512 = vmax.f32 %v2256, %v2384
      %v2513 = vmax.f32 %v2257, %v2385
      %v2514 = vmax.f32 %v2258, %v2386
      %v2515 = vmax.f32 %v2259, %v2387
      %v2516 = vmax.f32 %v2260, %v2388
      %v2517 = vmax.f32 %v2261, %v2389
      %v2518 = vmax.f32 %v2262, %v2390
      %v2519 = vmax.f32 %v2263, %v2391
      %v2520 = vpack.c.bf16 %v2392, %v2392
      %v2521 = vpack.c.bf16 %v2393, %v2393
      %v2522 = vpack.c.bf16 %v2394, %v2394
      %v2523 = vpack.c.bf16 %v2395, %v2395
      %v2524 = vpack.c.bf16 %v2396, %v2396
      %v2525 = vpack.c.bf16 %v2397, %v2397
      %v2526 = vpack.c.bf16 %v2398, %v2398
      %v2527 = vpack.c.bf16 %v2399, %v2399
      %v2528 = vpack.c.bf16 %v2400, %v2400
      %v2529 = vpack.c.bf16 %v2401, %v2401
      %v2530 = vpack.c.bf16 %v2402, %v2402
      %v2531 = vpack.c.bf16 %v2403, %v2403
      %v2532 = vpack.c.bf16 %v2404, %v2404
      %v2533 = vpack.c.bf16 %v2405, %v2405
      %v2534 = vpack.c.bf16 %v2406, %v2406
      %v2535 = vpack.c.bf16 %v2407, %v2407
      %v2536 = vpack.c.bf16 %v2408, %v2408
      %v2537 = vpack.c.bf16 %v2409, %v2409
      %v2538 = vpack.c.bf16 %v2410, %v2410
      %v2539 = vpack.c.bf16 %v2411, %v2411
      %v2540 = vpack.c.bf16 %v2412, %v2412
      %v2541 = vpack.c.bf16 %v2413, %v2413
      %v2542 = vpack.c.bf16 %v2414, %v2414
      %v2543 = vpack.c.bf16 %v2415, %v2415
      %v2544 = vpack.c.bf16 %v2416, %v2416
      %v2545 = vpack.c.bf16 %v2417, %v2417
      %v2546 = vpack.c.bf16 %v2418, %v2418
      %v2547 = vpack.c.bf16 %v2419, %v2419
      %v2548 = vpack.c.bf16 %v2420, %v2420
      %v2549 = vpack.c.bf16 %v2421, %v2421
      %v2550 = vpack.c.bf16 %v2422, %v2422
      %v2551 = vpack.c.bf16 %v2423, %v2423
      %v2552 = vpack.c.bf16 %v2424, %v2424
      %v2553 = vpack.c.bf16 %v2425, %v2425
      %v2554 = vpack.c.bf16 %v2426, %v2426
      %v2555 = vpack.c.bf16 %v2427, %v2427
      %v2556 = vpack.c.bf16 %v2428, %v2428
      %v2557 = vpack.c.bf16 %v2429, %v2429
      %v2558 = vpack.c.bf16 %v2430, %v2430
      %v2559 = vpack.c.bf16 %v2431, %v2431
      %v2560 = vpack.c.bf16 %v2432, %v2432
      %v2561 = vpack.c.bf16 %v2433, %v2433
      %v2562 = vpack.c.bf16 %v2434, %v2434
      %v2563 = vpack.c.bf16 %v2435, %v2435
      %v2564 = vpack.c.bf16 %v2436, %v2436
      %v2565 = vpack.c.bf16 %v2437, %v2437
      %v2566 = vpack.c.bf16 %v2438, %v2438
      %v2567 = vpack.c.bf16 %v2439, %v2439
      %v2568 = vpack.c.bf16 %v2440, %v2440
      %v2569 = vpack.c.bf16 %v2441, %v2441
      %v2570 = vpack.c.bf16 %v2442, %v2442
      %v2571 = vpack.c.bf16 %v2443, %v2443
      %v2572 = vpack.c.bf16 %v2444, %v2444
      %v2573 = vpack.c.bf16 %v2445, %v2445
      %v2574 = vpack.c.bf16 %v2446, %v2446
      %v2575 = vpack.c.bf16 %v2447, %v2447
      %v2576 = vpack.c.bf16 %v2448, %v2448
      %v2577 = vpack.c.bf16 %v2449, %v2449
      %v2578 = vpack.c.bf16 %v2450, %v2450
      %v2579 = vpack.c.bf16 %v2451, %v2451
      %v2580 = vpack.c.bf16 %v2452, %v2452
      %v2581 = vpack.c.bf16 %v2453, %v2453
      %v2582 = vpack.c.bf16 %v2454, %v2454
      %v2583 = vpack.c.bf16 %v2455, %v2455
      %v2584 = vpack.c.bf16 %v2456, %v2456
      %v2585 = vpack.c.bf16 %v2457, %v2457
      %v2586 = vpack.c.bf16 %v2458, %v2458
      %v2587 = vpack.c.bf16 %v2459, %v2459
      %v2588 = vpack.c.bf16 %v2460, %v2460
      %v2589 = vpack.c.bf16 %v2461, %v2461
      %v2590 = vpack.c.bf16 %v2462, %v2462
      %v2591 = vpack.c.bf16 %v2463, %v2463
      %v2592 = vpack.c.bf16 %v2464, %v2464
      %v2593 = vpack.c.bf16 %v2465, %v2465
      %v2594 = vpack.c.bf16 %v2466, %v2466
      %v2595 = vpack.c.bf16 %v2467, %v2467
      %v2596 = vpack.c.bf16 %v2468, %v2468
      %v2597 = vpack.c.bf16 %v2469, %v2469
      %v2598 = vpack.c.bf16 %v2470, %v2470
      %v2599 = vpack.c.bf16 %v2471, %v2471
      %v2600 = vpack.c.bf16 %v2472, %v2472
      %v2601 = vpack.c.bf16 %v2473, %v2473
      %v2602 = vpack.c.bf16 %v2474, %v2474
      %v2603 = vpack.c.bf16 %v2475, %v2475
      %v2604 = vpack.c.bf16 %v2476, %v2476
      %v2605 = vpack.c.bf16 %v2477, %v2477
      %v2606 = vpack.c.bf16 %v2478, %v2478
      %v2607 = vpack.c.bf16 %v2479, %v2479
      %v2608 = vpack.c.bf16 %v2480, %v2480
      %v2609 = vpack.c.bf16 %v2481, %v2481
      %v2610 = vpack.c.bf16 %v2482, %v2482
      %v2611 = vpack.c.bf16 %v2483, %v2483
      %v2612 = vpack.c.bf16 %v2484, %v2484
      %v2613 = vpack.c.bf16 %v2485, %v2485
      %v2614 = vpack.c.bf16 %v2486, %v2486
      %v2615 = vpack.c.bf16 %v2487, %v2487
      %v2616 = vpack.c.bf16 %v2488, %v2488
      %v2617 = vpack.c.bf16 %v2489, %v2489
      %v2618 = vpack.c.bf16 %v2490, %v2490
      %v2619 = vpack.c.bf16 %v2491, %v2491
      %v2620 = vpack.c.bf16 %v2492, %v2492
      %v2621 = vpack.c.bf16 %v2493, %v2493
      %v2622 = vpack.c.bf16 %v2494, %v2494
      %v2623 = vpack.c.bf16 %v2495, %v2495
      %v2624 = vpack.c.bf16 %v2496, %v2496
      %v2625 = vpack.c.bf16 %v2497, %v2497
      %v2626 = vpack.c.bf16 %v2498, %v2498
      %v2627 = vpack.c.bf16 %v2499, %v2499
      %v2628 = vpack.c.bf16 %v2500, %v2500
      %v2629 = vpack.c.bf16 %v2501, %v2501
      %v2630 = vpack.c.bf16 %v2502, %v2502
      %v2631 = vpack.c.bf16 %v2503, %v2503
      %v2632 = vpack.c.bf16 %v2504, %v2504
      %v2633 = vpack.c.bf16 %v2505, %v2505
      %v2634 = vpack.c.bf16 %v2506, %v2506
      %v2635 = vpack.c.bf16 %v2507, %v2507
      %v2636 = vpack.c.bf16 %v2508, %v2508
      %v2637 = vpack.c.bf16 %v2509, %v2509
      %v2638 = vpack.c.bf16 %v2510, %v2510
      %v2639 = vpack.c.bf16 %v2511, %v2511
      %v2640 = vpack.c.bf16 %v2512, %v2512
      %v2641 = vpack.c.bf16 %v2513, %v2513
      %v2642 = vpack.c.bf16 %v2514, %v2514
      %v2643 = vpack.c.bf16 %v2515, %v2515
      %v2644 = vpack.c.bf16 %v2516, %v2516
      %v2645 = vpack.c.bf16 %v2517, %v2517
      %v2646 = vpack.c.bf16 %v2518, %v2518
      %v2647 = vpack.c.bf16 %v2519, %v2519
      %vm2648 = vcmask 519168
      %2649 = vst.msk [vmem:[%s197] sm:$0xf] %vm2648, %v2520
      %2650 = vst.msk [vmem:[%s197 + $0x4] sm:$0xf] %vm2648, %v2521
      %2651 = vst.msk [vmem:[%s197 + $0x8] sm:$0xf] %vm2648, %v2522
      %2652 = vst.msk [vmem:[%s197 + $0xc] sm:$0xf] %vm2648, %v2523
      %2653 = vst.msk [vmem:[%s197 + $0x10] sm:$0xf] %vm2648, %v2524
      %2654 = vst.msk [vmem:[%s197 + $0x14] sm:$0xf] %vm2648, %v2525
      %2655 = vst.msk [vmem:[%s197 + $0x18] sm:$0xf] %vm2648, %v2526
      %2656 = vst.msk [vmem:[%s197 + $0x1c] sm:$0xf] %vm2648, %v2527
      %2657 = vst.msk [vmem:[%s197 + $0x20] sm:$0xf] %vm2648, %v2528
      %2658 = vst.msk [vmem:[%s197 + $0x24] sm:$0xf] %vm2648, %v2529
      %2659 = vst.msk [vmem:[%s197 + $0x28] sm:$0xf] %vm2648, %v2530
      %2660 = vst.msk [vmem:[%s197 + $0x2c] sm:$0xf] %vm2648, %v2531
      %2661 = vst.msk [vmem:[%s197 + $0x30] sm:$0xf] %vm2648, %v2532
      %2662 = vst.msk [vmem:[%s197 + $0x34] sm:$0xf] %vm2648, %v2533
      %2663 = vst.msk [vmem:[%s197 + $0x38] sm:$0xf] %vm2648, %v2534
      %2664 = vst.msk [vmem:[%s197 + $0x3c] sm:$0xf] %vm2648, %v2535
      %2665 = vst.msk [vmem:[%s197 + $0x40] sm:$0xf] %vm2648, %v2536
      %2666 = vst.msk [vmem:[%s197 + $0x44] sm:$0xf] %vm2648, %v2537
      %2667 = vst.msk [vmem:[%s197 + $0x48] sm:$0xf] %vm2648, %v2538
      %2668 = vst.msk [vmem:[%s197 + $0x4c] sm:$0xf] %vm2648, %v2539
      %2669 = vst.msk [vmem:[%s197 + $0x50] sm:$0xf] %vm2648, %v2540
      %2670 = vst.msk [vmem:[%s197 + $0x54] sm:$0xf] %vm2648, %v2541
      %2671 = vst.msk [vmem:[%s197 + $0x58] sm:$0xf] %vm2648, %v2542
      %2672 = vst.msk [vmem:[%s197 + $0x5c] sm:$0xf] %vm2648, %v2543
      %2673 = vst.msk [vmem:[%s197 + $0x60] sm:$0xf] %vm2648, %v2544
      %2674 = vst.msk [vmem:[%s197 + $0x64] sm:$0xf] %vm2648, %v2545
      %2675 = vst.msk [vmem:[%s197 + $0x68] sm:$0xf] %vm2648, %v2546
      %2676 = vst.msk [vmem:[%s197 + $0x6c] sm:$0xf] %vm2648, %v2547
      %2677 = vst.msk [vmem:[%s197 + $0x70] sm:$0xf] %vm2648, %v2548
      %2678 = vst.msk [vmem:[%s197 + $0x74] sm:$0xf] %vm2648, %v2549
      %2679 = vst.msk [vmem:[%s197 + $0x78] sm:$0xf] %vm2648, %v2550
      %2680 = vst.msk [vmem:[%s197 + $0x7c] sm:$0xf] %vm2648, %v2551
      %2681 = vst.msk [vmem:[%s197 + $0x80] sm:$0xf] %vm2648, %v2552
      %2682 = vst.msk [vmem:[%s197 + $0x84] sm:$0xf] %vm2648, %v2553
      %2683 = vst.msk [vmem:[%s197 + $0x88] sm:$0xf] %vm2648, %v2554
      %2684 = vst.msk [vmem:[%s197 + $0x8c] sm:$0xf] %vm2648, %v2555
      %2685 = vst.msk [vmem:[%s197 + $0x90] sm:$0xf] %vm2648, %v2556
      %2686 = vst.msk [vmem:[%s197 + $0x94] sm:$0xf] %vm2648, %v2557
      %2687 = vst.msk [vmem:[%s197 + $0x98] sm:$0xf] %vm2648, %v2558
      %2688 = vst.msk [vmem:[%s197 + $0x9c] sm:$0xf] %vm2648, %v2559
      %2689 = vst.msk [vmem:[%s197 + $0xa0] sm:$0xf] %vm2648, %v2560
      %2690 = vst.msk [vmem:[%s197 + $0xa4] sm:$0xf] %vm2648, %v2561
      %2691 = vst.msk [vmem:[%s197 + $0xa8] sm:$0xf] %vm2648, %v2562
      %2692 = vst.msk [vmem:[%s197 + $0xac] sm:$0xf] %vm2648, %v2563
      %2693 = vst.msk [vmem:[%s197 + $0xb0] sm:$0xf] %vm2648, %v2564
      %2694 = vst.msk [vmem:[%s197 + $0xb4] sm:$0xf] %vm2648, %v2565
      %2695 = vst.msk [vmem:[%s197 + $0xb8] sm:$0xf] %vm2648, %v2566
      %2696 = vst.msk [vmem:[%s197 + $0xbc] sm:$0xf] %vm2648, %v2567
      %2697 = vst.msk [vmem:[%s197 + $0xc0] sm:$0xf] %vm2648, %v2568
      %2698 = vst.msk [vmem:[%s197 + $0xc4] sm:$0xf] %vm2648, %v2569
      %2699 = vst.msk [vmem:[%s197 + $0xc8] sm:$0xf] %vm2648, %v2570
      %2700 = vst.msk [vmem:[%s197 + $0xcc] sm:$0xf] %vm2648, %v2571
      %2701 = vst.msk [vmem:[%s197 + $0xd0] sm:$0xf] %vm2648, %v2572
      %2702 = vst.msk [vmem:[%s197 + $0xd4] sm:$0xf] %vm2648, %v2573
      %2703 = vst.msk [vmem:[%s197 + $0xd8] sm:$0xf] %vm2648, %v2574
      %2704 = vst.msk [vmem:[%s197 + $0xdc] sm:$0xf] %vm2648, %v2575
      %2705 = vst.msk [vmem:[%s197 + $0xe0] sm:$0xf] %vm2648, %v2576
      %2706 = vst.msk [vmem:[%s197 + $0xe4] sm:$0xf] %vm2648, %v2577
      %2707 = vst.msk [vmem:[%s197 + $0xe8] sm:$0xf] %vm2648, %v2578
      %2708 = vst.msk [vmem:[%s197 + $0xec] sm:$0xf] %vm2648, %v2579
      %2709 = vst.msk [vmem:[%s197 + $0xf0] sm:$0xf] %vm2648, %v2580
      %2710 = vst.msk [vmem:[%s197 + $0xf4] sm:$0xf] %vm2648, %v2581
      %2711 = vst.msk [vmem:[%s197 + $0xf8] sm:$0xf] %vm2648, %v2582
      %2712 = vst.msk [vmem:[%s197 + $0xfc] sm:$0xf] %vm2648, %v2583
      %2713 = vst.msk [vmem:[%s197 + $0x100] sm:$0xf] %vm2648, %v2584
      %2714 = vst.msk [vmem:[%s197 + $0x104] sm:$0xf] %vm2648, %v2585
      %2715 = vst.msk [vmem:[%s197 + $0x108] sm:$0xf] %vm2648, %v2586
      %2716 = vst.msk [vmem:[%s197 + $0x10c] sm:$0xf] %vm2648, %v2587
      %2717 = vst.msk [vmem:[%s197 + $0x110] sm:$0xf] %vm2648, %v2588
      %2718 = vst.msk [vmem:[%s197 + $0x114] sm:$0xf] %vm2648, %v2589
      %2719 = vst.msk [vmem:[%s197 + $0x118] sm:$0xf] %vm2648, %v2590
      %2720 = vst.msk [vmem:[%s197 + $0x11c] sm:$0xf] %vm2648, %v2591
      %2721 = vst.msk [vmem:[%s197 + $0x120] sm:$0xf] %vm2648, %v2592
      %2722 = vst.msk [vmem:[%s197 + $0x124] sm:$0xf] %vm2648, %v2593
      %2723 = vst.msk [vmem:[%s197 + $0x128] sm:$0xf] %vm2648, %v2594
      %2724 = vst.msk [vmem:[%s197 + $0x12c] sm:$0xf] %vm2648, %v2595
      %2725 = vst.msk [vmem:[%s197 + $0x130] sm:$0xf] %vm2648, %v2596
      %2726 = vst.msk [vmem:[%s197 + $0x134] sm:$0xf] %vm2648, %v2597
      %2727 = vst.msk [vmem:[%s197 + $0x138] sm:$0xf] %vm2648, %v2598
      %2728 = vst.msk [vmem:[%s197 + $0x13c] sm:$0xf] %vm2648, %v2599
      %2729 = vst.msk [vmem:[%s197 + $0x140] sm:$0xf] %vm2648, %v2600
      %2730 = vst.msk [vmem:[%s197 + $0x144] sm:$0xf] %vm2648, %v2601
      %2731 = vst.msk [vmem:[%s197 + $0x148] sm:$0xf] %vm2648, %v2602
      %2732 = vst.msk [vmem:[%s197 + $0x14c] sm:$0xf] %vm2648, %v2603
      %2733 = vst.msk [vmem:[%s197 + $0x150] sm:$0xf] %vm2648, %v2604
      %2734 = vst.msk [vmem:[%s197 + $0x154] sm:$0xf] %vm2648, %v2605
      %2735 = vst.msk [vmem:[%s197 + $0x158] sm:$0xf] %vm2648, %v2606
      %2736 = vst.msk [vmem:[%s197 + $0x15c] sm:$0xf] %vm2648, %v2607
      %2737 = vst.msk [vmem:[%s197 + $0x160] sm:$0xf] %vm2648, %v2608
      %2738 = vst.msk [vmem:[%s197 + $0x164] sm:$0xf] %vm2648, %v2609
      %2739 = vst.msk [vmem:[%s197 + $0x168] sm:$0xf] %vm2648, %v2610
      %2740 = vst.msk [vmem:[%s197 + $0x16c] sm:$0xf] %vm2648, %v2611
      %2741 = vst.msk [vmem:[%s197 + $0x170] sm:$0xf] %vm2648, %v2612
      %2742 = vst.msk [vmem:[%s197 + $0x174] sm:$0xf] %vm2648, %v2613
      %2743 = vst.msk [vmem:[%s197 + $0x178] sm:$0xf] %vm2648, %v2614
      %2744 = vst.msk [vmem:[%s197 + $0x17c] sm:$0xf] %vm2648, %v2615
      %2745 = vst.msk [vmem:[%s197 + $0x180] sm:$0xf] %vm2648, %v2616
      %2746 = vst.msk [vmem:[%s197 + $0x184] sm:$0xf] %vm2648, %v2617
      %2747 = vst.msk [vmem:[%s197 + $0x188] sm:$0xf] %vm2648, %v2618
      %2748 = vst.msk [vmem:[%s197 + $0x18c] sm:$0xf] %vm2648, %v2619
      %2749 = vst.msk [vmem:[%s197 + $0x190] sm:$0xf] %vm2648, %v2620
      %2750 = vst.msk [vmem:[%s197 + $0x194] sm:$0xf] %vm2648, %v2621
      %2751 = vst.msk [vmem:[%s197 + $0x198] sm:$0xf] %vm2648, %v2622
      %2752 = vst.msk [vmem:[%s197 + $0x19c] sm:$0xf] %vm2648, %v2623
      %2753 = vst.msk [vmem:[%s197 + $0x1a0] sm:$0xf] %vm2648, %v2624
      %2754 = vst.msk [vmem:[%s197 + $0x1a4] sm:$0xf] %vm2648, %v2625
      %2755 = vst.msk [vmem:[%s197 + $0x1a8] sm:$0xf] %vm2648, %v2626
      %2756 = vst.msk [vmem:[%s197 + $0x1ac] sm:$0xf] %vm2648, %v2627
      %2757 = vst.msk [vmem:[%s197 + $0x1b0] sm:$0xf] %vm2648, %v2628
      %2758 = vst.msk [vmem:[%s197 + $0x1b4] sm:$0xf] %vm2648, %v2629
      %2759 = vst.msk [vmem:[%s197 + $0x1b8] sm:$0xf] %vm2648, %v2630
      %2760 = vst.msk [vmem:[%s197 + $0x1bc] sm:$0xf] %vm2648, %v2631
      %2761 = vst.msk [vmem:[%s197 + $0x1c0] sm:$0xf] %vm2648, %v2632
      %2762 = vst.msk [vmem:[%s197 + $0x1c4] sm:$0xf] %vm2648, %v2633
      %2763 = vst.msk [vmem:[%s197 + $0x1c8] sm:$0xf] %vm2648, %v2634
      %2764 = vst.msk [vmem:[%s197 + $0x1cc] sm:$0xf] %vm2648, %v2635
      %2765 = vst.msk [vmem:[%s197 + $0x1d0] sm:$0xf] %vm2648, %v2636
      %2766 = vst.msk [vmem:[%s197 + $0x1d4] sm:$0xf] %vm2648, %v2637
      %2767 = vst.msk [vmem:[%s197 + $0x1d8] sm:$0xf] %vm2648, %v2638
      %2768 = vst.msk [vmem:[%s197 + $0x1dc] sm:$0xf] %vm2648, %v2639
      %2769 = vst.msk [vmem:[%s197 + $0x1e0] sm:$0xf] %vm2648, %v2640
      %2770 = vst.msk [vmem:[%s197 + $0x1e4] sm:$0xf] %vm2648, %v2641
      %2771 = vst.msk [vmem:[%s197 + $0x1e8] sm:$0xf] %vm2648, %v2642
      %2772 = vst.msk [vmem:[%s197 + $0x1ec] sm:$0xf] %vm2648, %v2643
      %2773 = vst.msk [vmem:[%s197 + $0x1f0] sm:$0xf] %vm2648, %v2644
      %2774 = vst.msk [vmem:[%s197 + $0x1f4] sm:$0xf] %vm2648, %v2645
      %2775 = vst.msk [vmem:[%s197 + $0x1f8] sm:$0xf] %vm2648, %v2646
      %2776 = vst.msk [vmem:[%s197 + $0x1fc] sm:$0xf] %vm2648, %v2647
      %p2777 = scmp.lt.s32.totalorder %s15, 1
      %s2778 = scalar_select %p2777, %s15, 1
      %s2779 = smul.addr %s2778, 128
      %s2780 = smul.addr %s2779, 4
      %s2781 = scalar_lea.vmem %s4, %s2780
      // Predicated region
      $region37: #{d_forward.4} parent=35 // pred_check
        %p2782 = pneg %p122
      $region38: #{d_forward.4} parent=35 // pred_check_branch
        %2784 = sbr.rel (%p2782) target = $region40
      $region39: #{d_forward.4} parent=35 // pred_region
        _
      $region40: #{d_forward.4} parent=35 // pred_fallthru
        _
    $region36: #{d_forward.4} parent=5 // pred_fallthru
      _
    %p2785 = scmp.le.s32.totalorder 2, %s10
    // Predicated region
    $region41: #{d_forward.4} parent=5 // pred_check
      %p2786 = pneg %p2785
    $region42: #{d_forward.4} parent=5 // pred_check_branch
      %2788 = sbr.rel (%p2786) target = $region44
    $region43: #{d_forward.4} parent=5 // pred_region
      %s2789 = ssub.s32 %s10, 2
      // Predicated region
      $region45: #{d_forward.4} parent=43 // pred_check
        %p2790 = pneg %p128
      $region46: #{d_forward.4} parent=43 // pred_check_branch
        %2792 = sbr.rel (%p2790) target = $region48
      $region47: #{d_forward.4} parent=43 // pred_region
        %p2793 = scmp.lt.s32.totalorder %s16, 1
        %s2794 = scalar_select %p2793, %s16, 1
        %s2795 = smul.addr %s2794, 128
        %s2796 = smul.addr %s2795, 4
        %s2797 = scalar_lea.vmem %s4, %s2796
      $region48: #{d_forward.4} parent=43 // pred_fallthru
        _
    $region44: #{d_forward.4} parent=5 // pred_fallthru
      _
  $region6: #{d_forward.4} parent=0 // loop_footer
    %s14 = sadd.s32 1, %s10
  $region7: #{d_forward.4} parent=0 // loop_footer_branch
    %9 = sbr.rel target = $region3
  $region8: #{d_forward.4} parent=0 // loop_exit
    _

// kernel: d_forward.5
$region0: #{d_forward.5}
  #allocation0 [shape = 'u32[]', space=smem, size = 0x4, offset = 0x4, fixed_abs, tag = 'smem constant byte address 0x4 - core index']
  #allocation1 [shape = 'u32[72,128]{1,0:T(1,128)}', space=vmem, size = 0x9000, scoped, tag = 'internal scratch']
  %s0 = inlined_call_operand.vmem [shape: bf16[2,256,1024], index: 0, kind: input, shape index: {}]
  %s1 = inlined_call_operand.vmem [shape: bf16[1024,128], index: 1, kind: input, shape index: {}]
  %s2 = inlined_call_operand.vmem [shape: f32[1,128], index: 2, kind: input, shape index: {}]
  %s3 = inlined_call_operand.vmem [shape: f32[1,128], index: 3, kind: input, shape index: {}]
  %s4 = inlined_call_operand.vmem [shape: bf16[2,256,128], index: 4, kind: output, shape index: {}]
  %s5 = sld [smem:[#allocation0]]
  $region49: #{d_forward.5} parent=0
    _
  %s7 = ssub.s32 1, %s5
  %s8 = scalar_select 0, %s7, %s5
  loop: start=0, step=1, limit=4
  $region2: #{d_forward.5} parent=0 // loop_pre_header
    _
  $region3: #{d_forward.5} parent=0 // loop_header
    %s10 = sphi 0, %s14
    %p11 = scmp.ge.s32.totalorder %s10, 4
    %s20 = sphi 0, %s22
    %s23 = sphi 0, %s20
    %s24 = sphi 0, %s23
    %s40 = sphi 0, %s24
    %s44 = sphi 0, %s44
    %s46 = sphi 0, %s44
    %s47 = sphi 0, %s46
    %s61 = sphi 0, %s47
    %s65 = sphi 0, %s65
    %s67 = sphi 0, %s65
    %s68 = sphi 0, %s67
    %s82 = sphi 0, %s68
    %s86 = sphi 0, %s86
    %s88 = sphi 0, %s86
    %s89 = sphi 0, %s88
    %s103 = sphi 0, %s89
    %s109 = sphi 0, %s111
    %s112 = sphi 0, %s109
    %s113 = sphi 0, %s112
    %s129 = sphi 0, %s113
  $region4: #{d_forward.5} parent=0 // loop_header_branch
    %13 = sbr.rel (%p11) target = $region8
  $region5: #{d_forward.5} parent=0 // loop_body
    %s15 = ssub.s32 %s10, 1
    %s16 = ssub.s32 %s10, 2
    %s17 = sadd.s32 %s10, 1
    %s18 = ssub.s32 %s10, %s17
    %p19 = scmp.eq.s32.totalorder %s18, 0
    %s21 = sadd.s32 %s20, 1
    %s22 = scalar_select %p19, %s20, %s21
    %p25 = pneg %p19
    %p26 = scmp.eq.s32.totalorder %s10, 1
    %p27 = por %p25, %p26
    %p28 = scmp.ne.s32.totalorder %s20, %s23
    %p29 = scmp.eq.s32.totalorder %s10, 0
    %p30 = por %p28, %p29
    %p31 = scmp.ne.s32.totalorder %s20, %s23
    %p32 = scmp.eq.s32.totalorder %s15, 1
    %p33 = por %p31, %p32
    %p34 = scmp.ne.s32.totalorder %s23, %s24
    %p35 = scmp.eq.s32.totalorder %s15, 0
    %p36 = por %p34, %p35
    %p37 = scmp.ne.s32.totalorder %s23, %s24
    %p38 = scmp.eq.s32.totalorder %s16, 1
    %p39 = por %p37, %p38
    %p41 = scmp.ne.s32.totalorder %s24, %s40
    %p42 = scmp.eq.s32.totalorder %s16, 0
    %p43 = por %p41, %p42
    %s45 = sadd.s32 %s44, 1
    %p48 = scmp.eq.s32.totalorder %s10, 1
    %p49 = scmp.ne.s32.totalorder %s44, %s46
    %p50 = scmp.eq.s32.totalorder %s10, 0
    %p51 = por %p49, %p50
    %p52 = scmp.ne.s32.totalorder %s44, %s46
    %p53 = scmp.eq.s32.totalorder %s15, 1
    %p54 = por %p52, %p53
    %p55 = scmp.ne.s32.totalorder %s46, %s47
    %p56 = scmp.eq.s32.totalorder %s15, 0
    %p57 = por %p55, %p56
    %p58 = scmp.ne.s32.totalorder %s46, %s47
    %p59 = scmp.eq.s32.totalorder %s16, 1
    %p60 = por %p58, %p59
    %p62 = scmp.ne.s32.totalorder %s47, %s61
    %p63 = scmp.eq.s32.totalorder %s16, 0
    %p64 = por %p62, %p63
    %s66 = sadd.s32 %s65, 1
    %p69 = scmp.eq.s32.totalorder %s10, 1
    %p70 = scmp.ne.s32.totalorder %s65, %s67
    %p71 = scmp.eq.s32.totalorder %s10, 0
    %p72 = por %p70, %p71
    %p73 = scmp.ne.s32.totalorder %s65, %s67
    %p74 = scmp.eq.s32.totalorder %s15, 1
    %p75 = por %p73, %p74
    %p76 = scmp.ne.s32.totalorder %s67, %s68
    %p77 = scmp.eq.s32.totalorder %s15, 0
    %p78 = por %p76, %p77
    %p79 = scmp.ne.s32.totalorder %s67, %s68
    %p80 = scmp.eq.s32.totalorder %s16, 1
    %p81 = por %p79, %p80
    %p83 = scmp.ne.s32.totalorder %s68, %s82
    %p84 = scmp.eq.s32.totalorder %s16, 0
    %p85 = por %p83, %p84
    %s87 = sadd.s32 %s86, 1
    %p90 = scmp.eq.s32.totalorder %s10, 1
    %p91 = scmp.ne.s32.totalorder %s86, %s88
    %p92 = scmp.eq.s32.totalorder %s10, 0
    %p93 = por %p91, %p92
    %p94 = scmp.ne.s32.totalorder %s86, %s88
    %p95 = scmp.eq.s32.totalorder %s15, 1
    %p96 = por %p94, %p95
    %p97 = scmp.ne.s32.totalorder %s88, %s89
    %p98 = scmp.eq.s32.totalorder %s15, 0
    %p99 = por %p97, %p98
    %p100 = scmp.ne.s32.totalorder %s88, %s89
    %p101 = scmp.eq.s32.totalorder %s16, 1
    %p102 = por %p100, %p101
    %p104 = scmp.ne.s32.totalorder %s89, %s103
    %p105 = scmp.eq.s32.totalorder %s16, 0
    %p106 = por %p104, %p105
    %s107 = ssub.s32 %s10, %s17
    %p108 = scmp.eq.s32.totalorder %s107, 0
    %s110 = sadd.s32 %s109, 1
    %s111 = scalar_select %p108, %s109, %s110
    %p114 = pneg %p108
    %p115 = scmp.eq.s32.totalorder %s10, 1
    %p116 = por %p114, %p115
    %p117 = scmp.ne.s32.totalorder %s109, %s112
    %p118 = scmp.eq.s32.totalorder %s10, 0
    %p119 = por %p117, %p118
    %p120 = scmp.ne.s32.totalorder %s109, %s112
    %p121 = scmp.eq.s32.totalorder %s15, 1
    %p122 = por %p120, %p121
    %p123 = scmp.ne.s32.totalorder %s112, %s113
    %p124 = scmp.eq.s32.totalorder %s15, 0
    %p125 = por %p123, %p124
    %p126 = scmp.ne.s32.totalorder %s112, %s113
    %p127 = scmp.eq.s32.totalorder %s16, 1
    %p128 = por %p126, %p127
    %p130 = scmp.ne.s32.totalorder %s113, %s129
    %p131 = scmp.eq.s32.totalorder %s16, 0
    %p132 = por %p130, %p131
    %p133 = scmp.le.s32.totalorder 1, %s10
    %p134 = scmp.lt.s32.totalorder %s10, 3
    %p135 = pnand %p133, %p134
    %p136 = pneg %p135
    // Predicated region
    $region9: #{d_forward.5} parent=5 // pred_check
      _
    $region10: #{d_forward.5} parent=5 // pred_check_branch
      %138 = sbr.rel (%p135) target = $region12
    $region11: #{d_forward.5} parent=5 // pred_region
      %s139 = ssub.s32 %s10, 1
      // Predicated region
      $region13: #{d_forward.5} parent=11 // pred_check
        %p140 = pneg %p57
      $region14: #{d_forward.5} parent=11 // pred_check_branch
        %142 = sbr.rel (%p140) target = $region16
      $region15: #{d_forward.5} parent=11 // pred_region
        _
      $region16: #{d_forward.5} parent=11 // pred_fallthru
        _
      // Predicated region
      $region17: #{d_forward.5} parent=11 // pred_check
        %p143 = pneg %p78
      $region18: #{d_forward.5} parent=11 // pred_check_branch
        %145 = sbr.rel (%p143) target = $region20
      $region19: #{d_forward.5} parent=11 // pred_region
        _
      $region20: #{d_forward.5} parent=11 // pred_fallthru
        _
      // Predicated region
      $region21: #{d_forward.5} parent=11 // pred_check
        %p146 = pneg %p99
      $region22: #{d_forward.5} parent=11 // pred_check_branch
        %148 = sbr.rel (%p146) target = $region24
      $region23: #{d_forward.5} parent=11 // pred_region
        _
      $region24: #{d_forward.5} parent=11 // pred_fallthru
        _
    $region12: #{d_forward.5} parent=5 // pred_fallthru
      _
    %p149 = scmp.lt.s32.totalorder %s10, 2
    // Predicated region
    $region25: #{d_forward.5} parent=5 // pred_check
      %p150 = pneg %p149
    $region26: #{d_forward.5} parent=5 // pred_check_branch
      %152 = sbr.rel (%p150) target = $region28
    $region27: #{d_forward.5} parent=5 // pred_region
      // Predicated region
      $region29: #{d_forward.5} parent=27 // pred_check
        %p153 = pneg %p30
      $region30: #{d_forward.5} parent=27 // pred_check_branch
        %155 = sbr.rel (%p153) target = $region32
      $region31: #{d_forward.5} parent=27 // pred_region
        %p156 = scmp.lt.s32.totalorder %s10, 1
        %s157 = scalar_select %p156, %s10, 1
        %s158 = smul.addr %s157, 256
        %s159 = smul.addr %s158, 4
        %s160 = scalar_lea.vmem %s0, %s159
      $region32: #{d_forward.5} parent=27 // pred_fallthru
        _
    $region28: #{d_forward.5} parent=5 // pred_fallthru
      _
    %p161 = scmp.le.s32.totalorder 1, %s10
    %p162 = scmp.lt.s32.totalorder %s10, 3
    %p163 = pnand %p161, %p162
    %p164 = pneg %p163
    // Predicated region
    $region33: #{d_forward.5} parent=5 // pred_check
      _
    $region34: #{d_forward.5} parent=5 // pred_check_branch
      %166 = sbr.rel (%p163) target = $region36
    $region35: #{d_forward.5} parent=5 // pred_region
      %s167 = ssub.s32 %s10, 1
      %p168 = scmp.lt.s32.totalorder %s15, 1
      %s169 = scalar_select %p168, %s15, 1
      %s170 = smul.addr %s169, 256
      %s171 = smul.addr %s170, 4
      %s172 = scalar_lea.vmem %s0, %s171
      %p173 = pneg %p36
      %p174 = pneg %p33
      %p175 = pneg %p57
      %p176 = pneg %p54
      %p177 = pneg %p78
      %p178 = pneg %p75
      %p179 = pneg %p99
      %p180 = pneg %p96
      %p181 = pneg %p125
      %p182 = pneg %p122
      %p183 = scmp.lt.s32.totalorder %s15, 1
      %s184 = scalar_select %p183, %s15, 1
      %s185 = smul.addr %s184, 32
      %s186 = smul.addr %s185, 4
      %s187 = scalar_lea.vmem %s4, %s186
      %p188 = scmp.lt.s32.totalorder %s15, 1
      %s189 = scalar_select %p188, %s15, 1
      %s190 = smul.addr %s189, 256
      %s191 = smul.addr %s190, 4
      %s192 = scalar_lea.vmem %s0, %s191
      %p193 = scmp.lt.s32.totalorder %s15, 1
      %s194 = scalar_select %p193, %s15, 1
      %s195 = smul.addr %s194, 32
      %s196 = smul.addr %s195, 4
      %s197 = scalar_lea.vmem %s4, %s196
      %v198 = vld [vmem:[%s192] sm:$0xff]
      %v199 = vld [vmem:[%s192 + $0x8] sm:$0xff]
      %v200 = vld [vmem:[%s192 + $0x10] sm:$0xff]
      %v201 = vld [vmem:[%s192 + $0x18] sm:$0xff]
      %v202 = vld [vmem:[%s192 + $0x20] sm:$0xff]
      %v203 = vld [vmem:[%s192 + $0x28] sm:$0xff]
      %v204 = vld [vmem:[%s192 + $0x30] sm:$0xff]
      %v205 = vld [vmem:[%s192 + $0x38] sm:$0xff]
      %v206 = vld [vmem:[%s192 + $0x40] sm:$0xff]
      %v207 = vld [vmem:[%s192 + $0x48] sm:$0xff]
      %v208 = vld [vmem:[%s192 + $0x50] sm:$0xff]
      %v209 = vld [vmem:[%s192 + $0x58] sm:$0xff]
      %v210 = vld [vmem:[%s192 + $0x60] sm:$0xff]
      %v211 = vld [vmem:[%s192 + $0x68] sm:$0xff]
      %v212 = vld [vmem:[%s192 + $0x70] sm:$0xff]
      %v213 = vld [vmem:[%s192 + $0x78] sm:$0xff]
      %v214 = vld [vmem:[%s192 + $0x80] sm:$0xff]
      %v215 = vld [vmem:[%s192 + $0x88] sm:$0xff]
      %v216 = vld [vmem:[%s192 + $0x90] sm:$0xff]
      %v217 = vld [vmem:[%s192 + $0x98] sm:$0xff]
      %v218 = vld [vmem:[%s192 + $0xa0] sm:$0xff]
      %v219 = vld [vmem:[%s192 + $0xa8] sm:$0xff]
      %v220 = vld [vmem:[%s192 + $0xb0] sm:$0xff]
      %v221 = vld [vmem:[%s192 + $0xb8] sm:$0xff]
      %v222 = vld [vmem:[%s192 + $0xc0] sm:$0xff]
      %v223 = vld [vmem:[%s192 + $0xc8] sm:$0xff]
      %v224 = vld [vmem:[%s192 + $0xd0] sm:$0xff]
      %v225 = vld [vmem:[%s192 + $0xd8] sm:$0xff]
      %v226 = vld [vmem:[%s192 + $0xe0] sm:$0xff]
      %v227 = vld [vmem:[%s192 + $0xe8] sm:$0xff]
      %v228 = vld [vmem:[%s192 + $0xf0] sm:$0xff]
      %v229 = vld [vmem:[%s192 + $0xf8] sm:$0xff]
      %v230 = vld [vmem:[%s192 + $0x100] sm:$0xff]
      %v231 = vld [vmem:[%s192 + $0x108] sm:$0xff]
      %v232 = vld [vmem:[%s192 + $0x110] sm:$0xff]
      %v233 = vld [vmem:[%s192 + $0x118] sm:$0xff]
      %v234 = vld [vmem:[%s192 + $0x120] sm:$0xff]
      %v235 = vld [vmem:[%s192 + $0x128] sm:$0xff]
      %v236 = vld [vmem:[%s192 + $0x130] sm:$0xff]
      %v237 = vld [vmem:[%s192 + $0x138] sm:$0xff]
      %v238 = vld [vmem:[%s192 + $0x140] sm:$0xff]
      %v239 = vld [vmem:[%s192 + $0x148] sm:$0xff]
      %v240 = vld [vmem:[%s192 + $0x150] sm:$0xff]
      %v241 = vld [vmem:[%s192 + $0x158] sm:$0xff]
      %v242 = vld [vmem:[%s192 + $0x160] sm:$0xff]
      %v243 = vld [vmem:[%s192 + $0x168] sm:$0xff]
      %v244 = vld [vmem:[%s192 + $0x170] sm:$0xff]
      %v245 = vld [vmem:[%s192 + $0x178] sm:$0xff]
      %v246 = vld [vmem:[%s192 + $0x180] sm:$0xff]
      %v247 = vld [vmem:[%s192 + $0x188] sm:$0xff]
      %v248 = vld [vmem:[%s192 + $0x190] sm:$0xff]
      %v249 = vld [vmem:[%s192 + $0x198] sm:$0xff]
      %v250 = vld [vmem:[%s192 + $0x1a0] sm:$0xff]
      %v251 = vld [vmem:[%s192 + $0x1a8] sm:$0xff]
      %v252 = vld [vmem:[%s192 + $0x1b0] sm:$0xff]
      %v253 = vld [vmem:[%s192 + $0x1b8] sm:$0xff]
      %v254 = vld [vmem:[%s192 + $0x1c0] sm:$0xff]
      %v255 = vld [vmem:[%s192 + $0x1c8] sm:$0xff]
      %v256 = vld [vmem:[%s192 + $0x1d0] sm:$0xff]
      %v257 = vld [vmem:[%s192 + $0x1d8] sm:$0xff]
      %v258 = vld [vmem:[%s192 + $0x1e0] sm:$0xff]
      %v259 = vld [vmem:[%s192 + $0x1e8] sm:$0xff]
      %v260 = vld [vmem:[%s192 + $0x1f0] sm:$0xff]
      %v261 = vld [vmem:[%s192 + $0x1f8] sm:$0xff]
      %v262 = vld [vmem:[%s192 + $0x200] sm:$0xff]
      %v263 = vld [vmem:[%s192 + $0x208] sm:$0xff]
      %v264 = vld [vmem:[%s192 + $0x210] sm:$0xff]
      %v265 = vld [vmem:[%s192 + $0x218] sm:$0xff]
      %v266 = vld [vmem:[%s192 + $0x220] sm:$0xff]
      %v267 = vld [vmem:[%s192 + $0x228] sm:$0xff]
      %v268 = vld [vmem:[%s192 + $0x230] sm:$0xff]
      %v269 = vld [vmem:[%s192 + $0x238] sm:$0xff]
      %v270 = vld [vmem:[%s192 + $0x240] sm:$0xff]
      %v271 = vld [vmem:[%s192 + $0x248] sm:$0xff]
      %v272 = vld [vmem:[%s192 + $0x250] sm:$0xff]
      %v273 = vld [vmem:[%s192 + $0x258] sm:$0xff]
      %v274 = vld [vmem:[%s192 + $0x260] sm:$0xff]
      %v275 = vld [vmem:[%s192 + $0x268] sm:$0xff]
      %v276 = vld [vmem:[%s192 + $0x270] sm:$0xff]
      %v277 = vld [vmem:[%s192 + $0x278] sm:$0xff]
      %v278 = vld [vmem:[%s192 + $0x280] sm:$0xff]
      %v279 = vld [vmem:[%s192 + $0x288] sm:$0xff]
      %v280 = vld [vmem:[%s192 + $0x290] sm:$0xff]
      %v281 = vld [vmem:[%s192 + $0x298] sm:$0xff]
      %v282 = vld [vmem:[%s192 + $0x2a0] sm:$0xff]
      %v283 = vld [vmem:[%s192 + $0x2a8] sm:$0xff]
      %v284 = vld [vmem:[%s192 + $0x2b0] sm:$0xff]
      %v285 = vld [vmem:[%s192 + $0x2b8] sm:$0xff]
      %v286 = vld [vmem:[%s192 + $0x2c0] sm:$0xff]
      %v287 = vld [vmem:[%s192 + $0x2c8] sm:$0xff]
      %v288 = vld [vmem:[%s192 + $0x2d0] sm:$0xff]
      %v289 = vld [vmem:[%s192 + $0x2d8] sm:$0xff]
      %v290 = vld [vmem:[%s192 + $0x2e0] sm:$0xff]
      %v291 = vld [vmem:[%s192 + $0x2e8] sm:$0xff]
      %v292 = vld [vmem:[%s192 + $0x2f0] sm:$0xff]
      %v293 = vld [vmem:[%s192 + $0x2f8] sm:$0xff]
      %v294 = vld [vmem:[%s192 + $0x300] sm:$0xff]
      %v295 = vld [vmem:[%s192 + $0x308] sm:$0xff]
      %v296 = vld [vmem:[%s192 + $0x310] sm:$0xff]
      %v297 = vld [vmem:[%s192 + $0x318] sm:$0xff]
      %v298 = vld [vmem:[%s192 + $0x320] sm:$0xff]
      %v299 = vld [vmem:[%s192 + $0x328] sm:$0xff]
      %v300 = vld [vmem:[%s192 + $0x330] sm:$0xff]
      %v301 = vld [vmem:[%s192 + $0x338] sm:$0xff]
      %v302 = vld [vmem:[%s192 + $0x340] sm:$0xff]
      %v303 = vld [vmem:[%s192 + $0x348] sm:$0xff]
      %v304 = vld [vmem:[%s192 + $0x350] sm:$0xff]
      %v305 = vld [vmem:[%s192 + $0x358] sm:$0xff]
      %v306 = vld [vmem:[%s192 + $0x360] sm:$0xff]
      %v307 = vld [vmem:[%s192 + $0x368] sm:$0xff]
      %v308 = vld [vmem:[%s192 + $0x370] sm:$0xff]
      %v309 = vld [vmem:[%s192 + $0x378] sm:$0xff]
      %v310 = vld [vmem:[%s192 + $0x380] sm:$0xff]
      %v311 = vld [vmem:[%s192 + $0x388] sm:$0xff]
      %v312 = vld [vmem:[%s192 + $0x390] sm:$0xff]
      %v313 = vld [vmem:[%s192 + $0x398] sm:$0xff]
      %v314 = vld [vmem:[%s192 + $0x3a0] sm:$0xff]
      %v315 = vld [vmem:[%s192 + $0x3a8] sm:$0xff]
      %v316 = vld [vmem:[%s192 + $0x3b0] sm:$0xff]
      %v317 = vld [vmem:[%s192 + $0x3b8] sm:$0xff]
      %v318 = vld [vmem:[%s192 + $0x3c0] sm:$0xff]
      %v319 = vld [vmem:[%s192 + $0x3c8] sm:$0xff]
      %v320 = vld [vmem:[%s192 + $0x3d0] sm:$0xff]
      %v321 = vld [vmem:[%s192 + $0x3d8] sm:$0xff]
      %v322 = vld [vmem:[%s192 + $0x3e0] sm:$0xff]
      %v323 = vld [vmem:[%s192 + $0x3e8] sm:$0xff]
      %v324 = vld [vmem:[%s192 + $0x3f0] sm:$0xff]
      %v325 = vld [vmem:[%s192 + $0x3f8] sm:$0xff]
      %v326 = vld [vmem:[%s1] sm:$0xf]
      %v327 = vld [vmem:[%s1 + $0x4] sm:$0xf]
      %v328 = vld [vmem:[%s1 + $0x8] sm:$0xf]
      %v329 = vld [vmem:[%s1 + $0xc] sm:$0xf]
      %v330 = vld [vmem:[%s1 + $0x10] sm:$0xf]
      %v331 = vld [vmem:[%s1 + $0x14] sm:$0xf]
      %v332 = vld [vmem:[%s1 + $0x18] sm:$0xf]
      %v333 = vld [vmem:[%s1 + $0x1c] sm:$0xf]
      %v334 = vld [vmem:[%s1 + $0x20] sm:$0xf]
      %v335 = vld [vmem:[%s1 + $0x24] sm:$0xf]
      %v336 = vld [vmem:[%s1 + $0x28] sm:$0xf]
      %v337 = vld [vmem:[%s1 + $0x2c] sm:$0xf]
      %v338 = vld [vmem:[%s1 + $0x30] sm:$0xf]
      %v339 = vld [vmem:[%s1 + $0x34] sm:$0xf]
      %v340 = vld [vmem:[%s1 + $0x38] sm:$0xf]
      %v341 = vld [vmem:[%s1 + $0x3c] sm:$0xf]
      %v342 = vld [vmem:[%s1 + $0x40] sm:$0xf]
      %v343 = vld [vmem:[%s1 + $0x44] sm:$0xf]
      %v344 = vld [vmem:[%s1 + $0x48] sm:$0xf]
      %v345 = vld [vmem:[%s1 + $0x4c] sm:$0xf]
      %v346 = vld [vmem:[%s1 + $0x50] sm:$0xf]
      %v347 = vld [vmem:[%s1 + $0x54] sm:$0xf]
      %v348 = vld [vmem:[%s1 + $0x58] sm:$0xf]
      %v349 = vld [vmem:[%s1 + $0x5c] sm:$0xf]
      %v350 = vld [vmem:[%s1 + $0x60] sm:$0xf]
      %v351 = vld [vmem:[%s1 + $0x64] sm:$0xf]
      %v352 = vld [vmem:[%s1 + $0x68] sm:$0xf]
      %v353 = vld [vmem:[%s1 + $0x6c] sm:$0xf]
      %v354 = vld [vmem:[%s1 + $0x70] sm:$0xf]
      %v355 = vld [vmem:[%s1 + $0x74] sm:$0xf]
      %v356 = vld [vmem:[%s1 + $0x78] sm:$0xf]
      %v357 = vld [vmem:[%s1 + $0x7c] sm:$0xf]
      %v358 = vld [vmem:[%s1 + $0x80] sm:$0xf]
      %v359 = vld [vmem:[%s1 + $0x84] sm:$0xf]
      %v360 = vld [vmem:[%s1 + $0x88] sm:$0xf]
      %v361 = vld [vmem:[%s1 + $0x8c] sm:$0xf]
      %v362 = vld [vmem:[%s1 + $0x90] sm:$0xf]
      %v363 = vld [vmem:[%s1 + $0x94] sm:$0xf]
      %v364 = vld [vmem:[%s1 + $0x98] sm:$0xf]
      %v365 = vld [vmem:[%s1 + $0x9c] sm:$0xf]
      %v366 = vld [vmem:[%s1 + $0xa0] sm:$0xf]
      %v367 = vld [vmem:[%s1 + $0xa4] sm:$0xf]
      %v368 = vld [vmem:[%s1 + $0xa8] sm:$0xf]
      %v369 = vld [vmem:[%s1 + $0xac] sm:$0xf]
      %v370 = vld [vmem:[%s1 + $0xb0] sm:$0xf]
      %v371 = vld [vmem:[%s1 + $0xb4] sm:$0xf]
      %v372 = vld [vmem:[%s1 + $0xb8] sm:$0xf]
      %v373 = vld [vmem:[%s1 + $0xbc] sm:$0xf]
      %v374 = vld [vmem:[%s1 + $0xc0] sm:$0xf]
      %v375 = vld [vmem:[%s1 + $0xc4] sm:$0xf]
      %v376 = vld [vmem:[%s1 + $0xc8] sm:$0xf]
      %v377 = vld [vmem:[%s1 + $0xcc] sm:$0xf]
      %v378 = vld [vmem:[%s1 + $0xd0] sm:$0xf]
      %v379 = vld [vmem:[%s1 + $0xd4] sm:$0xf]
      %v380 = vld [vmem:[%s1 + $0xd8] sm:$0xf]
      %v381 = vld [vmem:[%s1 + $0xdc] sm:$0xf]
      %v382 = vld [vmem:[%s1 + $0xe0] sm:$0xf]
      %v383 = vld [vmem:[%s1 + $0xe4] sm:$0xf]
      %v384 = vld [vmem:[%s1 + $0xe8] sm:$0xf]
      %v385 = vld [vmem:[%s1 + $0xec] sm:$0xf]
      %v386 = vld [vmem:[%s1 + $0xf0] sm:$0xf]
      %v387 = vld [vmem:[%s1 + $0xf4] sm:$0xf]
      %v388 = vld [vmem:[%s1 + $0xf8] sm:$0xf]
      %v389 = vld [vmem:[%s1 + $0xfc] sm:$0xf]
      %v390 = vld [vmem:[%s1 + $0x100] sm:$0xf]
      %v391 = vld [vmem:[%s1 + $0x104] sm:$0xf]
      %v392 = vld [vmem:[%s1 + $0x108] sm:$0xf]
      %v393 = vld [vmem:[%s1 + $0x10c] sm:$0xf]
      %v394 = vld [vmem:[%s1 + $0x110] sm:$0xf]
      %v395 = vld [vmem:[%s1 + $0x114] sm:$0xf]
      %v396 = vld [vmem:[%s1 + $0x118] sm:$0xf]
      %v397 = vld [vmem:[%s1 + $0x11c] sm:$0xf]
      %v398 = vld [vmem:[%s1 + $0x120] sm:$0xf]
      %v399 = vld [vmem:[%s1 + $0x124] sm:$0xf]
      %v400 = vld [vmem:[%s1 + $0x128] sm:$0xf]
      %v401 = vld [vmem:[%s1 + $0x12c] sm:$0xf]
      %v402 = vld [vmem:[%s1 + $0x130] sm:$0xf]
      %v403 = vld [vmem:[%s1 + $0x134] sm:$0xf]
      %v404 = vld [vmem:[%s1 + $0x138] sm:$0xf]
      %v405 = vld [vmem:[%s1 + $0x13c] sm:$0xf]
      %v406 = vld [vmem:[%s1 + $0x140] sm:$0xf]
      %v407 = vld [vmem:[%s1 + $0x144] sm:$0xf]
      %v408 = vld [vmem:[%s1 + $0x148] sm:$0xf]
      %v409 = vld [vmem:[%s1 + $0x14c] sm:$0xf]
      %v410 = vld [vmem:[%s1 + $0x150] sm:$0xf]
      %v411 = vld [vmem:[%s1 + $0x154] sm:$0xf]
      %v412 = vld [vmem:[%s1 + $0x158] sm:$0xf]
      %v413 = vld [vmem:[%s1 + $0x15c] sm:$0xf]
      %v414 = vld [vmem:[%s1 + $0x160] sm:$0xf]
      %v415 = vld [vmem:[%s1 + $0x164] sm:$0xf]
      %v416 = vld [vmem:[%s1 + $0x168] sm:$0xf]
      %v417 = vld [vmem:[%s1 + $0x16c] sm:$0xf]
      %v418 = vld [vmem:[%s1 + $0x170] sm:$0xf]
      %v419 = vld [vmem:[%s1 + $0x174] sm:$0xf]
      %v420 = vld [vmem:[%s1 + $0x178] sm:$0xf]
      %v421 = vld [vmem:[%s1 + $0x17c] sm:$0xf]
      %v422 = vld [vmem:[%s1 + $0x180] sm:$0xf]
      %v423 = vld [vmem:[%s1 + $0x184] sm:$0xf]
      %v424 = vld [vmem:[%s1 + $0x188] sm:$0xf]
      %v425 = vld [vmem:[%s1 + $0x18c] sm:$0xf]
      %v426 = vld [vmem:[%s1 + $0x190] sm:$0xf]
      %v427 = vld [vmem:[%s1 + $0x194] sm:$0xf]
      %v428 = vld [vmem:[%s1 + $0x198] sm:$0xf]
      %v429 = vld [vmem:[%s1 + $0x19c] sm:$0xf]
      %v430 = vld [vmem:[%s1 + $0x1a0] sm:$0xf]
      %v431 = vld [vmem:[%s1 + $0x1a4] sm:$0xf]
      %v432 = vld [vmem:[%s1 + $0x1a8] sm:$0xf]
      %v433 = vld [vmem:[%s1 + $0x1ac] sm:$0xf]
      %v434 = vld [vmem:[%s1 + $0x1b0] sm:$0xf]
      %v435 = vld [vmem:[%s1 + $0x1b4] sm:$0xf]
      %v436 = vld [vmem:[%s1 + $0x1b8] sm:$0xf]
      %v437 = vld [vmem:[%s1 + $0x1bc] sm:$0xf]
      %v438 = vld [vmem:[%s1 + $0x1c0] sm:$0xf]
      %v439 = vld [vmem:[%s1 + $0x1c4] sm:$0xf]
      %v440 = vld [vmem:[%s1 + $0x1c8] sm:$0xf]
      %v441 = vld [vmem:[%s1 + $0x1cc] sm:$0xf]
      %v442 = vld [vmem:[%s1 + $0x1d0] sm:$0xf]
      %v443 = vld [vmem:[%s1 + $0x1d4] sm:$0xf]
      %v444 = vld [vmem:[%s1 + $0x1d8] sm:$0xf]
      %v445 = vld [vmem:[%s1 + $0x1dc] sm:$0xf]
      %v446 = vld [vmem:[%s1 + $0x1e0] sm:$0xf]
      %v447 = vld [vmem:[%s1 + $0x1e4] sm:$0xf]
      %v448 = vld [vmem:[%s1 + $0x1e8] sm:$0xf]
      %v449 = vld [vmem:[%s1 + $0x1ec] sm:$0xf]
      %v450 = vld [vmem:[%s1 + $0x1f0] sm:$0xf]
      %v451 = vld [vmem:[%s1 + $0x1f4] sm:$0xf]
      %v452 = vld [vmem:[%s1 + $0x1f8] sm:$0xf]
      %v453 = vld [vmem:[%s1 + $0x1fc] sm:$0xf]
      %v582 = vunpack.c.l.b16 %v198
      %v583 = vunpack.c.h.b16 %v198
      %v584 = vunpack.c.l.b16 %v199
      %v585 = vunpack.c.h.b16 %v199
      %v586 = vunpack.c.l.b16 %v200
      %v587 = vunpack.c.h.b16 %v200
      %v588 = vunpack.c.l.b16 %v201
      %v589 = vunpack.c.h.b16 %v201
      %v590 = vunpack.c.l.b16 %v202
      %v591 = vunpack.c.h.b16 %v202
      %v592 = vunpack.c.l.b16 %v203
      %v593 = vunpack.c.h.b16 %v203
      %v594 = vunpack.c.l.b16 %v204
      %v595 = vunpack.c.h.b16 %v204
      %v596 = vunpack.c.l.b16 %v205
      %v597 = vunpack.c.h.b16 %v205
      %v598 = vunpack.c.l.b16 %v206
      %v599 = vunpack.c.h.b16 %v206
      %v600 = vunpack.c.l.b16 %v207
      %v601 = vunpack.c.h.b16 %v207
      %v602 = vunpack.c.l.b16 %v208
      %v603 = vunpack.c.h.b16 %v208
      %v604 = vunpack.c.l.b16 %v209
      %v605 = vunpack.c.h.b16 %v209
      %v606 = vunpack.c.l.b16 %v210
      %v607 = vunpack.c.h.b16 %v210
      %v608 = vunpack.c.l.b16 %v211
      %v609 = vunpack.c.h.b16 %v211
      %v610 = vunpack.c.l.b16 %v212
      %v611 = vunpack.c.h.b16 %v212
      %v612 = vunpack.c.l.b16 %v213
      %v613 = vunpack.c.h.b16 %v213
      %v614 = vunpack.c.l.b16 %v214
      %v615 = vunpack.c.h.b16 %v214
      %v616 = vunpack.c.l.b16 %v215
      %v617 = vunpack.c.h.b16 %v215
      %v618 = vunpack.c.l.b16 %v216
      %v619 = vunpack.c.h.b16 %v216
      %v620 = vunpack.c.l.b16 %v217
      %v621 = vunpack.c.h.b16 %v217
      %v622 = vunpack.c.l.b16 %v218
      %v623 = vunpack.c.h.b16 %v218
      %v624 = vunpack.c.l.b16 %v219
      %v625 = vunpack.c.h.b16 %v219
      %v626 = vunpack.c.l.b16 %v220
      %v627 = vunpack.c.h.b16 %v220
      %v628 = vunpack.c.l.b16 %v221
      %v629 = vunpack.c.h.b16 %v221
      %v630 = vunpack.c.l.b16 %v222
      %v631 = vunpack.c.h.b16 %v222
      %v632 = vunpack.c.l.b16 %v223
      %v633 = vunpack.c.h.b16 %v223
      %v634 = vunpack.c.l.b16 %v224
      %v635 = vunpack.c.h.b16 %v224
      %v636 = vunpack.c.l.b16 %v225
      %v637 = vunpack.c.h.b16 %v225
      %v638 = vunpack.c.l.b16 %v226
      %v639 = vunpack.c.h.b16 %v226
      %v640 = vunpack.c.l.b16 %v227
      %v641 = vunpack.c.h.b16 %v227
      %v642 = vunpack.c.l.b16 %v228
      %v643 = vunpack.c.h.b16 %v228
      %v644 = vunpack.c.l.b16 %v229
      %v645 = vunpack.c.h.b16 %v229
      %v646 = vunpack.c.l.b16 %v230
      %v647 = vunpack.c.h.b16 %v230
      %v648 = vunpack.c.l.b16 %v231
      %v649 = vunpack.c.h.b16 %v231
      %v650 = vunpack.c.l.b16 %v232
      %v651 = vunpack.c.h.b16 %v232
      %v652 = vunpack.c.l.b16 %v233
      %v653 = vunpack.c.h.b16 %v233
      %v654 = vunpack.c.l.b16 %v234
      %v655 = vunpack.c.h.b16 %v234
      %v656 = vunpack.c.l.b16 %v235
      %v657 = vunpack.c.h.b16 %v235
      %v658 = vunpack.c.l.b16 %v236
      %v659 = vunpack.c.h.b16 %v236
      %v660 = vunpack.c.l.b16 %v237
      %v661 = vunpack.c.h.b16 %v237
      %v662 = vunpack.c.l.b16 %v238
      %v663 = vunpack.c.h.b16 %v238
      %v664 = vunpack.c.l.b16 %v239
      %v665 = vunpack.c.h.b16 %v239
      %v666 = vunpack.c.l.b16 %v240
      %v667 = vunpack.c.h.b16 %v240
      %v668 = vunpack.c.l.b16 %v241
      %v669 = vunpack.c.h.b16 %v241
      %v670 = vunpack.c.l.b16 %v242
      %v671 = vunpack.c.h.b16 %v242
      %v672 = vunpack.c.l.b16 %v243
      %v673 = vunpack.c.h.b16 %v243
      %v674 = vunpack.c.l.b16 %v244
      %v675 = vunpack.c.h.b16 %v244
      %v676 = vunpack.c.l.b16 %v245
      %v677 = vunpack.c.h.b16 %v245
      %v678 = vunpack.c.l.b16 %v246
      %v679 = vunpack.c.h.b16 %v246
      %v680 = vunpack.c.l.b16 %v247
      %v681 = vunpack.c.h.b16 %v247
      %v682 = vunpack.c.l.b16 %v248
      %v683 = vunpack.c.h.b16 %v248
      %v684 = vunpack.c.l.b16 %v249
      %v685 = vunpack.c.h.b16 %v249
      %v686 = vunpack.c.l.b16 %v250
      %v687 = vunpack.c.h.b16 %v250
      %v688 = vunpack.c.l.b16 %v251
      %v689 = vunpack.c.h.b16 %v251
      %v690 = vunpack.c.l.b16 %v252
      %v691 = vunpack.c.h.b16 %v252
      %v692 = vunpack.c.l.b16 %v253
      %v693 = vunpack.c.h.b16 %v253
      %v694 = vunpack.c.l.b16 %v254
      %v695 = vunpack.c.h.b16 %v254
      %v696 = vunpack.c.l.b16 %v255
      %v697 = vunpack.c.h.b16 %v255
      %v698 = vunpack.c.l.b16 %v256
      %v699 = vunpack.c.h.b16 %v256
      %v700 = vunpack.c.l.b16 %v257
      %v701 = vunpack.c.h.b16 %v257
      %v702 = vunpack.c.l.b16 %v258
      %v703 = vunpack.c.h.b16 %v258
      %v704 = vunpack.c.l.b16 %v259
      %v705 = vunpack.c.h.b16 %v259
      %v706 = vunpack.c.l.b16 %v260
      %v707 = vunpack.c.h.b16 %v260
      %v708 = vunpack.c.l.b16 %v261
      %v709 = vunpack.c.h.b16 %v261
      %v710 = vunpack.c.l.b16 %v262
      %v711 = vunpack.c.h.b16 %v262
      %v712 = vunpack.c.l.b16 %v263
      %v713 = vunpack.c.h.b16 %v263
      %v714 = vunpack.c.l.b16 %v264
      %v715 = vunpack.c.h.b16 %v264
      %v716 = vunpack.c.l.b16 %v265
      %v717 = vunpack.c.h.b16 %v265
      %v718 = vunpack.c.l.b16 %v266
      %v719 = vunpack.c.h.b16 %v266
      %v720 = vunpack.c.l.b16 %v267
      %v721 = vunpack.c.h.b16 %v267
      %v722 = vunpack.c.l.b16 %v268
      %v723 = vunpack.c.h.b16 %v268
      %v724 = vunpack.c.l.b16 %v269
      %v725 = vunpack.c.h.b16 %v269
      %v726 = vunpack.c.l.b16 %v270
      %v727 = vunpack.c.h.b16 %v270
      %v728 = vunpack.c.l.b16 %v271
      %v729 = vunpack.c.h.b16 %v271
      %v730 = vunpack.c.l.b16 %v272
      %v731 = vunpack.c.h.b16 %v272
      %v732 = vunpack.c.l.b16 %v273
      %v733 = vunpack.c.h.b16 %v273
      %v734 = vunpack.c.l.b16 %v274
      %v735 = vunpack.c.h.b16 %v274
      %v736 = vunpack.c.l.b16 %v275
      %v737 = vunpack.c.h.b16 %v275
      %v738 = vunpack.c.l.b16 %v276
      %v739 = vunpack.c.h.b16 %v276
      %v740 = vunpack.c.l.b16 %v277
      %v741 = vunpack.c.h.b16 %v277
      %v742 = vunpack.c.l.b16 %v278
      %v743 = vunpack.c.h.b16 %v278
      %v744 = vunpack.c.l.b16 %v279
      %v745 = vunpack.c.h.b16 %v279
      %v746 = vunpack.c.l.b16 %v280
      %v747 = vunpack.c.h.b16 %v280
      %v748 = vunpack.c.l.b16 %v281
      %v749 = vunpack.c.h.b16 %v281
      %v750 = vunpack.c.l.b16 %v282
      %v751 = vunpack.c.h.b16 %v282
      %v752 = vunpack.c.l.b16 %v283
      %v753 = vunpack.c.h.b16 %v283
      %v754 = vunpack.c.l.b16 %v284
      %v755 = vunpack.c.h.b16 %v284
      %v756 = vunpack.c.l.b16 %v285
      %v757 = vunpack.c.h.b16 %v285
      %v758 = vunpack.c.l.b16 %v286
      %v759 = vunpack.c.h.b16 %v286
      %v760 = vunpack.c.l.b16 %v287
      %v761 = vunpack.c.h.b16 %v287
      %v762 = vunpack.c.l.b16 %v288
      %v763 = vunpack.c.h.b16 %v288
      %v764 = vunpack.c.l.b16 %v289
      %v765 = vunpack.c.h.b16 %v289
      %v766 = vunpack.c.l.b16 %v290
      %v767 = vunpack.c.h.b16 %v290
      %v768 = vunpack.c.l.b16 %v291
      %v769 = vunpack.c.h.b16 %v291
      %v770 = vunpack.c.l.b16 %v292
      %v771 = vunpack.c.h.b16 %v292
      %v772 = vunpack.c.l.b16 %v293
      %v773 = vunpack.c.h.b16 %v293
      %v774 = vunpack.c.l.b16 %v294
      %v775 = vunpack.c.h.b16 %v294
      %v776 = vunpack.c.l.b16 %v295
      %v777 = vunpack.c.h.b16 %v295
      %v778 = vunpack.c.l.b16 %v296
      %v779 = vunpack.c.h.b16 %v296
      %v780 = vunpack.c.l.b16 %v297
      %v781 = vunpack.c.h.b16 %v297
      %v782 = vunpack.c.l.b16 %v298
      %v783 = vunpack.c.h.b16 %v298
      %v784 = vunpack.c.l.b16 %v299
      %v785 = vunpack.c.h.b16 %v299
      %v786 = vunpack.c.l.b16 %v300
      %v787 = vunpack.c.h.b16 %v300
      %v788 = vunpack.c.l.b16 %v301
      %v789 = vunpack.c.h.b16 %v301
      %v790 = vunpack.c.l.b16 %v302
      %v791 = vunpack.c.h.b16 %v302
      %v792 = vunpack.c.l.b16 %v303
      %v793 = vunpack.c.h.b16 %v303
      %v794 = vunpack.c.l.b16 %v304
      %v795 = vunpack.c.h.b16 %v304
      %v796 = vunpack.c.l.b16 %v305
      %v797 = vunpack.c.h.b16 %v305
      %v798 = vunpack.c.l.b16 %v306
      %v799 = vunpack.c.h.b16 %v306
      %v800 = vunpack.c.l.b16 %v307
      %v801 = vunpack.c.h.b16 %v307
      %v802 = vunpack.c.l.b16 %v308
      %v803 = vunpack.c.h.b16 %v308
      %v804 = vunpack.c.l.b16 %v309
      %v805 = vunpack.c.h.b16 %v309
      %v806 = vunpack.c.l.b16 %v310
      %v807 = vunpack.c.h.b16 %v310
      %v808 = vunpack.c.l.b16 %v311
      %v809 = vunpack.c.h.b16 %v311
      %v810 = vunpack.c.l.b16 %v312
      %v811 = vunpack.c.h.b16 %v312
      %v812 = vunpack.c.l.b16 %v313
      %v813 = vunpack.c.h.b16 %v313
      %v814 = vunpack.c.l.b16 %v314
      %v815 = vunpack.c.h.b16 %v314
      %v816 = vunpack.c.l.b16 %v315
      %v817 = vunpack.c.h.b16 %v315
      %v818 = vunpack.c.l.b16 %v316
      %v819 = vunpack.c.h.b16 %v316
      %v820 = vunpack.c.l.b16 %v317
      %v821 = vunpack.c.h.b16 %v317
      %v822 = vunpack.c.l.b16 %v318
      %v823 = vunpack.c.h.b16 %v318
      %v824 = vunpack.c.l.b16 %v319
      %v825 = vunpack.c.h.b16 %v319
      %v826 = vunpack.c.l.b16 %v320
      %v827 = vunpack.c.h.b16 %v320
      %v828 = vunpack.c.l.b16 %v321
      %v829 = vunpack.c.h.b16 %v321
      %v830 = vunpack.c.l.b16 %v322
      %v831 = vunpack.c.h.b16 %v322
      %v832 = vunpack.c.l.b16 %v323
      %v833 = vunpack.c.h.b16 %v323
      %v834 = vunpack.c.l.b16 %v324
      %v835 = vunpack.c.h.b16 %v324
      %v836 = vunpack.c.l.b16 %v325
      %v837 = vunpack.c.h.b16 %v325
      %v838 = vpack.c.b16 %v590, %v582
      %v839 = vpack.c.b16 %v591, %v583
      %v840 = vpack.c.b16 %v592, %v584
      %v841 = vpack.c.b16 %v593, %v585
      %v842 = vpack.c.b16 %v594, %v586
      %v843 = vpack.c.b16 %v595, %v587
      %v844 = vpack.c.b16 %v596, %v588
      %v845 = vpack.c.b16 %v597, %v589
      %v846 = vpack.c.b16 %v606, %v598
      %v847 = vpack.c.b16 %v607, %v599
      %v848 = vpack.c.b16 %v608, %v600
      %v849 = vpack.c.b16 %v609, %v601
      %v850 = vpack.c.b16 %v610, %v602
      %v851 = vpack.c.b16 %v611, %v603
      %v852 = vpack.c.b16 %v612, %v604
      %v853 = vpack.c.b16 %v613, %v605
      %v854 = vpack.c.b16 %v622, %v614
      %v855 = vpack.c.b16 %v623, %v615
      %v856 = vpack.c.b16 %v624, %v616
      %v857 = vpack.c.b16 %v625, %v617
      %v858 = vpack.c.b16 %v626, %v618
      %v859 = vpack.c.b16 %v627, %v619
      %v860 = vpack.c.b16 %v628, %v620
      %v861 = vpack.c.b16 %v629, %v621
      %v862 = vpack.c.b16 %v638, %v630
      %v863 = vpack.c.b16 %v639, %v631
      %v864 = vpack.c.b16 %v640, %v632
      %v865 = vpack.c.b16 %v641, %v633
      %v866 = vpack.c.b16 %v642, %v634
      %v867 = vpack.c.b16 %v643, %v635
      %v868 = vpack.c.b16 %v644, %v636
      %v869 = vpack.c.b16 %v645, %v637
      %v870 = vpack.c.b16 %v654, %v646
      %v871 = vpack.c.b16 %v655, %v647
      %v872 = vpack.c.b16 %v656, %v648
      %v873 = vpack.c.b16 %v657, %v649
      %v874 = vpack.c.b16 %v658, %v650
      %v875 = vpack.c.b16 %v659, %v651
      %v876 = vpack.c.b16 %v660, %v652
      %v877 = vpack.c.b16 %v661, %v653
      %v878 = vpack.c.b16 %v670, %v662
      %v879 = vpack.c.b16 %v671, %v663
      %v880 = vpack.c.b16 %v672, %v664
      %v881 = vpack.c.b16 %v673, %v665
      %v882 = vpack.c.b16 %v674, %v666
      %v883 = vpack.c.b16 %v675, %v667
      %v884 = vpack.c.b16 %v676, %v668
      %v885 = vpack.c.b16 %v677, %v669
      %v886 = vpack.c.b16 %v686, %v678
      %v887 = vpack.c.b16 %v687, %v679
      %v888 = vpack.c.b16 %v688, %v680
      %v889 = vpack.c.b16 %v689, %v681
      %v890 = vpack.c.b16 %v690, %v682
      %v891 = vpack.c.b16 %v691, %v683
      %v892 = vpack.c.b16 %v692, %v684
      %v893 = vpack.c.b16 %v693, %v685
      %v894 = vpack.c.b16 %v702, %v694
      %v895 = vpack.c.b16 %v703, %v695
      %v896 = vpack.c.b16 %v704, %v696
      %v897 = vpack.c.b16 %v705, %v697
      %v898 = vpack.c.b16 %v706, %v698
      %v899 = vpack.c.b16 %v707, %v699
      %v900 = vpack.c.b16 %v708, %v700
      %v901 = vpack.c.b16 %v709, %v701
      %v902 = vpack.c.b16 %v718, %v710
      %v903 = vpack.c.b16 %v719, %v711
      %v904 = vpack.c.b16 %v720, %v712
      %v905 = vpack.c.b16 %v721, %v713
      %v906 = vpack.c.b16 %v722, %v714
      %v907 = vpack.c.b16 %v723, %v715
      %v908 = vpack.c.b16 %v724, %v716
      %v909 = vpack.c.b16 %v725, %v717
      %v910 = vpack.c.b16 %v734, %v726
      %v911 = vpack.c.b16 %v735, %v727
      %v912 = vpack.c.b16 %v736, %v728
      %v913 = vpack.c.b16 %v737, %v729
      %v914 = vpack.c.b16 %v738, %v730
      %v915 = vpack.c.b16 %v739, %v731
      %v916 = vpack.c.b16 %v740, %v732
      %v917 = vpack.c.b16 %v741, %v733
      %v918 = vpack.c.b16 %v750, %v742
      %v919 = vpack.c.b16 %v751, %v743
      %v920 = vpack.c.b16 %v752, %v744
      %v921 = vpack.c.b16 %v753, %v745
      %v922 = vpack.c.b16 %v754, %v746
      %v923 = vpack.c.b16 %v755, %v747
      %v924 = vpack.c.b16 %v756, %v748
      %v925 = vpack.c.b16 %v757, %v749
      %v926 = vpack.c.b16 %v766, %v758
      %v927 = vpack.c.b16 %v767, %v759
      %v928 = vpack.c.b16 %v768, %v760
      %v929 = vpack.c.b16 %v769, %v761
      %v930 = vpack.c.b16 %v770, %v762
      %v931 = vpack.c.b16 %v771, %v763
      %v932 = vpack.c.b16 %v772, %v764
      %v933 = vpack.c.b16 %v773, %v765
      %v934 = vpack.c.b16 %v782, %v774
      %v935 = vpack.c.b16 %v783, %v775
      %v936 = vpack.c.b16 %v784, %v776
      %v937 = vpack.c.b16 %v785, %v777
      %v938 = vpack.c.b16 %v786, %v778
      %v939 = vpack.c.b16 %v787, %v779
      %v940 = vpack.c.b16 %v788, %v780
      %v941 = vpack.c.b16 %v789, %v781
      %v942 = vpack.c.b16 %v798, %v790
      %v943 = vpack.c.b16 %v799, %v791
      %v944 = vpack.c.b16 %v800, %v792
      %v945 = vpack.c.b16 %v801, %v793
      %v946 = vpack.c.b16 %v802, %v794
      %v947 = vpack.c.b16 %v803, %v795
      %v948 = vpack.c.b16 %v804, %v796
      %v949 = vpack.c.b16 %v805, %v797
      %v950 = vpack.c.b16 %v814, %v806
      %v951 = vpack.c.b16 %v815, %v807
      %v952 = vpack.c.b16 %v816, %v808
      %v953 = vpack.c.b16 %v817, %v809
      %v954 = vpack.c.b16 %v818, %v810
      %v955 = vpack.c.b16 %v819, %v811
      %v956 = vpack.c.b16 %v820, %v812
      %v957 = vpack.c.b16 %v821, %v813
      %v958 = vpack.c.b16 %v830, %v822
      %v959 = vpack.c.b16 %v831, %v823
      %v960 = vpack.c.b16 %v832, %v824
      %v961 = vpack.c.b16 %v833, %v825
      %v962 = vpack.c.b16 %v834, %v826
      %v963 = vpack.c.b16 %v835, %v827
      %v964 = vpack.c.b16 %v836, %v828
      %v965 = vpack.c.b16 %v837, %v829
      %v1222 = vunpack.c.l.b16 %v326
      %v1223 = vunpack.c.l.b16 %v327
      %v1224 = vunpack.c.l.b16 %v328
      %v1225 = vunpack.c.l.b16 %v329
      %v1226 = vunpack.c.l.b16 %v330
      %v1227 = vunpack.c.l.b16 %v331
      %v1228 = vunpack.c.l.b16 %v332
      %v1229 = vunpack.c.l.b16 %v333
      %v1230 = vunpack.c.l.b16 %v334
      %v1231 = vunpack.c.l.b16 %v335
      %v1232 = vunpack.c.l.b16 %v336
      %v1233 = vunpack.c.l.b16 %v337
      %v1234 = vunpack.c.l.b16 %v338
      %v1235 = vunpack.c.l.b16 %v339
      %v1236 = vunpack.c.l.b16 %v340
      %v1237 = vunpack.c.l.b16 %v341
      %v1238 = vunpack.c.l.b16 %v342
      %v1239 = vunpack.c.l.b16 %v343
      %v1240 = vunpack.c.l.b16 %v344
      %v1241 = vunpack.c.l.b16 %v345
      %v1242 = vunpack.c.l.b16 %v346
      %v1243 = vunpack.c.l.b16 %v347
      %v1244 = vunpack.c.l.b16 %v348
      %v1245 = vunpack.c.l.b16 %v349
      %v1246 = vunpack.c.l.b16 %v350
      %v1247 = vunpack.c.l.b16 %v351
      %v1248 = vunpack.c.l.b16 %v352
      %v1249 = vunpack.c.l.b16 %v353
      %v1250 = vunpack.c.l.b16 %v354
      %v1251 = vunpack.c.l.b16 %v355
      %v1252 = vunpack.c.l.b16 %v356
      %v1253 = vunpack.c.l.b16 %v357
      %v1254 = vunpack.c.l.b16 %v358
      %v1255 = vunpack.c.l.b16 %v359
      %v1256 = vunpack.c.l.b16 %v360
      %v1257 = vunpack.c.l.b16 %v361
      %v1258 = vunpack.c.l.b16 %v362
      %v1259 = vunpack.c.l.b16 %v363
      %v1260 = vunpack.c.l.b16 %v364
      %v1261 = vunpack.c.l.b16 %v365
      %v1262 = vunpack.c.l.b16 %v366
      %v1263 = vunpack.c.l.b16 %v367
      %v1264 = vunpack.c.l.b16 %v368
      %v1265 = vunpack.c.l.b16 %v369
      %v1266 = vunpack.c.l.b16 %v370
      %v1267 = vunpack.c.l.b16 %v371
      %v1268 = vunpack.c.l.b16 %v372
      %v1269 = vunpack.c.l.b16 %v373
      %v1270 = vunpack.c.l.b16 %v374
      %v1271 = vunpack.c.l.b16 %v375
      %v1272 = vunpack.c.l.b16 %v376
      %v1273 = vunpack.c.l.b16 %v377
      %v1274 = vunpack.c.l.b16 %v378
      %v1275 = vunpack.c.l.b16 %v379
      %v1276 = vunpack.c.l.b16 %v380
      %v1277 = vunpack.c.l.b16 %v381
      %v1278 = vunpack.c.l.b16 %v382
      %v1279 = vunpack.c.l.b16 %v383
      %v1280 = vunpack.c.l.b16 %v384
      %v1281 = vunpack.c.l.b16 %v385
      %v1282 = vunpack.c.l.b16 %v386
      %v1283 = vunpack.c.l.b16 %v387
      %v1284 = vunpack.c.l.b16 %v388
      %v1285 = vunpack.c.l.b16 %v389
      %v1286 = vunpack.c.l.b16 %v390
      %v1287 = vunpack.c.l.b16 %v391
      %v1288 = vunpack.c.l.b16 %v392
      %v1289 = vunpack.c.l.b16 %v393
      %v1290 = vunpack.c.l.b16 %v394
      %v1291 = vunpack.c.l.b16 %v395
      %v1292 = vunpack.c.l.b16 %v396
      %v1293 = vunpack.c.l.b16 %v397
      %v1294 = vunpack.c.l.b16 %v398
      %v1295 = vunpack.c.l.b16 %v399
      %v1296 = vunpack.c.l.b16 %v400
      %v1297 = vunpack.c.l.b16 %v401
      %v1298 = vunpack.c.l.b16 %v402
      %v1299 = vunpack.c.l.b16 %v403
      %v1300 = vunpack.c.l.b16 %v404
      %v1301 = vunpack.c.l.b16 %v405
      %v1302 = vunpack.c.l.b16 %v406
      %v1303 = vunpack.c.l.b16 %v407
      %v1304 = vunpack.c.l.b16 %v408
      %v1305 = vunpack.c.l.b16 %v409
      %v1306 = vunpack.c.l.b16 %v410
      %v1307 = vunpack.c.l.b16 %v411
      %v1308 = vunpack.c.l.b16 %v412
      %v1309 = vunpack.c.l.b16 %v413
      %v1310 = vunpack.c.l.b16 %v414
      %v1311 = vunpack.c.l.b16 %v415
      %v1312 = vunpack.c.l.b16 %v416
      %v1313 = vunpack.c.l.b16 %v417
      %v1314 = vunpack.c.l.b16 %v418
      %v1315 = vunpack.c.l.b16 %v419
      %v1316 = vunpack.c.l.b16 %v420
      %v1317 = vunpack.c.l.b16 %v421
      %v1318 = vunpack.c.l.b16 %v422
      %v1319 = vunpack.c.l.b16 %v423
      %v1320 = vunpack.c.l.b16 %v424
      %v1321 = vunpack.c.l.b16 %v425
      %v1322 = vunpack.c.l.b16 %v426
      %v1323 = vunpack.c.l.b16 %v427
      %v1324 = vunpack.c.l.b16 %v428
      %v1325 = vunpack.c.l.b16 %v429
      %v1326 = vunpack.c.l.b16 %v430
      %v1327 = vunpack.c.l.b16 %v431
      %v1328 = vunpack.c.l.b16 %v432
      %v1329 = vunpack.c.l.b16 %v433
      %v1330 = vunpack.c.l.b16 %v434
      %v1331 = vunpack.c.l.b16 %v435
      %v1332 = vunpack.c.l.b16 %v436
      %v1333 = vunpack.c.l.b16 %v437
      %v1334 = vunpack.c.l.b16 %v438
      %v1335 = vunpack.c.l.b16 %v439
      %v1336 = vunpack.c.l.b16 %v440
      %v1337 = vunpack.c.l.b16 %v441
      %v1338 = vunpack.c.l.b16 %v442
      %v1339 = vunpack.c.l.b16 %v443
      %v1340 = vunpack.c.l.b16 %v444
      %v1341 = vunpack.c.l.b16 %v445
      %v1342 = vunpack.c.l.b16 %v446
      %v1343 = vunpack.c.l.b16 %v447
      %v1344 = vunpack.c.l.b16 %v448
      %v1345 = vunpack.c.l.b16 %v449
      %v1346 = vunpack.c.l.b16 %v450
      %v1347 = vunpack.c.l.b16 %v451
      %v1348 = vunpack.c.l.b16 %v452
      %v1349 = vunpack.c.l.b16 %v453
      %v1350 = vpack.c.b16 %v1223, %v1222
      %v1351 = vpack.c.b16 %v1225, %v1224
      %v1352 = vpack.c.b16 %v1227, %v1226
      %v1353 = vpack.c.b16 %v1229, %v1228
      %v1354 = vpack.c.b16 %v1231, %v1230
      %v1355 = vpack.c.b16 %v1233, %v1232
      %v1356 = vpack.c.b16 %v1235, %v1234
      %v1357 = vpack.c.b16 %v1237, %v1236
      %v1358 = vpack.c.b16 %v1239, %v1238
      %v1359 = vpack.c.b16 %v1241, %v1240
      %v1360 = vpack.c.b16 %v1243, %v1242
      %v1361 = vpack.c.b16 %v1245, %v1244
      %v1362 = vpack.c.b16 %v1247, %v1246
      %v1363 = vpack.c.b16 %v1249, %v1248
      %v1364 = vpack.c.b16 %v1251, %v1250
      %v1365 = vpack.c.b16 %v1253, %v1252
      %v1366 = vpack.c.b16 %v1255, %v1254
      %v1367 = vpack.c.b16 %v1257, %v1256
      %v1368 = vpack.c.b16 %v1259, %v1258
      %v1369 = vpack.c.b16 %v1261, %v1260
      %v1370 = vpack.c.b16 %v1263, %v1262
      %v1371 = vpack.c.b16 %v1265, %v1264
      %v1372 = vpack.c.b16 %v1267, %v1266
      %v1373 = vpack.c.b16 %v1269, %v1268
      %v1374 = vpack.c.b16 %v1271, %v1270
      %v1375 = vpack.c.b16 %v1273, %v1272
      %v1376 = vpack.c.b16 %v1275, %v1274
      %v1377 = vpack.c.b16 %v1277, %v1276
      %v1378 = vpack.c.b16 %v1279, %v1278
      %v1379 = vpack.c.b16 %v1281, %v1280
      %v1380 = vpack.c.b16 %v1283, %v1282
      %v1381 = vpack.c.b16 %v1285, %v1284
      %v1382 = vpack.c.b16 %v1287, %v1286
      %v1383 = vpack.c.b16 %v1289, %v1288
      %v1384 = vpack.c.b16 %v1291, %v1290
      %v1385 = vpack.c.b16 %v1293, %v1292
      %v1386 = vpack.c.b16 %v1295, %v1294
      %v1387 = vpack.c.b16 %v1297, %v1296
      %v1388 = vpack.c.b16 %v1299, %v1298
      %v1389 = vpack.c.b16 %v1301, %v1300
      %v1390 = vpack.c.b16 %v1303, %v1302
      %v1391 = vpack.c.b16 %v1305, %v1304
      %v1392 = vpack.c.b16 %v1307, %v1306
      %v1393 = vpack.c.b16 %v1309, %v1308
      %v1394 = vpack.c.b16 %v1311, %v1310
      %v1395 = vpack.c.b16 %v1313, %v1312
      %v1396 = vpack.c.b16 %v1315, %v1314
      %v1397 = vpack.c.b16 %v1317, %v1316
      %v1398 = vpack.c.b16 %v1319, %v1318
      %v1399 = vpack.c.b16 %v1321, %v1320
      %v1400 = vpack.c.b16 %v1323, %v1322
      %v1401 = vpack.c.b16 %v1325, %v1324
      %v1402 = vpack.c.b16 %v1327, %v1326
      %v1403 = vpack.c.b16 %v1329, %v1328
      %v1404 = vpack.c.b16 %v1331, %v1330
      %v1405 = vpack.c.b16 %v1333, %v1332
      %v1406 = vpack.c.b16 %v1335, %v1334
      %v1407 = vpack.c.b16 %v1337, %v1336
      %v1408 = vpack.c.b16 %v1339, %v1338
      %v1409 = vpack.c.b16 %v1341, %v1340
      %v1410 = vpack.c.b16 %v1343, %v1342
      %v1411 = vpack.c.b16 %v1345, %v1344
      %v1412 = vpack.c.b16 %v1347, %v1346
      %v1413 = vpack.c.b16 %v1349, %v1348
      %1478 = vmatpush.bf16.msra.mxu0 %v1357
      %1479 = vmatpush.bf16.msra.mxu0 %v1356
      %1480 = vmatpush.bf16.msra.mxu0 %v1355
      %1481 = vmatpush.bf16.msra.mxu0 %v1354
      %1482 = vmatpush.bf16.msra.mxu0 %v1353
      %1483 = vmatpush.bf16.msra.mxu0 %v1352
      %1484 = vmatpush.bf16.msra.mxu0 %v1351
      %1485 = vmatpush.bf16.msra.mxu0 %v1350
      %1486 = vmatmul.bf16.gmra.mxu0 %v838
      %v1487 = vpop.f32.mrf.mxu0
      %v1488 = vadd.f32 0.0, %v1487
      %v1489 = vpop.f32.mrf.mxu0
      %v1490 = vadd.f32 0.0, %v1489
      %1491 = vmatmul.bf16.gmra.mxu0 %v846
      %v1492 = vpop.f32.mrf.mxu0
      %v1493 = vadd.f32 0.0, %v1492
      %v1494 = vpop.f32.mrf.mxu0
      %v1495 = vadd.f32 0.0, %v1494
      %1496 = vmatmul.bf16.gmra.mxu0 %v854
      %v1497 = vpop.f32.mrf.mxu0
      %v1498 = vadd.f32 0.0, %v1497
      %v1499 = vpop.f32.mrf.mxu0
      %v1500 = vadd.f32 0.0, %v1499
      %1501 = vmatmul.bf16.gmra.mxu0 %v862
      %v1502 = vpop.f32.mrf.mxu0
      %v1503 = vadd.f32 0.0, %v1502
      %v1504 = vpop.f32.mrf.mxu0
      %v1505 = vadd.f32 0.0, %v1504
      %1506 = vmatmul.bf16.gmra.mxu0 %v870
      %v1507 = vpop.f32.mrf.mxu0
      %v1508 = vadd.f32 0.0, %v1507
      %v1509 = vpop.f32.mrf.mxu0
      %v1510 = vadd.f32 0.0, %v1509
      %1511 = vmatmul.bf16.gmra.mxu0 %v878
      %v1512 = vpop.f32.mrf.mxu0
      %v1513 = vadd.f32 0.0, %v1512
      %v1514 = vpop.f32.mrf.mxu0
      %v1515 = vadd.f32 0.0, %v1514
      %1516 = vmatmul.bf16.gmra.mxu0 %v886
      %v1517 = vpop.f32.mrf.mxu0
      %v1518 = vadd.f32 0.0, %v1517
      %v1519 = vpop.f32.mrf.mxu0
      %v1520 = vadd.f32 0.0, %v1519
      %1521 = vmatmul.bf16.gmra.mxu0 %v894
      %v1522 = vpop.f32.mrf.mxu0
      %v1523 = vadd.f32 0.0, %v1522
      %v1524 = vpop.f32.mrf.mxu0
      %v1525 = vadd.f32 0.0, %v1524
      %1526 = vmatmul.bf16.gmra.mxu0 %v902
      %v1527 = vpop.f32.mrf.mxu0
      %v1528 = vadd.f32 0.0, %v1527
      %v1529 = vpop.f32.mrf.mxu0
      %v1530 = vadd.f32 0.0, %v1529
      %1531 = vmatmul.bf16.gmra.mxu0 %v910
      %v1532 = vpop.f32.mrf.mxu0
      %v1533 = vadd.f32 0.0, %v1532
      %v1534 = vpop.f32.mrf.mxu0
      %v1535 = vadd.f32 0.0, %v1534
      %1536 = vmatmul.bf16.gmra.mxu0 %v918
      %v1537 = vpop.f32.mrf.mxu0
      %v1538 = vadd.f32 0.0, %v1537
      %v1539 = vpop.f32.mrf.mxu0
      %v1540 = vadd.f32 0.0, %v1539
      %1541 = vmatmul.bf16.gmra.mxu0 %v926
      %v1542 = vpop.f32.mrf.mxu0
      %v1543 = vadd.f32 0.0, %v1542
      %v1544 = vpop.f32.mrf.mxu0
      %v1545 = vadd.f32 0.0, %v1544
      %1546 = vmatmul.bf16.gmra.mxu0 %v934
      %v1547 = vpop.f32.mrf.mxu0
      %v1548 = vadd.f32 0.0, %v1547
      %v1549 = vpop.f32.mrf.mxu0
      %v1550 = vadd.f32 0.0, %v1549
      %1551 = vmatmul.bf16.gmra.mxu0 %v942
      %v1552 = vpop.f32.mrf.mxu0
      %v1553 = vadd.f32 0.0, %v1552
      %v1554 = vpop.f32.mrf.mxu0
      %v1555 = vadd.f32 0.0, %v1554
      %1556 = vmatmul.bf16.gmra.mxu0 %v950
      %v1557 = vpop.f32.mrf.mxu0
      %v1558 = vadd.f32 0.0, %v1557
      %v1559 = vpop.f32.mrf.mxu0
      %v1560 = vadd.f32 0.0, %v1559
      %1561 = vmatmul.bf16.gmra.mxu0 %v958
      %v1562 = vpop.f32.mrf.mxu0
      %v1563 = vadd.f32 0.0, %v1562
      %v1564 = vpop.f32.mrf.mxu0
      %v1565 = vadd.f32 0.0, %v1564
      %1566 = vdwg.mxu0
      %1567 = vmatpush.bf16.msra.mxu0 %v1365
      %1568 = vmatpush.bf16.msra.mxu0 %v1364
      %1569 = vmatpush.bf16.msra.mxu0 %v1363
      %1570 = vmatpush.bf16.msra.mxu0 %v1362
      %1571 = vmatpush.bf16.msra.mxu0 %v1361
      %1572 = vmatpush.bf16.msra.mxu0 %v1360
      %1573 = vmatpush.bf16.msra.mxu0 %v1359
      %1574 = vmatpush.bf16.msra.mxu0 %v1358
      %1575 = vmatmul.bf16.gmra.mxu0 %v839
      %v1576 = vpop.f32.mrf.mxu0
      %v1577 = vadd.f32 %v1488, %v1576
      %v1578 = vpop.f32.mrf.mxu0
      %v1579 = vadd.f32 %v1490, %v1578
      %1580 = vmatmul.bf16.gmra.mxu0 %v847
      %v1581 = vpop.f32.mrf.mxu0
      %v1582 = vadd.f32 %v1493, %v1581
      %v1583 = vpop.f32.mrf.mxu0
      %v1584 = vadd.f32 %v1495, %v1583
      %1585 = vmatmul.bf16.gmra.mxu0 %v855
      %v1586 = vpop.f32.mrf.mxu0
      %v1587 = vadd.f32 %v1498, %v1586
      %v1588 = vpop.f32.mrf.mxu0
      %v1589 = vadd.f32 %v1500, %v1588
      %1590 = vmatmul.bf16.gmra.mxu0 %v863
      %v1591 = vpop.f32.mrf.mxu0
      %v1592 = vadd.f32 %v1503, %v1591
      %v1593 = vpop.f32.mrf.mxu0
      %v1594 = vadd.f32 %v1505, %v1593
      %1595 = vmatmul.bf16.gmra.mxu0 %v871
      %v1596 = vpop.f32.mrf.mxu0
      %v1597 = vadd.f32 %v1508, %v1596
      %v1598 = vpop.f32.mrf.mxu0
      %v1599 = vadd.f32 %v1510, %v1598
      %1600 = vmatmul.bf16.gmra.mxu0 %v879
      %v1601 = vpop.f32.mrf.mxu0
      %v1602 = vadd.f32 %v1513, %v1601
      %v1603 = vpop.f32.mrf.mxu0
      %v1604 = vadd.f32 %v1515, %v1603
      %1605 = vmatmul.bf16.gmra.mxu0 %v887
      %v1606 = vpop.f32.mrf.mxu0
      %v1607 = vadd.f32 %v1518, %v1606
      %v1608 = vpop.f32.mrf.mxu0
      %v1609 = vadd.f32 %v1520, %v1608
      %1610 = vmatmul.bf16.gmra.mxu0 %v895
      %v1611 = vpop.f32.mrf.mxu0
      %v1612 = vadd.f32 %v1523, %v1611
      %v1613 = vpop.f32.mrf.mxu0
      %v1614 = vadd.f32 %v1525, %v1613
      %1615 = vmatmul.bf16.gmra.mxu0 %v903
      %v1616 = vpop.f32.mrf.mxu0
      %v1617 = vadd.f32 %v1528, %v1616
      %v1618 = vpop.f32.mrf.mxu0
      %v1619 = vadd.f32 %v1530, %v1618
      %1620 = vmatmul.bf16.gmra.mxu0 %v911
      %v1621 = vpop.f32.mrf.mxu0
      %v1622 = vadd.f32 %v1533, %v1621
      %v1623 = vpop.f32.mrf.mxu0
      %v1624 = vadd.f32 %v1535, %v1623
      %1625 = vmatmul.bf16.gmra.mxu0 %v919
      %v1626 = vpop.f32.mrf.mxu0
      %v1627 = vadd.f32 %v1538, %v1626
      %v1628 = vpop.f32.mrf.mxu0
      %v1629 = vadd.f32 %v1540, %v1628
      %1630 = vmatmul.bf16.gmra.mxu0 %v927
      %v1631 = vpop.f32.mrf.mxu0
      %v1632 = vadd.f32 %v1543, %v1631
      %v1633 = vpop.f32.mrf.mxu0
      %v1634 = vadd.f32 %v1545, %v1633
      %1635 = vmatmul.bf16.gmra.mxu0 %v935
      %v1636 = vpop.f32.mrf.mxu0
      %v1637 = vadd.f32 %v1548, %v1636
      %v1638 = vpop.f32.mrf.mxu0
      %v1639 = vadd.f32 %v1550, %v1638
      %1640 = vmatmul.bf16.gmra.mxu0 %v943
      %v1641 = vpop.f32.mrf.mxu0
      %v1642 = vadd.f32 %v1553, %v1641
      %v1643 = vpop.f32.mrf.mxu0
      %v1644 = vadd.f32 %v1555, %v1643
      %1645 = vmatmul.bf16.gmra.mxu0 %v951
      %v1646 = vpop.f32.mrf.mxu0
      %v1647 = vadd.f32 %v1558, %v1646
      %v1648 = vpop.f32.mrf.mxu0
      %v1649 = vadd.f32 %v1560, %v1648
      %1650 = vmatmul.bf16.gmra.mxu0 %v959
      %v1651 = vpop.f32.mrf.mxu0
      %v1652 = vadd.f32 %v1563, %v1651
      %v1653 = vpop.f32.mrf.mxu0
      %v1654 = vadd.f32 %v1565, %v1653
      %1655 = vdwg.mxu0
      %1656 = vmatpush.bf16.msra.mxu0 %v1373
      %1657 = vmatpush.bf16.msra.mxu0 %v1372
      %1658 = vmatpush.bf16.msra.mxu0 %v1371
      %1659 = vmatpush.bf16.msra.mxu0 %v1370
      %1660 = vmatpush.bf16.msra.mxu0 %v1369
      %1661 = vmatpush.bf16.msra.mxu0 %v1368
      %1662 = vmatpush.bf16.msra.mxu0 %v1367
      %1663 = vmatpush.bf16.msra.mxu0 %v1366
      %1664 = vmatmul.bf16.gmra.mxu0 %v840
      %v1665 = vpop.f32.mrf.mxu0
      %v1666 = vadd.f32 %v1577, %v1665
      %v1667 = vpop.f32.mrf.mxu0
      %v1668 = vadd.f32 %v1579, %v1667
      %1669 = vmatmul.bf16.gmra.mxu0 %v848
      %v1670 = vpop.f32.mrf.mxu0
      %v1671 = vadd.f32 %v1582, %v1670
      %v1672 = vpop.f32.mrf.mxu0
      %v1673 = vadd.f32 %v1584, %v1672
      %1674 = vmatmul.bf16.gmra.mxu0 %v856
      %v1675 = vpop.f32.mrf.mxu0
      %v1676 = vadd.f32 %v1587, %v1675
      %v1677 = vpop.f32.mrf.mxu0
      %v1678 = vadd.f32 %v1589, %v1677
      %1679 = vmatmul.bf16.gmra.mxu0 %v864
      %v1680 = vpop.f32.mrf.mxu0
      %v1681 = vadd.f32 %v1592, %v1680
      %v1682 = vpop.f32.mrf.mxu0
      %v1683 = vadd.f32 %v1594, %v1682
      %1684 = vmatmul.bf16.gmra.mxu0 %v872
      %v1685 = vpop.f32.mrf.mxu0
      %v1686 = vadd.f32 %v1597, %v1685
      %v1687 = vpop.f32.mrf.mxu0
      %v1688 = vadd.f32 %v1599, %v1687
      %1689 = vmatmul.bf16.gmra.mxu0 %v880
      %v1690 = vpop.f32.mrf.mxu0
      %v1691 = vadd.f32 %v1602, %v1690
      %v1692 = vpop.f32.mrf.mxu0
      %v1693 = vadd.f32 %v1604, %v1692
      %1694 = vmatmul.bf16.gmra.mxu0 %v888
      %v1695 = vpop.f32.mrf.mxu0
      %v1696 = vadd.f32 %v1607, %v1695
      %v1697 = vpop.f32.mrf.mxu0
      %v1698 = vadd.f32 %v1609, %v1697
      %1699 = vmatmul.bf16.gmra.mxu0 %v896
      %v1700 = vpop.f32.mrf.mxu0
      %v1701 = vadd.f32 %v1612, %v1700
      %v1702 = vpop.f32.mrf.mxu0
      %v1703 = vadd.f32 %v1614, %v1702
      %1704 = vmatmul.bf16.gmra.mxu0 %v904
      %v1705 = vpop.f32.mrf.mxu0
      %v1706 = vadd.f32 %v1617, %v1705
      %v1707 = vpop.f32.mrf.mxu0
      %v1708 = vadd.f32 %v1619, %v1707
      %1709 = vmatmul.bf16.gmra.mxu0 %v912
      %v1710 = vpop.f32.mrf.mxu0
      %v1711 = vadd.f32 %v1622, %v1710
      %v1712 = vpop.f32.mrf.mxu0
      %v1713 = vadd.f32 %v1624, %v1712
      %1714 = vmatmul.bf16.gmra.mxu0 %v920
      %v1715 = vpop.f32.mrf.mxu0
      %v1716 = vadd.f32 %v1627, %v1715
      %v1717 = vpop.f32.mrf.mxu0
      %v1718 = vadd.f32 %v1629, %v1717
      %1719 = vmatmul.bf16.gmra.mxu0 %v928
      %v1720 = vpop.f32.mrf.mxu0
      %v1721 = vadd.f32 %v1632, %v1720
      %v1722 = vpop.f32.mrf.mxu0
      %v1723 = vadd.f32 %v1634, %v1722
      %1724 = vmatmul.bf16.gmra.mxu0 %v936
      %v1725 = vpop.f32.mrf.mxu0
      %v1726 = vadd.f32 %v1637, %v1725
      %v1727 = vpop.f32.mrf.mxu0
      %v1728 = vadd.f32 %v1639, %v1727
      %1729 = vmatmul.bf16.gmra.mxu0 %v944
      %v1730 = vpop.f32.mrf.mxu0
      %v1731 = vadd.f32 %v1642, %v1730
      %v1732 = vpop.f32.mrf.mxu0
      %v1733 = vadd.f32 %v1644, %v1732
      %1734 = vmatmul.bf16.gmra.mxu0 %v952
      %v1735 = vpop.f32.mrf.mxu0
      %v1736 = vadd.f32 %v1647, %v1735
      %v1737 = vpop.f32.mrf.mxu0
      %v1738 = vadd.f32 %v1649, %v1737
      %1739 = vmatmul.bf16.gmra.mxu0 %v960
      %v1740 = vpop.f32.mrf.mxu0
      %v1741 = vadd.f32 %v1652, %v1740
      %v1742 = vpop.f32.mrf.mxu0
      %v1743 = vadd.f32 %v1654, %v1742
      %1744 = vdwg.mxu0
      %1745 = vmatpush.bf16.msra.mxu0 %v1381
      %1746 = vmatpush.bf16.msra.mxu0 %v1380
      %1747 = vmatpush.bf16.msra.mxu0 %v1379
      %1748 = vmatpush.bf16.msra.mxu0 %v1378
      %1749 = vmatpush.bf16.msra.mxu0 %v1377
      %1750 = vmatpush.bf16.msra.mxu0 %v1376
      %1751 = vmatpush.bf16.msra.mxu0 %v1375
      %1752 = vmatpush.bf16.msra.mxu0 %v1374
      %1753 = vmatmul.bf16.gmra.mxu0 %v841
      %v1754 = vpop.f32.mrf.mxu0
      %v1755 = vadd.f32 %v1666, %v1754
      %v1756 = vpop.f32.mrf.mxu0
      %v1757 = vadd.f32 %v1668, %v1756
      %1758 = vmatmul.bf16.gmra.mxu0 %v849
      %v1759 = vpop.f32.mrf.mxu0
      %v1760 = vadd.f32 %v1671, %v1759
      %v1761 = vpop.f32.mrf.mxu0
      %v1762 = vadd.f32 %v1673, %v1761
      %1763 = vmatmul.bf16.gmra.mxu0 %v857
      %v1764 = vpop.f32.mrf.mxu0
      %v1765 = vadd.f32 %v1676, %v1764
      %v1766 = vpop.f32.mrf.mxu0
      %v1767 = vadd.f32 %v1678, %v1766
      %1768 = vmatmul.bf16.gmra.mxu0 %v865
      %v1769 = vpop.f32.mrf.mxu0
      %v1770 = vadd.f32 %v1681, %v1769
      %v1771 = vpop.f32.mrf.mxu0
      %v1772 = vadd.f32 %v1683, %v1771
      %1773 = vmatmul.bf16.gmra.mxu0 %v873
      %v1774 = vpop.f32.mrf.mxu0
      %v1775 = vadd.f32 %v1686, %v1774
      %v1776 = vpop.f32.mrf.mxu0
      %v1777 = vadd.f32 %v1688, %v1776
      %1778 = vmatmul.bf16.gmra.mxu0 %v881
      %v1779 = vpop.f32.mrf.mxu0
      %v1780 = vadd.f32 %v1691, %v1779
      %v1781 = vpop.f32.mrf.mxu0
      %v1782 = vadd.f32 %v1693, %v1781
      %1783 = vmatmul.bf16.gmra.mxu0 %v889
      %v1784 = vpop.f32.mrf.mxu0
      %v1785 = vadd.f32 %v1696, %v1784
      %v1786 = vpop.f32.mrf.mxu0
      %v1787 = vadd.f32 %v1698, %v1786
      %1788 = vmatmul.bf16.gmra.mxu0 %v897
      %v1789 = vpop.f32.mrf.mxu0
      %v1790 = vadd.f32 %v1701, %v1789
      %v1791 = vpop.f32.mrf.mxu0
      %v1792 = vadd.f32 %v1703, %v1791
      %1793 = vmatmul.bf16.gmra.mxu0 %v905
      %v1794 = vpop.f32.mrf.mxu0
      %v1795 = vadd.f32 %v1706, %v1794
      %v1796 = vpop.f32.mrf.mxu0
      %v1797 = vadd.f32 %v1708, %v1796
      %1798 = vmatmul.bf16.gmra.mxu0 %v913
      %v1799 = vpop.f32.mrf.mxu0
      %v1800 = vadd.f32 %v1711, %v1799
      %v1801 = vpop.f32.mrf.mxu0
      %v1802 = vadd.f32 %v1713, %v1801
      %1803 = vmatmul.bf16.gmra.mxu0 %v921
      %v1804 = vpop.f32.mrf.mxu0
      %v1805 = vadd.f32 %v1716, %v1804
      %v1806 = vpop.f32.mrf.mxu0
      %v1807 = vadd.f32 %v1718, %v1806
      %1808 = vmatmul.bf16.gmra.mxu0 %v929
      %v1809 = vpop.f32.mrf.mxu0
      %v1810 = vadd.f32 %v1721, %v1809
      %v1811 = vpop.f32.mrf.mxu0
      %v1812 = vadd.f32 %v1723, %v1811
      %1813 = vmatmul.bf16.gmra.mxu0 %v937
      %v1814 = vpop.f32.mrf.mxu0
      %v1815 = vadd.f32 %v1726, %v1814
      %v1816 = vpop.f32.mrf.mxu0
      %v1817 = vadd.f32 %v1728, %v1816
      %1818 = vmatmul.bf16.gmra.mxu0 %v945
      %v1819 = vpop.f32.mrf.mxu0
      %v1820 = vadd.f32 %v1731, %v1819
      %v1821 = vpop.f32.mrf.mxu0
      %v1822 = vadd.f32 %v1733, %v1821
      %1823 = vmatmul.bf16.gmra.mxu0 %v953
      %v1824 = vpop.f32.mrf.mxu0
      %v1825 = vadd.f32 %v1736, %v1824
      %v1826 = vpop.f32.mrf.mxu0
      %v1827 = vadd.f32 %v1738, %v1826
      %1828 = vmatmul.bf16.gmra.mxu0 %v961
      %v1829 = vpop.f32.mrf.mxu0
      %v1830 = vadd.f32 %v1741, %v1829
      %v1831 = vpop.f32.mrf.mxu0
      %v1832 = vadd.f32 %v1743, %v1831
      %1833 = vdwg.mxu0
      %1834 = vmatpush.bf16.msra.mxu0 %v1389
      %1835 = vmatpush.bf16.msra.mxu0 %v1388
      %1836 = vmatpush.bf16.msra.mxu0 %v1387
      %1837 = vmatpush.bf16.msra.mxu0 %v1386
      %1838 = vmatpush.bf16.msra.mxu0 %v1385
      %1839 = vmatpush.bf16.msra.mxu0 %v1384
      %1840 = vmatpush.bf16.msra.mxu0 %v1383
      %1841 = vmatpush.bf16.msra.mxu0 %v1382
      %1842 = vmatmul.bf16.gmra.mxu0 %v842
      %v1843 = vpop.f32.mrf.mxu0
      %v1844 = vadd.f32 %v1755, %v1843
      %v1845 = vpop.f32.mrf.mxu0
      %v1846 = vadd.f32 %v1757, %v1845
      %1847 = vmatmul.bf16.gmra.mxu0 %v850
      %v1848 = vpop.f32.mrf.mxu0
      %v1849 = vadd.f32 %v1760, %v1848
      %v1850 = vpop.f32.mrf.mxu0
      %v1851 = vadd.f32 %v1762, %v1850
      %1852 = vmatmul.bf16.gmra.mxu0 %v858
      %v1853 = vpop.f32.mrf.mxu0
      %v1854 = vadd.f32 %v1765, %v1853
      %v1855 = vpop.f32.mrf.mxu0
      %v1856 = vadd.f32 %v1767, %v1855
      %1857 = vmatmul.bf16.gmra.mxu0 %v866
      %v1858 = vpop.f32.mrf.mxu0
      %v1859 = vadd.f32 %v1770, %v1858
      %v1860 = vpop.f32.mrf.mxu0
      %v1861 = vadd.f32 %v1772, %v1860
      %1862 = vmatmul.bf16.gmra.mxu0 %v874
      %v1863 = vpop.f32.mrf.mxu0
      %v1864 = vadd.f32 %v1775, %v1863
      %v1865 = vpop.f32.mrf.mxu0
      %v1866 = vadd.f32 %v1777, %v1865
      %1867 = vmatmul.bf16.gmra.mxu0 %v882
      %v1868 = vpop.f32.mrf.mxu0
      %v1869 = vadd.f32 %v1780, %v1868
      %v1870 = vpop.f32.mrf.mxu0
      %v1871 = vadd.f32 %v1782, %v1870
      %1872 = vmatmul.bf16.gmra.mxu0 %v890
      %v1873 = vpop.f32.mrf.mxu0
      %v1874 = vadd.f32 %v1785, %v1873
      %v1875 = vpop.f32.mrf.mxu0
      %v1876 = vadd.f32 %v1787, %v1875
      %1877 = vmatmul.bf16.gmra.mxu0 %v898
      %v1878 = vpop.f32.mrf.mxu0
      %v1879 = vadd.f32 %v1790, %v1878
      %v1880 = vpop.f32.mrf.mxu0
      %v1881 = vadd.f32 %v1792, %v1880
      %1882 = vmatmul.bf16.gmra.mxu0 %v906
      %v1883 = vpop.f32.mrf.mxu0
      %v1884 = vadd.f32 %v1795, %v1883
      %v1885 = vpop.f32.mrf.mxu0
      %v1886 = vadd.f32 %v1797, %v1885
      %1887 = vmatmul.bf16.gmra.mxu0 %v914
      %v1888 = vpop.f32.mrf.mxu0
      %v1889 = vadd.f32 %v1800, %v1888
      %v1890 = vpop.f32.mrf.mxu0
      %v1891 = vadd.f32 %v1802, %v1890
      %1892 = vmatmul.bf16.gmra.mxu0 %v922
      %v1893 = vpop.f32.mrf.mxu0
      %v1894 = vadd.f32 %v1805, %v1893
      %v1895 = vpop.f32.mrf.mxu0
      %v1896 = vadd.f32 %v1807, %v1895
      %1897 = vmatmul.bf16.gmra.mxu0 %v930
      %v1898 = vpop.f32.mrf.mxu0
      %v1899 = vadd.f32 %v1810, %v1898
      %v1900 = vpop.f32.mrf.mxu0
      %v1901 = vadd.f32 %v1812, %v1900
      %1902 = vmatmul.bf16.gmra.mxu0 %v938
      %v1903 = vpop.f32.mrf.mxu0
      %v1904 = vadd.f32 %v1815, %v1903
      %v1905 = vpop.f32.mrf.mxu0
      %v1906 = vadd.f32 %v1817, %v1905
      %1907 = vmatmul.bf16.gmra.mxu0 %v946
      %v1908 = vpop.f32.mrf.mxu0
      %v1909 = vadd.f32 %v1820, %v1908
      %v1910 = vpop.f32.mrf.mxu0
      %v1911 = vadd.f32 %v1822, %v1910
      %1912 = vmatmul.bf16.gmra.mxu0 %v954
      %v1913 = vpop.f32.mrf.mxu0
      %v1914 = vadd.f32 %v1825, %v1913
      %v1915 = vpop.f32.mrf.mxu0
      %v1916 = vadd.f32 %v1827, %v1915
      %1917 = vmatmul.bf16.gmra.mxu0 %v962
      %v1918 = vpop.f32.mrf.mxu0
      %v1919 = vadd.f32 %v1830, %v1918
      %v1920 = vpop.f32.mrf.mxu0
      %v1921 = vadd.f32 %v1832, %v1920
      %1922 = vdwg.mxu0
      %1923 = vmatpush.bf16.msra.mxu0 %v1397
      %1924 = vmatpush.bf16.msra.mxu0 %v1396
      %1925 = vmatpush.bf16.msra.mxu0 %v1395
      %1926 = vmatpush.bf16.msra.mxu0 %v1394
      %1927 = vmatpush.bf16.msra.mxu0 %v1393
      %1928 = vmatpush.bf16.msra.mxu0 %v1392
      %1929 = vmatpush.bf16.msra.mxu0 %v1391
      %1930 = vmatpush.bf16.msra.mxu0 %v1390
      %1931 = vmatmul.bf16.gmra.mxu0 %v843
      %v1932 = vpop.f32.mrf.mxu0
      %v1933 = vadd.f32 %v1844, %v1932
      %v1934 = vpop.f32.mrf.mxu0
      %v1935 = vadd.f32 %v1846, %v1934
      %1936 = vmatmul.bf16.gmra.mxu0 %v851
      %v1937 = vpop.f32.mrf.mxu0
      %v1938 = vadd.f32 %v1849, %v1937
      %v1939 = vpop.f32.mrf.mxu0
      %v1940 = vadd.f32 %v1851, %v1939
      %1941 = vmatmul.bf16.gmra.mxu0 %v859
      %v1942 = vpop.f32.mrf.mxu0
      %v1943 = vadd.f32 %v1854, %v1942
      %v1944 = vpop.f32.mrf.mxu0
      %v1945 = vadd.f32 %v1856, %v1944
      %1946 = vmatmul.bf16.gmra.mxu0 %v867
      %v1947 = vpop.f32.mrf.mxu0
      %v1948 = vadd.f32 %v1859, %v1947
      %v1949 = vpop.f32.mrf.mxu0
      %v1950 = vadd.f32 %v1861, %v1949
      %1951 = vmatmul.bf16.gmra.mxu0 %v875
      %v1952 = vpop.f32.mrf.mxu0
      %v1953 = vadd.f32 %v1864, %v1952
      %v1954 = vpop.f32.mrf.mxu0
      %v1955 = vadd.f32 %v1866, %v1954
      %1956 = vmatmul.bf16.gmra.mxu0 %v883
      %v1957 = vpop.f32.mrf.mxu0
      %v1958 = vadd.f32 %v1869, %v1957
      %v1959 = vpop.f32.mrf.mxu0
      %v1960 = vadd.f32 %v1871, %v1959
      %1961 = vmatmul.bf16.gmra.mxu0 %v891
      %v1962 = vpop.f32.mrf.mxu0
      %v1963 = vadd.f32 %v1874, %v1962
      %v1964 = vpop.f32.mrf.mxu0
      %v1965 = vadd.f32 %v1876, %v1964
      %1966 = vmatmul.bf16.gmra.mxu0 %v899
      %v1967 = vpop.f32.mrf.mxu0
      %v1968 = vadd.f32 %v1879, %v1967
      %v1969 = vpop.f32.mrf.mxu0
      %v1970 = vadd.f32 %v1881, %v1969
      %1971 = vmatmul.bf16.gmra.mxu0 %v907
      %v1972 = vpop.f32.mrf.mxu0
      %v1973 = vadd.f32 %v1884, %v1972
      %v1974 = vpop.f32.mrf.mxu0
      %v1975 = vadd.f32 %v1886, %v1974
      %1976 = vmatmul.bf16.gmra.mxu0 %v915
      %v1977 = vpop.f32.mrf.mxu0
      %v1978 = vadd.f32 %v1889, %v1977
      %v1979 = vpop.f32.mrf.mxu0
      %v1980 = vadd.f32 %v1891, %v1979
      %1981 = vmatmul.bf16.gmra.mxu0 %v923
      %v1982 = vpop.f32.mrf.mxu0
      %v1983 = vadd.f32 %v1894, %v1982
      %v1984 = vpop.f32.mrf.mxu0
      %v1985 = vadd.f32 %v1896, %v1984
      %1986 = vmatmul.bf16.gmra.mxu0 %v931
      %v1987 = vpop.f32.mrf.mxu0
      %v1988 = vadd.f32 %v1899, %v1987
      %v1989 = vpop.f32.mrf.mxu0
      %v1990 = vadd.f32 %v1901, %v1989
      %1991 = vmatmul.bf16.gmra.mxu0 %v939
      %v1992 = vpop.f32.mrf.mxu0
      %v1993 = vadd.f32 %v1904, %v1992
      %v1994 = vpop.f32.mrf.mxu0
      %v1995 = vadd.f32 %v1906, %v1994
      %1996 = vmatmul.bf16.gmra.mxu0 %v947
      %v1997 = vpop.f32.mrf.mxu0
      %v1998 = vadd.f32 %v1909, %v1997
      %v1999 = vpop.f32.mrf.mxu0
      %v2000 = vadd.f32 %v1911, %v1999
      %2001 = vmatmul.bf16.gmra.mxu0 %v955
      %v2002 = vpop.f32.mrf.mxu0
      %v2003 = vadd.f32 %v1914, %v2002
      %v2004 = vpop.f32.mrf.mxu0
      %v2005 = vadd.f32 %v1916, %v2004
      %2006 = vmatmul.bf16.gmra.mxu0 %v963
      %v2007 = vpop.f32.mrf.mxu0
      %v2008 = vadd.f32 %v1919, %v2007
      %v2009 = vpop.f32.mrf.mxu0
      %v2010 = vadd.f32 %v1921, %v2009
      %2011 = vdwg.mxu0
      %2012 = vmatpush.bf16.msra.mxu0 %v1405
      %2013 = vmatpush.bf16.msra.mxu0 %v1404
      %2014 = vmatpush.bf16.msra.mxu0 %v1403
      %2015 = vmatpush.bf16.msra.mxu0 %v1402
      %2016 = vmatpush.bf16.msra.mxu0 %v1401
      %2017 = vmatpush.bf16.msra.mxu0 %v1400
      %2018 = vmatpush.bf16.msra.mxu0 %v1399
      %2019 = vmatpush.bf16.msra.mxu0 %v1398
      %2020 = vmatmul.bf16.gmra.mxu0 %v844
      %v2021 = vpop.f32.mrf.mxu0
      %v2022 = vadd.f32 %v1933, %v2021
      %v2023 = vpop.f32.mrf.mxu0
      %v2024 = vadd.f32 %v1935, %v2023
      %2025 = vmatmul.bf16.gmra.mxu0 %v852
      %v2026 = vpop.f32.mrf.mxu0
      %v2027 = vadd.f32 %v1938, %v2026
      %v2028 = vpop.f32.mrf.mxu0
      %v2029 = vadd.f32 %v1940, %v2028
      %2030 = vmatmul.bf16.gmra.mxu0 %v860
      %v2031 = vpop.f32.mrf.mxu0
      %v2032 = vadd.f32 %v1943, %v2031
      %v2033 = vpop.f32.mrf.mxu0
      %v2034 = vadd.f32 %v1945, %v2033
      %2035 = vmatmul.bf16.gmra.mxu0 %v868
      %v2036 = vpop.f32.mrf.mxu0
      %v2037 = vadd.f32 %v1948, %v2036
      %v2038 = vpop.f32.mrf.mxu0
      %v2039 = vadd.f32 %v1950, %v2038
      %2040 = vmatmul.bf16.gmra.mxu0 %v876
      %v2041 = vpop.f32.mrf.mxu0
      %v2042 = vadd.f32 %v1953, %v2041
      %v2043 = vpop.f32.mrf.mxu0
      %v2044 = vadd.f32 %v1955, %v2043
      %2045 = vmatmul.bf16.gmra.mxu0 %v884
      %v2046 = vpop.f32.mrf.mxu0
      %v2047 = vadd.f32 %v1958, %v2046
      %v2048 = vpop.f32.mrf.mxu0
      %v2049 = vadd.f32 %v1960, %v2048
      %2050 = vmatmul.bf16.gmra.mxu0 %v892
      %v2051 = vpop.f32.mrf.mxu0
      %v2052 = vadd.f32 %v1963, %v2051
      %v2053 = vpop.f32.mrf.mxu0
      %v2054 = vadd.f32 %v1965, %v2053
      %2055 = vmatmul.bf16.gmra.mxu0 %v900
      %v2056 = vpop.f32.mrf.mxu0
      %v2057 = vadd.f32 %v1968, %v2056
      %v2058 = vpop.f32.mrf.mxu0
      %v2059 = vadd.f32 %v1970, %v2058
      %2060 = vmatmul.bf16.gmra.mxu0 %v908
      %v2061 = vpop.f32.mrf.mxu0
      %v2062 = vadd.f32 %v1973, %v2061
      %v2063 = vpop.f32.mrf.mxu0
      %v2064 = vadd.f32 %v1975, %v2063
      %2065 = vmatmul.bf16.gmra.mxu0 %v916
      %v2066 = vpop.f32.mrf.mxu0
      %v2067 = vadd.f32 %v1978, %v2066
      %v2068 = vpop.f32.mrf.mxu0
      %v2069 = vadd.f32 %v1980, %v2068
      %2070 = vmatmul.bf16.gmra.mxu0 %v924
      %v2071 = vpop.f32.mrf.mxu0
      %v2072 = vadd.f32 %v1983, %v2071
      %v2073 = vpop.f32.mrf.mxu0
      %v2074 = vadd.f32 %v1985, %v2073
      %2075 = vmatmul.bf16.gmra.mxu0 %v932
      %v2076 = vpop.f32.mrf.mxu0
      %v2077 = vadd.f32 %v1988, %v2076
      %v2078 = vpop.f32.mrf.mxu0
      %v2079 = vadd.f32 %v1990, %v2078
      %2080 = vmatmul.bf16.gmra.mxu0 %v940
      %v2081 = vpop.f32.mrf.mxu0
      %v2082 = vadd.f32 %v1993, %v2081
      %v2083 = vpop.f32.mrf.mxu0
      %v2084 = vadd.f32 %v1995, %v2083
      %2085 = vmatmul.bf16.gmra.mxu0 %v948
      %v2086 = vpop.f32.mrf.mxu0
      %v2087 = vadd.f32 %v1998, %v2086
      %v2088 = vpop.f32.mrf.mxu0
      %v2089 = vadd.f32 %v2000, %v2088
      %2090 = vmatmul.bf16.gmra.mxu0 %v956
      %v2091 = vpop.f32.mrf.mxu0
      %v2092 = vadd.f32 %v2003, %v2091
      %v2093 = vpop.f32.mrf.mxu0
      %v2094 = vadd.f32 %v2005, %v2093
      %2095 = vmatmul.bf16.gmra.mxu0 %v964
      %v2096 = vpop.f32.mrf.mxu0
      %v2097 = vadd.f32 %v2008, %v2096
      %v2098 = vpop.f32.mrf.mxu0
      %v2099 = vadd.f32 %v2010, %v2098
      %2100 = vdwg.mxu0
      %2101 = vmatpush.bf16.msra.mxu0 %v1413
      %2102 = vmatpush.bf16.msra.mxu0 %v1412
      %2103 = vmatpush.bf16.msra.mxu0 %v1411
      %2104 = vmatpush.bf16.msra.mxu0 %v1410
      %2105 = vmatpush.bf16.msra.mxu0 %v1409
      %2106 = vmatpush.bf16.msra.mxu0 %v1408
      %2107 = vmatpush.bf16.msra.mxu0 %v1407
      %2108 = vmatpush.bf16.msra.mxu0 %v1406
      %2109 = vmatmul.bf16.gmra.mxu0 %v845
      %v2110 = vpop.f32.mrf.mxu0
      %v2111 = vadd.f32 %v2022, %v2110
      %v2112 = vpop.f32.mrf.mxu0
      %v2113 = vadd.f32 %v2024, %v2112
      %2114 = vmatmul.bf16.gmra.mxu0 %v853
      %v2115 = vpop.f32.mrf.mxu0
      %v2116 = vadd.f32 %v2027, %v2115
      %v2117 = vpop.f32.mrf.mxu0
      %v2118 = vadd.f32 %v2029, %v2117
      %2119 = vmatmul.bf16.gmra.mxu0 %v861
      %v2120 = vpop.f32.mrf.mxu0
      %v2121 = vadd.f32 %v2032, %v2120
      %v2122 = vpop.f32.mrf.mxu0
      %v2123 = vadd.f32 %v2034, %v2122
      %2124 = vmatmul.bf16.gmra.mxu0 %v869
      %v2125 = vpop.f32.mrf.mxu0
      %v2126 = vadd.f32 %v2037, %v2125
      %v2127 = vpop.f32.mrf.mxu0
      %v2128 = vadd.f32 %v2039, %v2127
      %2129 = vmatmul.bf16.gmra.mxu0 %v877
      %v2130 = vpop.f32.mrf.mxu0
      %v2131 = vadd.f32 %v2042, %v2130
      %v2132 = vpop.f32.mrf.mxu0
      %v2133 = vadd.f32 %v2044, %v2132
      %2134 = vmatmul.bf16.gmra.mxu0 %v885
      %v2135 = vpop.f32.mrf.mxu0
      %v2136 = vadd.f32 %v2047, %v2135
      %v2137 = vpop.f32.mrf.mxu0
      %v2138 = vadd.f32 %v2049, %v2137
      %2139 = vmatmul.bf16.gmra.mxu0 %v893
      %v2140 = vpop.f32.mrf.mxu0
      %v2141 = vadd.f32 %v2052, %v2140
      %v2142 = vpop.f32.mrf.mxu0
      %v2143 = vadd.f32 %v2054, %v2142
      %2144 = vmatmul.bf16.gmra.mxu0 %v901
      %v2145 = vpop.f32.mrf.mxu0
      %v2146 = vadd.f32 %v2057, %v2145
      %v2147 = vpop.f32.mrf.mxu0
      %v2148 = vadd.f32 %v2059, %v2147
      %2149 = vmatmul.bf16.gmra.mxu0 %v909
      %v2150 = vpop.f32.mrf.mxu0
      %v2151 = vadd.f32 %v2062, %v2150
      %v2152 = vpop.f32.mrf.mxu0
      %v2153 = vadd.f32 %v2064, %v2152
      %2154 = vmatmul.bf16.gmra.mxu0 %v917
      %v2155 = vpop.f32.mrf.mxu0
      %v2156 = vadd.f32 %v2067, %v2155
      %v2157 = vpop.f32.mrf.mxu0
      %v2158 = vadd.f32 %v2069, %v2157
      %2159 = vmatmul.bf16.gmra.mxu0 %v925
      %v2160 = vpop.f32.mrf.mxu0
      %v2161 = vadd.f32 %v2072, %v2160
      %v2162 = vpop.f32.mrf.mxu0
      %v2163 = vadd.f32 %v2074, %v2162
      %2164 = vmatmul.bf16.gmra.mxu0 %v933
      %v2165 = vpop.f32.mrf.mxu0
      %v2166 = vadd.f32 %v2077, %v2165
      %v2167 = vpop.f32.mrf.mxu0
      %v2168 = vadd.f32 %v2079, %v2167
      %2169 = vmatmul.bf16.gmra.mxu0 %v941
      %v2170 = vpop.f32.mrf.mxu0
      %v2171 = vadd.f32 %v2082, %v2170
      %v2172 = vpop.f32.mrf.mxu0
      %v2173 = vadd.f32 %v2084, %v2172
      %2174 = vmatmul.bf16.gmra.mxu0 %v949
      %v2175 = vpop.f32.mrf.mxu0
      %v2176 = vadd.f32 %v2087, %v2175
      %v2177 = vpop.f32.mrf.mxu0
      %v2178 = vadd.f32 %v2089, %v2177
      %2179 = vmatmul.bf16.gmra.mxu0 %v957
      %v2180 = vpop.f32.mrf.mxu0
      %v2181 = vadd.f32 %v2092, %v2180
      %v2182 = vpop.f32.mrf.mxu0
      %v2183 = vadd.f32 %v2094, %v2182
      %2184 = vmatmul.bf16.gmra.mxu0 %v965
      %v2185 = vpop.f32.mrf.mxu0
      %v2186 = vadd.f32 %v2097, %v2185
      %v2187 = vpop.f32.mrf.mxu0
      %v2188 = vadd.f32 %v2099, %v2187
      %2189 = vdwg.mxu0
      %v2190 = vadd.f32 %v2111, %v2113
      %v2191 = vadd.f32 %v2190, %v2116
      %v2192 = vadd.f32 %v2191, %v2118
      %v2193 = vadd.f32 %v2192, %v2121
      %v2194 = vadd.f32 %v2193, %v2123
      %v2195 = vadd.f32 %v2194, %v2126
      %v2196 = vadd.f32 %v2195, %v2128
      %v2197 = vadd.f32 %v2196, %v2131
      %v2198 = vadd.f32 %v2197, %v2133
      %v2199 = vadd.f32 %v2198, %v2136
      %v2200 = vadd.f32 %v2199, %v2138
      %v2201 = vadd.f32 %v2200, %v2141
      %v2202 = vadd.f32 %v2201, %v2143
      %v2203 = vadd.f32 %v2202, %v2146
      %v2204 = vadd.f32 %v2203, %v2148
      %v2205 = vadd.f32 %v2204, %v2151
      %v2206 = vadd.f32 %v2205, %v2153
      %v2207 = vadd.f32 %v2206, %v2156
      %v2208 = vadd.f32 %v2207, %v2158
      %v2209 = vadd.f32 %v2208, %v2161
      %v2210 = vadd.f32 %v2209, %v2163
      %v2211 = vadd.f32 %v2210, %v2166
      %v2212 = vadd.f32 %v2211, %v2168
      %v2213 = vadd.f32 %v2212, %v2171
      %v2214 = vadd.f32 %v2213, %v2173
      %v2215 = vadd.f32 %v2214, %v2176
      %v2216 = vadd.f32 %v2215, %v2178
      %v2217 = vadd.f32 %v2216, %v2181
      %v2218 = vadd.f32 %v2217, %v2183
      %v2219 = vadd.f32 %v2218, %v2186
      %v2220 = vadd.f32 %v2219, %v2188
      %v2221 = vrot.slane %v2220, 4
      %v2222 = vadd.f32 %v2220, %v2221
      %v2223 = vrot.slane %v2222, 2
      %v2224 = vadd.f32 %v2222, %v2223
      %v2225 = vrot.slane %v2224, 1
      %v2226 = vadd.f32 %v2224, %v2225
      %v2227 = vrcp.pop 256.0
      %v2228 = vmul.f32 256.0, %v2227
      %v2229 = vsub.f32 1.0, %v2228
      %v2230 = vmul.f32 %v2227, %v2229
      %v2231 = vadd.f32 %v2227, %v2230
      %vm2232 = vweird.f32 %v2227
      %v2233 = vsel %vm2232, %v2227, %v2231
      %v2234 = vmul.f32 %v2226, %v2233
      %v2235 = vsub.f32 %v2111, %v2234
      %v2236 = vsub.f32 %v2113, %v2234
      %v2237 = vsub.f32 %v2116, %v2234
      %v2238 = vsub.f32 %v2118, %v2234
      %v2239 = vsub.f32 %v2121, %v2234
      %v2240 = vsub.f32 %v2123, %v2234
      %v2241 = vsub.f32 %v2126, %v2234
      %v2242 = vsub.f32 %v2128, %v2234
      %v2243 = vsub.f32 %v2131, %v2234
      %v2244 = vsub.f32 %v2133, %v2234
      %v2245 = vsub.f32 %v2136, %v2234
      %v2246 = vsub.f32 %v2138, %v2234
      %v2247 = vsub.f32 %v2141, %v2234
      %v2248 = vsub.f32 %v2143, %v2234
      %v2249 = vsub.f32 %v2146, %v2234
      %v2250 = vsub.f32 %v2148, %v2234
      %v2251 = vsub.f32 %v2151, %v2234
      %v2252 = vsub.f32 %v2153, %v2234
      %v2253 = vsub.f32 %v2156, %v2234
      %v2254 = vsub.f32 %v2158, %v2234
      %v2255 = vsub.f32 %v2161, %v2234
      %v2256 = vsub.f32 %v2163, %v2234
      %v2257 = vsub.f32 %v2166, %v2234
      %v2258 = vsub.f32 %v2168, %v2234
      %v2259 = vsub.f32 %v2171, %v2234
      %v2260 = vsub.f32 %v2173, %v2234
      %v2261 = vsub.f32 %v2176, %v2234
      %v2262 = vsub.f32 %v2178, %v2234
      %v2263 = vsub.f32 %v2181, %v2234
      %v2264 = vsub.f32 %v2183, %v2234
      %v2265 = vsub.f32 %v2186, %v2234
      %v2266 = vsub.f32 %v2188, %v2234
      %v2267 = vmul.f32 %v2235, %v2235
      %v2268 = vmul.f32 %v2236, %v2236
      %v2269 = vmul.f32 %v2237, %v2237
      %v2270 = vmul.f32 %v2238, %v2238
      %v2271 = vmul.f32 %v2239, %v2239
      %v2272 = vmul.f32 %v2240, %v2240
      %v2273 = vmul.f32 %v2241, %v2241
      %v2274 = vmul.f32 %v2242, %v2242
      %v2275 = vmul.f32 %v2243, %v2243
      %v2276 = vmul.f32 %v2244, %v2244
      %v2277 = vmul.f32 %v2245, %v2245
      %v2278 = vmul.f32 %v2246, %v2246
      %v2279 = vmul.f32 %v2247, %v2247
      %v2280 = vmul.f32 %v2248, %v2248
      %v2281 = vmul.f32 %v2249, %v2249
      %v2282 = vmul.f32 %v2250, %v2250
      %v2283 = vmul.f32 %v2251, %v2251
      %v2284 = vmul.f32 %v2252, %v2252
      %v2285 = vmul.f32 %v2253, %v2253
      %v2286 = vmul.f32 %v2254, %v2254
      %v2287 = vmul.f32 %v2255, %v2255
      %v2288 = vmul.f32 %v2256, %v2256
      %v2289 = vmul.f32 %v2257, %v2257
      %v2290 = vmul.f32 %v2258, %v2258
      %v2291 = vmul.f32 %v2259, %v2259
      %v2292 = vmul.f32 %v2260, %v2260
      %v2293 = vmul.f32 %v2261, %v2261
      %v2294 = vmul.f32 %v2262, %v2262
      %v2295 = vmul.f32 %v2263, %v2263
      %v2296 = vmul.f32 %v2264, %v2264
      %v2297 = vmul.f32 %v2265, %v2265
      %v2298 = vmul.f32 %v2266, %v2266
      %v2299 = vadd.f32 %v2267, %v2268
      %v2300 = vadd.f32 %v2299, %v2269
      %v2301 = vadd.f32 %v2300, %v2270
      %v2302 = vadd.f32 %v2301, %v2271
      %v2303 = vadd.f32 %v2302, %v2272
      %v2304 = vadd.f32 %v2303, %v2273
      %v2305 = vadd.f32 %v2304, %v2274
      %v2306 = vadd.f32 %v2305, %v2275
      %v2307 = vadd.f32 %v2306, %v2276
      %v2308 = vadd.f32 %v2307, %v2277
      %v2309 = vadd.f32 %v2308, %v2278
      %v2310 = vadd.f32 %v2309, %v2279
      %v2311 = vadd.f32 %v2310, %v2280
      %v2312 = vadd.f32 %v2311, %v2281
      %v2313 = vadd.f32 %v2312, %v2282
      %v2314 = vadd.f32 %v2313, %v2283
      %v2315 = vadd.f32 %v2314, %v2284
      %v2316 = vadd.f32 %v2315, %v2285
      %v2317 = vadd.f32 %v2316, %v2286
      %v2318 = vadd.f32 %v2317, %v2287
      %v2319 = vadd.f32 %v2318, %v2288
      %v2320 = vadd.f32 %v2319, %v2289
      %v2321 = vadd.f32 %v2320, %v2290
      %v2322 = vadd.f32 %v2321, %v2291
      %v2323 = vadd.f32 %v2322, %v2292
      %v2324 = vadd.f32 %v2323, %v2293
      %v2325 = vadd.f32 %v2324, %v2294
      %v2326 = vadd.f32 %v2325, %v2295
      %v2327 = vadd.f32 %v2326, %v2296
      %v2328 = vadd.f32 %v2327, %v2297
      %v2329 = vadd.f32 %v2328, %v2298
      %v2330 = vrot.slane %v2329, 4
      %v2331 = vadd.f32 %v2329, %v2330
      %v2332 = vrot.slane %v2331, 2
      %v2333 = vadd.f32 %v2331, %v2332
      %v2334 = vrot.slane %v2333, 1
      %v2335 = vadd.f32 %v2333, %v2334
      %v2336 = vmul.f32 %v2335, %v2233
      %v2337 = vld [vmem:[%s2] sm:$0x1]
      %v2338 = vadd.f32 %v2336, 1e-05
      %v2339 = vrsqrt.pop %v2338
      %v2340 = vmul.f32 %v2339, %v2338
      %v2341 = vmul.f32 %v2340, %v2339
      %v2342 = vmul.f32 0.5, %v2341
      %v2343 = vsub.f32 1.5, %v2342
      %v2344 = vmul.f32 %v2339, %v2343
      %vm2345 = vweird.f32 %v2338
      %vm2346 = vweird.f32 %v2339
      %vm2347 = vmor %vm2345, %vm2346
      %v2348 = vsel %vm2347, %v2339, %v2344
      %v2349 = vmul.f32 %v2337, %v2348
      %v2351 = vperm.slane %v2349, 0
      %v2353 = vmul.f32 %v2235, %v2351
      %v2354 = vmul.f32 %v2236, %v2351
      %v2355 = vmul.f32 %v2237, %v2351
      %v2356 = vmul.f32 %v2238, %v2351
      %v2357 = vmul.f32 %v2239, %v2351
      %v2358 = vmul.f32 %v2240, %v2351
      %v2359 = vmul.f32 %v2241, %v2351
      %v2360 = vmul.f32 %v2242, %v2351
      %v2361 = vmul.f32 %v2243, %v2351
      %v2362 = vmul.f32 %v2244, %v2351
      %v2363 = vmul.f32 %v2245, %v2351
      %v2364 = vmul.f32 %v2246, %v2351
      %v2365 = vmul.f32 %v2247, %v2351
      %v2366 = vmul.f32 %v2248, %v2351
      %v2367 = vmul.f32 %v2249, %v2351
      %v2368 = vmul.f32 %v2250, %v2351
      %v2369 = vmul.f32 %v2251, %v2351
      %v2370 = vmul.f32 %v2252, %v2351
      %v2371 = vmul.f32 %v2253, %v2351
      %v2372 = vmul.f32 %v2254, %v2351
      %v2373 = vmul.f32 %v2255, %v2351
      %v2374 = vmul.f32 %v2256, %v2351
      %v2375 = vmul.f32 %v2257, %v2351
      %v2376 = vmul.f32 %v2258, %v2351
      %v2377 = vmul.f32 %v2259, %v2351
      %v2378 = vmul.f32 %v2260, %v2351
      %v2379 = vmul.f32 %v2261, %v2351
      %v2380 = vmul.f32 %v2262, %v2351
      %v2381 = vmul.f32 %v2263, %v2351
      %v2382 = vmul.f32 %v2264, %v2351
      %v2383 = vmul.f32 %v2265, %v2351
      %v2384 = vmul.f32 %v2266, %v2351
      %v2385 = vld [vmem:[%s3] sm:$0x1]
      %v2387 = vperm.slane %v2385, 0
      %v2389 = vadd.f32 %v2353, %v2387
      %v2390 = vadd.f32 %v2354, %v2387
      %v2391 = vadd.f32 %v2355, %v2387
      %v2392 = vadd.f32 %v2356, %v2387
      %v2393 = vadd.f32 %v2357, %v2387
      %v2394 = vadd.f32 %v2358, %v2387
      %v2395 = vadd.f32 %v2359, %v2387
      %v2396 = vadd.f32 %v2360, %v2387
      %v2397 = vadd.f32 %v2361, %v2387
      %v2398 = vadd.f32 %v2362, %v2387
      %v2399 = vadd.f32 %v2363, %v2387
      %v2400 = vadd.f32 %v2364, %v2387
      %v2401 = vadd.f32 %v2365, %v2387
      %v2402 = vadd.f32 %v2366, %v2387
      %v2403 = vadd.f32 %v2367, %v2387
      %v2404 = vadd.f32 %v2368, %v2387
      %v2405 = vadd.f32 %v2369, %v2387
      %v2406 = vadd.f32 %v2370, %v2387
      %v2407 = vadd.f32 %v2371, %v2387
      %v2408 = vadd.f32 %v2372, %v2387
      %v2409 = vadd.f32 %v2373, %v2387
      %v2410 = vadd.f32 %v2374, %v2387
      %v2411 = vadd.f32 %v2375, %v2387
      %v2412 = vadd.f32 %v2376, %v2387
      %v2413 = vadd.f32 %v2377, %v2387
      %v2414 = vadd.f32 %v2378, %v2387
      %v2415 = vadd.f32 %v2379, %v2387
      %v2416 = vadd.f32 %v2380, %v2387
      %v2417 = vadd.f32 %v2381, %v2387
      %v2418 = vadd.f32 %v2382, %v2387
      %v2419 = vadd.f32 %v2383, %v2387
      %v2420 = vadd.f32 %v2384, %v2387
      %v2421 = vmul.f32 %v2389, 0.2
      %v2422 = vmul.f32 %v2390, 0.2
      %v2423 = vmul.f32 %v2391, 0.2
      %v2424 = vmul.f32 %v2392, 0.2
      %v2425 = vmul.f32 %v2393, 0.2
      %v2426 = vmul.f32 %v2394, 0.2
      %v2427 = vmul.f32 %v2395, 0.2
      %v2428 = vmul.f32 %v2396, 0.2
      %v2429 = vmul.f32 %v2397, 0.2
      %v2430 = vmul.f32 %v2398, 0.2
      %v2431 = vmul.f32 %v2399, 0.2
      %v2432 = vmul.f32 %v2400, 0.2
      %v2433 = vmul.f32 %v2401, 0.2
      %v2434 = vmul.f32 %v2402, 0.2
      %v2435 = vmul.f32 %v2403, 0.2
      %v2436 = vmul.f32 %v2404, 0.2
      %v2437 = vmul.f32 %v2405, 0.2
      %v2438 = vmul.f32 %v2406, 0.2
      %v2439 = vmul.f32 %v2407, 0.2
      %v2440 = vmul.f32 %v2408, 0.2
      %v2441 = vmul.f32 %v2409, 0.2
      %v2442 = vmul.f32 %v2410, 0.2
      %v2443 = vmul.f32 %v2411, 0.2
      %v2444 = vmul.f32 %v2412, 0.2
      %v2445 = vmul.f32 %v2413, 0.2
      %v2446 = vmul.f32 %v2414, 0.2
      %v2447 = vmul.f32 %v2415, 0.2
      %v2448 = vmul.f32 %v2416, 0.2
      %v2449 = vmul.f32 %v2417, 0.2
      %v2450 = vmul.f32 %v2418, 0.2
      %v2451 = vmul.f32 %v2419, 0.2
      %v2452 = vmul.f32 %v2420, 0.2
      %v2453 = vmax.f32 %v2389, %v2421
      %v2454 = vmax.f32 %v2390, %v2422
      %v2455 = vmax.f32 %v2391, %v2423
      %v2456 = vmax.f32 %v2392, %v2424
      %v2457 = vmax.f32 %v2393, %v2425
      %v2458 = vmax.f32 %v2394, %v2426
      %v2459 = vmax.f32 %v2395, %v2427
      %v2460 = vmax.f32 %v2396, %v2428
      %v2461 = vmax.f32 %v2397, %v2429
      %v2462 = vmax.f32 %v2398, %v2430
      %v2463 = vmax.f32 %v2399, %v2431
      %v2464 = vmax.f32 %v2400, %v2432
      %v2465 = vmax.f32 %v2401, %v2433
      %v2466 = vmax.f32 %v2402, %v2434
      %v2467 = vmax.f32 %v2403, %v2435
      %v2468 = vmax.f32 %v2404, %v2436
      %v2469 = vmax.f32 %v2405, %v2437
      %v2470 = vmax.f32 %v2406, %v2438
      %v2471 = vmax.f32 %v2407, %v2439
      %v2472 = vmax.f32 %v2408, %v2440
      %v2473 = vmax.f32 %v2409, %v2441
      %v2474 = vmax.f32 %v2410, %v2442
      %v2475 = vmax.f32 %v2411, %v2443
      %v2476 = vmax.f32 %v2412, %v2444
      %v2477 = vmax.f32 %v2413, %v2445
      %v2478 = vmax.f32 %v2414, %v2446
      %v2479 = vmax.f32 %v2415, %v2447
      %v2480 = vmax.f32 %v2416, %v2448
      %v2481 = vmax.f32 %v2417, %v2449
      %v2482 = vmax.f32 %v2418, %v2450
      %v2483 = vmax.f32 %v2419, %v2451
      %v2484 = vmax.f32 %v2420, %v2452
      %v2485 = vpack.c.bf16 %v2453, %v2453
      %v2486 = vpack.c.bf16 %v2454, %v2454
      %v2487 = vpack.c.bf16 %v2455, %v2455
      %v2488 = vpack.c.bf16 %v2456, %v2456
      %v2489 = vpack.c.bf16 %v2457, %v2457
      %v2490 = vpack.c.bf16 %v2458, %v2458
      %v2491 = vpack.c.bf16 %v2459, %v2459
      %v2492 = vpack.c.bf16 %v2460, %v2460
      %v2493 = vpack.c.bf16 %v2461, %v2461
      %v2494 = vpack.c.bf16 %v2462, %v2462
      %v2495 = vpack.c.bf16 %v2463, %v2463
      %v2496 = vpack.c.bf16 %v2464, %v2464
      %v2497 = vpack.c.bf16 %v2465, %v2465
      %v2498 = vpack.c.bf16 %v2466, %v2466
      %v2499 = vpack.c.bf16 %v2467, %v2467
      %v2500 = vpack.c.bf16 %v2468, %v2468
      %v2501 = vpack.c.bf16 %v2469, %v2469
      %v2502 = vpack.c.bf16 %v2470, %v2470
      %v2503 = vpack.c.bf16 %v2471, %v2471
      %v2504 = vpack.c.bf16 %v2472, %v2472
      %v2505 = vpack.c.bf16 %v2473, %v2473
      %v2506 = vpack.c.bf16 %v2474, %v2474
      %v2507 = vpack.c.bf16 %v2475, %v2475
      %v2508 = vpack.c.bf16 %v2476, %v2476
      %v2509 = vpack.c.bf16 %v2477, %v2477
      %v2510 = vpack.c.bf16 %v2478, %v2478
      %v2511 = vpack.c.bf16 %v2479, %v2479
      %v2512 = vpack.c.bf16 %v2480, %v2480
      %v2513 = vpack.c.bf16 %v2481, %v2481
      %v2514 = vpack.c.bf16 %v2482, %v2482
      %v2515 = vpack.c.bf16 %v2483, %v2483
      %v2516 = vpack.c.bf16 %v2484, %v2484
      %2517 = vst [vmem:[%s197] sm:$0xf] %v2485
      %2518 = vst [vmem:[%s197 + $0x4] sm:$0xf] %v2486
      %2519 = vst [vmem:[%s197 + $0x8] sm:$0xf] %v2487
      %2520 = vst [vmem:[%s197 + $0xc] sm:$0xf] %v2488
      %2521 = vst [vmem:[%s197 + $0x10] sm:$0xf] %v2489
      %2522 = vst [vmem:[%s197 + $0x14] sm:$0xf] %v2490
      %2523 = vst [vmem:[%s197 + $0x18] sm:$0xf] %v2491
      %2524 = vst [vmem:[%s197 + $0x1c] sm:$0xf] %v2492
      %2525 = vst [vmem:[%s197 + $0x20] sm:$0xf] %v2493
      %2526 = vst [vmem:[%s197 + $0x24] sm:$0xf] %v2494
      %2527 = vst [vmem:[%s197 + $0x28] sm:$0xf] %v2495
      %2528 = vst [vmem:[%s197 + $0x2c] sm:$0xf] %v2496
      %2529 = vst [vmem:[%s197 + $0x30] sm:$0xf] %v2497
      %2530 = vst [vmem:[%s197 + $0x34] sm:$0xf] %v2498
      %2531 = vst [vmem:[%s197 + $0x38] sm:$0xf] %v2499
      %2532 = vst [vmem:[%s197 + $0x3c] sm:$0xf] %v2500
      %2533 = vst [vmem:[%s197 + $0x40] sm:$0xf] %v2501
      %2534 = vst [vmem:[%s197 + $0x44] sm:$0xf] %v2502
      %2535 = vst [vmem:[%s197 + $0x48] sm:$0xf] %v2503
      %2536 = vst [vmem:[%s197 + $0x4c] sm:$0xf] %v2504
      %2537 = vst [vmem:[%s197 + $0x50] sm:$0xf] %v2505
      %2538 = vst [vmem:[%s197 + $0x54] sm:$0xf] %v2506
      %2539 = vst [vmem:[%s197 + $0x58] sm:$0xf] %v2507
      %2540 = vst [vmem:[%s197 + $0x5c] sm:$0xf] %v2508
      %2541 = vst [vmem:[%s197 + $0x60] sm:$0xf] %v2509
      %2542 = vst [vmem:[%s197 + $0x64] sm:$0xf] %v2510
      %2543 = vst [vmem:[%s197 + $0x68] sm:$0xf] %v2511
      %2544 = vst [vmem:[%s197 + $0x6c] sm:$0xf] %v2512
      %2545 = vst [vmem:[%s197 + $0x70] sm:$0xf] %v2513
      %2546 = vst [vmem:[%s197 + $0x74] sm:$0xf] %v2514
      %2547 = vst [vmem:[%s197 + $0x78] sm:$0xf] %v2515
      %2548 = vst [vmem:[%s197 + $0x7c] sm:$0xf] %v2516
      %p2549 = scmp.lt.s32.totalorder %s15, 1
      %s2550 = scalar_select %p2549, %s15, 1
      %s2551 = smul.addr %s2550, 32
      %s2552 = smul.addr %s2551, 4
      %s2553 = scalar_lea.vmem %s4, %s2552
      // Predicated region
      $region37: #{d_forward.5} parent=35 // pred_check
        %p2554 = pneg %p122
      $region38: #{d_forward.5} parent=35 // pred_check_branch
        %2556 = sbr.rel (%p2554) target = $region40
      $region39: #{d_forward.5} parent=35 // pred_region
        _
      $region40: #{d_forward.5} parent=35 // pred_fallthru
        _
    $region36: #{d_forward.5} parent=5 // pred_fallthru
      _
    %p2557 = scmp.le.s32.totalorder 2, %s10
    // Predicated region
    $region41: #{d_forward.5} parent=5 // pred_check
      %p2558 = pneg %p2557
    $region42: #{d_forward.5} parent=5 // pred_check_branch
      %2560 = sbr.rel (%p2558) target = $region44
    $region43: #{d_forward.5} parent=5 // pred_region
      %s2561 = ssub.s32 %s10, 2
      // Predicated region
      $region45: #{d_forward.5} parent=43 // pred_check
        %p2562 = pneg %p128
      $region46: #{d_forward.5} parent=43 // pred_check_branch
        %2564 = sbr.rel (%p2562) target = $region48
      $region47: #{d_forward.5} parent=43 // pred_region
        %p2565 = scmp.lt.s32.totalorder %s16, 1
        %s2566 = scalar_select %p2565, %s16, 1
        %s2567 = smul.addr %s2566, 32
        %s2568 = smul.addr %s2567, 4
        %s2569 = scalar_lea.vmem %s4, %s2568
      $region48: #{d_forward.5} parent=43 // pred_fallthru
        _
    $region44: #{d_forward.5} parent=5 // pred_fallthru
      _
  $region6: #{d_forward.5} parent=0 // loop_footer
    %s14 = sadd.s32 1, %s10
  $region7: #{d_forward.5} parent=0 // loop_footer_branch
    %9 = sbr.rel target = $region3
  $region8: #{d_forward.5} parent=0 // loop_exit
    _

// kernel: d_forward.6
$region0: #{d_forward.6}
  #allocation0 [shape = 'u32[]', space=smem, size = 0x4, offset = 0x4, fixed_abs, tag = 'smem constant byte address 0x4 - core index']
  #allocation1 [shape = 'u32[72,128]{1,0:T(1,128)}', space=vmem, size = 0x9000, scoped, tag = 'internal scratch']
  %s0 = inlined_call_operand.vmem [shape: bf16[2,64,2048], index: 0, kind: input, shape index: {}]
  %s1 = inlined_call_operand.vmem [shape: bf16[2048,256], index: 1, kind: input, shape index: {}]
  %s2 = inlined_call_operand.vmem [shape: f32[1,256], index: 2, kind: input, shape index: {}]
  %s3 = inlined_call_operand.vmem [shape: f32[1,256], index: 3, kind: input, shape index: {}]
  %s4 = inlined_call_operand.vmem [shape: bf16[2,64,256], index: 4, kind: output, shape index: {}]
  %s5 = sld [smem:[#allocation0]]
  $region49: #{d_forward.6} parent=0
    _
  %s7 = ssub.s32 1, %s5
  %s8 = scalar_select 0, %s7, %s5
  loop: start=0, step=1, limit=4
  $region2: #{d_forward.6} parent=0 // loop_pre_header
    _
  $region3: #{d_forward.6} parent=0 // loop_header
    %s10 = sphi 0, %s14
    %p11 = scmp.ge.s32.totalorder %s10, 4
    %s20 = sphi 0, %s22
    %s23 = sphi 0, %s20
    %s24 = sphi 0, %s23
    %s40 = sphi 0, %s24
    %s44 = sphi 0, %s44
    %s46 = sphi 0, %s44
    %s47 = sphi 0, %s46
    %s61 = sphi 0, %s47
    %s65 = sphi 0, %s65
    %s67 = sphi 0, %s65
    %s68 = sphi 0, %s67
    %s82 = sphi 0, %s68
    %s86 = sphi 0, %s86
    %s88 = sphi 0, %s86
    %s89 = sphi 0, %s88
    %s103 = sphi 0, %s89
    %s109 = sphi 0, %s111
    %s112 = sphi 0, %s109
    %s113 = sphi 0, %s112
    %s129 = sphi 0, %s113
  $region4: #{d_forward.6} parent=0 // loop_header_branch
    %13 = sbr.rel (%p11) target = $region8
  $region5: #{d_forward.6} parent=0 // loop_body
    %s15 = ssub.s32 %s10, 1
    %s16 = ssub.s32 %s10, 2
    %s17 = sadd.s32 %s10, 1
    %s18 = ssub.s32 %s10, %s17
    %p19 = scmp.eq.s32.totalorder %s18, 0
    %s21 = sadd.s32 %s20, 1
    %s22 = scalar_select %p19, %s20, %s21
    %p25 = pneg %p19
    %p26 = scmp.eq.s32.totalorder %s10, 1
    %p27 = por %p25, %p26
    %p28 = scmp.ne.s32.totalorder %s20, %s23
    %p29 = scmp.eq.s32.totalorder %s10, 0
    %p30 = por %p28, %p29
    %p31 = scmp.ne.s32.totalorder %s20, %s23
    %p32 = scmp.eq.s32.totalorder %s15, 1
    %p33 = por %p31, %p32
    %p34 = scmp.ne.s32.totalorder %s23, %s24
    %p35 = scmp.eq.s32.totalorder %s15, 0
    %p36 = por %p34, %p35
    %p37 = scmp.ne.s32.totalorder %s23, %s24
    %p38 = scmp.eq.s32.totalorder %s16, 1
    %p39 = por %p37, %p38
    %p41 = scmp.ne.s32.totalorder %s24, %s40
    %p42 = scmp.eq.s32.totalorder %s16, 0
    %p43 = por %p41, %p42
    %s45 = sadd.s32 %s44, 1
    %p48 = scmp.eq.s32.totalorder %s10, 1
    %p49 = scmp.ne.s32.totalorder %s44, %s46
    %p50 = scmp.eq.s32.totalorder %s10, 0
    %p51 = por %p49, %p50
    %p52 = scmp.ne.s32.totalorder %s44, %s46
    %p53 = scmp.eq.s32.totalorder %s15, 1
    %p54 = por %p52, %p53
    %p55 = scmp.ne.s32.totalorder %s46, %s47
    %p56 = scmp.eq.s32.totalorder %s15, 0
    %p57 = por %p55, %p56
    %p58 = scmp.ne.s32.totalorder %s46, %s47
    %p59 = scmp.eq.s32.totalorder %s16, 1
    %p60 = por %p58, %p59
    %p62 = scmp.ne.s32.totalorder %s47, %s61
    %p63 = scmp.eq.s32.totalorder %s16, 0
    %p64 = por %p62, %p63
    %s66 = sadd.s32 %s65, 1
    %p69 = scmp.eq.s32.totalorder %s10, 1
    %p70 = scmp.ne.s32.totalorder %s65, %s67
    %p71 = scmp.eq.s32.totalorder %s10, 0
    %p72 = por %p70, %p71
    %p73 = scmp.ne.s32.totalorder %s65, %s67
    %p74 = scmp.eq.s32.totalorder %s15, 1
    %p75 = por %p73, %p74
    %p76 = scmp.ne.s32.totalorder %s67, %s68
    %p77 = scmp.eq.s32.totalorder %s15, 0
    %p78 = por %p76, %p77
    %p79 = scmp.ne.s32.totalorder %s67, %s68
    %p80 = scmp.eq.s32.totalorder %s16, 1
    %p81 = por %p79, %p80
    %p83 = scmp.ne.s32.totalorder %s68, %s82
    %p84 = scmp.eq.s32.totalorder %s16, 0
    %p85 = por %p83, %p84
    %s87 = sadd.s32 %s86, 1
    %p90 = scmp.eq.s32.totalorder %s10, 1
    %p91 = scmp.ne.s32.totalorder %s86, %s88
    %p92 = scmp.eq.s32.totalorder %s10, 0
    %p93 = por %p91, %p92
    %p94 = scmp.ne.s32.totalorder %s86, %s88
    %p95 = scmp.eq.s32.totalorder %s15, 1
    %p96 = por %p94, %p95
    %p97 = scmp.ne.s32.totalorder %s88, %s89
    %p98 = scmp.eq.s32.totalorder %s15, 0
    %p99 = por %p97, %p98
    %p100 = scmp.ne.s32.totalorder %s88, %s89
    %p101 = scmp.eq.s32.totalorder %s16, 1
    %p102 = por %p100, %p101
    %p104 = scmp.ne.s32.totalorder %s89, %s103
    %p105 = scmp.eq.s32.totalorder %s16, 0
    %p106 = por %p104, %p105
    %s107 = ssub.s32 %s10, %s17
    %p108 = scmp.eq.s32.totalorder %s107, 0
    %s110 = sadd.s32 %s109, 1
    %s111 = scalar_select %p108, %s109, %s110
    %p114 = pneg %p108
    %p115 = scmp.eq.s32.totalorder %s10, 1
    %p116 = por %p114, %p115
    %p117 = scmp.ne.s32.totalorder %s109, %s112
    %p118 = scmp.eq.s32.totalorder %s10, 0
    %p119 = por %p117, %p118
    %p120 = scmp.ne.s32.totalorder %s109, %s112
    %p121 = scmp.eq.s32.totalorder %s15, 1
    %p122 = por %p120, %p121
    %p123 = scmp.ne.s32.totalorder %s112, %s113
    %p124 = scmp.eq.s32.totalorder %s15, 0
    %p125 = por %p123, %p124
    %p126 = scmp.ne.s32.totalorder %s112, %s113
    %p127 = scmp.eq.s32.totalorder %s16, 1
    %p128 = por %p126, %p127
    %p130 = scmp.ne.s32.totalorder %s113, %s129
    %p131 = scmp.eq.s32.totalorder %s16, 0
    %p132 = por %p130, %p131
    %p133 = scmp.le.s32.totalorder 1, %s10
    %p134 = scmp.lt.s32.totalorder %s10, 3
    %p135 = pnand %p133, %p134
    %p136 = pneg %p135
    // Predicated region
    $region9: #{d_forward.6} parent=5 // pred_check
      _
    $region10: #{d_forward.6} parent=5 // pred_check_branch
      %138 = sbr.rel (%p135) target = $region12
    $region11: #{d_forward.6} parent=5 // pred_region
      %s139 = ssub.s32 %s10, 1
      // Predicated region
      $region13: #{d_forward.6} parent=11 // pred_check
        %p140 = pneg %p57
      $region14: #{d_forward.6} parent=11 // pred_check_branch
        %142 = sbr.rel (%p140) target = $region16
      $region15: #{d_forward.6} parent=11 // pred_region
        _
      $region16: #{d_forward.6} parent=11 // pred_fallthru
        _
      // Predicated region
      $region17: #{d_forward.6} parent=11 // pred_check
        %p143 = pneg %p78
      $region18: #{d_forward.6} parent=11 // pred_check_branch
        %145 = sbr.rel (%p143) target = $region20
      $region19: #{d_forward.6} parent=11 // pred_region
        _
      $region20: #{d_forward.6} parent=11 // pred_fallthru
        _
      // Predicated region
      $region21: #{d_forward.6} parent=11 // pred_check
        %p146 = pneg %p99
      $region22: #{d_forward.6} parent=11 // pred_check_branch
        %148 = sbr.rel (%p146) target = $region24
      $region23: #{d_forward.6} parent=11 // pred_region
        _
      $region24: #{d_forward.6} parent=11 // pred_fallthru
        _
    $region12: #{d_forward.6} parent=5 // pred_fallthru
      _
    %p149 = scmp.lt.s32.totalorder %s10, 2
    // Predicated region
    $region25: #{d_forward.6} parent=5 // pred_check
      %p150 = pneg %p149
    $region26: #{d_forward.6} parent=5 // pred_check_branch
      %152 = sbr.rel (%p150) target = $region28
    $region27: #{d_forward.6} parent=5 // pred_region
      // Predicated region
      $region29: #{d_forward.6} parent=27 // pred_check
        %p153 = pneg %p30
      $region30: #{d_forward.6} parent=27 // pred_check_branch
        %155 = sbr.rel (%p153) target = $region32
      $region31: #{d_forward.6} parent=27 // pred_region
        %p156 = scmp.lt.s32.totalorder %s10, 1
        %s157 = scalar_select %p156, %s10, 1
        %s158 = smul.addr %s157, 128
        %s159 = smul.addr %s158, 4
        %s160 = scalar_lea.vmem %s0, %s159
      $region32: #{d_forward.6} parent=27 // pred_fallthru
        _
    $region28: #{d_forward.6} parent=5 // pred_fallthru
      _
    %p161 = scmp.le.s32.totalorder 1, %s10
    %p162 = scmp.lt.s32.totalorder %s10, 3
    %p163 = pnand %p161, %p162
    %p164 = pneg %p163
    // Predicated region
    $region33: #{d_forward.6} parent=5 // pred_check
      _
    $region34: #{d_forward.6} parent=5 // pred_check_branch
      %166 = sbr.rel (%p163) target = $region36
    $region35: #{d_forward.6} parent=5 // pred_region
      %s167 = ssub.s32 %s10, 1
      %p168 = scmp.lt.s32.totalorder %s15, 1
      %s169 = scalar_select %p168, %s15, 1
      %s170 = smul.addr %s169, 128
      %s171 = smul.addr %s170, 4
      %s172 = scalar_lea.vmem %s0, %s171
      %p173 = pneg %p36
      %p174 = pneg %p33
      %p175 = pneg %p57
      %p176 = pneg %p54
      %p177 = pneg %p78
      %p178 = pneg %p75
      %p179 = pneg %p99
      %p180 = pneg %p96
      %p181 = pneg %p125
      %p182 = pneg %p122
      %p183 = scmp.lt.s32.totalorder %s15, 1
      %s184 = scalar_select %p183, %s15, 1
      %s185 = smul.addr %s184, 16
      %s186 = smul.addr %s185, 4
      %s187 = scalar_lea.vmem %s4, %s186
      %p188 = scmp.lt.s32.totalorder %s15, 1
      %s189 = scalar_select %p188, %s15, 1
      %s190 = smul.addr %s189, 128
      %s191 = smul.addr %s190, 4
      %s192 = scalar_lea.vmem %s0, %s191
      %p193 = scmp.lt.s32.totalorder %s15, 1
      %s194 = scalar_select %p193, %s15, 1
      %s195 = smul.addr %s194, 16
      %s196 = smul.addr %s195, 4
      %s197 = scalar_lea.vmem %s4, %s196
      %v198 = vld [vmem:[%s192] sm:$0xff]
      %v199 = vld [vmem:[%s192 + $0x8] sm:$0xff]
      %v200 = vld [vmem:[%s192 + $0x10] sm:$0xff]
      %v201 = vld [vmem:[%s192 + $0x18] sm:$0xff]
      %v202 = vld [vmem:[%s192 + $0x20] sm:$0xff]
      %v203 = vld [vmem:[%s192 + $0x28] sm:$0xff]
      %v204 = vld [vmem:[%s192 + $0x30] sm:$0xff]
      %v205 = vld [vmem:[%s192 + $0x38] sm:$0xff]
      %v206 = vld [vmem:[%s192 + $0x40] sm:$0xff]
      %v207 = vld [vmem:[%s192 + $0x48] sm:$0xff]
      %v208 = vld [vmem:[%s192 + $0x50] sm:$0xff]
      %v209 = vld [vmem:[%s192 + $0x58] sm:$0xff]
      %v210 = vld [vmem:[%s192 + $0x60] sm:$0xff]
      %v211 = vld [vmem:[%s192 + $0x68] sm:$0xff]
      %v212 = vld [vmem:[%s192 + $0x70] sm:$0xff]
      %v213 = vld [vmem:[%s192 + $0x78] sm:$0xff]
      %v214 = vld [vmem:[%s192 + $0x80] sm:$0xff]
      %v215 = vld [vmem:[%s192 + $0x88] sm:$0xff]
      %v216 = vld [vmem:[%s192 + $0x90] sm:$0xff]
      %v217 = vld [vmem:[%s192 + $0x98] sm:$0xff]
      %v218 = vld [vmem:[%s192 + $0xa0] sm:$0xff]
      %v219 = vld [vmem:[%s192 + $0xa8] sm:$0xff]
      %v220 = vld [vmem:[%s192 + $0xb0] sm:$0xff]
      %v221 = vld [vmem:[%s192 + $0xb8] sm:$0xff]
      %v222 = vld [vmem:[%s192 + $0xc0] sm:$0xff]
      %v223 = vld [vmem:[%s192 + $0xc8] sm:$0xff]
      %v224 = vld [vmem:[%s192 + $0xd0] sm:$0xff]
      %v225 = vld [vmem:[%s192 + $0xd8] sm:$0xff]
      %v226 = vld [vmem:[%s192 + $0xe0] sm:$0xff]
      %v227 = vld [vmem:[%s192 + $0xe8] sm:$0xff]
      %v228 = vld [vmem:[%s192 + $0xf0] sm:$0xff]
      %v229 = vld [vmem:[%s192 + $0xf8] sm:$0xff]
      %v230 = vld [vmem:[%s192 + $0x100] sm:$0xff]
      %v231 = vld [vmem:[%s192 + $0x108] sm:$0xff]
      %v232 = vld [vmem:[%s192 + $0x110] sm:$0xff]
      %v233 = vld [vmem:[%s192 + $0x118] sm:$0xff]
      %v234 = vld [vmem:[%s192 + $0x120] sm:$0xff]
      %v235 = vld [vmem:[%s192 + $0x128] sm:$0xff]
      %v236 = vld [vmem:[%s192 + $0x130] sm:$0xff]
      %v237 = vld [vmem:[%s192 + $0x138] sm:$0xff]
      %v238 = vld [vmem:[%s192 + $0x140] sm:$0xff]
      %v239 = vld [vmem:[%s192 + $0x148] sm:$0xff]
      %v240 = vld [vmem:[%s192 + $0x150] sm:$0xff]
      %v241 = vld [vmem:[%s192 + $0x158] sm:$0xff]
      %v242 = vld [vmem:[%s192 + $0x160] sm:$0xff]
      %v243 = vld [vmem:[%s192 + $0x168] sm:$0xff]
      %v244 = vld [vmem:[%s192 + $0x170] sm:$0xff]
      %v245 = vld [vmem:[%s192 + $0x178] sm:$0xff]
      %v246 = vld [vmem:[%s192 + $0x180] sm:$0xff]
      %v247 = vld [vmem:[%s192 + $0x188] sm:$0xff]
      %v248 = vld [vmem:[%s192 + $0x190] sm:$0xff]
      %v249 = vld [vmem:[%s192 + $0x198] sm:$0xff]
      %v250 = vld [vmem:[%s192 + $0x1a0] sm:$0xff]
      %v251 = vld [vmem:[%s192 + $0x1a8] sm:$0xff]
      %v252 = vld [vmem:[%s192 + $0x1b0] sm:$0xff]
      %v253 = vld [vmem:[%s192 + $0x1b8] sm:$0xff]
      %v254 = vld [vmem:[%s192 + $0x1c0] sm:$0xff]
      %v255 = vld [vmem:[%s192 + $0x1c8] sm:$0xff]
      %v256 = vld [vmem:[%s192 + $0x1d0] sm:$0xff]
      %v257 = vld [vmem:[%s192 + $0x1d8] sm:$0xff]
      %v258 = vld [vmem:[%s192 + $0x1e0] sm:$0xff]
      %v259 = vld [vmem:[%s192 + $0x1e8] sm:$0xff]
      %v260 = vld [vmem:[%s192 + $0x1f0] sm:$0xff]
      %v261 = vld [vmem:[%s192 + $0x1f8] sm:$0xff]
      %v262 = vld [vmem:[%s1] sm:$0xff]
      %v263 = vld [vmem:[%s1 + $0x8] sm:$0xff]
      %v264 = vld [vmem:[%s1 + $0x10] sm:$0xff]
      %v265 = vld [vmem:[%s1 + $0x18] sm:$0xff]
      %v266 = vld [vmem:[%s1 + $0x20] sm:$0xff]
      %v267 = vld [vmem:[%s1 + $0x28] sm:$0xff]
      %v268 = vld [vmem:[%s1 + $0x30] sm:$0xff]
      %v269 = vld [vmem:[%s1 + $0x38] sm:$0xff]
      %v270 = vld [vmem:[%s1 + $0x40] sm:$0xff]
      %v271 = vld [vmem:[%s1 + $0x48] sm:$0xff]
      %v272 = vld [vmem:[%s1 + $0x50] sm:$0xff]
      %v273 = vld [vmem:[%s1 + $0x58] sm:$0xff]
      %v274 = vld [vmem:[%s1 + $0x60] sm:$0xff]
      %v275 = vld [vmem:[%s1 + $0x68] sm:$0xff]
      %v276 = vld [vmem:[%s1 + $0x70] sm:$0xff]
      %v277 = vld [vmem:[%s1 + $0x78] sm:$0xff]
      %v278 = vld [vmem:[%s1 + $0x80] sm:$0xff]
      %v279 = vld [vmem:[%s1 + $0x88] sm:$0xff]
      %v280 = vld [vmem:[%s1 + $0x90] sm:$0xff]
      %v281 = vld [vmem:[%s1 + $0x98] sm:$0xff]
      %v282 = vld [vmem:[%s1 + $0xa0] sm:$0xff]
      %v283 = vld [vmem:[%s1 + $0xa8] sm:$0xff]
      %v284 = vld [vmem:[%s1 + $0xb0] sm:$0xff]
      %v285 = vld [vmem:[%s1 + $0xb8] sm:$0xff]
      %v286 = vld [vmem:[%s1 + $0xc0] sm:$0xff]
      %v287 = vld [vmem:[%s1 + $0xc8] sm:$0xff]
      %v288 = vld [vmem:[%s1 + $0xd0] sm:$0xff]
      %v289 = vld [vmem:[%s1 + $0xd8] sm:$0xff]
      %v290 = vld [vmem:[%s1 + $0xe0] sm:$0xff]
      %v291 = vld [vmem:[%s1 + $0xe8] sm:$0xff]
      %v292 = vld [vmem:[%s1 + $0xf0] sm:$0xff]
      %v293 = vld [vmem:[%s1 + $0xf8] sm:$0xff]
      %v294 = vld [vmem:[%s1 + $0x100] sm:$0xff]
      %v295 = vld [vmem:[%s1 + $0x108] sm:$0xff]
      %v296 = vld [vmem:[%s1 + $0x110] sm:$0xff]
      %v297 = vld [vmem:[%s1 + $0x118] sm:$0xff]
      %v298 = vld [vmem:[%s1 + $0x120] sm:$0xff]
      %v299 = vld [vmem:[%s1 + $0x128] sm:$0xff]
      %v300 = vld [vmem:[%s1 + $0x130] sm:$0xff]
      %v301 = vld [vmem:[%s1 + $0x138] sm:$0xff]
      %v302 = vld [vmem:[%s1 + $0x140] sm:$0xff]
      %v303 = vld [vmem:[%s1 + $0x148] sm:$0xff]
      %v304 = vld [vmem:[%s1 + $0x150] sm:$0xff]
      %v305 = vld [vmem:[%s1 + $0x158] sm:$0xff]
      %v306 = vld [vmem:[%s1 + $0x160] sm:$0xff]
      %v307 = vld [vmem:[%s1 + $0x168] sm:$0xff]
      %v308 = vld [vmem:[%s1 + $0x170] sm:$0xff]
      %v309 = vld [vmem:[%s1 + $0x178] sm:$0xff]
      %v310 = vld [vmem:[%s1 + $0x180] sm:$0xff]
      %v311 = vld [vmem:[%s1 + $0x188] sm:$0xff]
      %v312 = vld [vmem:[%s1 + $0x190] sm:$0xff]
      %v313 = vld [vmem:[%s1 + $0x198] sm:$0xff]
      %v314 = vld [vmem:[%s1 + $0x1a0] sm:$0xff]
      %v315 = vld [vmem:[%s1 + $0x1a8] sm:$0xff]
      %v316 = vld [vmem:[%s1 + $0x1b0] sm:$0xff]
      %v317 = vld [vmem:[%s1 + $0x1b8] sm:$0xff]
      %v318 = vld [vmem:[%s1 + $0x1c0] sm:$0xff]
      %v319 = vld [vmem:[%s1 + $0x1c8] sm:$0xff]
      %v320 = vld [vmem:[%s1 + $0x1d0] sm:$0xff]
      %v321 = vld [vmem:[%s1 + $0x1d8] sm:$0xff]
      %v322 = vld [vmem:[%s1 + $0x1e0] sm:$0xff]
      %v323 = vld [vmem:[%s1 + $0x1e8] sm:$0xff]
      %v324 = vld [vmem:[%s1 + $0x1f0] sm:$0xff]
      %v325 = vld [vmem:[%s1 + $0x1f8] sm:$0xff]
      %v326 = vld [vmem:[%s1 + $0x200] sm:$0xff]
      %v327 = vld [vmem:[%s1 + $0x208] sm:$0xff]
      %v328 = vld [vmem:[%s1 + $0x210] sm:$0xff]
      %v329 = vld [vmem:[%s1 + $0x218] sm:$0xff]
      %v330 = vld [vmem:[%s1 + $0x220] sm:$0xff]
      %v331 = vld [vmem:[%s1 + $0x228] sm:$0xff]
      %v332 = vld [vmem:[%s1 + $0x230] sm:$0xff]
      %v333 = vld [vmem:[%s1 + $0x238] sm:$0xff]
      %v334 = vld [vmem:[%s1 + $0x240] sm:$0xff]
      %v335 = vld [vmem:[%s1 + $0x248] sm:$0xff]
      %v336 = vld [vmem:[%s1 + $0x250] sm:$0xff]
      %v337 = vld [vmem:[%s1 + $0x258] sm:$0xff]
      %v338 = vld [vmem:[%s1 + $0x260] sm:$0xff]
      %v339 = vld [vmem:[%s1 + $0x268] sm:$0xff]
      %v340 = vld [vmem:[%s1 + $0x270] sm:$0xff]
      %v341 = vld [vmem:[%s1 + $0x278] sm:$0xff]
      %v342 = vld [vmem:[%s1 + $0x280] sm:$0xff]
      %v343 = vld [vmem:[%s1 + $0x288] sm:$0xff]
      %v344 = vld [vmem:[%s1 + $0x290] sm:$0xff]
      %v345 = vld [vmem:[%s1 + $0x298] sm:$0xff]
      %v346 = vld [vmem:[%s1 + $0x2a0] sm:$0xff]
      %v347 = vld [vmem:[%s1 + $0x2a8] sm:$0xff]
      %v348 = vld [vmem:[%s1 + $0x2b0] sm:$0xff]
      %v349 = vld [vmem:[%s1 + $0x2b8] sm:$0xff]
      %v350 = vld [vmem:[%s1 + $0x2c0] sm:$0xff]
      %v351 = vld [vmem:[%s1 + $0x2c8] sm:$0xff]
      %v352 = vld [vmem:[%s1 + $0x2d0] sm:$0xff]
      %v353 = vld [vmem:[%s1 + $0x2d8] sm:$0xff]
      %v354 = vld [vmem:[%s1 + $0x2e0] sm:$0xff]
      %v355 = vld [vmem:[%s1 + $0x2e8] sm:$0xff]
      %v356 = vld [vmem:[%s1 + $0x2f0] sm:$0xff]
      %v357 = vld [vmem:[%s1 + $0x2f8] sm:$0xff]
      %v358 = vld [vmem:[%s1 + $0x300] sm:$0xff]
      %v359 = vld [vmem:[%s1 + $0x308] sm:$0xff]
      %v360 = vld [vmem:[%s1 + $0x310] sm:$0xff]
      %v361 = vld [vmem:[%s1 + $0x318] sm:$0xff]
      %v362 = vld [vmem:[%s1 + $0x320] sm:$0xff]
      %v363 = vld [vmem:[%s1 + $0x328] sm:$0xff]
      %v364 = vld [vmem:[%s1 + $0x330] sm:$0xff]
      %v365 = vld [vmem:[%s1 + $0x338] sm:$0xff]
      %v366 = vld [vmem:[%s1 + $0x340] sm:$0xff]
      %v367 = vld [vmem:[%s1 + $0x348] sm:$0xff]
      %v368 = vld [vmem:[%s1 + $0x350] sm:$0xff]
      %v369 = vld [vmem:[%s1 + $0x358] sm:$0xff]
      %v370 = vld [vmem:[%s1 + $0x360] sm:$0xff]
      %v371 = vld [vmem:[%s1 + $0x368] sm:$0xff]
      %v372 = vld [vmem:[%s1 + $0x370] sm:$0xff]
      %v373 = vld [vmem:[%s1 + $0x378] sm:$0xff]
      %v374 = vld [vmem:[%s1 + $0x380] sm:$0xff]
      %v375 = vld [vmem:[%s1 + $0x388] sm:$0xff]
      %v376 = vld [vmem:[%s1 + $0x390] sm:$0xff]
      %v377 = vld [vmem:[%s1 + $0x398] sm:$0xff]
      %v378 = vld [vmem:[%s1 + $0x3a0] sm:$0xff]
      %v379 = vld [vmem:[%s1 + $0x3a8] sm:$0xff]
      %v380 = vld [vmem:[%s1 + $0x3b0] sm:$0xff]
      %v381 = vld [vmem:[%s1 + $0x3b8] sm:$0xff]
      %v382 = vld [vmem:[%s1 + $0x3c0] sm:$0xff]
      %v383 = vld [vmem:[%s1 + $0x3c8] sm:$0xff]
      %v384 = vld [vmem:[%s1 + $0x3d0] sm:$0xff]
      %v385 = vld [vmem:[%s1 + $0x3d8] sm:$0xff]
      %v386 = vld [vmem:[%s1 + $0x3e0] sm:$0xff]
      %v387 = vld [vmem:[%s1 + $0x3e8] sm:$0xff]
      %v388 = vld [vmem:[%s1 + $0x3f0] sm:$0xff]
      %v389 = vld [vmem:[%s1 + $0x3f8] sm:$0xff]
      %v390 = vld [vmem:[%s1 + $0x400] sm:$0xff]
      %v391 = vld [vmem:[%s1 + $0x408] sm:$0xff]
      %v392 = vld [vmem:[%s1 + $0x410] sm:$0xff]
      %v393 = vld [vmem:[%s1 + $0x418] sm:$0xff]
      %v394 = vld [vmem:[%s1 + $0x420] sm:$0xff]
      %v395 = vld [vmem:[%s1 + $0x428] sm:$0xff]
      %v396 = vld [vmem:[%s1 + $0x430] sm:$0xff]
      %v397 = vld [vmem:[%s1 + $0x438] sm:$0xff]
      %v398 = vld [vmem:[%s1 + $0x440] sm:$0xff]
      %v399 = vld [vmem:[%s1 + $0x448] sm:$0xff]
      %v400 = vld [vmem:[%s1 + $0x450] sm:$0xff]
      %v401 = vld [vmem:[%s1 + $0x458] sm:$0xff]
      %v402 = vld [vmem:[%s1 + $0x460] sm:$0xff]
      %v403 = vld [vmem:[%s1 + $0x468] sm:$0xff]
      %v404 = vld [vmem:[%s1 + $0x470] sm:$0xff]
      %v405 = vld [vmem:[%s1 + $0x478] sm:$0xff]
      %v406 = vld [vmem:[%s1 + $0x480] sm:$0xff]
      %v407 = vld [vmem:[%s1 + $0x488] sm:$0xff]
      %v408 = vld [vmem:[%s1 + $0x490] sm:$0xff]
      %v409 = vld [vmem:[%s1 + $0x498] sm:$0xff]
      %v410 = vld [vmem:[%s1 + $0x4a0] sm:$0xff]
      %v411 = vld [vmem:[%s1 + $0x4a8] sm:$0xff]
      %v412 = vld [vmem:[%s1 + $0x4b0] sm:$0xff]
      %v413 = vld [vmem:[%s1 + $0x4b8] sm:$0xff]
      %v414 = vld [vmem:[%s1 + $0x4c0] sm:$0xff]
      %v415 = vld [vmem:[%s1 + $0x4c8] sm:$0xff]
      %v416 = vld [vmem:[%s1 + $0x4d0] sm:$0xff]
      %v417 = vld [vmem:[%s1 + $0x4d8] sm:$0xff]
      %v418 = vld [vmem:[%s1 + $0x4e0] sm:$0xff]
      %v419 = vld [vmem:[%s1 + $0x4e8] sm:$0xff]
      %v420 = vld [vmem:[%s1 + $0x4f0] sm:$0xff]
      %v421 = vld [vmem:[%s1 + $0x4f8] sm:$0xff]
      %v422 = vld [vmem:[%s1 + $0x500] sm:$0xff]
      %v423 = vld [vmem:[%s1 + $0x508] sm:$0xff]
      %v424 = vld [vmem:[%s1 + $0x510] sm:$0xff]
      %v425 = vld [vmem:[%s1 + $0x518] sm:$0xff]
      %v426 = vld [vmem:[%s1 + $0x520] sm:$0xff]
      %v427 = vld [vmem:[%s1 + $0x528] sm:$0xff]
      %v428 = vld [vmem:[%s1 + $0x530] sm:$0xff]
      %v429 = vld [vmem:[%s1 + $0x538] sm:$0xff]
      %v430 = vld [vmem:[%s1 + $0x540] sm:$0xff]
      %v431 = vld [vmem:[%s1 + $0x548] sm:$0xff]
      %v432 = vld [vmem:[%s1 + $0x550] sm:$0xff]
      %v433 = vld [vmem:[%s1 + $0x558] sm:$0xff]
      %v434 = vld [vmem:[%s1 + $0x560] sm:$0xff]
      %v435 = vld [vmem:[%s1 + $0x568] sm:$0xff]
      %v436 = vld [vmem:[%s1 + $0x570] sm:$0xff]
      %v437 = vld [vmem:[%s1 + $0x578] sm:$0xff]
      %v438 = vld [vmem:[%s1 + $0x580] sm:$0xff]
      %v439 = vld [vmem:[%s1 + $0x588] sm:$0xff]
      %v440 = vld [vmem:[%s1 + $0x590] sm:$0xff]
      %v441 = vld [vmem:[%s1 + $0x598] sm:$0xff]
      %v442 = vld [vmem:[%s1 + $0x5a0] sm:$0xff]
      %v443 = vld [vmem:[%s1 + $0x5a8] sm:$0xff]
      %v444 = vld [vmem:[%s1 + $0x5b0] sm:$0xff]
      %v445 = vld [vmem:[%s1 + $0x5b8] sm:$0xff]
      %v446 = vld [vmem:[%s1 + $0x5c0] sm:$0xff]
      %v447 = vld [vmem:[%s1 + $0x5c8] sm:$0xff]
      %v448 = vld [vmem:[%s1 + $0x5d0] sm:$0xff]
      %v449 = vld [vmem:[%s1 + $0x5d8] sm:$0xff]
      %v450 = vld [vmem:[%s1 + $0x5e0] sm:$0xff]
      %v451 = vld [vmem:[%s1 + $0x5e8] sm:$0xff]
      %v452 = vld [vmem:[%s1 + $0x5f0] sm:$0xff]
      %v453 = vld [vmem:[%s1 + $0x5f8] sm:$0xff]
      %v454 = vld [vmem:[%s1 + $0x600] sm:$0xff]
      %v455 = vld [vmem:[%s1 + $0x608] sm:$0xff]
      %v456 = vld [vmem:[%s1 + $0x610] sm:$0xff]
      %v457 = vld [vmem:[%s1 + $0x618] sm:$0xff]
      %v458 = vld [vmem:[%s1 + $0x620] sm:$0xff]
      %v459 = vld [vmem:[%s1 + $0x628] sm:$0xff]
      %v460 = vld [vmem:[%s1 + $0x630] sm:$0xff]
      %v461 = vld [vmem:[%s1 + $0x638] sm:$0xff]
      %v462 = vld [vmem:[%s1 + $0x640] sm:$0xff]
      %v463 = vld [vmem:[%s1 + $0x648] sm:$0xff]
      %v464 = vld [vmem:[%s1 + $0x650] sm:$0xff]
      %v465 = vld [vmem:[%s1 + $0x658] sm:$0xff]
      %v466 = vld [vmem:[%s1 + $0x660] sm:$0xff]
      %v467 = vld [vmem:[%s1 + $0x668] sm:$0xff]
      %v468 = vld [vmem:[%s1 + $0x670] sm:$0xff]
      %v469 = vld [vmem:[%s1 + $0x678] sm:$0xff]
      %v470 = vld [vmem:[%s1 + $0x680] sm:$0xff]
      %v471 = vld [vmem:[%s1 + $0x688] sm:$0xff]
      %v472 = vld [vmem:[%s1 + $0x690] sm:$0xff]
      %v473 = vld [vmem:[%s1 + $0x698] sm:$0xff]
      %v474 = vld [vmem:[%s1 + $0x6a0] sm:$0xff]
      %v475 = vld [vmem:[%s1 + $0x6a8] sm:$0xff]
      %v476 = vld [vmem:[%s1 + $0x6b0] sm:$0xff]
      %v477 = vld [vmem:[%s1 + $0x6b8] sm:$0xff]
      %v478 = vld [vmem:[%s1 + $0x6c0] sm:$0xff]
      %v479 = vld [vmem:[%s1 + $0x6c8] sm:$0xff]
      %v480 = vld [vmem:[%s1 + $0x6d0] sm:$0xff]
      %v481 = vld [vmem:[%s1 + $0x6d8] sm:$0xff]
      %v482 = vld [vmem:[%s1 + $0x6e0] sm:$0xff]
      %v483 = vld [vmem:[%s1 + $0x6e8] sm:$0xff]
      %v484 = vld [vmem:[%s1 + $0x6f0] sm:$0xff]
      %v485 = vld [vmem:[%s1 + $0x6f8] sm:$0xff]
      %v486 = vld [vmem:[%s1 + $0x700] sm:$0xff]
      %v487 = vld [vmem:[%s1 + $0x708] sm:$0xff]
      %v488 = vld [vmem:[%s1 + $0x710] sm:$0xff]
      %v489 = vld [vmem:[%s1 + $0x718] sm:$0xff]
      %v490 = vld [vmem:[%s1 + $0x720] sm:$0xff]
      %v491 = vld [vmem:[%s1 + $0x728] sm:$0xff]
      %v492 = vld [vmem:[%s1 + $0x730] sm:$0xff]
      %v493 = vld [vmem:[%s1 + $0x738] sm:$0xff]
      %v494 = vld [vmem:[%s1 + $0x740] sm:$0xff]
      %v495 = vld [vmem:[%s1 + $0x748] sm:$0xff]
      %v496 = vld [vmem:[%s1 + $0x750] sm:$0xff]
      %v497 = vld [vmem:[%s1 + $0x758] sm:$0xff]
      %v498 = vld [vmem:[%s1 + $0x760] sm:$0xff]
      %v499 = vld [vmem:[%s1 + $0x768] sm:$0xff]
      %v500 = vld [vmem:[%s1 + $0x770] sm:$0xff]
      %v501 = vld [vmem:[%s1 + $0x778] sm:$0xff]
      %v502 = vld [vmem:[%s1 + $0x780] sm:$0xff]
      %v503 = vld [vmem:[%s1 + $0x788] sm:$0xff]
      %v504 = vld [vmem:[%s1 + $0x790] sm:$0xff]
      %v505 = vld [vmem:[%s1 + $0x798] sm:$0xff]
      %v506 = vld [vmem:[%s1 + $0x7a0] sm:$0xff]
      %v507 = vld [vmem:[%s1 + $0x7a8] sm:$0xff]
      %v508 = vld [vmem:[%s1 + $0x7b0] sm:$0xff]
      %v509 = vld [vmem:[%s1 + $0x7b8] sm:$0xff]
      %v510 = vld [vmem:[%s1 + $0x7c0] sm:$0xff]
      %v511 = vld [vmem:[%s1 + $0x7c8] sm:$0xff]
      %v512 = vld [vmem:[%s1 + $0x7d0] sm:$0xff]
      %v513 = vld [vmem:[%s1 + $0x7d8] sm:$0xff]
      %v514 = vld [vmem:[%s1 + $0x7e0] sm:$0xff]
      %v515 = vld [vmem:[%s1 + $0x7e8] sm:$0xff]
      %v516 = vld [vmem:[%s1 + $0x7f0] sm:$0xff]
      %v517 = vld [vmem:[%s1 + $0x7f8] sm:$0xff]
      %v582 = vunpack.c.l.b16 %v198
      %v583 = vunpack.c.h.b16 %v198
      %v584 = vunpack.c.l.b16 %v199
      %v585 = vunpack.c.h.b16 %v199
      %v586 = vunpack.c.l.b16 %v200
      %v587 = vunpack.c.h.b16 %v200
      %v588 = vunpack.c.l.b16 %v201
      %v589 = vunpack.c.h.b16 %v201
      %v590 = vunpack.c.l.b16 %v202
      %v591 = vunpack.c.h.b16 %v202
      %v592 = vunpack.c.l.b16 %v203
      %v593 = vunpack.c.h.b16 %v203
      %v594 = vunpack.c.l.b16 %v204
      %v595 = vunpack.c.h.b16 %v204
      %v596 = vunpack.c.l.b16 %v205
      %v597 = vunpack.c.h.b16 %v205
      %v598 = vunpack.c.l.b16 %v206
      %v599 = vunpack.c.h.b16 %v206
      %v600 = vunpack.c.l.b16 %v207
      %v601 = vunpack.c.h.b16 %v207
      %v602 = vunpack.c.l.b16 %v208
      %v603 = vunpack.c.h.b16 %v208
      %v604 = vunpack.c.l.b16 %v209
      %v605 = vunpack.c.h.b16 %v209
      %v606 = vunpack.c.l.b16 %v210
      %v607 = vunpack.c.h.b16 %v210
      %v608 = vunpack.c.l.b16 %v211
      %v609 = vunpack.c.h.b16 %v211
      %v610 = vunpack.c.l.b16 %v212
      %v611 = vunpack.c.h.b16 %v212
      %v612 = vunpack.c.l.b16 %v213
      %v613 = vunpack.c.h.b16 %v213
      %v614 = vunpack.c.l.b16 %v214
      %v615 = vunpack.c.h.b16 %v214
      %v616 = vunpack.c.l.b16 %v215
      %v617 = vunpack.c.h.b16 %v215
      %v618 = vunpack.c.l.b16 %v216
      %v619 = vunpack.c.h.b16 %v216
      %v620 = vunpack.c.l.b16 %v217
      %v621 = vunpack.c.h.b16 %v217
      %v622 = vunpack.c.l.b16 %v218
      %v623 = vunpack.c.h.b16 %v218
      %v624 = vunpack.c.l.b16 %v219
      %v625 = vunpack.c.h.b16 %v219
      %v626 = vunpack.c.l.b16 %v220
      %v627 = vunpack.c.h.b16 %v220
      %v628 = vunpack.c.l.b16 %v221
      %v629 = vunpack.c.h.b16 %v221
      %v630 = vunpack.c.l.b16 %v222
      %v631 = vunpack.c.h.b16 %v222
      %v632 = vunpack.c.l.b16 %v223
      %v633 = vunpack.c.h.b16 %v223
      %v634 = vunpack.c.l.b16 %v224
      %v635 = vunpack.c.h.b16 %v224
      %v636 = vunpack.c.l.b16 %v225
      %v637 = vunpack.c.h.b16 %v225
      %v638 = vunpack.c.l.b16 %v226
      %v639 = vunpack.c.h.b16 %v226
      %v640 = vunpack.c.l.b16 %v227
      %v641 = vunpack.c.h.b16 %v227
      %v642 = vunpack.c.l.b16 %v228
      %v643 = vunpack.c.h.b16 %v228
      %v644 = vunpack.c.l.b16 %v229
      %v645 = vunpack.c.h.b16 %v229
      %v646 = vunpack.c.l.b16 %v230
      %v647 = vunpack.c.h.b16 %v230
      %v648 = vunpack.c.l.b16 %v231
      %v649 = vunpack.c.h.b16 %v231
      %v650 = vunpack.c.l.b16 %v232
      %v651 = vunpack.c.h.b16 %v232
      %v652 = vunpack.c.l.b16 %v233
      %v653 = vunpack.c.h.b16 %v233
      %v654 = vunpack.c.l.b16 %v234
      %v655 = vunpack.c.h.b16 %v234
      %v656 = vunpack.c.l.b16 %v235
      %v657 = vunpack.c.h.b16 %v235
      %v658 = vunpack.c.l.b16 %v236
      %v659 = vunpack.c.h.b16 %v236
      %v660 = vunpack.c.l.b16 %v237
      %v661 = vunpack.c.h.b16 %v237
      %v662 = vunpack.c.l.b16 %v238
      %v663 = vunpack.c.h.b16 %v238
      %v664 = vunpack.c.l.b16 %v239
      %v665 = vunpack.c.h.b16 %v239
      %v666 = vunpack.c.l.b16 %v240
      %v667 = vunpack.c.h.b16 %v240
      %v668 = vunpack.c.l.b16 %v241
      %v669 = vunpack.c.h.b16 %v241
      %v670 = vunpack.c.l.b16 %v242
      %v671 = vunpack.c.h.b16 %v242
      %v672 = vunpack.c.l.b16 %v243
      %v673 = vunpack.c.h.b16 %v243
      %v674 = vunpack.c.l.b16 %v244
      %v675 = vunpack.c.h.b16 %v244
      %v676 = vunpack.c.l.b16 %v245
      %v677 = vunpack.c.h.b16 %v245
      %v678 = vunpack.c.l.b16 %v246
      %v679 = vunpack.c.h.b16 %v246
      %v680 = vunpack.c.l.b16 %v247
      %v681 = vunpack.c.h.b16 %v247
      %v682 = vunpack.c.l.b16 %v248
      %v683 = vunpack.c.h.b16 %v248
      %v684 = vunpack.c.l.b16 %v249
      %v685 = vunpack.c.h.b16 %v249
      %v686 = vunpack.c.l.b16 %v250
      %v687 = vunpack.c.h.b16 %v250
      %v688 = vunpack.c.l.b16 %v251
      %v689 = vunpack.c.h.b16 %v251
      %v690 = vunpack.c.l.b16 %v252
      %v691 = vunpack.c.h.b16 %v252
      %v692 = vunpack.c.l.b16 %v253
      %v693 = vunpack.c.h.b16 %v253
      %v694 = vunpack.c.l.b16 %v254
      %v695 = vunpack.c.h.b16 %v254
      %v696 = vunpack.c.l.b16 %v255
      %v697 = vunpack.c.h.b16 %v255
      %v698 = vunpack.c.l.b16 %v256
      %v699 = vunpack.c.h.b16 %v256
      %v700 = vunpack.c.l.b16 %v257
      %v701 = vunpack.c.h.b16 %v257
      %v702 = vunpack.c.l.b16 %v258
      %v703 = vunpack.c.h.b16 %v258
      %v704 = vunpack.c.l.b16 %v259
      %v705 = vunpack.c.h.b16 %v259
      %v706 = vunpack.c.l.b16 %v260
      %v707 = vunpack.c.h.b16 %v260
      %v708 = vunpack.c.l.b16 %v261
      %v709 = vunpack.c.h.b16 %v261
      %v710 = vpack.c.b16 %v598, %v582
      %v711 = vpack.c.b16 %v599, %v583
      %v712 = vpack.c.b16 %v600, %v584
      %v713 = vpack.c.b16 %v601, %v585
      %v714 = vpack.c.b16 %v602, %v586
      %v715 = vpack.c.b16 %v603, %v587
      %v716 = vpack.c.b16 %v604, %v588
      %v717 = vpack.c.b16 %v605, %v589
      %v718 = vpack.c.b16 %v606, %v590
      %v719 = vpack.c.b16 %v607, %v591
      %v720 = vpack.c.b16 %v608, %v592
      %v721 = vpack.c.b16 %v609, %v593
      %v722 = vpack.c.b16 %v610, %v594
      %v723 = vpack.c.b16 %v611, %v595
      %v724 = vpack.c.b16 %v612, %v596
      %v725 = vpack.c.b16 %v613, %v597
      %v726 = vpack.c.b16 %v630, %v614
      %v727 = vpack.c.b16 %v631, %v615
      %v728 = vpack.c.b16 %v632, %v616
      %v729 = vpack.c.b16 %v633, %v617
      %v730 = vpack.c.b16 %v634, %v618
      %v731 = vpack.c.b16 %v635, %v619
      %v732 = vpack.c.b16 %v636, %v620
      %v733 = vpack.c.b16 %v637, %v621
      %v734 = vpack.c.b16 %v638, %v622
      %v735 = vpack.c.b16 %v639, %v623
      %v736 = vpack.c.b16 %v640, %v624
      %v737 = vpack.c.b16 %v641, %v625
      %v738 = vpack.c.b16 %v642, %v626
      %v739 = vpack.c.b16 %v643, %v627
      %v740 = vpack.c.b16 %v644, %v628
      %v741 = vpack.c.b16 %v645, %v629
      %v742 = vpack.c.b16 %v662, %v646
      %v743 = vpack.c.b16 %v663, %v647
      %v744 = vpack.c.b16 %v664, %v648
      %v745 = vpack.c.b16 %v665, %v649
      %v746 = vpack.c.b16 %v666, %v650
      %v747 = vpack.c.b16 %v667, %v651
      %v748 = vpack.c.b16 %v668, %v652
      %v749 = vpack.c.b16 %v669, %v653
      %v750 = vpack.c.b16 %v670, %v654
      %v751 = vpack.c.b16 %v671, %v655
      %v752 = vpack.c.b16 %v672, %v656
      %v753 = vpack.c.b16 %v673, %v657
      %v754 = vpack.c.b16 %v674, %v658
      %v755 = vpack.c.b16 %v675, %v659
      %v756 = vpack.c.b16 %v676, %v660
      %v757 = vpack.c.b16 %v677, %v661
      %v758 = vpack.c.b16 %v694, %v678
      %v759 = vpack.c.b16 %v695, %v679
      %v760 = vpack.c.b16 %v696, %v680
      %v761 = vpack.c.b16 %v697, %v681
      %v762 = vpack.c.b16 %v698, %v682
      %v763 = vpack.c.b16 %v699, %v683
      %v764 = vpack.c.b16 %v700, %v684
      %v765 = vpack.c.b16 %v701, %v685
      %v766 = vpack.c.b16 %v702, %v686
      %v767 = vpack.c.b16 %v703, %v687
      %v768 = vpack.c.b16 %v704, %v688
      %v769 = vpack.c.b16 %v705, %v689
      %v770 = vpack.c.b16 %v706, %v690
      %v771 = vpack.c.b16 %v707, %v691
      %v772 = vpack.c.b16 %v708, %v692
      %v773 = vpack.c.b16 %v709, %v693
      %v1094 = vunpack.c.l.b16 %v262
      %v1095 = vunpack.c.h.b16 %v262
      %v1096 = vunpack.c.l.b16 %v263
      %v1097 = vunpack.c.h.b16 %v263
      %v1098 = vunpack.c.l.b16 %v264
      %v1099 = vunpack.c.h.b16 %v264
      %v1100 = vunpack.c.l.b16 %v265
      %v1101 = vunpack.c.h.b16 %v265
      %v1102 = vunpack.c.l.b16 %v266
      %v1103 = vunpack.c.h.b16 %v266
      %v1104 = vunpack.c.l.b16 %v267
      %v1105 = vunpack.c.h.b16 %v267
      %v1106 = vunpack.c.l.b16 %v268
      %v1107 = vunpack.c.h.b16 %v268
      %v1108 = vunpack.c.l.b16 %v269
      %v1109 = vunpack.c.h.b16 %v269
      %v1110 = vunpack.c.l.b16 %v270
      %v1111 = vunpack.c.h.b16 %v270
      %v1112 = vunpack.c.l.b16 %v271
      %v1113 = vunpack.c.h.b16 %v271
      %v1114 = vunpack.c.l.b16 %v272
      %v1115 = vunpack.c.h.b16 %v272
      %v1116 = vunpack.c.l.b16 %v273
      %v1117 = vunpack.c.h.b16 %v273
      %v1118 = vunpack.c.l.b16 %v274
      %v1119 = vunpack.c.h.b16 %v274
      %v1120 = vunpack.c.l.b16 %v275
      %v1121 = vunpack.c.h.b16 %v275
      %v1122 = vunpack.c.l.b16 %v276
      %v1123 = vunpack.c.h.b16 %v276
      %v1124 = vunpack.c.l.b16 %v277
      %v1125 = vunpack.c.h.b16 %v277
      %v1126 = vunpack.c.l.b16 %v278
      %v1127 = vunpack.c.h.b16 %v278
      %v1128 = vunpack.c.l.b16 %v279
      %v1129 = vunpack.c.h.b16 %v279
      %v1130 = vunpack.c.l.b16 %v280
      %v1131 = vunpack.c.h.b16 %v280
      %v1132 = vunpack.c.l.b16 %v281
      %v1133 = vunpack.c.h.b16 %v281
      %v1134 = vunpack.c.l.b16 %v282
      %v1135 = vunpack.c.h.b16 %v282
      %v1136 = vunpack.c.l.b16 %v283
      %v1137 = vunpack.c.h.b16 %v283
      %v1138 = vunpack.c.l.b16 %v284
      %v1139 = vunpack.c.h.b16 %v284
      %v1140 = vunpack.c.l.b16 %v285
      %v1141 = vunpack.c.h.b16 %v285
      %v1142 = vunpack.c.l.b16 %v286
      %v1143 = vunpack.c.h.b16 %v286
      %v1144 = vunpack.c.l.b16 %v287
      %v1145 = vunpack.c.h.b16 %v287
      %v1146 = vunpack.c.l.b16 %v288
      %v1147 = vunpack.c.h.b16 %v288
      %v1148 = vunpack.c.l.b16 %v289
      %v1149 = vunpack.c.h.b16 %v289
      %v1150 = vunpack.c.l.b16 %v290
      %v1151 = vunpack.c.h.b16 %v290
      %v1152 = vunpack.c.l.b16 %v291
      %v1153 = vunpack.c.h.b16 %v291
      %v1154 = vunpack.c.l.b16 %v292
      %v1155 = vunpack.c.h.b16 %v292
      %v1156 = vunpack.c.l.b16 %v293
      %v1157 = vunpack.c.h.b16 %v293
      %v1158 = vunpack.c.l.b16 %v294
      %v1159 = vunpack.c.h.b16 %v294
      %v1160 = vunpack.c.l.b16 %v295
      %v1161 = vunpack.c.h.b16 %v295
      %v1162 = vunpack.c.l.b16 %v296
      %v1163 = vunpack.c.h.b16 %v296
      %v1164 = vunpack.c.l.b16 %v297
      %v1165 = vunpack.c.h.b16 %v297
      %v1166 = vunpack.c.l.b16 %v298
      %v1167 = vunpack.c.h.b16 %v298
      %v1168 = vunpack.c.l.b16 %v299
      %v1169 = vunpack.c.h.b16 %v299
      %v1170 = vunpack.c.l.b16 %v300
      %v1171 = vunpack.c.h.b16 %v300
      %v1172 = vunpack.c.l.b16 %v301
      %v1173 = vunpack.c.h.b16 %v301
      %v1174 = vunpack.c.l.b16 %v302
      %v1175 = vunpack.c.h.b16 %v302
      %v1176 = vunpack.c.l.b16 %v303
      %v1177 = vunpack.c.h.b16 %v303
      %v1178 = vunpack.c.l.b16 %v304
      %v1179 = vunpack.c.h.b16 %v304
      %v1180 = vunpack.c.l.b16 %v305
      %v1181 = vunpack.c.h.b16 %v305
      %v1182 = vunpack.c.l.b16 %v306
      %v1183 = vunpack.c.h.b16 %v306
      %v1184 = vunpack.c.l.b16 %v307
      %v1185 = vunpack.c.h.b16 %v307
      %v1186 = vunpack.c.l.b16 %v308
      %v1187 = vunpack.c.h.b16 %v308
      %v1188 = vunpack.c.l.b16 %v309
      %v1189 = vunpack.c.h.b16 %v309
      %v1190 = vunpack.c.l.b16 %v310
      %v1191 = vunpack.c.h.b16 %v310
      %v1192 = vunpack.c.l.b16 %v311
      %v1193 = vunpack.c.h.b16 %v311
      %v1194 = vunpack.c.l.b16 %v312
      %v1195 = vunpack.c.h.b16 %v312
      %v1196 = vunpack.c.l.b16 %v313
      %v1197 = vunpack.c.h.b16 %v313
      %v1198 = vunpack.c.l.b16 %v314
      %v1199 = vunpack.c.h.b16 %v314
      %v1200 = vunpack.c.l.b16 %v315
      %v1201 = vunpack.c.h.b16 %v315
      %v1202 = vunpack.c.l.b16 %v316
      %v1203 = vunpack.c.h.b16 %v316
      %v1204 = vunpack.c.l.b16 %v317
      %v1205 = vunpack.c.h.b16 %v317
      %v1206 = vunpack.c.l.b16 %v318
      %v1207 = vunpack.c.h.b16 %v318
      %v1208 = vunpack.c.l.b16 %v319
      %v1209 = vunpack.c.h.b16 %v319
      %v1210 = vunpack.c.l.b16 %v320
      %v1211 = vunpack.c.h.b16 %v320
      %v1212 = vunpack.c.l.b16 %v321
      %v1213 = vunpack.c.h.b16 %v321
      %v1214 = vunpack.c.l.b16 %v322
      %v1215 = vunpack.c.h.b16 %v322
      %v1216 = vunpack.c.l.b16 %v323
      %v1217 = vunpack.c.h.b16 %v323
      %v1218 = vunpack.c.l.b16 %v324
      %v1219 = vunpack.c.h.b16 %v324
      %v1220 = vunpack.c.l.b16 %v325
      %v1221 = vunpack.c.h.b16 %v325
      %v1222 = vunpack.c.l.b16 %v326
      %v1223 = vunpack.c.h.b16 %v326
      %v1224 = vunpack.c.l.b16 %v327
      %v1225 = vunpack.c.h.b16 %v327
      %v1226 = vunpack.c.l.b16 %v328
      %v1227 = vunpack.c.h.b16 %v328
      %v1228 = vunpack.c.l.b16 %v329
      %v1229 = vunpack.c.h.b16 %v329
      %v1230 = vunpack.c.l.b16 %v330
      %v1231 = vunpack.c.h.b16 %v330
      %v1232 = vunpack.c.l.b16 %v331
      %v1233 = vunpack.c.h.b16 %v331
      %v1234 = vunpack.c.l.b16 %v332
      %v1235 = vunpack.c.h.b16 %v332
      %v1236 = vunpack.c.l.b16 %v333
      %v1237 = vunpack.c.h.b16 %v333
      %v1238 = vunpack.c.l.b16 %v334
      %v1239 = vunpack.c.h.b16 %v334
      %v1240 = vunpack.c.l.b16 %v335
      %v1241 = vunpack.c.h.b16 %v335
      %v1242 = vunpack.c.l.b16 %v336
      %v1243 = vunpack.c.h.b16 %v336
      %v1244 = vunpack.c.l.b16 %v337
      %v1245 = vunpack.c.h.b16 %v337
      %v1246 = vunpack.c.l.b16 %v338
      %v1247 = vunpack.c.h.b16 %v338
      %v1248 = vunpack.c.l.b16 %v339
      %v1249 = vunpack.c.h.b16 %v339
      %v1250 = vunpack.c.l.b16 %v340
      %v1251 = vunpack.c.h.b16 %v340
      %v1252 = vunpack.c.l.b16 %v341
      %v1253 = vunpack.c.h.b16 %v341
      %v1254 = vunpack.c.l.b16 %v342
      %v1255 = vunpack.c.h.b16 %v342
      %v1256 = vunpack.c.l.b16 %v343
      %v1257 = vunpack.c.h.b16 %v343
      %v1258 = vunpack.c.l.b16 %v344
      %v1259 = vunpack.c.h.b16 %v344
      %v1260 = vunpack.c.l.b16 %v345
      %v1261 = vunpack.c.h.b16 %v345
      %v1262 = vunpack.c.l.b16 %v346
      %v1263 = vunpack.c.h.b16 %v346
      %v1264 = vunpack.c.l.b16 %v347
      %v1265 = vunpack.c.h.b16 %v347
      %v1266 = vunpack.c.l.b16 %v348
      %v1267 = vunpack.c.h.b16 %v348
      %v1268 = vunpack.c.l.b16 %v349
      %v1269 = vunpack.c.h.b16 %v349
      %v1270 = vunpack.c.l.b16 %v350
      %v1271 = vunpack.c.h.b16 %v350
      %v1272 = vunpack.c.l.b16 %v351
      %v1273 = vunpack.c.h.b16 %v351
      %v1274 = vunpack.c.l.b16 %v352
      %v1275 = vunpack.c.h.b16 %v352
      %v1276 = vunpack.c.l.b16 %v353
      %v1277 = vunpack.c.h.b16 %v353
      %v1278 = vunpack.c.l.b16 %v354
      %v1279 = vunpack.c.h.b16 %v354
      %v1280 = vunpack.c.l.b16 %v355
      %v1281 = vunpack.c.h.b16 %v355
      %v1282 = vunpack.c.l.b16 %v356
      %v1283 = vunpack.c.h.b16 %v356
      %v1284 = vunpack.c.l.b16 %v357
      %v1285 = vunpack.c.h.b16 %v357
      %v1286 = vunpack.c.l.b16 %v358
      %v1287 = vunpack.c.h.b16 %v358
      %v1288 = vunpack.c.l.b16 %v359
      %v1289 = vunpack.c.h.b16 %v359
      %v1290 = vunpack.c.l.b16 %v360
      %v1291 = vunpack.c.h.b16 %v360
      %v1292 = vunpack.c.l.b16 %v361
      %v1293 = vunpack.c.h.b16 %v361
      %v1294 = vunpack.c.l.b16 %v362
      %v1295 = vunpack.c.h.b16 %v362
      %v1296 = vunpack.c.l.b16 %v363
      %v1297 = vunpack.c.h.b16 %v363
      %v1298 = vunpack.c.l.b16 %v364
      %v1299 = vunpack.c.h.b16 %v364
      %v1300 = vunpack.c.l.b16 %v365
      %v1301 = vunpack.c.h.b16 %v365
      %v1302 = vunpack.c.l.b16 %v366
      %v1303 = vunpack.c.h.b16 %v366
      %v1304 = vunpack.c.l.b16 %v367
      %v1305 = vunpack.c.h.b16 %v367
      %v1306 = vunpack.c.l.b16 %v368
      %v1307 = vunpack.c.h.b16 %v368
      %v1308 = vunpack.c.l.b16 %v369
      %v1309 = vunpack.c.h.b16 %v369
      %v1310 = vunpack.c.l.b16 %v370
      %v1311 = vunpack.c.h.b16 %v370
      %v1312 = vunpack.c.l.b16 %v371
      %v1313 = vunpack.c.h.b16 %v371
      %v1314 = vunpack.c.l.b16 %v372
      %v1315 = vunpack.c.h.b16 %v372
      %v1316 = vunpack.c.l.b16 %v373
      %v1317 = vunpack.c.h.b16 %v373
      %v1318 = vunpack.c.l.b16 %v374
      %v1319 = vunpack.c.h.b16 %v374
      %v1320 = vunpack.c.l.b16 %v375
      %v1321 = vunpack.c.h.b16 %v375
      %v1322 = vunpack.c.l.b16 %v376
      %v1323 = vunpack.c.h.b16 %v376
      %v1324 = vunpack.c.l.b16 %v377
      %v1325 = vunpack.c.h.b16 %v377
      %v1326 = vunpack.c.l.b16 %v378
      %v1327 = vunpack.c.h.b16 %v378
      %v1328 = vunpack.c.l.b16 %v379
      %v1329 = vunpack.c.h.b16 %v379
      %v1330 = vunpack.c.l.b16 %v380
      %v1331 = vunpack.c.h.b16 %v380
      %v1332 = vunpack.c.l.b16 %v381
      %v1333 = vunpack.c.h.b16 %v381
      %v1334 = vunpack.c.l.b16 %v382
      %v1335 = vunpack.c.h.b16 %v382
      %v1336 = vunpack.c.l.b16 %v383
      %v1337 = vunpack.c.h.b16 %v383
      %v1338 = vunpack.c.l.b16 %v384
      %v1339 = vunpack.c.h.b16 %v384
      %v1340 = vunpack.c.l.b16 %v385
      %v1341 = vunpack.c.h.b16 %v385
      %v1342 = vunpack.c.l.b16 %v386
      %v1343 = vunpack.c.h.b16 %v386
      %v1344 = vunpack.c.l.b16 %v387
      %v1345 = vunpack.c.h.b16 %v387
      %v1346 = vunpack.c.l.b16 %v388
      %v1347 = vunpack.c.h.b16 %v388
      %v1348 = vunpack.c.l.b16 %v389
      %v1349 = vunpack.c.h.b16 %v389
      %v1350 = vunpack.c.l.b16 %v390
      %v1351 = vunpack.c.h.b16 %v390
      %v1352 = vunpack.c.l.b16 %v391
      %v1353 = vunpack.c.h.b16 %v391
      %v1354 = vunpack.c.l.b16 %v392
      %v1355 = vunpack.c.h.b16 %v392
      %v1356 = vunpack.c.l.b16 %v393
      %v1357 = vunpack.c.h.b16 %v393
      %v1358 = vunpack.c.l.b16 %v394
      %v1359 = vunpack.c.h.b16 %v394
      %v1360 = vunpack.c.l.b16 %v395
      %v1361 = vunpack.c.h.b16 %v395
      %v1362 = vunpack.c.l.b16 %v396
      %v1363 = vunpack.c.h.b16 %v396
      %v1364 = vunpack.c.l.b16 %v397
      %v1365 = vunpack.c.h.b16 %v397
      %v1366 = vunpack.c.l.b16 %v398
      %v1367 = vunpack.c.h.b16 %v398
      %v1368 = vunpack.c.l.b16 %v399
      %v1369 = vunpack.c.h.b16 %v399
      %v1370 = vunpack.c.l.b16 %v400
      %v1371 = vunpack.c.h.b16 %v400
      %v1372 = vunpack.c.l.b16 %v401
      %v1373 = vunpack.c.h.b16 %v401
      %v1374 = vunpack.c.l.b16 %v402
      %v1375 = vunpack.c.h.b16 %v402
      %v1376 = vunpack.c.l.b16 %v403
      %v1377 = vunpack.c.h.b16 %v403
      %v1378 = vunpack.c.l.b16 %v404
      %v1379 = vunpack.c.h.b16 %v404
      %v1380 = vunpack.c.l.b16 %v405
      %v1381 = vunpack.c.h.b16 %v405
      %v1382 = vunpack.c.l.b16 %v406
      %v1383 = vunpack.c.h.b16 %v406
      %v1384 = vunpack.c.l.b16 %v407
      %v1385 = vunpack.c.h.b16 %v407
      %v1386 = vunpack.c.l.b16 %v408
      %v1387 = vunpack.c.h.b16 %v408
      %v1388 = vunpack.c.l.b16 %v409
      %v1389 = vunpack.c.h.b16 %v409
      %v1390 = vunpack.c.l.b16 %v410
      %v1391 = vunpack.c.h.b16 %v410
      %v1392 = vunpack.c.l.b16 %v411
      %v1393 = vunpack.c.h.b16 %v411
      %v1394 = vunpack.c.l.b16 %v412
      %v1395 = vunpack.c.h.b16 %v412
      %v1396 = vunpack.c.l.b16 %v413
      %v1397 = vunpack.c.h.b16 %v413
      %v1398 = vunpack.c.l.b16 %v414
      %v1399 = vunpack.c.h.b16 %v414
      %v1400 = vunpack.c.l.b16 %v415
      %v1401 = vunpack.c.h.b16 %v415
      %v1402 = vunpack.c.l.b16 %v416
      %v1403 = vunpack.c.h.b16 %v416
      %v1404 = vunpack.c.l.b16 %v417
      %v1405 = vunpack.c.h.b16 %v417
      %v1406 = vunpack.c.l.b16 %v418
      %v1407 = vunpack.c.h.b16 %v418
      %v1408 = vunpack.c.l.b16 %v419
      %v1409 = vunpack.c.h.b16 %v419
      %v1410 = vunpack.c.l.b16 %v420
      %v1411 = vunpack.c.h.b16 %v420
      %v1412 = vunpack.c.l.b16 %v421
      %v1413 = vunpack.c.h.b16 %v421
      %v1414 = vunpack.c.l.b16 %v422
      %v1415 = vunpack.c.h.b16 %v422
      %v1416 = vunpack.c.l.b16 %v423
      %v1417 = vunpack.c.h.b16 %v423
      %v1418 = vunpack.c.l.b16 %v424
      %v1419 = vunpack.c.h.b16 %v424
      %v1420 = vunpack.c.l.b16 %v425
      %v1421 = vunpack.c.h.b16 %v425
      %v1422 = vunpack.c.l.b16 %v426
      %v1423 = vunpack.c.h.b16 %v426
      %v1424 = vunpack.c.l.b16 %v427
      %v1425 = vunpack.c.h.b16 %v427
      %v1426 = vunpack.c.l.b16 %v428
      %v1427 = vunpack.c.h.b16 %v428
      %v1428 = vunpack.c.l.b16 %v429
      %v1429 = vunpack.c.h.b16 %v429
      %v1430 = vunpack.c.l.b16 %v430
      %v1431 = vunpack.c.h.b16 %v430
      %v1432 = vunpack.c.l.b16 %v431
      %v1433 = vunpack.c.h.b16 %v431
      %v1434 = vunpack.c.l.b16 %v432
      %v1435 = vunpack.c.h.b16 %v432
      %v1436 = vunpack.c.l.b16 %v433
      %v1437 = vunpack.c.h.b16 %v433
      %v1438 = vunpack.c.l.b16 %v434
      %v1439 = vunpack.c.h.b16 %v434
      %v1440 = vunpack.c.l.b16 %v435
      %v1441 = vunpack.c.h.b16 %v435
      %v1442 = vunpack.c.l.b16 %v436
      %v1443 = vunpack.c.h.b16 %v436
      %v1444 = vunpack.c.l.b16 %v437
      %v1445 = vunpack.c.h.b16 %v437
      %v1446 = vunpack.c.l.b16 %v438
      %v1447 = vunpack.c.h.b16 %v438
      %v1448 = vunpack.c.l.b16 %v439
      %v1449 = vunpack.c.h.b16 %v439
      %v1450 = vunpack.c.l.b16 %v440
      %v1451 = vunpack.c.h.b16 %v440
      %v1452 = vunpack.c.l.b16 %v441
      %v1453 = vunpack.c.h.b16 %v441
      %v1454 = vunpack.c.l.b16 %v442
      %v1455 = vunpack.c.h.b16 %v442
      %v1456 = vunpack.c.l.b16 %v443
      %v1457 = vunpack.c.h.b16 %v443
      %v1458 = vunpack.c.l.b16 %v444
      %v1459 = vunpack.c.h.b16 %v444
      %v1460 = vunpack.c.l.b16 %v445
      %v1461 = vunpack.c.h.b16 %v445
      %v1462 = vunpack.c.l.b16 %v446
      %v1463 = vunpack.c.h.b16 %v446
      %v1464 = vunpack.c.l.b16 %v447
      %v1465 = vunpack.c.h.b16 %v447
      %v1466 = vunpack.c.l.b16 %v448
      %v1467 = vunpack.c.h.b16 %v448
      %v1468 = vunpack.c.l.b16 %v449
      %v1469 = vunpack.c.h.b16 %v449
      %v1470 = vunpack.c.l.b16 %v450
      %v1471 = vunpack.c.h.b16 %v450
      %v1472 = vunpack.c.l.b16 %v451
      %v1473 = vunpack.c.h.b16 %v451
      %v1474 = vunpack.c.l.b16 %v452
      %v1475 = vunpack.c.h.b16 %v452
      %v1476 = vunpack.c.l.b16 %v453
      %v1477 = vunpack.c.h.b16 %v453
      %v1478 = vunpack.c.l.b16 %v454
      %v1479 = vunpack.c.h.b16 %v454
      %v1480 = vunpack.c.l.b16 %v455
      %v1481 = vunpack.c.h.b16 %v455
      %v1482 = vunpack.c.l.b16 %v456
      %v1483 = vunpack.c.h.b16 %v456
      %v1484 = vunpack.c.l.b16 %v457
      %v1485 = vunpack.c.h.b16 %v457
      %v1486 = vunpack.c.l.b16 %v458
      %v1487 = vunpack.c.h.b16 %v458
      %v1488 = vunpack.c.l.b16 %v459
      %v1489 = vunpack.c.h.b16 %v459
      %v1490 = vunpack.c.l.b16 %v460
      %v1491 = vunpack.c.h.b16 %v460
      %v1492 = vunpack.c.l.b16 %v461
      %v1493 = vunpack.c.h.b16 %v461
      %v1494 = vunpack.c.l.b16 %v462
      %v1495 = vunpack.c.h.b16 %v462
      %v1496 = vunpack.c.l.b16 %v463
      %v1497 = vunpack.c.h.b16 %v463
      %v1498 = vunpack.c.l.b16 %v464
      %v1499 = vunpack.c.h.b16 %v464
      %v1500 = vunpack.c.l.b16 %v465
      %v1501 = vunpack.c.h.b16 %v465
      %v1502 = vunpack.c.l.b16 %v466
      %v1503 = vunpack.c.h.b16 %v466
      %v1504 = vunpack.c.l.b16 %v467
      %v1505 = vunpack.c.h.b16 %v467
      %v1506 = vunpack.c.l.b16 %v468
      %v1507 = vunpack.c.h.b16 %v468
      %v1508 = vunpack.c.l.b16 %v469
      %v1509 = vunpack.c.h.b16 %v469
      %v1510 = vunpack.c.l.b16 %v470
      %v1511 = vunpack.c.h.b16 %v470
      %v1512 = vunpack.c.l.b16 %v471
      %v1513 = vunpack.c.h.b16 %v471
      %v1514 = vunpack.c.l.b16 %v472
      %v1515 = vunpack.c.h.b16 %v472
      %v1516 = vunpack.c.l.b16 %v473
      %v1517 = vunpack.c.h.b16 %v473
      %v1518 = vunpack.c.l.b16 %v474
      %v1519 = vunpack.c.h.b16 %v474
      %v1520 = vunpack.c.l.b16 %v475
      %v1521 = vunpack.c.h.b16 %v475
      %v1522 = vunpack.c.l.b16 %v476
      %v1523 = vunpack.c.h.b16 %v476
      %v1524 = vunpack.c.l.b16 %v477
      %v1525 = vunpack.c.h.b16 %v477
      %v1526 = vunpack.c.l.b16 %v478
      %v1527 = vunpack.c.h.b16 %v478
      %v1528 = vunpack.c.l.b16 %v479
      %v1529 = vunpack.c.h.b16 %v479
      %v1530 = vunpack.c.l.b16 %v480
      %v1531 = vunpack.c.h.b16 %v480
      %v1532 = vunpack.c.l.b16 %v481
      %v1533 = vunpack.c.h.b16 %v481
      %v1534 = vunpack.c.l.b16 %v482
      %v1535 = vunpack.c.h.b16 %v482
      %v1536 = vunpack.c.l.b16 %v483
      %v1537 = vunpack.c.h.b16 %v483
      %v1538 = vunpack.c.l.b16 %v484
      %v1539 = vunpack.c.h.b16 %v484
      %v1540 = vunpack.c.l.b16 %v485
      %v1541 = vunpack.c.h.b16 %v485
      %v1542 = vunpack.c.l.b16 %v486
      %v1543 = vunpack.c.h.b16 %v486
      %v1544 = vunpack.c.l.b16 %v487
      %v1545 = vunpack.c.h.b16 %v487
      %v1546 = vunpack.c.l.b16 %v488
      %v1547 = vunpack.c.h.b16 %v488
      %v1548 = vunpack.c.l.b16 %v489
      %v1549 = vunpack.c.h.b16 %v489
      %v1550 = vunpack.c.l.b16 %v490
      %v1551 = vunpack.c.h.b16 %v490
      %v1552 = vunpack.c.l.b16 %v491
      %v1553 = vunpack.c.h.b16 %v491
      %v1554 = vunpack.c.l.b16 %v492
      %v1555 = vunpack.c.h.b16 %v492
      %v1556 = vunpack.c.l.b16 %v493
      %v1557 = vunpack.c.h.b16 %v493
      %v1558 = vunpack.c.l.b16 %v494
      %v1559 = vunpack.c.h.b16 %v494
      %v1560 = vunpack.c.l.b16 %v495
      %v1561 = vunpack.c.h.b16 %v495
      %v1562 = vunpack.c.l.b16 %v496
      %v1563 = vunpack.c.h.b16 %v496
      %v1564 = vunpack.c.l.b16 %v497
      %v1565 = vunpack.c.h.b16 %v497
      %v1566 = vunpack.c.l.b16 %v498
      %v1567 = vunpack.c.h.b16 %v498
      %v1568 = vunpack.c.l.b16 %v499
      %v1569 = vunpack.c.h.b16 %v499
      %v1570 = vunpack.c.l.b16 %v500
      %v1571 = vunpack.c.h.b16 %v500
      %v1572 = vunpack.c.l.b16 %v501
      %v1573 = vunpack.c.h.b16 %v501
      %v1574 = vunpack.c.l.b16 %v502
      %v1575 = vunpack.c.h.b16 %v502
      %v1576 = vunpack.c.l.b16 %v503
      %v1577 = vunpack.c.h.b16 %v503
      %v1578 = vunpack.c.l.b16 %v504
      %v1579 = vunpack.c.h.b16 %v504
      %v1580 = vunpack.c.l.b16 %v505
      %v1581 = vunpack.c.h.b16 %v505
      %v1582 = vunpack.c.l.b16 %v506
      %v1583 = vunpack.c.h.b16 %v506
      %v1584 = vunpack.c.l.b16 %v507
      %v1585 = vunpack.c.h.b16 %v507
      %v1586 = vunpack.c.l.b16 %v508
      %v1587 = vunpack.c.h.b16 %v508
      %v1588 = vunpack.c.l.b16 %v509
      %v1589 = vunpack.c.h.b16 %v509
      %v1590 = vunpack.c.l.b16 %v510
      %v1591 = vunpack.c.h.b16 %v510
      %v1592 = vunpack.c.l.b16 %v511
      %v1593 = vunpack.c.h.b16 %v511
      %v1594 = vunpack.c.l.b16 %v512
      %v1595 = vunpack.c.h.b16 %v512
      %v1596 = vunpack.c.l.b16 %v513
      %v1597 = vunpack.c.h.b16 %v513
      %v1598 = vunpack.c.l.b16 %v514
      %v1599 = vunpack.c.h.b16 %v514
      %v1600 = vunpack.c.l.b16 %v515
      %v1601 = vunpack.c.h.b16 %v515
      %v1602 = vunpack.c.l.b16 %v516
      %v1603 = vunpack.c.h.b16 %v516
      %v1604 = vunpack.c.l.b16 %v517
      %v1605 = vunpack.c.h.b16 %v517
      %v1606 = vpack.c.b16 %v1096, %v1094
      %v1607 = vpack.c.b16 %v1097, %v1095
      %v1608 = vpack.c.b16 %v1100, %v1098
      %v1609 = vpack.c.b16 %v1101, %v1099
      %v1610 = vpack.c.b16 %v1104, %v1102
      %v1611 = vpack.c.b16 %v1105, %v1103
      %v1612 = vpack.c.b16 %v1108, %v1106
      %v1613 = vpack.c.b16 %v1109, %v1107
      %v1614 = vpack.c.b16 %v1112, %v1110
      %v1615 = vpack.c.b16 %v1113, %v1111
      %v1616 = vpack.c.b16 %v1116, %v1114
      %v1617 = vpack.c.b16 %v1117, %v1115
      %v1618 = vpack.c.b16 %v1120, %v1118
      %v1619 = vpack.c.b16 %v1121, %v1119
      %v1620 = vpack.c.b16 %v1124, %v1122
      %v1621 = vpack.c.b16 %v1125, %v1123
      %v1622 = vpack.c.b16 %v1128, %v1126
      %v1623 = vpack.c.b16 %v1129, %v1127
      %v1624 = vpack.c.b16 %v1132, %v1130
      %v1625 = vpack.c.b16 %v1133, %v1131
      %v1626 = vpack.c.b16 %v1136, %v1134
      %v1627 = vpack.c.b16 %v1137, %v1135
      %v1628 = vpack.c.b16 %v1140, %v1138
      %v1629 = vpack.c.b16 %v1141, %v1139
      %v1630 = vpack.c.b16 %v1144, %v1142
      %v1631 = vpack.c.b16 %v1145, %v1143
      %v1632 = vpack.c.b16 %v1148, %v1146
      %v1633 = vpack.c.b16 %v1149, %v1147
      %v1634 = vpack.c.b16 %v1152, %v1150
      %v1635 = vpack.c.b16 %v1153, %v1151
      %v1636 = vpack.c.b16 %v1156, %v1154
      %v1637 = vpack.c.b16 %v1157, %v1155
      %v1638 = vpack.c.b16 %v1160, %v1158
      %v1639 = vpack.c.b16 %v1161, %v1159
      %v1640 = vpack.c.b16 %v1164, %v1162
      %v1641 = vpack.c.b16 %v1165, %v1163
      %v1642 = vpack.c.b16 %v1168, %v1166
      %v1643 = vpack.c.b16 %v1169, %v1167
      %v1644 = vpack.c.b16 %v1172, %v1170
      %v1645 = vpack.c.b16 %v1173, %v1171
      %v1646 = vpack.c.b16 %v1176, %v1174
      %v1647 = vpack.c.b16 %v1177, %v1175
      %v1648 = vpack.c.b16 %v1180, %v1178
      %v1649 = vpack.c.b16 %v1181, %v1179
      %v1650 = vpack.c.b16 %v1184, %v1182
      %v1651 = vpack.c.b16 %v1185, %v1183
      %v1652 = vpack.c.b16 %v1188, %v1186
      %v1653 = vpack.c.b16 %v1189, %v1187
      %v1654 = vpack.c.b16 %v1192, %v1190
      %v1655 = vpack.c.b16 %v1193, %v1191
      %v1656 = vpack.c.b16 %v1196, %v1194
      %v1657 = vpack.c.b16 %v1197, %v1195
      %v1658 = vpack.c.b16 %v1200, %v1198
      %v1659 = vpack.c.b16 %v1201, %v1199
      %v1660 = vpack.c.b16 %v1204, %v1202
      %v1661 = vpack.c.b16 %v1205, %v1203
      %v1662 = vpack.c.b16 %v1208, %v1206
      %v1663 = vpack.c.b16 %v1209, %v1207
      %v1664 = vpack.c.b16 %v1212, %v1210
      %v1665 = vpack.c.b16 %v1213, %v1211
      %v1666 = vpack.c.b16 %v1216, %v1214
      %v1667 = vpack.c.b16 %v1217, %v1215
      %v1668 = vpack.c.b16 %v1220, %v1218
      %v1669 = vpack.c.b16 %v1221, %v1219
      %v1670 = vpack.c.b16 %v1224, %v1222
      %v1671 = vpack.c.b16 %v1225, %v1223
      %v1672 = vpack.c.b16 %v1228, %v1226
      %v1673 = vpack.c.b16 %v1229, %v1227
      %v1674 = vpack.c.b16 %v1232, %v1230
      %v1675 = vpack.c.b16 %v1233, %v1231
      %v1676 = vpack.c.b16 %v1236, %v1234
      %v1677 = vpack.c.b16 %v1237, %v1235
      %v1678 = vpack.c.b16 %v1240, %v1238
      %v1679 = vpack.c.b16 %v1241, %v1239
      %v1680 = vpack.c.b16 %v1244, %v1242
      %v1681 = vpack.c.b16 %v1245, %v1243
      %v1682 = vpack.c.b16 %v1248, %v1246
      %v1683 = vpack.c.b16 %v1249, %v1247
      %v1684 = vpack.c.b16 %v1252, %v1250
      %v1685 = vpack.c.b16 %v1253, %v1251
      %v1686 = vpack.c.b16 %v1256, %v1254
      %v1687 = vpack.c.b16 %v1257, %v1255
      %v1688 = vpack.c.b16 %v1260, %v1258
      %v1689 = vpack.c.b16 %v1261, %v1259
      %v1690 = vpack.c.b16 %v1264, %v1262
      %v1691 = vpack.c.b16 %v1265, %v1263
      %v1692 = vpack.c.b16 %v1268, %v1266
      %v1693 = vpack.c.b16 %v1269, %v1267
      %v1694 = vpack.c.b16 %v1272, %v1270
      %v1695 = vpack.c.b16 %v1273, %v1271
      %v1696 = vpack.c.b16 %v1276, %v1274
      %v1697 = vpack.c.b16 %v1277, %v1275
      %v1698 = vpack.c.b16 %v1280, %v1278
      %v1699 = vpack.c.b16 %v1281, %v1279
      %v1700 = vpack.c.b16 %v1284, %v1282
      %v1701 = vpack.c.b16 %v1285, %v1283
      %v1702 = vpack.c.b16 %v1288, %v1286
      %v1703 = vpack.c.b16 %v1289, %v1287
      %v1704 = vpack.c.b16 %v1292, %v1290
      %v1705 = vpack.c.b16 %v1293, %v1291
      %v1706 = vpack.c.b16 %v1296, %v1294
      %v1707 = vpack.c.b16 %v1297, %v1295
      %v1708 = vpack.c.b16 %v1300, %v1298
      %v1709 = vpack.c.b16 %v1301, %v1299
      %v1710 = vpack.c.b16 %v1304, %v1302
      %v1711 = vpack.c.b16 %v1305, %v1303
      %v1712 = vpack.c.b16 %v1308, %v1306
      %v1713 = vpack.c.b16 %v1309, %v1307
      %v1714 = vpack.c.b16 %v1312, %v1310
      %v1715 = vpack.c.b16 %v1313, %v1311
      %v1716 = vpack.c.b16 %v1316, %v1314
      %v1717 = vpack.c.b16 %v1317, %v1315
      %v1718 = vpack.c.b16 %v1320, %v1318
      %v1719 = vpack.c.b16 %v1321, %v1319
      %v1720 = vpack.c.b16 %v1324, %v1322
      %v1721 = vpack.c.b16 %v1325, %v1323
      %v1722 = vpack.c.b16 %v1328, %v1326
      %v1723 = vpack.c.b16 %v1329, %v1327
      %v1724 = vpack.c.b16 %v1332, %v1330
      %v1725 = vpack.c.b16 %v1333, %v1331
      %v1726 = vpack.c.b16 %v1336, %v1334
      %v1727 = vpack.c.b16 %v1337, %v1335
      %v1728 = vpack.c.b16 %v1340, %v1338
      %v1729 = vpack.c.b16 %v1341, %v1339
      %v1730 = vpack.c.b16 %v1344, %v1342
      %v1731 = vpack.c.b16 %v1345, %v1343
      %v1732 = vpack.c.b16 %v1348, %v1346
      %v1733 = vpack.c.b16 %v1349, %v1347
      %v1734 = vpack.c.b16 %v1352, %v1350
      %v1735 = vpack.c.b16 %v1353, %v1351
      %v1736 = vpack.c.b16 %v1356, %v1354
      %v1737 = vpack.c.b16 %v1357, %v1355
      %v1738 = vpack.c.b16 %v1360, %v1358
      %v1739 = vpack.c.b16 %v1361, %v1359
      %v1740 = vpack.c.b16 %v1364, %v1362
      %v1741 = vpack.c.b16 %v1365, %v1363
      %v1742 = vpack.c.b16 %v1368, %v1366
      %v1743 = vpack.c.b16 %v1369, %v1367
      %v1744 = vpack.c.b16 %v1372, %v1370
      %v1745 = vpack.c.b16 %v1373, %v1371
      %v1746 = vpack.c.b16 %v1376, %v1374
      %v1747 = vpack.c.b16 %v1377, %v1375
      %v1748 = vpack.c.b16 %v1380, %v1378
      %v1749 = vpack.c.b16 %v1381, %v1379
      %v1750 = vpack.c.b16 %v1384, %v1382
      %v1751 = vpack.c.b16 %v1385, %v1383
      %v1752 = vpack.c.b16 %v1388, %v1386
      %v1753 = vpack.c.b16 %v1389, %v1387
      %v1754 = vpack.c.b16 %v1392, %v1390
      %v1755 = vpack.c.b16 %v1393, %v1391
      %v1756 = vpack.c.b16 %v1396, %v1394
      %v1757 = vpack.c.b16 %v1397, %v1395
      %v1758 = vpack.c.b16 %v1400, %v1398
      %v1759 = vpack.c.b16 %v1401, %v1399
      %v1760 = vpack.c.b16 %v1404, %v1402
      %v1761 = vpack.c.b16 %v1405, %v1403
      %v1762 = vpack.c.b16 %v1408, %v1406
      %v1763 = vpack.c.b16 %v1409, %v1407
      %v1764 = vpack.c.b16 %v1412, %v1410
      %v1765 = vpack.c.b16 %v1413, %v1411
      %v1766 = vpack.c.b16 %v1416, %v1414
      %v1767 = vpack.c.b16 %v1417, %v1415
      %v1768 = vpack.c.b16 %v1420, %v1418
      %v1769 = vpack.c.b16 %v1421, %v1419
      %v1770 = vpack.c.b16 %v1424, %v1422
      %v1771 = vpack.c.b16 %v1425, %v1423
      %v1772 = vpack.c.b16 %v1428, %v1426
      %v1773 = vpack.c.b16 %v1429, %v1427
      %v1774 = vpack.c.b16 %v1432, %v1430
      %v1775 = vpack.c.b16 %v1433, %v1431
      %v1776 = vpack.c.b16 %v1436, %v1434
      %v1777 = vpack.c.b16 %v1437, %v1435
      %v1778 = vpack.c.b16 %v1440, %v1438
      %v1779 = vpack.c.b16 %v1441, %v1439
      %v1780 = vpack.c.b16 %v1444, %v1442
      %v1781 = vpack.c.b16 %v1445, %v1443
      %v1782 = vpack.c.b16 %v1448, %v1446
      %v1783 = vpack.c.b16 %v1449, %v1447
      %v1784 = vpack.c.b16 %v1452, %v1450
      %v1785 = vpack.c.b16 %v1453, %v1451
      %v1786 = vpack.c.b16 %v1456, %v1454
      %v1787 = vpack.c.b16 %v1457, %v1455
      %v1788 = vpack.c.b16 %v1460, %v1458
      %v1789 = vpack.c.b16 %v1461, %v1459
      %v1790 = vpack.c.b16 %v1464, %v1462
      %v1791 = vpack.c.b16 %v1465, %v1463
      %v1792 = vpack.c.b16 %v1468, %v1466
      %v1793 = vpack.c.b16 %v1469, %v1467
      %v1794 = vpack.c.b16 %v1472, %v1470
      %v1795 = vpack.c.b16 %v1473, %v1471
      %v1796 = vpack.c.b16 %v1476, %v1474
      %v1797 = vpack.c.b16 %v1477, %v1475
      %v1798 = vpack.c.b16 %v1480, %v1478
      %v1799 = vpack.c.b16 %v1481, %v1479
      %v1800 = vpack.c.b16 %v1484, %v1482
      %v1801 = vpack.c.b16 %v1485, %v1483
      %v1802 = vpack.c.b16 %v1488, %v1486
      %v1803 = vpack.c.b16 %v1489, %v1487
      %v1804 = vpack.c.b16 %v1492, %v1490
      %v1805 = vpack.c.b16 %v1493, %v1491
      %v1806 = vpack.c.b16 %v1496, %v1494
      %v1807 = vpack.c.b16 %v1497, %v1495
      %v1808 = vpack.c.b16 %v1500, %v1498
      %v1809 = vpack.c.b16 %v1501, %v1499
      %v1810 = vpack.c.b16 %v1504, %v1502
      %v1811 = vpack.c.b16 %v1505, %v1503
      %v1812 = vpack.c.b16 %v1508, %v1506
      %v1813 = vpack.c.b16 %v1509, %v1507
      %v1814 = vpack.c.b16 %v1512, %v1510
      %v1815 = vpack.c.b16 %v1513, %v1511
      %v1816 = vpack.c.b16 %v1516, %v1514
      %v1817 = vpack.c.b16 %v1517, %v1515
      %v1818 = vpack.c.b16 %v1520, %v1518
      %v1819 = vpack.c.b16 %v1521, %v1519
      %v1820 = vpack.c.b16 %v1524, %v1522
      %v1821 = vpack.c.b16 %v1525, %v1523
      %v1822 = vpack.c.b16 %v1528, %v1526
      %v1823 = vpack.c.b16 %v1529, %v1527
      %v1824 = vpack.c.b16 %v1532, %v1530
      %v1825 = vpack.c.b16 %v1533, %v1531
      %v1826 = vpack.c.b16 %v1536, %v1534
      %v1827 = vpack.c.b16 %v1537, %v1535
      %v1828 = vpack.c.b16 %v1540, %v1538
      %v1829 = vpack.c.b16 %v1541, %v1539
      %v1830 = vpack.c.b16 %v1544, %v1542
      %v1831 = vpack.c.b16 %v1545, %v1543
      %v1832 = vpack.c.b16 %v1548, %v1546
      %v1833 = vpack.c.b16 %v1549, %v1547
      %v1834 = vpack.c.b16 %v1552, %v1550
      %v1835 = vpack.c.b16 %v1553, %v1551
      %v1836 = vpack.c.b16 %v1556, %v1554
      %v1837 = vpack.c.b16 %v1557, %v1555
      %v1838 = vpack.c.b16 %v1560, %v1558
      %v1839 = vpack.c.b16 %v1561, %v1559
      %v1840 = vpack.c.b16 %v1564, %v1562
      %v1841 = vpack.c.b16 %v1565, %v1563
      %v1842 = vpack.c.b16 %v1568, %v1566
      %v1843 = vpack.c.b16 %v1569, %v1567
      %v1844 = vpack.c.b16 %v1572, %v1570
      %v1845 = vpack.c.b16 %v1573, %v1571
      %v1846 = vpack.c.b16 %v1576, %v1574
      %v1847 = vpack.c.b16 %v1577, %v1575
      %v1848 = vpack.c.b16 %v1580, %v1578
      %v1849 = vpack.c.b16 %v1581, %v1579
      %v1850 = vpack.c.b16 %v1584, %v1582
      %v1851 = vpack.c.b16 %v1585, %v1583
      %v1852 = vpack.c.b16 %v1588, %v1586
      %v1853 = vpack.c.b16 %v1589, %v1587
      %v1854 = vpack.c.b16 %v1592, %v1590
      %v1855 = vpack.c.b16 %v1593, %v1591
      %v1856 = vpack.c.b16 %v1596, %v1594
      %v1857 = vpack.c.b16 %v1597, %v1595
      %v1858 = vpack.c.b16 %v1600, %v1598
      %v1859 = vpack.c.b16 %v1601, %v1599
      %v1860 = vpack.c.b16 %v1604, %v1602
      %v1861 = vpack.c.b16 %v1605, %v1603
      %2118 = vmatpush.bf16.msra.mxu0 %v1620
      %2119 = vmatpush.bf16.msra.mxu0 %v1618
      %2120 = vmatpush.bf16.msra.mxu0 %v1616
      %2121 = vmatpush.bf16.msra.mxu0 %v1614
      %2122 = vmatpush.bf16.msra.mxu0 %v1612
      %2123 = vmatpush.bf16.msra.mxu0 %v1610
      %2124 = vmatpush.bf16.msra.mxu0 %v1608
      %2125 = vmatpush.bf16.msra.mxu0 %v1606
      %2126 = vmatmul.bf16.gmra.mxu0 %v710
      %v2127 = vpop.f32.mrf.mxu0
      %v2128 = vadd.f32 0.0, %v2127
      %v2129 = vpop.f32.mrf.mxu0
      %v2130 = vadd.f32 0.0, %v2129
      %2131 = vmatmul.bf16.gmra.mxu0 %v726
      %v2132 = vpop.f32.mrf.mxu0
      %v2133 = vadd.f32 0.0, %v2132
      %v2134 = vpop.f32.mrf.mxu0
      %v2135 = vadd.f32 0.0, %v2134
      %2136 = vmatmul.bf16.gmra.mxu0 %v742
      %v2137 = vpop.f32.mrf.mxu0
      %v2138 = vadd.f32 0.0, %v2137
      %v2139 = vpop.f32.mrf.mxu0
      %v2140 = vadd.f32 0.0, %v2139
      %2141 = vmatmul.bf16.gmra.mxu0 %v758
      %v2142 = vpop.f32.mrf.mxu0
      %v2143 = vadd.f32 0.0, %v2142
      %v2144 = vpop.f32.mrf.mxu0
      %v2145 = vadd.f32 0.0, %v2144
      %2146 = vdwg.mxu0
      %2147 = vmatpush.bf16.msra.mxu0 %v1636
      %2148 = vmatpush.bf16.msra.mxu0 %v1634
      %2149 = vmatpush.bf16.msra.mxu0 %v1632
      %2150 = vmatpush.bf16.msra.mxu0 %v1630
      %2151 = vmatpush.bf16.msra.mxu0 %v1628
      %2152 = vmatpush.bf16.msra.mxu0 %v1626
      %2153 = vmatpush.bf16.msra.mxu0 %v1624
      %2154 = vmatpush.bf16.msra.mxu0 %v1622
      %2155 = vmatmul.bf16.gmra.mxu0 %v711
      %v2156 = vpop.f32.mrf.mxu0
      %v2157 = vadd.f32 %v2128, %v2156
      %v2158 = vpop.f32.mrf.mxu0
      %v2159 = vadd.f32 %v2130, %v2158
      %2160 = vmatmul.bf16.gmra.mxu0 %v727
      %v2161 = vpop.f32.mrf.mxu0
      %v2162 = vadd.f32 %v2133, %v2161
      %v2163 = vpop.f32.mrf.mxu0
      %v2164 = vadd.f32 %v2135, %v2163
      %2165 = vmatmul.bf16.gmra.mxu0 %v743
      %v2166 = vpop.f32.mrf.mxu0
      %v2167 = vadd.f32 %v2138, %v2166
      %v2168 = vpop.f32.mrf.mxu0
      %v2169 = vadd.f32 %v2140, %v2168
      %2170 = vmatmul.bf16.gmra.mxu0 %v759
      %v2171 = vpop.f32.mrf.mxu0
      %v2172 = vadd.f32 %v2143, %v2171
      %v2173 = vpop.f32.mrf.mxu0
      %v2174 = vadd.f32 %v2145, %v2173
      %2175 = vdwg.mxu0
      %2176 = vmatpush.bf16.msra.mxu0 %v1652
      %2177 = vmatpush.bf16.msra.mxu0 %v1650
      %2178 = vmatpush.bf16.msra.mxu0 %v1648
      %2179 = vmatpush.bf16.msra.mxu0 %v1646
      %2180 = vmatpush.bf16.msra.mxu0 %v1644
      %2181 = vmatpush.bf16.msra.mxu0 %v1642
      %2182 = vmatpush.bf16.msra.mxu0 %v1640
      %2183 = vmatpush.bf16.msra.mxu0 %v1638
      %2184 = vmatmul.bf16.gmra.mxu0 %v712
      %v2185 = vpop.f32.mrf.mxu0
      %v2186 = vadd.f32 %v2157, %v2185
      %v2187 = vpop.f32.mrf.mxu0
      %v2188 = vadd.f32 %v2159, %v2187
      %2189 = vmatmul.bf16.gmra.mxu0 %v728
      %v2190 = vpop.f32.mrf.mxu0
      %v2191 = vadd.f32 %v2162, %v2190
      %v2192 = vpop.f32.mrf.mxu0
      %v2193 = vadd.f32 %v2164, %v2192
      %2194 = vmatmul.bf16.gmra.mxu0 %v744
      %v2195 = vpop.f32.mrf.mxu0
      %v2196 = vadd.f32 %v2167, %v2195
      %v2197 = vpop.f32.mrf.mxu0
      %v2198 = vadd.f32 %v2169, %v2197
      %2199 = vmatmul.bf16.gmra.mxu0 %v760
      %v2200 = vpop.f32.mrf.mxu0
      %v2201 = vadd.f32 %v2172, %v2200
      %v2202 = vpop.f32.mrf.mxu0
      %v2203 = vadd.f32 %v2174, %v2202
      %2204 = vdwg.mxu0
      %2205 = vmatpush.bf16.msra.mxu0 %v1668
      %2206 = vmatpush.bf16.msra.mxu0 %v1666
      %2207 = vmatpush.bf16.msra.mxu0 %v1664
      %2208 = vmatpush.bf16.msra.mxu0 %v1662
      %2209 = vmatpush.bf16.msra.mxu0 %v1660
      %2210 = vmatpush.bf16.msra.mxu0 %v1658
      %2211 = vmatpush.bf16.msra.mxu0 %v1656
      %2212 = vmatpush.bf16.msra.mxu0 %v1654
      %2213 = vmatmul.bf16.gmra.mxu0 %v713
      %v2214 = vpop.f32.mrf.mxu0
      %v2215 = vadd.f32 %v2186, %v2214
      %v2216 = vpop.f32.mrf.mxu0
      %v2217 = vadd.f32 %v2188, %v2216
      %2218 = vmatmul.bf16.gmra.mxu0 %v729
      %v2219 = vpop.f32.mrf.mxu0
      %v2220 = vadd.f32 %v2191, %v2219
      %v2221 = vpop.f32.mrf.mxu0
      %v2222 = vadd.f32 %v2193, %v2221
      %2223 = vmatmul.bf16.gmra.mxu0 %v745
      %v2224 = vpop.f32.mrf.mxu0
      %v2225 = vadd.f32 %v2196, %v2224
      %v2226 = vpop.f32.mrf.mxu0
      %v2227 = vadd.f32 %v2198, %v2226
      %2228 = vmatmul.bf16.gmra.mxu0 %v761
      %v2229 = vpop.f32.mrf.mxu0
      %v2230 = vadd.f32 %v2201, %v2229
      %v2231 = vpop.f32.mrf.mxu0
      %v2232 = vadd.f32 %v2203, %v2231
      %2233 = vdwg.mxu0
      %2234 = vmatpush.bf16.msra.mxu0 %v1684
      %2235 = vmatpush.bf16.msra.mxu0 %v1682
      %2236 = vmatpush.bf16.msra.mxu0 %v1680
      %2237 = vmatpush.bf16.msra.mxu0 %v1678
      %2238 = vmatpush.bf16.msra.mxu0 %v1676
      %2239 = vmatpush.bf16.msra.mxu0 %v1674
      %2240 = vmatpush.bf16.msra.mxu0 %v1672
      %2241 = vmatpush.bf16.msra.mxu0 %v1670
      %2242 = vmatmul.bf16.gmra.mxu0 %v714
      %v2243 = vpop.f32.mrf.mxu0
      %v2244 = vadd.f32 %v2215, %v2243
      %v2245 = vpop.f32.mrf.mxu0
      %v2246 = vadd.f32 %v2217, %v2245
      %2247 = vmatmul.bf16.gmra.mxu0 %v730
      %v2248 = vpop.f32.mrf.mxu0
      %v2249 = vadd.f32 %v2220, %v2248
      %v2250 = vpop.f32.mrf.mxu0
      %v2251 = vadd.f32 %v2222, %v2250
      %2252 = vmatmul.bf16.gmra.mxu0 %v746
      %v2253 = vpop.f32.mrf.mxu0
      %v2254 = vadd.f32 %v2225, %v2253
      %v2255 = vpop.f32.mrf.mxu0
      %v2256 = vadd.f32 %v2227, %v2255
      %2257 = vmatmul.bf16.gmra.mxu0 %v762
      %v2258 = vpop.f32.mrf.mxu0
      %v2259 = vadd.f32 %v2230, %v2258
      %v2260 = vpop.f32.mrf.mxu0
      %v2261 = vadd.f32 %v2232, %v2260
      %2262 = vdwg.mxu0
      %2263 = vmatpush.bf16.msra.mxu0 %v1700
      %2264 = vmatpush.bf16.msra.mxu0 %v1698
      %2265 = vmatpush.bf16.msra.mxu0 %v1696
      %2266 = vmatpush.bf16.msra.mxu0 %v1694
      %2267 = vmatpush.bf16.msra.mxu0 %v1692
      %2268 = vmatpush.bf16.msra.mxu0 %v1690
      %2269 = vmatpush.bf16.msra.mxu0 %v1688
      %2270 = vmatpush.bf16.msra.mxu0 %v1686
      %2271 = vmatmul.bf16.gmra.mxu0 %v715
      %v2272 = vpop.f32.mrf.mxu0
      %v2273 = vadd.f32 %v2244, %v2272
      %v2274 = vpop.f32.mrf.mxu0
      %v2275 = vadd.f32 %v2246, %v2274
      %2276 = vmatmul.bf16.gmra.mxu0 %v731
      %v2277 = vpop.f32.mrf.mxu0
      %v2278 = vadd.f32 %v2249, %v2277
      %v2279 = vpop.f32.mrf.mxu0
      %v2280 = vadd.f32 %v2251, %v2279
      %2281 = vmatmul.bf16.gmra.mxu0 %v747
      %v2282 = vpop.f32.mrf.mxu0
      %v2283 = vadd.f32 %v2254, %v2282
      %v2284 = vpop.f32.mrf.mxu0
      %v2285 = vadd.f32 %v2256, %v2284
      %2286 = vmatmul.bf16.gmra.mxu0 %v763
      %v2287 = vpop.f32.mrf.mxu0
      %v2288 = vadd.f32 %v2259, %v2287
      %v2289 = vpop.f32.mrf.mxu0
      %v2290 = vadd.f32 %v2261, %v2289
      %2291 = vdwg.mxu0
      %2292 = vmatpush.bf16.msra.mxu0 %v1716
      %2293 = vmatpush.bf16.msra.mxu0 %v1714
      %2294 = vmatpush.bf16.msra.mxu0 %v1712
      %2295 = vmatpush.bf16.msra.mxu0 %v1710
      %2296 = vmatpush.bf16.msra.mxu0 %v1708
      %2297 = vmatpush.bf16.msra.mxu0 %v1706
      %2298 = vmatpush.bf16.msra.mxu0 %v1704
      %2299 = vmatpush.bf16.msra.mxu0 %v1702
      %2300 = vmatmul.bf16.gmra.mxu0 %v716
      %v2301 = vpop.f32.mrf.mxu0
      %v2302 = vadd.f32 %v2273, %v2301
      %v2303 = vpop.f32.mrf.mxu0
      %v2304 = vadd.f32 %v2275, %v2303
      %2305 = vmatmul.bf16.gmra.mxu0 %v732
      %v2306 = vpop.f32.mrf.mxu0
      %v2307 = vadd.f32 %v2278, %v2306
      %v2308 = vpop.f32.mrf.mxu0
      %v2309 = vadd.f32 %v2280, %v2308
      %2310 = vmatmul.bf16.gmra.mxu0 %v748
      %v2311 = vpop.f32.mrf.mxu0
      %v2312 = vadd.f32 %v2283, %v2311
      %v2313 = vpop.f32.mrf.mxu0
      %v2314 = vadd.f32 %v2285, %v2313
      %2315 = vmatmul.bf16.gmra.mxu0 %v764
      %v2316 = vpop.f32.mrf.mxu0
      %v2317 = vadd.f32 %v2288, %v2316
      %v2318 = vpop.f32.mrf.mxu0
      %v2319 = vadd.f32 %v2290, %v2318
      %2320 = vdwg.mxu0
      %2321 = vmatpush.bf16.msra.mxu0 %v1732
      %2322 = vmatpush.bf16.msra.mxu0 %v1730
      %2323 = vmatpush.bf16.msra.mxu0 %v1728
      %2324 = vmatpush.bf16.msra.mxu0 %v1726
      %2325 = vmatpush.bf16.msra.mxu0 %v1724
      %2326 = vmatpush.bf16.msra.mxu0 %v1722
      %2327 = vmatpush.bf16.msra.mxu0 %v1720
      %2328 = vmatpush.bf16.msra.mxu0 %v1718
      %2329 = vmatmul.bf16.gmra.mxu0 %v717
      %v2330 = vpop.f32.mrf.mxu0
      %v2331 = vadd.f32 %v2302, %v2330
      %v2332 = vpop.f32.mrf.mxu0
      %v2333 = vadd.f32 %v2304, %v2332
      %2334 = vmatmul.bf16.gmra.mxu0 %v733
      %v2335 = vpop.f32.mrf.mxu0
      %v2336 = vadd.f32 %v2307, %v2335
      %v2337 = vpop.f32.mrf.mxu0
      %v2338 = vadd.f32 %v2309, %v2337
      %2339 = vmatmul.bf16.gmra.mxu0 %v749
      %v2340 = vpop.f32.mrf.mxu0
      %v2341 = vadd.f32 %v2312, %v2340
      %v2342 = vpop.f32.mrf.mxu0
      %v2343 = vadd.f32 %v2314, %v2342
      %2344 = vmatmul.bf16.gmra.mxu0 %v765
      %v2345 = vpop.f32.mrf.mxu0
      %v2346 = vadd.f32 %v2317, %v2345
      %v2347 = vpop.f32.mrf.mxu0
      %v2348 = vadd.f32 %v2319, %v2347
      %2349 = vdwg.mxu0
      %2350 = vmatpush.bf16.msra.mxu0 %v1748
      %2351 = vmatpush.bf16.msra.mxu0 %v1746
      %2352 = vmatpush.bf16.msra.mxu0 %v1744
      %2353 = vmatpush.bf16.msra.mxu0 %v1742
      %2354 = vmatpush.bf16.msra.mxu0 %v1740
      %2355 = vmatpush.bf16.msra.mxu0 %v1738
      %2356 = vmatpush.bf16.msra.mxu0 %v1736
      %2357 = vmatpush.bf16.msra.mxu0 %v1734
      %2358 = vmatmul.bf16.gmra.mxu0 %v718
      %v2359 = vpop.f32.mrf.mxu0
      %v2360 = vadd.f32 %v2331, %v2359
      %v2361 = vpop.f32.mrf.mxu0
      %v2362 = vadd.f32 %v2333, %v2361
      %2363 = vmatmul.bf16.gmra.mxu0 %v734
      %v2364 = vpop.f32.mrf.mxu0
      %v2365 = vadd.f32 %v2336, %v2364
      %v2366 = vpop.f32.mrf.mxu0
      %v2367 = vadd.f32 %v2338, %v2366
      %2368 = vmatmul.bf16.gmra.mxu0 %v750
      %v2369 = vpop.f32.mrf.mxu0
      %v2370 = vadd.f32 %v2341, %v2369
      %v2371 = vpop.f32.mrf.mxu0
      %v2372 = vadd.f32 %v2343, %v2371
      %2373 = vmatmul.bf16.gmra.mxu0 %v766
      %v2374 = vpop.f32.mrf.mxu0
      %v2375 = vadd.f32 %v2346, %v2374
      %v2376 = vpop.f32.mrf.mxu0
      %v2377 = vadd.f32 %v2348, %v2376
      %2378 = vdwg.mxu0
      %2379 = vmatpush.bf16.msra.mxu0 %v1764
      %2380 = vmatpush.bf16.msra.mxu0 %v1762
      %2381 = vmatpush.bf16.msra.mxu0 %v1760
      %2382 = vmatpush.bf16.msra.mxu0 %v1758
      %2383 = vmatpush.bf16.msra.mxu0 %v1756
      %2384 = vmatpush.bf16.msra.mxu0 %v1754
      %2385 = vmatpush.bf16.msra.mxu0 %v1752
      %2386 = vmatpush.bf16.msra.mxu0 %v1750
      %2387 = vmatmul.bf16.gmra.mxu0 %v719
      %v2388 = vpop.f32.mrf.mxu0
      %v2389 = vadd.f32 %v2360, %v2388
      %v2390 = vpop.f32.mrf.mxu0
      %v2391 = vadd.f32 %v2362, %v2390
      %2392 = vmatmul.bf16.gmra.mxu0 %v735
      %v2393 = vpop.f32.mrf.mxu0
      %v2394 = vadd.f32 %v2365, %v2393
      %v2395 = vpop.f32.mrf.mxu0
      %v2396 = vadd.f32 %v2367, %v2395
      %2397 = vmatmul.bf16.gmra.mxu0 %v751
      %v2398 = vpop.f32.mrf.mxu0
      %v2399 = vadd.f32 %v2370, %v2398
      %v2400 = vpop.f32.mrf.mxu0
      %v2401 = vadd.f32 %v2372, %v2400
      %2402 = vmatmul.bf16.gmra.mxu0 %v767
      %v2403 = vpop.f32.mrf.mxu0
      %v2404 = vadd.f32 %v2375, %v2403
      %v2405 = vpop.f32.mrf.mxu0
      %v2406 = vadd.f32 %v2377, %v2405
      %2407 = vdwg.mxu0
      %2408 = vmatpush.bf16.msra.mxu0 %v1780
      %2409 = vmatpush.bf16.msra.mxu0 %v1778
      %2410 = vmatpush.bf16.msra.mxu0 %v1776
      %2411 = vmatpush.bf16.msra.mxu0 %v1774
      %2412 = vmatpush.bf16.msra.mxu0 %v1772
      %2413 = vmatpush.bf16.msra.mxu0 %v1770
      %2414 = vmatpush.bf16.msra.mxu0 %v1768
      %2415 = vmatpush.bf16.msra.mxu0 %v1766
      %2416 = vmatmul.bf16.gmra.mxu0 %v720
      %v2417 = vpop.f32.mrf.mxu0
      %v2418 = vadd.f32 %v2389, %v2417
      %v2419 = vpop.f32.mrf.mxu0
      %v2420 = vadd.f32 %v2391, %v2419
      %2421 = vmatmul.bf16.gmra.mxu0 %v736
      %v2422 = vpop.f32.mrf.mxu0
      %v2423 = vadd.f32 %v2394, %v2422
      %v2424 = vpop.f32.mrf.mxu0
      %v2425 = vadd.f32 %v2396, %v2424
      %2426 = vmatmul.bf16.gmra.mxu0 %v752
      %v2427 = vpop.f32.mrf.mxu0
      %v2428 = vadd.f32 %v2399, %v2427
      %v2429 = vpop.f32.mrf.mxu0
      %v2430 = vadd.f32 %v2401, %v2429
      %2431 = vmatmul.bf16.gmra.mxu0 %v768
      %v2432 = vpop.f32.mrf.mxu0
      %v2433 = vadd.f32 %v2404, %v2432
      %v2434 = vpop.f32.mrf.mxu0
      %v2435 = vadd.f32 %v2406, %v2434
      %2436 = vdwg.mxu0
      %2437 = vmatpush.bf16.msra.mxu0 %v1796
      %2438 = vmatpush.bf16.msra.mxu0 %v1794
      %2439 = vmatpush.bf16.msra.mxu0 %v1792
      %2440 = vmatpush.bf16.msra.mxu0 %v1790
      %2441 = vmatpush.bf16.msra.mxu0 %v1788
      %2442 = vmatpush.bf16.msra.mxu0 %v1786
      %2443 = vmatpush.bf16.msra.mxu0 %v1784
      %2444 = vmatpush.bf16.msra.mxu0 %v1782
      %2445 = vmatmul.bf16.gmra.mxu0 %v721
      %v2446 = vpop.f32.mrf.mxu0
      %v2447 = vadd.f32 %v2418, %v2446
      %v2448 = vpop.f32.mrf.mxu0
      %v2449 = vadd.f32 %v2420, %v2448
      %2450 = vmatmul.bf16.gmra.mxu0 %v737
      %v2451 = vpop.f32.mrf.mxu0
      %v2452 = vadd.f32 %v2423, %v2451
      %v2453 = vpop.f32.mrf.mxu0
      %v2454 = vadd.f32 %v2425, %v2453
      %2455 = vmatmul.bf16.gmra.mxu0 %v753
      %v2456 = vpop.f32.mrf.mxu0
      %v2457 = vadd.f32 %v2428, %v2456
      %v2458 = vpop.f32.mrf.mxu0
      %v2459 = vadd.f32 %v2430, %v2458
      %2460 = vmatmul.bf16.gmra.mxu0 %v769
      %v2461 = vpop.f32.mrf.mxu0
      %v2462 = vadd.f32 %v2433, %v2461
      %v2463 = vpop.f32.mrf.mxu0
      %v2464 = vadd.f32 %v2435, %v2463
      %2465 = vdwg.mxu0
      %2466 = vmatpush.bf16.msra.mxu0 %v1812
      %2467 = vmatpush.bf16.msra.mxu0 %v1810
      %2468 = vmatpush.bf16.msra.mxu0 %v1808
      %2469 = vmatpush.bf16.msra.mxu0 %v1806
      %2470 = vmatpush.bf16.msra.mxu0 %v1804
      %2471 = vmatpush.bf16.msra.mxu0 %v1802
      %2472 = vmatpush.bf16.msra.mxu0 %v1800
      %2473 = vmatpush.bf16.msra.mxu0 %v1798
      %2474 = vmatmul.bf16.gmra.mxu0 %v722
      %v2475 = vpop.f32.mrf.mxu0
      %v2476 = vadd.f32 %v2447, %v2475
      %v2477 = vpop.f32.mrf.mxu0
      %v2478 = vadd.f32 %v2449, %v2477
      %2479 = vmatmul.bf16.gmra.mxu0 %v738
      %v2480 = vpop.f32.mrf.mxu0
      %v2481 = vadd.f32 %v2452, %v2480
      %v2482 = vpop.f32.mrf.mxu0
      %v2483 = vadd.f32 %v2454, %v2482
      %2484 = vmatmul.bf16.gmra.mxu0 %v754
      %v2485 = vpop.f32.mrf.mxu0
      %v2486 = vadd.f32 %v2457, %v2485
      %v2487 = vpop.f32.mrf.mxu0
      %v2488 = vadd.f32 %v2459, %v2487
      %2489 = vmatmul.bf16.gmra.mxu0 %v770
      %v2490 = vpop.f32.mrf.mxu0
      %v2491 = vadd.f32 %v2462, %v2490
      %v2492 = vpop.f32.mrf.mxu0
      %v2493 = vadd.f32 %v2464, %v2492
      %2494 = vdwg.mxu0
      %2495 = vmatpush.bf16.msra.mxu0 %v1828
      %2496 = vmatpush.bf16.msra.mxu0 %v1826
      %2497 = vmatpush.bf16.msra.mxu0 %v1824
      %2498 = vmatpush.bf16.msra.mxu0 %v1822
      %2499 = vmatpush.bf16.msra.mxu0 %v1820
      %2500 = vmatpush.bf16.msra.mxu0 %v1818
      %2501 = vmatpush.bf16.msra.mxu0 %v1816
      %2502 = vmatpush.bf16.msra.mxu0 %v1814
      %2503 = vmatmul.bf16.gmra.mxu0 %v723
      %v2504 = vpop.f32.mrf.mxu0
      %v2505 = vadd.f32 %v2476, %v2504
      %v2506 = vpop.f32.mrf.mxu0
      %v2507 = vadd.f32 %v2478, %v2506
      %2508 = vmatmul.bf16.gmra.mxu0 %v739
      %v2509 = vpop.f32.mrf.mxu0
      %v2510 = vadd.f32 %v2481, %v2509
      %v2511 = vpop.f32.mrf.mxu0
      %v2512 = vadd.f32 %v2483, %v2511
      %2513 = vmatmul.bf16.gmra.mxu0 %v755
      %v2514 = vpop.f32.mrf.mxu0
      %v2515 = vadd.f32 %v2486, %v2514
      %v2516 = vpop.f32.mrf.mxu0
      %v2517 = vadd.f32 %v2488, %v2516
      %2518 = vmatmul.bf16.gmra.mxu0 %v771
      %v2519 = vpop.f32.mrf.mxu0
      %v2520 = vadd.f32 %v2491, %v2519
      %v2521 = vpop.f32.mrf.mxu0
      %v2522 = vadd.f32 %v2493, %v2521
      %2523 = vdwg.mxu0
      %2524 = vmatpush.bf16.msra.mxu0 %v1844
      %2525 = vmatpush.bf16.msra.mxu0 %v1842
      %2526 = vmatpush.bf16.msra.mxu0 %v1840
      %2527 = vmatpush.bf16.msra.mxu0 %v1838
      %2528 = vmatpush.bf16.msra.mxu0 %v1836
      %2529 = vmatpush.bf16.msra.mxu0 %v1834
      %2530 = vmatpush.bf16.msra.mxu0 %v1832
      %2531 = vmatpush.bf16.msra.mxu0 %v1830
      %2532 = vmatmul.bf16.gmra.mxu0 %v724
      %v2533 = vpop.f32.mrf.mxu0
      %v2534 = vadd.f32 %v2505, %v2533
      %v2535 = vpop.f32.mrf.mxu0
      %v2536 = vadd.f32 %v2507, %v2535
      %2537 = vmatmul.bf16.gmra.mxu0 %v740
      %v2538 = vpop.f32.mrf.mxu0
      %v2539 = vadd.f32 %v2510, %v2538
      %v2540 = vpop.f32.mrf.mxu0
      %v2541 = vadd.f32 %v2512, %v2540
      %2542 = vmatmul.bf16.gmra.mxu0 %v756
      %v2543 = vpop.f32.mrf.mxu0
      %v2544 = vadd.f32 %v2515, %v2543
      %v2545 = vpop.f32.mrf.mxu0
      %v2546 = vadd.f32 %v2517, %v2545
      %2547 = vmatmul.bf16.gmra.mxu0 %v772
      %v2548 = vpop.f32.mrf.mxu0
      %v2549 = vadd.f32 %v2520, %v2548
      %v2550 = vpop.f32.mrf.mxu0
      %v2551 = vadd.f32 %v2522, %v2550
      %2552 = vdwg.mxu0
      %2553 = vmatpush.bf16.msra.mxu0 %v1860
      %2554 = vmatpush.bf16.msra.mxu0 %v1858
      %2555 = vmatpush.bf16.msra.mxu0 %v1856
      %2556 = vmatpush.bf16.msra.mxu0 %v1854
      %2557 = vmatpush.bf16.msra.mxu0 %v1852
      %2558 = vmatpush.bf16.msra.mxu0 %v1850
      %2559 = vmatpush.bf16.msra.mxu0 %v1848
      %2560 = vmatpush.bf16.msra.mxu0 %v1846
      %2561 = vmatmul.bf16.gmra.mxu0 %v725
      %v2562 = vpop.f32.mrf.mxu0
      %v2563 = vadd.f32 %v2534, %v2562
      %v2564 = vpop.f32.mrf.mxu0
      %v2565 = vadd.f32 %v2536, %v2564
      %2566 = vmatmul.bf16.gmra.mxu0 %v741
      %v2567 = vpop.f32.mrf.mxu0
      %v2568 = vadd.f32 %v2539, %v2567
      %v2569 = vpop.f32.mrf.mxu0
      %v2570 = vadd.f32 %v2541, %v2569
      %2571 = vmatmul.bf16.gmra.mxu0 %v757
      %v2572 = vpop.f32.mrf.mxu0
      %v2573 = vadd.f32 %v2544, %v2572
      %v2574 = vpop.f32.mrf.mxu0
      %v2575 = vadd.f32 %v2546, %v2574
      %2576 = vmatmul.bf16.gmra.mxu0 %v773
      %v2577 = vpop.f32.mrf.mxu0
      %v2578 = vadd.f32 %v2549, %v2577
      %v2579 = vpop.f32.mrf.mxu0
      %v2580 = vadd.f32 %v2551, %v2579
      %2581 = vdwg.mxu0
      %2582 = vmatpush.bf16.msra.mxu0 %v1621
      %2583 = vmatpush.bf16.msra.mxu0 %v1619
      %2584 = vmatpush.bf16.msra.mxu0 %v1617
      %2585 = vmatpush.bf16.msra.mxu0 %v1615
      %2586 = vmatpush.bf16.msra.mxu0 %v1613
      %2587 = vmatpush.bf16.msra.mxu0 %v1611
      %2588 = vmatpush.bf16.msra.mxu0 %v1609
      %2589 = vmatpush.bf16.msra.mxu0 %v1607
      %2590 = vmatmul.bf16.gmra.mxu0 %v710
      %v2591 = vpop.f32.mrf.mxu0
      %v2592 = vadd.f32 0.0, %v2591
      %v2593 = vpop.f32.mrf.mxu0
      %v2594 = vadd.f32 0.0, %v2593
      %2595 = vmatmul.bf16.gmra.mxu0 %v726
      %v2596 = vpop.f32.mrf.mxu0
      %v2597 = vadd.f32 0.0, %v2596
      %v2598 = vpop.f32.mrf.mxu0
      %v2599 = vadd.f32 0.0, %v2598
      %2600 = vmatmul.bf16.gmra.mxu0 %v742
      %v2601 = vpop.f32.mrf.mxu0
      %v2602 = vadd.f32 0.0, %v2601
      %v2603 = vpop.f32.mrf.mxu0
      %v2604 = vadd.f32 0.0, %v2603
      %2605 = vmatmul.bf16.gmra.mxu0 %v758
      %v2606 = vpop.f32.mrf.mxu0
      %v2607 = vadd.f32 0.0, %v2606
      %v2608 = vpop.f32.mrf.mxu0
      %v2609 = vadd.f32 0.0, %v2608
      %2610 = vdwg.mxu0
      %2611 = vmatpush.bf16.msra.mxu0 %v1637
      %2612 = vmatpush.bf16.msra.mxu0 %v1635
      %2613 = vmatpush.bf16.msra.mxu0 %v1633
      %2614 = vmatpush.bf16.msra.mxu0 %v1631
      %2615 = vmatpush.bf16.msra.mxu0 %v1629
      %2616 = vmatpush.bf16.msra.mxu0 %v1627
      %2617 = vmatpush.bf16.msra.mxu0 %v1625
      %2618 = vmatpush.bf16.msra.mxu0 %v1623
      %2619 = vmatmul.bf16.gmra.mxu0 %v711
      %v2620 = vpop.f32.mrf.mxu0
      %v2621 = vadd.f32 %v2592, %v2620
      %v2622 = vpop.f32.mrf.mxu0
      %v2623 = vadd.f32 %v2594, %v2622
      %2624 = vmatmul.bf16.gmra.mxu0 %v727
      %v2625 = vpop.f32.mrf.mxu0
      %v2626 = vadd.f32 %v2597, %v2625
      %v2627 = vpop.f32.mrf.mxu0
      %v2628 = vadd.f32 %v2599, %v2627
      %2629 = vmatmul.bf16.gmra.mxu0 %v743
      %v2630 = vpop.f32.mrf.mxu0
      %v2631 = vadd.f32 %v2602, %v2630
      %v2632 = vpop.f32.mrf.mxu0
      %v2633 = vadd.f32 %v2604, %v2632
      %2634 = vmatmul.bf16.gmra.mxu0 %v759
      %v2635 = vpop.f32.mrf.mxu0
      %v2636 = vadd.f32 %v2607, %v2635
      %v2637 = vpop.f32.mrf.mxu0
      %v2638 = vadd.f32 %v2609, %v2637
      %2639 = vdwg.mxu0
      %2640 = vmatpush.bf16.msra.mxu0 %v1653
      %2641 = vmatpush.bf16.msra.mxu0 %v1651
      %2642 = vmatpush.bf16.msra.mxu0 %v1649
      %2643 = vmatpush.bf16.msra.mxu0 %v1647
      %2644 = vmatpush.bf16.msra.mxu0 %v1645
      %2645 = vmatpush.bf16.msra.mxu0 %v1643
      %2646 = vmatpush.bf16.msra.mxu0 %v1641
      %2647 = vmatpush.bf16.msra.mxu0 %v1639
      %2648 = vmatmul.bf16.gmra.mxu0 %v712
      %v2649 = vpop.f32.mrf.mxu0
      %v2650 = vadd.f32 %v2621, %v2649
      %v2651 = vpop.f32.mrf.mxu0
      %v2652 = vadd.f32 %v2623, %v2651
      %2653 = vmatmul.bf16.gmra.mxu0 %v728
      %v2654 = vpop.f32.mrf.mxu0
      %v2655 = vadd.f32 %v2626, %v2654
      %v2656 = vpop.f32.mrf.mxu0
      %v2657 = vadd.f32 %v2628, %v2656
      %2658 = vmatmul.bf16.gmra.mxu0 %v744
      %v2659 = vpop.f32.mrf.mxu0
      %v2660 = vadd.f32 %v2631, %v2659
      %v2661 = vpop.f32.mrf.mxu0
      %v2662 = vadd.f32 %v2633, %v2661
      %2663 = vmatmul.bf16.gmra.mxu0 %v760
      %v2664 = vpop.f32.mrf.mxu0
      %v2665 = vadd.f32 %v2636, %v2664
      %v2666 = vpop.f32.mrf.mxu0
      %v2667 = vadd.f32 %v2638, %v2666
      %2668 = vdwg.mxu0
      %2669 = vmatpush.bf16.msra.mxu0 %v1669
      %2670 = vmatpush.bf16.msra.mxu0 %v1667
      %2671 = vmatpush.bf16.msra.mxu0 %v1665
      %2672 = vmatpush.bf16.msra.mxu0 %v1663
      %2673 = vmatpush.bf16.msra.mxu0 %v1661
      %2674 = vmatpush.bf16.msra.mxu0 %v1659
      %2675 = vmatpush.bf16.msra.mxu0 %v1657
      %2676 = vmatpush.bf16.msra.mxu0 %v1655
      %2677 = vmatmul.bf16.gmra.mxu0 %v713
      %v2678 = vpop.f32.mrf.mxu0
      %v2679 = vadd.f32 %v2650, %v2678
      %v2680 = vpop.f32.mrf.mxu0
      %v2681 = vadd.f32 %v2652, %v2680
      %2682 = vmatmul.bf16.gmra.mxu0 %v729
      %v2683 = vpop.f32.mrf.mxu0
      %v2684 = vadd.f32 %v2655, %v2683
      %v2685 = vpop.f32.mrf.mxu0
      %v2686 = vadd.f32 %v2657, %v2685
      %2687 = vmatmul.bf16.gmra.mxu0 %v745
      %v2688 = vpop.f32.mrf.mxu0
      %v2689 = vadd.f32 %v2660, %v2688
      %v2690 = vpop.f32.mrf.mxu0
      %v2691 = vadd.f32 %v2662, %v2690
      %2692 = vmatmul.bf16.gmra.mxu0 %v761
      %v2693 = vpop.f32.mrf.mxu0
      %v2694 = vadd.f32 %v2665, %v2693
      %v2695 = vpop.f32.mrf.mxu0
      %v2696 = vadd.f32 %v2667, %v2695
      %2697 = vdwg.mxu0
      %2698 = vmatpush.bf16.msra.mxu0 %v1685
      %2699 = vmatpush.bf16.msra.mxu0 %v1683
      %2700 = vmatpush.bf16.msra.mxu0 %v1681
      %2701 = vmatpush.bf16.msra.mxu0 %v1679
      %2702 = vmatpush.bf16.msra.mxu0 %v1677
      %2703 = vmatpush.bf16.msra.mxu0 %v1675
      %2704 = vmatpush.bf16.msra.mxu0 %v1673
      %2705 = vmatpush.bf16.msra.mxu0 %v1671
      %2706 = vmatmul.bf16.gmra.mxu0 %v714
      %v2707 = vpop.f32.mrf.mxu0
      %v2708 = vadd.f32 %v2679, %v2707
      %v2709 = vpop.f32.mrf.mxu0
      %v2710 = vadd.f32 %v2681, %v2709
      %2711 = vmatmul.bf16.gmra.mxu0 %v730
      %v2712 = vpop.f32.mrf.mxu0
      %v2713 = vadd.f32 %v2684, %v2712
      %v2714 = vpop.f32.mrf.mxu0
      %v2715 = vadd.f32 %v2686, %v2714
      %2716 = vmatmul.bf16.gmra.mxu0 %v746
      %v2717 = vpop.f32.mrf.mxu0
      %v2718 = vadd.f32 %v2689, %v2717
      %v2719 = vpop.f32.mrf.mxu0
      %v2720 = vadd.f32 %v2691, %v2719
      %2721 = vmatmul.bf16.gmra.mxu0 %v762
      %v2722 = vpop.f32.mrf.mxu0
      %v2723 = vadd.f32 %v2694, %v2722
      %v2724 = vpop.f32.mrf.mxu0
      %v2725 = vadd.f32 %v2696, %v2724
      %2726 = vdwg.mxu0
      %2727 = vmatpush.bf16.msra.mxu0 %v1701
      %2728 = vmatpush.bf16.msra.mxu0 %v1699
      %2729 = vmatpush.bf16.msra.mxu0 %v1697
      %2730 = vmatpush.bf16.msra.mxu0 %v1695
      %2731 = vmatpush.bf16.msra.mxu0 %v1693
      %2732 = vmatpush.bf16.msra.mxu0 %v1691
      %2733 = vmatpush.bf16.msra.mxu0 %v1689
      %2734 = vmatpush.bf16.msra.mxu0 %v1687
      %2735 = vmatmul.bf16.gmra.mxu0 %v715
      %v2736 = vpop.f32.mrf.mxu0
      %v2737 = vadd.f32 %v2708, %v2736
      %v2738 = vpop.f32.mrf.mxu0
      %v2739 = vadd.f32 %v2710, %v2738
      %2740 = vmatmul.bf16.gmra.mxu0 %v731
      %v2741 = vpop.f32.mrf.mxu0
      %v2742 = vadd.f32 %v2713, %v2741
      %v2743 = vpop.f32.mrf.mxu0
      %v2744 = vadd.f32 %v2715, %v2743
      %2745 = vmatmul.bf16.gmra.mxu0 %v747
      %v2746 = vpop.f32.mrf.mxu0
      %v2747 = vadd.f32 %v2718, %v2746
      %v2748 = vpop.f32.mrf.mxu0
      %v2749 = vadd.f32 %v2720, %v2748
      %2750 = vmatmul.bf16.gmra.mxu0 %v763
      %v2751 = vpop.f32.mrf.mxu0
      %v2752 = vadd.f32 %v2723, %v2751
      %v2753 = vpop.f32.mrf.mxu0
      %v2754 = vadd.f32 %v2725, %v2753
      %2755 = vdwg.mxu0
      %2756 = vmatpush.bf16.msra.mxu0 %v1717
      %2757 = vmatpush.bf16.msra.mxu0 %v1715
      %2758 = vmatpush.bf16.msra.mxu0 %v1713
      %2759 = vmatpush.bf16.msra.mxu0 %v1711
      %2760 = vmatpush.bf16.msra.mxu0 %v1709
      %2761 = vmatpush.bf16.msra.mxu0 %v1707
      %2762 = vmatpush.bf16.msra.mxu0 %v1705
      %2763 = vmatpush.bf16.msra.mxu0 %v1703
      %2764 = vmatmul.bf16.gmra.mxu0 %v716
      %v2765 = vpop.f32.mrf.mxu0
      %v2766 = vadd.f32 %v2737, %v2765
      %v2767 = vpop.f32.mrf.mxu0
      %v2768 = vadd.f32 %v2739, %v2767
      %2769 = vmatmul.bf16.gmra.mxu0 %v732
      %v2770 = vpop.f32.mrf.mxu0
      %v2771 = vadd.f32 %v2742, %v2770
      %v2772 = vpop.f32.mrf.mxu0
      %v2773 = vadd.f32 %v2744, %v2772
      %2774 = vmatmul.bf16.gmra.mxu0 %v748
      %v2775 = vpop.f32.mrf.mxu0
      %v2776 = vadd.f32 %v2747, %v2775
      %v2777 = vpop.f32.mrf.mxu0
      %v2778 = vadd.f32 %v2749, %v2777
      %2779 = vmatmul.bf16.gmra.mxu0 %v764
      %v2780 = vpop.f32.mrf.mxu0
      %v2781 = vadd.f32 %v2752, %v2780
      %v2782 = vpop.f32.mrf.mxu0
      %v2783 = vadd.f32 %v2754, %v2782
      %2784 = vdwg.mxu0
      %2785 = vmatpush.bf16.msra.mxu0 %v1733
      %2786 = vmatpush.bf16.msra.mxu0 %v1731
      %2787 = vmatpush.bf16.msra.mxu0 %v1729
      %2788 = vmatpush.bf16.msra.mxu0 %v1727
      %2789 = vmatpush.bf16.msra.mxu0 %v1725
      %2790 = vmatpush.bf16.msra.mxu0 %v1723
      %2791 = vmatpush.bf16.msra.mxu0 %v1721
      %2792 = vmatpush.bf16.msra.mxu0 %v1719
      %2793 = vmatmul.bf16.gmra.mxu0 %v717
      %v2794 = vpop.f32.mrf.mxu0
      %v2795 = vadd.f32 %v2766, %v2794
      %v2796 = vpop.f32.mrf.mxu0
      %v2797 = vadd.f32 %v2768, %v2796
      %2798 = vmatmul.bf16.gmra.mxu0 %v733
      %v2799 = vpop.f32.mrf.mxu0
      %v2800 = vadd.f32 %v2771, %v2799
      %v2801 = vpop.f32.mrf.mxu0
      %v2802 = vadd.f32 %v2773, %v2801
      %2803 = vmatmul.bf16.gmra.mxu0 %v749
      %v2804 = vpop.f32.mrf.mxu0
      %v2805 = vadd.f32 %v2776, %v2804
      %v2806 = vpop.f32.mrf.mxu0
      %v2807 = vadd.f32 %v2778, %v2806
      %2808 = vmatmul.bf16.gmra.mxu0 %v765
      %v2809 = vpop.f32.mrf.mxu0
      %v2810 = vadd.f32 %v2781, %v2809
      %v2811 = vpop.f32.mrf.mxu0
      %v2812 = vadd.f32 %v2783, %v2811
      %2813 = vdwg.mxu0
      %2814 = vmatpush.bf16.msra.mxu0 %v1749
      %2815 = vmatpush.bf16.msra.mxu0 %v1747
      %2816 = vmatpush.bf16.msra.mxu0 %v1745
      %2817 = vmatpush.bf16.msra.mxu0 %v1743
      %2818 = vmatpush.bf16.msra.mxu0 %v1741
      %2819 = vmatpush.bf16.msra.mxu0 %v1739
      %2820 = vmatpush.bf16.msra.mxu0 %v1737
      %2821 = vmatpush.bf16.msra.mxu0 %v1735
      %2822 = vmatmul.bf16.gmra.mxu0 %v718
      %v2823 = vpop.f32.mrf.mxu0
      %v2824 = vadd.f32 %v2795, %v2823
      %v2825 = vpop.f32.mrf.mxu0
      %v2826 = vadd.f32 %v2797, %v2825
      %2827 = vmatmul.bf16.gmra.mxu0 %v734
      %v2828 = vpop.f32.mrf.mxu0
      %v2829 = vadd.f32 %v2800, %v2828
      %v2830 = vpop.f32.mrf.mxu0
      %v2831 = vadd.f32 %v2802, %v2830
      %2832 = vmatmul.bf16.gmra.mxu0 %v750
      %v2833 = vpop.f32.mrf.mxu0
      %v2834 = vadd.f32 %v2805, %v2833
      %v2835 = vpop.f32.mrf.mxu0
      %v2836 = vadd.f32 %v2807, %v2835
      %2837 = vmatmul.bf16.gmra.mxu0 %v766
      %v2838 = vpop.f32.mrf.mxu0
      %v2839 = vadd.f32 %v2810, %v2838
      %v2840 = vpop.f32.mrf.mxu0
      %v2841 = vadd.f32 %v2812, %v2840
      %2842 = vdwg.mxu0
      %2843 = vmatpush.bf16.msra.mxu0 %v1765
      %2844 = vmatpush.bf16.msra.mxu0 %v1763
      %2845 = vmatpush.bf16.msra.mxu0 %v1761
      %2846 = vmatpush.bf16.msra.mxu0 %v1759
      %2847 = vmatpush.bf16.msra.mxu0 %v1757
      %2848 = vmatpush.bf16.msra.mxu0 %v1755
      %2849 = vmatpush.bf16.msra.mxu0 %v1753
      %2850 = vmatpush.bf16.msra.mxu0 %v1751
      %2851 = vmatmul.bf16.gmra.mxu0 %v719
      %v2852 = vpop.f32.mrf.mxu0
      %v2853 = vadd.f32 %v2824, %v2852
      %v2854 = vpop.f32.mrf.mxu0
      %v2855 = vadd.f32 %v2826, %v2854
      %2856 = vmatmul.bf16.gmra.mxu0 %v735
      %v2857 = vpop.f32.mrf.mxu0
      %v2858 = vadd.f32 %v2829, %v2857
      %v2859 = vpop.f32.mrf.mxu0
      %v2860 = vadd.f32 %v2831, %v2859
      %2861 = vmatmul.bf16.gmra.mxu0 %v751
      %v2862 = vpop.f32.mrf.mxu0
      %v2863 = vadd.f32 %v2834, %v2862
      %v2864 = vpop.f32.mrf.mxu0
      %v2865 = vadd.f32 %v2836, %v2864
      %2866 = vmatmul.bf16.gmra.mxu0 %v767
      %v2867 = vpop.f32.mrf.mxu0
      %v2868 = vadd.f32 %v2839, %v2867
      %v2869 = vpop.f32.mrf.mxu0
      %v2870 = vadd.f32 %v2841, %v2869
      %2871 = vdwg.mxu0
      %2872 = vmatpush.bf16.msra.mxu0 %v1781
      %2873 = vmatpush.bf16.msra.mxu0 %v1779
      %2874 = vmatpush.bf16.msra.mxu0 %v1777
      %2875 = vmatpush.bf16.msra.mxu0 %v1775
      %2876 = vmatpush.bf16.msra.mxu0 %v1773
      %2877 = vmatpush.bf16.msra.mxu0 %v1771
      %2878 = vmatpush.bf16.msra.mxu0 %v1769
      %2879 = vmatpush.bf16.msra.mxu0 %v1767
      %2880 = vmatmul.bf16.gmra.mxu0 %v720
      %v2881 = vpop.f32.mrf.mxu0
      %v2882 = vadd.f32 %v2853, %v2881
      %v2883 = vpop.f32.mrf.mxu0
      %v2884 = vadd.f32 %v2855, %v2883
      %2885 = vmatmul.bf16.gmra.mxu0 %v736
      %v2886 = vpop.f32.mrf.mxu0
      %v2887 = vadd.f32 %v2858, %v2886
      %v2888 = vpop.f32.mrf.mxu0
      %v2889 = vadd.f32 %v2860, %v2888
      %2890 = vmatmul.bf16.gmra.mxu0 %v752
      %v2891 = vpop.f32.mrf.mxu0
      %v2892 = vadd.f32 %v2863, %v2891
      %v2893 = vpop.f32.mrf.mxu0
      %v2894 = vadd.f32 %v2865, %v2893
      %2895 = vmatmul.bf16.gmra.mxu0 %v768
      %v2896 = vpop.f32.mrf.mxu0
      %v2897 = vadd.f32 %v2868, %v2896
      %v2898 = vpop.f32.mrf.mxu0
      %v2899 = vadd.f32 %v2870, %v2898
      %2900 = vdwg.mxu0
      %2901 = vmatpush.bf16.msra.mxu0 %v1797
      %2902 = vmatpush.bf16.msra.mxu0 %v1795
      %2903 = vmatpush.bf16.msra.mxu0 %v1793
      %2904 = vmatpush.bf16.msra.mxu0 %v1791
      %2905 = vmatpush.bf16.msra.mxu0 %v1789
      %2906 = vmatpush.bf16.msra.mxu0 %v1787
      %2907 = vmatpush.bf16.msra.mxu0 %v1785
      %2908 = vmatpush.bf16.msra.mxu0 %v1783
      %2909 = vmatmul.bf16.gmra.mxu0 %v721
      %v2910 = vpop.f32.mrf.mxu0
      %v2911 = vadd.f32 %v2882, %v2910
      %v2912 = vpop.f32.mrf.mxu0
      %v2913 = vadd.f32 %v2884, %v2912
      %2914 = vmatmul.bf16.gmra.mxu0 %v737
      %v2915 = vpop.f32.mrf.mxu0
      %v2916 = vadd.f32 %v2887, %v2915
      %v2917 = vpop.f32.mrf.mxu0
      %v2918 = vadd.f32 %v2889, %v2917
      %2919 = vmatmul.bf16.gmra.mxu0 %v753
      %v2920 = vpop.f32.mrf.mxu0
      %v2921 = vadd.f32 %v2892, %v2920
      %v2922 = vpop.f32.mrf.mxu0
      %v2923 = vadd.f32 %v2894, %v2922
      %2924 = vmatmul.bf16.gmra.mxu0 %v769
      %v2925 = vpop.f32.mrf.mxu0
      %v2926 = vadd.f32 %v2897, %v2925
      %v2927 = vpop.f32.mrf.mxu0
      %v2928 = vadd.f32 %v2899, %v2927
      %2929 = vdwg.mxu0
      %2930 = vmatpush.bf16.msra.mxu0 %v1813
      %2931 = vmatpush.bf16.msra.mxu0 %v1811
      %2932 = vmatpush.bf16.msra.mxu0 %v1809
      %2933 = vmatpush.bf16.msra.mxu0 %v1807
      %2934 = vmatpush.bf16.msra.mxu0 %v1805
      %2935 = vmatpush.bf16.msra.mxu0 %v1803
      %2936 = vmatpush.bf16.msra.mxu0 %v1801
      %2937 = vmatpush.bf16.msra.mxu0 %v1799
      %2938 = vmatmul.bf16.gmra.mxu0 %v722
      %v2939 = vpop.f32.mrf.mxu0
      %v2940 = vadd.f32 %v2911, %v2939
      %v2941 = vpop.f32.mrf.mxu0
      %v2942 = vadd.f32 %v2913, %v2941
      %2943 = vmatmul.bf16.gmra.mxu0 %v738
      %v2944 = vpop.f32.mrf.mxu0
      %v2945 = vadd.f32 %v2916, %v2944
      %v2946 = vpop.f32.mrf.mxu0
      %v2947 = vadd.f32 %v2918, %v2946
      %2948 = vmatmul.bf16.gmra.mxu0 %v754
      %v2949 = vpop.f32.mrf.mxu0
      %v2950 = vadd.f32 %v2921, %v2949
      %v2951 = vpop.f32.mrf.mxu0
      %v2952 = vadd.f32 %v2923, %v2951
      %2953 = vmatmul.bf16.gmra.mxu0 %v770
      %v2954 = vpop.f32.mrf.mxu0
      %v2955 = vadd.f32 %v2926, %v2954
      %v2956 = vpop.f32.mrf.mxu0
      %v2957 = vadd.f32 %v2928, %v2956
      %2958 = vdwg.mxu0
      %2959 = vmatpush.bf16.msra.mxu0 %v1829
      %2960 = vmatpush.bf16.msra.mxu0 %v1827
      %2961 = vmatpush.bf16.msra.mxu0 %v1825
      %2962 = vmatpush.bf16.msra.mxu0 %v1823
      %2963 = vmatpush.bf16.msra.mxu0 %v1821
      %2964 = vmatpush.bf16.msra.mxu0 %v1819
      %2965 = vmatpush.bf16.msra.mxu0 %v1817
      %2966 = vmatpush.bf16.msra.mxu0 %v1815
      %2967 = vmatmul.bf16.gmra.mxu0 %v723
      %v2968 = vpop.f32.mrf.mxu0
      %v2969 = vadd.f32 %v2940, %v2968
      %v2970 = vpop.f32.mrf.mxu0
      %v2971 = vadd.f32 %v2942, %v2970
      %2972 = vmatmul.bf16.gmra.mxu0 %v739
      %v2973 = vpop.f32.mrf.mxu0
      %v2974 = vadd.f32 %v2945, %v2973
      %v2975 = vpop.f32.mrf.mxu0
      %v2976 = vadd.f32 %v2947, %v2975
      %2977 = vmatmul.bf16.gmra.mxu0 %v755
      %v2978 = vpop.f32.mrf.mxu0
      %v2979 = vadd.f32 %v2950, %v2978
      %v2980 = vpop.f32.mrf.mxu0
      %v2981 = vadd.f32 %v2952, %v2980
      %2982 = vmatmul.bf16.gmra.mxu0 %v771
      %v2983 = vpop.f32.mrf.mxu0
      %v2984 = vadd.f32 %v2955, %v2983
      %v2985 = vpop.f32.mrf.mxu0
      %v2986 = vadd.f32 %v2957, %v2985
      %2987 = vdwg.mxu0
      %2988 = vmatpush.bf16.msra.mxu0 %v1845
      %2989 = vmatpush.bf16.msra.mxu0 %v1843
      %2990 = vmatpush.bf16.msra.mxu0 %v1841
      %2991 = vmatpush.bf16.msra.mxu0 %v1839
      %2992 = vmatpush.bf16.msra.mxu0 %v1837
      %2993 = vmatpush.bf16.msra.mxu0 %v1835
      %2994 = vmatpush.bf16.msra.mxu0 %v1833
      %2995 = vmatpush.bf16.msra.mxu0 %v1831
      %2996 = vmatmul.bf16.gmra.mxu0 %v724
      %v2997 = vpop.f32.mrf.mxu0
      %v2998 = vadd.f32 %v2969, %v2997
      %v2999 = vpop.f32.mrf.mxu0
      %v3000 = vadd.f32 %v2971, %v2999
      %3001 = vmatmul.bf16.gmra.mxu0 %v740
      %v3002 = vpop.f32.mrf.mxu0
      %v3003 = vadd.f32 %v2974, %v3002
      %v3004 = vpop.f32.mrf.mxu0
      %v3005 = vadd.f32 %v2976, %v3004
      %3006 = vmatmul.bf16.gmra.mxu0 %v756
      %v3007 = vpop.f32.mrf.mxu0
      %v3008 = vadd.f32 %v2979, %v3007
      %v3009 = vpop.f32.mrf.mxu0
      %v3010 = vadd.f32 %v2981, %v3009
      %3011 = vmatmul.bf16.gmra.mxu0 %v772
      %v3012 = vpop.f32.mrf.mxu0
      %v3013 = vadd.f32 %v2984, %v3012
      %v3014 = vpop.f32.mrf.mxu0
      %v3015 = vadd.f32 %v2986, %v3014
      %3016 = vdwg.mxu0
      %3017 = vmatpush.bf16.msra.mxu0 %v1861
      %3018 = vmatpush.bf16.msra.mxu0 %v1859
      %3019 = vmatpush.bf16.msra.mxu0 %v1857
      %3020 = vmatpush.bf16.msra.mxu0 %v1855
      %3021 = vmatpush.bf16.msra.mxu0 %v1853
      %3022 = vmatpush.bf16.msra.mxu0 %v1851
      %3023 = vmatpush.bf16.msra.mxu0 %v1849
      %3024 = vmatpush.bf16.msra.mxu0 %v1847
      %3025 = vmatmul.bf16.gmra.mxu0 %v725
      %v3026 = vpop.f32.mrf.mxu0
      %v3027 = vadd.f32 %v2998, %v3026
      %v3028 = vpop.f32.mrf.mxu0
      %v3029 = vadd.f32 %v3000, %v3028
      %3030 = vmatmul.bf16.gmra.mxu0 %v741
      %v3031 = vpop.f32.mrf.mxu0
      %v3032 = vadd.f32 %v3003, %v3031
      %v3033 = vpop.f32.mrf.mxu0
      %v3034 = vadd.f32 %v3005, %v3033
      %3035 = vmatmul.bf16.gmra.mxu0 %v757
      %v3036 = vpop.f32.mrf.mxu0
      %v3037 = vadd.f32 %v3008, %v3036
      %v3038 = vpop.f32.mrf.mxu0
      %v3039 = vadd.f32 %v3010, %v3038
      %3040 = vmatmul.bf16.gmra.mxu0 %v773
      %v3041 = vpop.f32.mrf.mxu0
      %v3042 = vadd.f32 %v3013, %v3041
      %v3043 = vpop.f32.mrf.mxu0
      %v3044 = vadd.f32 %v3015, %v3043
      %3045 = vdwg.mxu0
      %v3046 = vadd.f32 %v2563, %v2565
      %v3047 = vadd.f32 %v3046, %v2568
      %v3048 = vadd.f32 %v3047, %v2570
      %v3049 = vadd.f32 %v3048, %v2573
      %v3050 = vadd.f32 %v3049, %v2575
      %v3051 = vadd.f32 %v3050, %v2578
      %v3052 = vadd.f32 %v3051, %v2580
      %v3053 = vrot.slane %v3052, 4
      %v3054 = vadd.f32 %v3052, %v3053
      %v3055 = vrot.slane %v3054, 2
      %v3056 = vadd.f32 %v3054, %v3055
      %v3057 = vrot.slane %v3056, 1
      %v3058 = vadd.f32 %v3056, %v3057
      %v3059 = vadd.f32 %v3027, %v3029
      %v3060 = vadd.f32 %v3059, %v3032
      %v3061 = vadd.f32 %v3060, %v3034
      %v3062 = vadd.f32 %v3061, %v3037
      %v3063 = vadd.f32 %v3062, %v3039
      %v3064 = vadd.f32 %v3063, %v3042
      %v3065 = vadd.f32 %v3064, %v3044
      %v3066 = vrot.slane %v3065, 4
      %v3067 = vadd.f32 %v3065, %v3066
      %v3068 = vrot.slane %v3067, 2
      %v3069 = vadd.f32 %v3067, %v3068
      %v3070 = vrot.slane %v3069, 1
      %v3071 = vadd.f32 %v3069, %v3070
      %v3072 = vrcp.pop 64.0
      %v3073 = vmul.f32 64.0, %v3072
      %v3074 = vsub.f32 1.0, %v3073
      %v3075 = vmul.f32 %v3072, %v3074
      %v3076 = vadd.f32 %v3072, %v3075
      %vm3077 = vweird.f32 %v3072
      %v3078 = vsel %vm3077, %v3072, %v3076
      %v3079 = vmul.f32 %v3058, %v3078
      %v3080 = vmul.f32 %v3071, %v3078
      %v3081 = vsub.f32 %v2563, %v3079
      %v3082 = vsub.f32 %v3027, %v3080
      %v3083 = vsub.f32 %v2565, %v3079
      %v3084 = vsub.f32 %v3029, %v3080
      %v3085 = vsub.f32 %v2568, %v3079
      %v3086 = vsub.f32 %v3032, %v3080
      %v3087 = vsub.f32 %v2570, %v3079
      %v3088 = vsub.f32 %v3034, %v3080
      %v3089 = vsub.f32 %v2573, %v3079
      %v3090 = vsub.f32 %v3037, %v3080
      %v3091 = vsub.f32 %v2575, %v3079
      %v3092 = vsub.f32 %v3039, %v3080
      %v3093 = vsub.f32 %v2578, %v3079
      %v3094 = vsub.f32 %v3042, %v3080
      %v3095 = vsub.f32 %v2580, %v3079
      %v3096 = vsub.f32 %v3044, %v3080
      %v3097 = vmul.f32 %v3081, %v3081
      %v3098 = vmul.f32 %v3082, %v3082
      %v3099 = vmul.f32 %v3083, %v3083
      %v3100 = vmul.f32 %v3084, %v3084
      %v3101 = vmul.f32 %v3085, %v3085
      %v3102 = vmul.f32 %v3086, %v3086
      %v3103 = vmul.f32 %v3087, %v3087
      %v3104 = vmul.f32 %v3088, %v3088
      %v3105 = vmul.f32 %v3089, %v3089
      %v3106 = vmul.f32 %v3090, %v3090
      %v3107 = vmul.f32 %v3091, %v3091
      %v3108 = vmul.f32 %v3092, %v3092
      %v3109 = vmul.f32 %v3093, %v3093
      %v3110 = vmul.f32 %v3094, %v3094
      %v3111 = vmul.f32 %v3095, %v3095
      %v3112 = vmul.f32 %v3096, %v3096
      %v3113 = vadd.f32 %v3097, %v3099
      %v3114 = vadd.f32 %v3113, %v3101
      %v3115 = vadd.f32 %v3114, %v3103
      %v3116 = vadd.f32 %v3115, %v3105
      %v3117 = vadd.f32 %v3116, %v3107
      %v3118 = vadd.f32 %v3117, %v3109
      %v3119 = vadd.f32 %v3118, %v3111
      %v3120 = vrot.slane %v3119, 4
      %v3121 = vadd.f32 %v3119, %v3120
      %v3122 = vrot.slane %v3121, 2
      %v3123 = vadd.f32 %v3121, %v3122
      %v3124 = vrot.slane %v3123, 1
      %v3125 = vadd.f32 %v3123, %v3124
      %v3126 = vadd.f32 %v3098, %v3100
      %v3127 = vadd.f32 %v3126, %v3102
      %v3128 = vadd.f32 %v3127, %v3104
      %v3129 = vadd.f32 %v3128, %v3106
      %v3130 = vadd.f32 %v3129, %v3108
      %v3131 = vadd.f32 %v3130, %v3110
      %v3132 = vadd.f32 %v3131, %v3112
      %v3133 = vrot.slane %v3132, 4
      %v3134 = vadd.f32 %v3132, %v3133
      %v3135 = vrot.slane %v3134, 2
      %v3136 = vadd.f32 %v3134, %v3135
      %v3137 = vrot.slane %v3136, 1
      %v3138 = vadd.f32 %v3136, %v3137
      %v3139 = vmul.f32 %v3125, %v3078
      %v3140 = vmul.f32 %v3138, %v3078
      %v3141 = vld [vmem:[%s2] sm:$0x3]
      %v3142 = vadd.f32 %v3139, 1e-05
      %v3143 = vadd.f32 %v3140, 1e-05
      %v3144 = vrsqrt.pop %v3142
      %v3145 = vmul.f32 %v3144, %v3142
      %v3146 = vmul.f32 %v3145, %v3144
      %v3147 = vmul.f32 0.5, %v3146
      %v3148 = vsub.f32 1.5, %v3147
      %v3149 = vmul.f32 %v3144, %v3148
      %vm3150 = vweird.f32 %v3142
      %vm3151 = vweird.f32 %v3144
      %vm3152 = vmor %vm3150, %vm3151
      %v3153 = vsel %vm3152, %v3144, %v3149
      %v3154 = vrsqrt.pop %v3143
      %v3155 = vmul.f32 %v3154, %v3143
      %v3156 = vmul.f32 %v3155, %v3154
      %v3157 = vmul.f32 0.5, %v3156
      %v3158 = vsub.f32 1.5, %v3157
      %v3159 = vmul.f32 %v3154, %v3158
      %vm3160 = vweird.f32 %v3143
      %vm3161 = vweird.f32 %v3154
      %vm3162 = vmor %vm3160, %vm3161
      %v3163 = vsel %vm3162, %v3154, %v3159
      %v3166 = vrot.slane %v3163, 7
      %vm3167 = vcmask 1040384
      %v3168 = vsel %vm3167, %v3153, %v3166
      %v3170 = vmul.f32 %v3141, %v3168
      %v3172 = vperm.slane %v3170, 0
      %v3173 = vperm.slane %v3170, 1
      %v3176 = vmul.f32 %v3081, %v3172
      %v3177 = vmul.f32 %v3082, %v3173
      %v3178 = vmul.f32 %v3083, %v3172
      %v3179 = vmul.f32 %v3084, %v3173
      %v3180 = vmul.f32 %v3085, %v3172
      %v3181 = vmul.f32 %v3086, %v3173
      %v3182 = vmul.f32 %v3087, %v3172
      %v3183 = vmul.f32 %v3088, %v3173
      %v3184 = vmul.f32 %v3089, %v3172
      %v3185 = vmul.f32 %v3090, %v3173
      %v3186 = vmul.f32 %v3091, %v3172
      %v3187 = vmul.f32 %v3092, %v3173
      %v3188 = vmul.f32 %v3093, %v3172
      %v3189 = vmul.f32 %v3094, %v3173
      %v3190 = vmul.f32 %v3095, %v3172
      %v3191 = vmul.f32 %v3096, %v3173
      %v3192 = vld [vmem:[%s3] sm:$0x3]
      %v3194 = vperm.slane %v3192, 0
      %v3195 = vperm.slane %v3192, 1
      %v3198 = vadd.f32 %v3176, %v3194
      %v3199 = vadd.f32 %v3177, %v3195
      %v3200 = vadd.f32 %v3178, %v3194
      %v3201 = vadd.f32 %v3179, %v3195
      %v3202 = vadd.f32 %v3180, %v3194
      %v3203 = vadd.f32 %v3181, %v3195
      %v3204 = vadd.f32 %v3182, %v3194
      %v3205 = vadd.f32 %v3183, %v3195
      %v3206 = vadd.f32 %v3184, %v3194
      %v3207 = vadd.f32 %v3185, %v3195
      %v3208 = vadd.f32 %v3186, %v3194
      %v3209 = vadd.f32 %v3187, %v3195
      %v3210 = vadd.f32 %v3188, %v3194
      %v3211 = vadd.f32 %v3189, %v3195
      %v3212 = vadd.f32 %v3190, %v3194
      %v3213 = vadd.f32 %v3191, %v3195
      %v3214 = vmul.f32 %v3198, 0.2
      %v3215 = vmul.f32 %v3199, 0.2
      %v3216 = vmul.f32 %v3200, 0.2
      %v3217 = vmul.f32 %v3201, 0.2
      %v3218 = vmul.f32 %v3202, 0.2
      %v3219 = vmul.f32 %v3203, 0.2
      %v3220 = vmul.f32 %v3204, 0.2
      %v3221 = vmul.f32 %v3205, 0.2
      %v3222 = vmul.f32 %v3206, 0.2
      %v3223 = vmul.f32 %v3207, 0.2
      %v3224 = vmul.f32 %v3208, 0.2
      %v3225 = vmul.f32 %v3209, 0.2
      %v3226 = vmul.f32 %v3210, 0.2
      %v3227 = vmul.f32 %v3211, 0.2
      %v3228 = vmul.f32 %v3212, 0.2
      %v3229 = vmul.f32 %v3213, 0.2
      %v3230 = vmax.f32 %v3198, %v3214
      %v3231 = vmax.f32 %v3199, %v3215
      %v3232 = vmax.f32 %v3200, %v3216
      %v3233 = vmax.f32 %v3201, %v3217
      %v3234 = vmax.f32 %v3202, %v3218
      %v3235 = vmax.f32 %v3203, %v3219
      %v3236 = vmax.f32 %v3204, %v3220
      %v3237 = vmax.f32 %v3205, %v3221
      %v3238 = vmax.f32 %v3206, %v3222
      %v3239 = vmax.f32 %v3207, %v3223
      %v3240 = vmax.f32 %v3208, %v3224
      %v3241 = vmax.f32 %v3209, %v3225
      %v3242 = vmax.f32 %v3210, %v3226
      %v3243 = vmax.f32 %v3211, %v3227
      %v3244 = vmax.f32 %v3212, %v3228
      %v3245 = vmax.f32 %v3213, %v3229
      %v3246 = vpack.c.bf16 %v3231, %v3230
      %v3247 = vpack.c.bf16 %v3233, %v3232
      %v3248 = vpack.c.bf16 %v3235, %v3234
      %v3249 = vpack.c.bf16 %v3237, %v3236
      %v3250 = vpack.c.bf16 %v3239, %v3238
      %v3251 = vpack.c.bf16 %v3241, %v3240
      %v3252 = vpack.c.bf16 %v3243, %v3242
      %v3253 = vpack.c.bf16 %v3245, %v3244
      %3254 = vst [vmem:[%s197] sm:$0xff] %v3246
      %3255 = vst [vmem:[%s197 + $0x8] sm:$0xff] %v3247
      %3256 = vst [vmem:[%s197 + $0x10] sm:$0xff] %v3248
      %3257 = vst [vmem:[%s197 + $0x18] sm:$0xff] %v3249
      %3258 = vst [vmem:[%s197 + $0x20] sm:$0xff] %v3250
      %3259 = vst [vmem:[%s197 + $0x28] sm:$0xff] %v3251
      %3260 = vst [vmem:[%s197 + $0x30] sm:$0xff] %v3252
      %3261 = vst [vmem:[%s197 + $0x38] sm:$0xff] %v3253
      %p3262 = scmp.lt.s32.totalorder %s15, 1
      %s3263 = scalar_select %p3262, %s15, 1
      %s3264 = smul.addr %s3263, 16
      %s3265 = smul.addr %s3264, 4
      %s3266 = scalar_lea.vmem %s4, %s3265
      // Predicated region
      $region37: #{d_forward.6} parent=35 // pred_check
        %p3267 = pneg %p122
      $region38: #{d_forward.6} parent=35 // pred_check_branch
        %3269 = sbr.rel (%p3267) target = $region40
      $region39: #{d_forward.6} parent=35 // pred_region
        _
      $region40: #{d_forward.6} parent=35 // pred_fallthru
        _
    $region36: #{d_forward.6} parent=5 // pred_fallthru
      _
    %p3270 = scmp.le.s32.totalorder 2, %s10
    // Predicated region
    $region41: #{d_forward.6} parent=5 // pred_check
      %p3271 = pneg %p3270
    $region42: #{d_forward.6} parent=5 // pred_check_branch
      %3273 = sbr.rel (%p3271) target = $region44
    $region43: #{d_forward.6} parent=5 // pred_region
      %s3274 = ssub.s32 %s10, 2
      // Predicated region
      $region45: #{d_forward.6} parent=43 // pred_check
        %p3275 = pneg %p128
      $region46: #{d_forward.6} parent=43 // pred_check_branch
        %3277 = sbr.rel (%p3275) target = $region48
      $region47: #{d_forward.6} parent=43 // pred_region
        %p3278 = scmp.lt.s32.totalorder %s16, 1
        %s3279 = scalar_select %p3278, %s16, 1
        %s3280 = smul.addr %s3279, 16
        %s3281 = smul.addr %s3280, 4
        %s3282 = scalar_lea.vmem %s4, %s3281
      $region48: #{d_forward.6} parent=43 // pred_fallthru
        _
    $region44: #{d_forward.6} parent=5 // pred_fallthru
      _
  $region6: #{d_forward.6} parent=0 // loop_footer
    %s14 = sadd.s32 1, %s10
  $region7: #{d_forward.6} parent=0 // loop_footer_branch
    %9 = sbr.rel target = $region3
  $region8: #{d_forward.6} parent=0 // loop_exit
    _

// kernel: d_forward.7
$region0: #{d_forward.7}
  #allocation0 [shape = 'u32[]', space=smem, size = 0x4, offset = 0x4, fixed_abs, tag = 'smem constant byte address 0x4 - core index']
  #allocation1 [shape = 'u32[72,128]{1,0:T(1,128)}', space=vmem, size = 0x9000, scoped, tag = 'internal scratch']
  #allocation2 [shape = 'f32[1,1]{1,0:T(1,128)S(1)}', space=vmem, size = 0x200, scoped, tag = 'scoped memory for d_forward.7']
  %s0 = inlined_call_operand.vmem [shape: bf16[2,16,4096], index: 0, kind: input, shape index: {}]
  %s1 = inlined_call_operand.vmem [shape: bf16[4096,256], index: 1, kind: input, shape index: {}]
  %s2 = inlined_call_operand.vmem [shape: f32[1,256], index: 2, kind: input, shape index: {}]
  %s3 = inlined_call_operand.vmem [shape: f32[1,256], index: 3, kind: input, shape index: {}]
  %s4 = inlined_call_operand.vmem [shape: f32[16,256], index: 4, kind: input, shape index: {}]
  %s5 = inlined_call_operand.<no memory space> [shape: f32[1,1], index: 5, kind: input, shape index: {}]
  %s6 = inlined_call_operand.vmem [shape: f32[2,1,1], index: 6, kind: output, shape index: {}]
  %s7 = sld [smem:[#allocation0]]
  $region57: #{d_forward.7} parent=0
    _
  %s9 = ssub.s32 1, %s7
  %s10 = scalar_select 0, %s9, %s7
  %v11 = vstv %s5
  %12 = vst [vmem:[#allocation2] sm:$0x1] %v11
  loop: start=0, step=1, limit=4
  $region2: #{d_forward.7} parent=0 // loop_pre_header
    _
  $region3: #{d_forward.7} parent=0 // loop_header
    %s14 = sphi 0, %s18
    %p15 = scmp.ge.s32.totalorder %s14, 4
    %s24 = sphi 0, %s26
    %s27 = sphi 0, %s24
    %s28 = sphi 0, %s27
    %s44 = sphi 0, %s28
    %s48 = sphi 0, %s48
    %s50 = sphi 0, %s48
    %s51 = sphi 0, %s50
    %s65 = sphi 0, %s51
    %s69 = sphi 0, %s69
    %s71 = sphi 0, %s69
    %s72 = sphi 0, %s71
    %s86 = sphi 0, %s72
    %s90 = sphi 0, %s90
    %s92 = sphi 0, %s90
    %s93 = sphi 0, %s92
    %s107 = sphi 0, %s93
    %s111 = sphi 0, %s111
    %s113 = sphi 0, %s111
    %s114 = sphi 0, %s113
    %s128 = sphi 0, %s114
    %s132 = sphi 0, %s132
    %s134 = sphi 0, %s132
    %s135 = sphi 0, %s134
    %s149 = sphi 0, %s135
    %s155 = sphi 0, %s157
    %s158 = sphi 0, %s155
    %s159 = sphi 0, %s158
    %s175 = sphi 0, %s159
  $region4: #{d_forward.7} parent=0 // loop_header_branch
    %17 = sbr.rel (%p15) target = $region8
  $region5: #{d_forward.7} parent=0 // loop_body
    %s19 = ssub.s32 %s14, 1
    %s20 = ssub.s32 %s14, 2
    %s21 = sadd.s32 %s14, 1
    %s22 = ssub.s32 %s14, %s21
    %p23 = scmp.eq.s32.totalorder %s22, 0
    %s25 = sadd.s32 %s24, 1
    %s26 = scalar_select %p23, %s24, %s25
    %p29 = pneg %p23
    %p30 = scmp.eq.s32.totalorder %s14, 1
    %p31 = por %p29, %p30
    %p32 = scmp.ne.s32.totalorder %s24, %s27
    %p33 = scmp.eq.s32.totalorder %s14, 0
    %p34 = por %p32, %p33
    %p35 = scmp.ne.s32.totalorder %s24, %s27
    %p36 = scmp.eq.s32.totalorder %s19, 1
    %p37 = por %p35, %p36
    %p38 = scmp.ne.s32.totalorder %s27, %s28
    %p39 = scmp.eq.s32.totalorder %s19, 0
    %p40 = por %p38, %p39
    %p41 = scmp.ne.s32.totalorder %s27, %s28
    %p42 = scmp.eq.s32.totalorder %s20, 1
    %p43 = por %p41, %p42
    %p45 = scmp.ne.s32.totalorder %s28, %s44
    %p46 = scmp.eq.s32.totalorder %s20, 0
    %p47 = por %p45, %p46
    %s49 = sadd.s32 %s48, 1
    %p52 = scmp.eq.s32.totalorder %s14, 1
    %p53 = scmp.ne.s32.totalorder %s48, %s50
    %p54 = scmp.eq.s32.totalorder %s14, 0
    %p55 = por %p53, %p54
    %p56 = scmp.ne.s32.totalorder %s48, %s50
    %p57 = scmp.eq.s32.totalorder %s19, 1
    %p58 = por %p56, %p57
    %p59 = scmp.ne.s32.totalorder %s50, %s51
    %p60 = scmp.eq.s32.totalorder %s19, 0
    %p61 = por %p59, %p60
    %p62 = scmp.ne.s32.totalorder %s50, %s51
    %p63 = scmp.eq.s32.totalorder %s20, 1
    %p64 = por %p62, %p63
    %p66 = scmp.ne.s32.totalorder %s51, %s65
    %p67 = scmp.eq.s32.totalorder %s20, 0
    %p68 = por %p66, %p67
    %s70 = sadd.s32 %s69, 1
    %p73 = scmp.eq.s32.totalorder %s14, 1
    %p74 = scmp.ne.s32.totalorder %s69, %s71
    %p75 = scmp.eq.s32.totalorder %s14, 0
    %p76 = por %p74, %p75
    %p77 = scmp.ne.s32.totalorder %s69, %s71
    %p78 = scmp.eq.s32.totalorder %s19, 1
    %p79 = por %p77, %p78
    %p80 = scmp.ne.s32.totalorder %s71, %s72
    %p81 = scmp.eq.s32.totalorder %s19, 0
    %p82 = por %p80, %p81
    %p83 = scmp.ne.s32.totalorder %s71, %s72
    %p84 = scmp.eq.s32.totalorder %s20, 1
    %p85 = por %p83, %p84
    %p87 = scmp.ne.s32.totalorder %s72, %s86
    %p88 = scmp.eq.s32.totalorder %s20, 0
    %p89 = por %p87, %p88
    %s91 = sadd.s32 %s90, 1
    %p94 = scmp.eq.s32.totalorder %s14, 1
    %p95 = scmp.ne.s32.totalorder %s90, %s92
    %p96 = scmp.eq.s32.totalorder %s14, 0
    %p97 = por %p95, %p96
    %p98 = scmp.ne.s32.totalorder %s90, %s92
    %p99 = scmp.eq.s32.totalorder %s19, 1
    %p100 = por %p98, %p99
    %p101 = scmp.ne.s32.totalorder %s92, %s93
    %p102 = scmp.eq.s32.totalorder %s19, 0
    %p103 = por %p101, %p102
    %p104 = scmp.ne.s32.totalorder %s92, %s93
    %p105 = scmp.eq.s32.totalorder %s20, 1
    %p106 = por %p104, %p105
    %p108 = scmp.ne.s32.totalorder %s93, %s107
    %p109 = scmp.eq.s32.totalorder %s20, 0
    %p110 = por %p108, %p109
    %s112 = sadd.s32 %s111, 1
    %p115 = scmp.eq.s32.totalorder %s14, 1
    %p116 = scmp.ne.s32.totalorder %s111, %s113
    %p117 = scmp.eq.s32.totalorder %s14, 0
    %p118 = por %p116, %p117
    %p119 = scmp.ne.s32.totalorder %s111, %s113
    %p120 = scmp.eq.s32.totalorder %s19, 1
    %p121 = por %p119, %p120
    %p122 = scmp.ne.s32.totalorder %s113, %s114
    %p123 = scmp.eq.s32.totalorder %s19, 0
    %p124 = por %p122, %p123
    %p125 = scmp.ne.s32.totalorder %s113, %s114
    %p126 = scmp.eq.s32.totalorder %s20, 1
    %p127 = por %p125, %p126
    %p129 = scmp.ne.s32.totalorder %s114, %s128
    %p130 = scmp.eq.s32.totalorder %s20, 0
    %p131 = por %p129, %p130
    %s133 = sadd.s32 %s132, 1
    %p136 = scmp.eq.s32.totalorder %s14, 1
    %p137 = scmp.ne.s32.totalorder %s132, %s134
    %p138 = scmp.eq.s32.totalorder %s14, 0
    %p139 = por %p137, %p138
    %p140 = scmp.ne.s32.totalorder %s132, %s134
    %p141 = scmp.eq.s32.totalorder %s19, 1
    %p142 = por %p140, %p141
    %p143 = scmp.ne.s32.totalorder %s134, %s135
    %p144 = scmp.eq.s32.totalorder %s19, 0
    %p145 = por %p143, %p144
    %p146 = scmp.ne.s32.totalorder %s134, %s135
    %p147 = scmp.eq.s32.totalorder %s20, 1
    %p148 = por %p146, %p147
    %p150 = scmp.ne.s32.totalorder %s135, %s149
    %p151 = scmp.eq.s32.totalorder %s20, 0
    %p152 = por %p150, %p151
    %s153 = ssub.s32 %s14, %s21
    %p154 = scmp.eq.s32.totalorder %s153, 0
    %s156 = sadd.s32 %s155, 1
    %s157 = scalar_select %p154, %s155, %s156
    %p160 = pneg %p154
    %p161 = scmp.eq.s32.totalorder %s14, 1
    %p162 = por %p160, %p161
    %p163 = scmp.ne.s32.totalorder %s155, %s158
    %p164 = scmp.eq.s32.totalorder %s14, 0
    %p165 = por %p163, %p164
    %p166 = scmp.ne.s32.totalorder %s155, %s158
    %p167 = scmp.eq.s32.totalorder %s19, 1
    %p168 = por %p166, %p167
    %p169 = scmp.ne.s32.totalorder %s158, %s159
    %p170 = scmp.eq.s32.totalorder %s19, 0
    %p171 = por %p169, %p170
    %p172 = scmp.ne.s32.totalorder %s158, %s159
    %p173 = scmp.eq.s32.totalorder %s20, 1
    %p174 = por %p172, %p173
    %p176 = scmp.ne.s32.totalorder %s159, %s175
    %p177 = scmp.eq.s32.totalorder %s20, 0
    %p178 = por %p176, %p177
    %p179 = scmp.le.s32.totalorder 1, %s14
    %p180 = scmp.lt.s32.totalorder %s14, 3
    %p181 = pnand %p179, %p180
    %p182 = pneg %p181
    // Predicated region
    $region9: #{d_forward.7} parent=5 // pred_check
      _
    $region10: #{d_forward.7} parent=5 // pred_check_branch
      %184 = sbr.rel (%p181) target = $region12
    $region11: #{d_forward.7} parent=5 // pred_region
      %s185 = ssub.s32 %s14, 1
      // Predicated region
      $region13: #{d_forward.7} parent=11 // pred_check
        %p186 = pneg %p61
      $region14: #{d_forward.7} parent=11 // pred_check_branch
        %188 = sbr.rel (%p186) target = $region16
      $region15: #{d_forward.7} parent=11 // pred_region
        _
      $region16: #{d_forward.7} parent=11 // pred_fallthru
        _
      // Predicated region
      $region17: #{d_forward.7} parent=11 // pred_check
        %p189 = pneg %p82
      $region18: #{d_forward.7} parent=11 // pred_check_branch
        %191 = sbr.rel (%p189) target = $region20
      $region19: #{d_forward.7} parent=11 // pred_region
        _
      $region20: #{d_forward.7} parent=11 // pred_fallthru
        _
      // Predicated region
      $region21: #{d_forward.7} parent=11 // pred_check
        %p192 = pneg %p103
      $region22: #{d_forward.7} parent=11 // pred_check_branch
        %194 = sbr.rel (%p192) target = $region24
      $region23: #{d_forward.7} parent=11 // pred_region
        _
      $region24: #{d_forward.7} parent=11 // pred_fallthru
        _
      // Predicated region
      $region25: #{d_forward.7} parent=11 // pred_check
        %p195 = pneg %p124
      $region26: #{d_forward.7} parent=11 // pred_check_branch
        %197 = sbr.rel (%p195) target = $region28
      $region27: #{d_forward.7} parent=11 // pred_region
        _
      $region28: #{d_forward.7} parent=11 // pred_fallthru
        _
      // Predicated region
      $region29: #{d_forward.7} parent=11 // pred_check
        %p198 = pneg %p145
      $region30: #{d_forward.7} parent=11 // pred_check_branch
        %200 = sbr.rel (%p198) target = $region32
      $region31: #{d_forward.7} parent=11 // pred_region
        _
      $region32: #{d_forward.7} parent=11 // pred_fallthru
        _
    $region12: #{d_forward.7} parent=5 // pred_fallthru
      _
    %p201 = scmp.lt.s32.totalorder %s14, 2
    // Predicated region
    $region33: #{d_forward.7} parent=5 // pred_check
      %p202 = pneg %p201
    $region34: #{d_forward.7} parent=5 // pred_check_branch
      %204 = sbr.rel (%p202) target = $region36
    $region35: #{d_forward.7} parent=5 // pred_region
      // Predicated region
      $region37: #{d_forward.7} parent=35 // pred_check
        %p205 = pneg %p34
      $region38: #{d_forward.7} parent=35 // pred_check_branch
        %207 = sbr.rel (%p205) target = $region40
      $region39: #{d_forward.7} parent=35 // pred_region
        %p208 = scmp.lt.s32.totalorder %s14, 1
        %s209 = scalar_select %p208, %s14, 1
        %s210 = smul.addr %s209, 64
        %s211 = smul.addr %s210, 4
        %s212 = scalar_lea.vmem %s0, %s211
      $region40: #{d_forward.7} parent=35 // pred_fallthru
        _
    $region36: #{d_forward.7} parent=5 // pred_fallthru
      _
    %p213 = scmp.le.s32.totalorder 1, %s14
    %p214 = scmp.lt.s32.totalorder %s14, 3
    %p215 = pnand %p213, %p214
    %p216 = pneg %p215
    // Predicated region
    $region41: #{d_forward.7} parent=5 // pred_check
      _
    $region42: #{d_forward.7} parent=5 // pred_check_branch
      %218 = sbr.rel (%p215) target = $region44
    $region43: #{d_forward.7} parent=5 // pred_region
      %s219 = ssub.s32 %s14, 1
      %p220 = scmp.lt.s32.totalorder %s19, 1
      %s221 = scalar_select %p220, %s19, 1
      %s222 = smul.addr %s221, 64
      %s223 = smul.addr %s222, 4
      %s224 = scalar_lea.vmem %s0, %s223
      %p225 = pneg %p40
      %p226 = pneg %p37
      %p227 = pneg %p61
      %p228 = pneg %p58
      %p229 = pneg %p82
      %p230 = pneg %p79
      %p231 = pneg %p103
      %p232 = pneg %p100
      %p233 = pneg %p124
      %p234 = pneg %p121
      %p235 = pneg %p145
      %p236 = pneg %p142
      %p237 = pneg %p171
      %p238 = pneg %p168
      %p239 = scmp.lt.s32.totalorder %s19, 1
      %s240 = scalar_select %p239, %s19, 1
      %s241 = scalar_lea.vmem %s6, %s240
      %p242 = scmp.lt.s32.totalorder %s19, 1
      %s243 = scalar_select %p242, %s19, 1
      %s244 = smul.addr %s243, 64
      %s245 = smul.addr %s244, 4
      %s246 = scalar_lea.vmem %s0, %s245
      %p247 = scmp.lt.s32.totalorder %s19, 1
      %s248 = scalar_select %p247, %s19, 1
      %s249 = scalar_lea.vmem %s6, %s248
      %v250 = vld [vmem:[%s246] sm:$0xff]
      %v251 = vld [vmem:[%s246 + $0x8] sm:$0xff]
      %v252 = vld [vmem:[%s246 + $0x10] sm:$0xff]
      %v253 = vld [vmem:[%s246 + $0x18] sm:$0xff]
      %v254 = vld [vmem:[%s246 + $0x20] sm:$0xff]
      %v255 = vld [vmem:[%s246 + $0x28] sm:$0xff]
      %v256 = vld [vmem:[%s246 + $0x30] sm:$0xff]
      %v257 = vld [vmem:[%s246 + $0x38] sm:$0xff]
      %v258 = vld [vmem:[%s246 + $0x40] sm:$0xff]
      %v259 = vld [vmem:[%s246 + $0x48] sm:$0xff]
      %v260 = vld [vmem:[%s246 + $0x50] sm:$0xff]
      %v261 = vld [vmem:[%s246 + $0x58] sm:$0xff]
      %v262 = vld [vmem:[%s246 + $0x60] sm:$0xff]
      %v263 = vld [vmem:[%s246 + $0x68] sm:$0xff]
      %v264 = vld [vmem:[%s246 + $0x70] sm:$0xff]
      %v265 = vld [vmem:[%s246 + $0x78] sm:$0xff]
      %v266 = vld [vmem:[%s246 + $0x80] sm:$0xff]
      %v267 = vld [vmem:[%s246 + $0x88] sm:$0xff]
      %v268 = vld [vmem:[%s246 + $0x90] sm:$0xff]
      %v269 = vld [vmem:[%s246 + $0x98] sm:$0xff]
      %v270 = vld [vmem:[%s246 + $0xa0] sm:$0xff]
      %v271 = vld [vmem:[%s246 + $0xa8] sm:$0xff]
      %v272 = vld [vmem:[%s246 + $0xb0] sm:$0xff]
      %v273 = vld [vmem:[%s246 + $0xb8] sm:$0xff]
      %v274 = vld [vmem:[%s246 + $0xc0] sm:$0xff]
      %v275 = vld [vmem:[%s246 + $0xc8] sm:$0xff]
      %v276 = vld [vmem:[%s246 + $0xd0] sm:$0xff]
      %v277 = vld [vmem:[%s246 + $0xd8] sm:$0xff]
      %v278 = vld [vmem:[%s246 + $0xe0] sm:$0xff]
      %v279 = vld [vmem:[%s246 + $0xe8] sm:$0xff]
      %v280 = vld [vmem:[%s246 + $0xf0] sm:$0xff]
      %v281 = vld [vmem:[%s246 + $0xf8] sm:$0xff]
      %v282 = vld [vmem:[%s1] sm:$0xff]
      %v283 = vld [vmem:[%s1 + $0x8] sm:$0xff]
      %v284 = vld [vmem:[%s1 + $0x10] sm:$0xff]
      %v285 = vld [vmem:[%s1 + $0x18] sm:$0xff]
      %v286 = vld [vmem:[%s1 + $0x20] sm:$0xff]
      %v287 = vld [vmem:[%s1 + $0x28] sm:$0xff]
      %v288 = vld [vmem:[%s1 + $0x30] sm:$0xff]
      %v289 = vld [vmem:[%s1 + $0x38] sm:$0xff]
      %v290 = vld [vmem:[%s1 + $0x40] sm:$0xff]
      %v291 = vld [vmem:[%s1 + $0x48] sm:$0xff]
      %v292 = vld [vmem:[%s1 + $0x50] sm:$0xff]
      %v293 = vld [vmem:[%s1 + $0x58] sm:$0xff]
      %v294 = vld [vmem:[%s1 + $0x60] sm:$0xff]
      %v295 = vld [vmem:[%s1 + $0x68] sm:$0xff]
      %v296 = vld [vmem:[%s1 + $0x70] sm:$0xff]
      %v297 = vld [vmem:[%s1 + $0x78] sm:$0xff]
      %v298 = vld [vmem:[%s1 + $0x80] sm:$0xff]
      %v299 = vld [vmem:[%s1 + $0x88] sm:$0xff]
      %v300 = vld [vmem:[%s1 + $0x90] sm:$0xff]
      %v301 = vld [vmem:[%s1 + $0x98] sm:$0xff]
      %v302 = vld [vmem:[%s1 + $0xa0] sm:$0xff]
      %v303 = vld [vmem:[%s1 + $0xa8] sm:$0xff]
      %v304 = vld [vmem:[%s1 + $0xb0] sm:$0xff]
      %v305 = vld [vmem:[%s1 + $0xb8] sm:$0xff]
      %v306 = vld [vmem:[%s1 + $0xc0] sm:$0xff]
      %v307 = vld [vmem:[%s1 + $0xc8] sm:$0xff]
      %v308 = vld [vmem:[%s1 + $0xd0] sm:$0xff]
      %v309 = vld [vmem:[%s1 + $0xd8] sm:$0xff]
      %v310 = vld [vmem:[%s1 + $0xe0] sm:$0xff]
      %v311 = vld [vmem:[%s1 + $0xe8] sm:$0xff]
      %v312 = vld [vmem:[%s1 + $0xf0] sm:$0xff]
      %v313 = vld [vmem:[%s1 + $0xf8] sm:$0xff]
      %v314 = vld [vmem:[%s1 + $0x100] sm:$0xff]
      %v315 = vld [vmem:[%s1 + $0x108] sm:$0xff]
      %v316 = vld [vmem:[%s1 + $0x110] sm:$0xff]
      %v317 = vld [vmem:[%s1 + $0x118] sm:$0xff]
      %v318 = vld [vmem:[%s1 + $0x120] sm:$0xff]
      %v319 = vld [vmem:[%s1 + $0x128] sm:$0xff]
      %v320 = vld [vmem:[%s1 + $0x130] sm:$0xff]
      %v321 = vld [vmem:[%s1 + $0x138] sm:$0xff]
      %v322 = vld [vmem:[%s1 + $0x140] sm:$0xff]
      %v323 = vld [vmem:[%s1 + $0x148] sm:$0xff]
      %v324 = vld [vmem:[%s1 + $0x150] sm:$0xff]
      %v325 = vld [vmem:[%s1 + $0x158] sm:$0xff]
      %v326 = vld [vmem:[%s1 + $0x160] sm:$0xff]
      %v327 = vld [vmem:[%s1 + $0x168] sm:$0xff]
      %v328 = vld [vmem:[%s1 + $0x170] sm:$0xff]
      %v329 = vld [vmem:[%s1 + $0x178] sm:$0xff]
      %v330 = vld [vmem:[%s1 + $0x180] sm:$0xff]
      %v331 = vld [vmem:[%s1 + $0x188] sm:$0xff]
      %v332 = vld [vmem:[%s1 + $0x190] sm:$0xff]
      %v333 = vld [vmem:[%s1 + $0x198] sm:$0xff]
      %v334 = vld [vmem:[%s1 + $0x1a0] sm:$0xff]
      %v335 = vld [vmem:[%s1 + $0x1a8] sm:$0xff]
      %v336 = vld [vmem:[%s1 + $0x1b0] sm:$0xff]
      %v337 = vld [vmem:[%s1 + $0x1b8] sm:$0xff]
      %v338 = vld [vmem:[%s1 + $0x1c0] sm:$0xff]
      %v339 = vld [vmem:[%s1 + $0x1c8] sm:$0xff]
      %v340 = vld [vmem:[%s1 + $0x1d0] sm:$0xff]
      %v341 = vld [vmem:[%s1 + $0x1d8] sm:$0xff]
      %v342 = vld [vmem:[%s1 + $0x1e0] sm:$0xff]
      %v343 = vld [vmem:[%s1 + $0x1e8] sm:$0xff]
      %v344 = vld [vmem:[%s1 + $0x1f0] sm:$0xff]
      %v345 = vld [vmem:[%s1 + $0x1f8] sm:$0xff]
      %v346 = vld [vmem:[%s1 + $0x200] sm:$0xff]
      %v347 = vld [vmem:[%s1 + $0x208] sm:$0xff]
      %v348 = vld [vmem:[%s1 + $0x210] sm:$0xff]
      %v349 = vld [vmem:[%s1 + $0x218] sm:$0xff]
      %v350 = vld [vmem:[%s1 + $0x220] sm:$0xff]
      %v351 = vld [vmem:[%s1 + $0x228] sm:$0xff]
      %v352 = vld [vmem:[%s1 + $0x230] sm:$0xff]
      %v353 = vld [vmem:[%s1 + $0x238] sm:$0xff]
      %v354 = vld [vmem:[%s1 + $0x240] sm:$0xff]
      %v355 = vld [vmem:[%s1 + $0x248] sm:$0xff]
      %v356 = vld [vmem:[%s1 + $0x250] sm:$0xff]
      %v357 = vld [vmem:[%s1 + $0x258] sm:$0xff]
      %v358 = vld [vmem:[%s1 + $0x260] sm:$0xff]
      %v359 = vld [vmem:[%s1 + $0x268] sm:$0xff]
      %v360 = vld [vmem:[%s1 + $0x270] sm:$0xff]
      %v361 = vld [vmem:[%s1 + $0x278] sm:$0xff]
      %v362 = vld [vmem:[%s1 + $0x280] sm:$0xff]
      %v363 = vld [vmem:[%s1 + $0x288] sm:$0xff]
      %v364 = vld [vmem:[%s1 + $0x290] sm:$0xff]
      %v365 = vld [vmem:[%s1 + $0x298] sm:$0xff]
      %v366 = vld [vmem:[%s1 + $0x2a0] sm:$0xff]
      %v367 = vld [vmem:[%s1 + $0x2a8] sm:$0xff]
      %v368 = vld [vmem:[%s1 + $0x2b0] sm:$0xff]
      %v369 = vld [vmem:[%s1 + $0x2b8] sm:$0xff]
      %v370 = vld [vmem:[%s1 + $0x2c0] sm:$0xff]
      %v371 = vld [vmem:[%s1 + $0x2c8] sm:$0xff]
      %v372 = vld [vmem:[%s1 + $0x2d0] sm:$0xff]
      %v373 = vld [vmem:[%s1 + $0x2d8] sm:$0xff]
      %v374 = vld [vmem:[%s1 + $0x2e0] sm:$0xff]
      %v375 = vld [vmem:[%s1 + $0x2e8] sm:$0xff]
      %v376 = vld [vmem:[%s1 + $0x2f0] sm:$0xff]
      %v377 = vld [vmem:[%s1 + $0x2f8] sm:$0xff]
      %v378 = vld [vmem:[%s1 + $0x300] sm:$0xff]
      %v379 = vld [vmem:[%s1 + $0x308] sm:$0xff]
      %v380 = vld [vmem:[%s1 + $0x310] sm:$0xff]
      %v381 = vld [vmem:[%s1 + $0x318] sm:$0xff]
      %v382 = vld [vmem:[%s1 + $0x320] sm:$0xff]
      %v383 = vld [vmem:[%s1 + $0x328] sm:$0xff]
      %v384 = vld [vmem:[%s1 + $0x330] sm:$0xff]
      %v385 = vld [vmem:[%s1 + $0x338] sm:$0xff]
      %v386 = vld [vmem:[%s1 + $0x340] sm:$0xff]
      %v387 = vld [vmem:[%s1 + $0x348] sm:$0xff]
      %v388 = vld [vmem:[%s1 + $0x350] sm:$0xff]
      %v389 = vld [vmem:[%s1 + $0x358] sm:$0xff]
      %v390 = vld [vmem:[%s1 + $0x360] sm:$0xff]
      %v391 = vld [vmem:[%s1 + $0x368] sm:$0xff]
      %v392 = vld [vmem:[%s1 + $0x370] sm:$0xff]
      %v393 = vld [vmem:[%s1 + $0x378] sm:$0xff]
      %v394 = vld [vmem:[%s1 + $0x380] sm:$0xff]
      %v395 = vld [vmem:[%s1 + $0x388] sm:$0xff]
      %v396 = vld [vmem:[%s1 + $0x390] sm:$0xff]
      %v397 = vld [vmem:[%s1 + $0x398] sm:$0xff]
      %v398 = vld [vmem:[%s1 + $0x3a0] sm:$0xff]
      %v399 = vld [vmem:[%s1 + $0x3a8] sm:$0xff]
      %v400 = vld [vmem:[%s1 + $0x3b0] sm:$0xff]
      %v401 = vld [vmem:[%s1 + $0x3b8] sm:$0xff]
      %v402 = vld [vmem:[%s1 + $0x3c0] sm:$0xff]
      %v403 = vld [vmem:[%s1 + $0x3c8] sm:$0xff]
      %v404 = vld [vmem:[%s1 + $0x3d0] sm:$0xff]
      %v405 = vld [vmem:[%s1 + $0x3d8] sm:$0xff]
      %v406 = vld [vmem:[%s1 + $0x3e0] sm:$0xff]
      %v407 = vld [vmem:[%s1 + $0x3e8] sm:$0xff]
      %v408 = vld [vmem:[%s1 + $0x3f0] sm:$0xff]
      %v409 = vld [vmem:[%s1 + $0x3f8] sm:$0xff]
      %v410 = vld [vmem:[%s1 + $0x400] sm:$0xff]
      %v411 = vld [vmem:[%s1 + $0x408] sm:$0xff]
      %v412 = vld [vmem:[%s1 + $0x410] sm:$0xff]
      %v413 = vld [vmem:[%s1 + $0x418] sm:$0xff]
      %v414 = vld [vmem:[%s1 + $0x420] sm:$0xff]
      %v415 = vld [vmem:[%s1 + $0x428] sm:$0xff]
      %v416 = vld [vmem:[%s1 + $0x430] sm:$0xff]
      %v417 = vld [vmem:[%s1 + $0x438] sm:$0xff]
      %v418 = vld [vmem:[%s1 + $0x440] sm:$0xff]
      %v419 = vld [vmem:[%s1 + $0x448] sm:$0xff]
      %v420 = vld [vmem:[%s1 + $0x450] sm:$0xff]
      %v421 = vld [vmem:[%s1 + $0x458] sm:$0xff]
      %v422 = vld [vmem:[%s1 + $0x460] sm:$0xff]
      %v423 = vld [vmem:[%s1 + $0x468] sm:$0xff]
      %v424 = vld [vmem:[%s1 + $0x470] sm:$0xff]
      %v425 = vld [vmem:[%s1 + $0x478] sm:$0xff]
      %v426 = vld [vmem:[%s1 + $0x480] sm:$0xff]
      %v427 = vld [vmem:[%s1 + $0x488] sm:$0xff]
      %v428 = vld [vmem:[%s1 + $0x490] sm:$0xff]
      %v429 = vld [vmem:[%s1 + $0x498] sm:$0xff]
      %v430 = vld [vmem:[%s1 + $0x4a0] sm:$0xff]
      %v431 = vld [vmem:[%s1 + $0x4a8] sm:$0xff]
      %v432 = vld [vmem:[%s1 + $0x4b0] sm:$0xff]
      %v433 = vld [vmem:[%s1 + $0x4b8] sm:$0xff]
      %v434 = vld [vmem:[%s1 + $0x4c0] sm:$0xff]
      %v435 = vld [vmem:[%s1 + $0x4c8] sm:$0xff]
      %v436 = vld [vmem:[%s1 + $0x4d0] sm:$0xff]
      %v437 = vld [vmem:[%s1 + $0x4d8] sm:$0xff]
      %v438 = vld [vmem:[%s1 + $0x4e0] sm:$0xff]
      %v439 = vld [vmem:[%s1 + $0x4e8] sm:$0xff]
      %v440 = vld [vmem:[%s1 + $0x4f0] sm:$0xff]
      %v441 = vld [vmem:[%s1 + $0x4f8] sm:$0xff]
      %v442 = vld [vmem:[%s1 + $0x500] sm:$0xff]
      %v443 = vld [vmem:[%s1 + $0x508] sm:$0xff]
      %v444 = vld [vmem:[%s1 + $0x510] sm:$0xff]
      %v445 = vld [vmem:[%s1 + $0x518] sm:$0xff]
      %v446 = vld [vmem:[%s1 + $0x520] sm:$0xff]
      %v447 = vld [vmem:[%s1 + $0x528] sm:$0xff]
      %v448 = vld [vmem:[%s1 + $0x530] sm:$0xff]
      %v449 = vld [vmem:[%s1 + $0x538] sm:$0xff]
      %v450 = vld [vmem:[%s1 + $0x540] sm:$0xff]
      %v451 = vld [vmem:[%s1 + $0x548] sm:$0xff]
      %v452 = vld [vmem:[%s1 + $0x550] sm:$0xff]
      %v453 = vld [vmem:[%s1 + $0x558] sm:$0xff]
      %v454 = vld [vmem:[%s1 + $0x560] sm:$0xff]
      %v455 = vld [vmem:[%s1 + $0x568] sm:$0xff]
      %v456 = vld [vmem:[%s1 + $0x570] sm:$0xff]
      %v457 = vld [vmem:[%s1 + $0x578] sm:$0xff]
      %v458 = vld [vmem:[%s1 + $0x580] sm:$0xff]
      %v459 = vld [vmem:[%s1 + $0x588] sm:$0xff]
      %v460 = vld [vmem:[%s1 + $0x590] sm:$0xff]
      %v461 = vld [vmem:[%s1 + $0x598] sm:$0xff]
      %v462 = vld [vmem:[%s1 + $0x5a0] sm:$0xff]
      %v463 = vld [vmem:[%s1 + $0x5a8] sm:$0xff]
      %v464 = vld [vmem:[%s1 + $0x5b0] sm:$0xff]
      %v465 = vld [vmem:[%s1 + $0x5b8] sm:$0xff]
      %v466 = vld [vmem:[%s1 + $0x5c0] sm:$0xff]
      %v467 = vld [vmem:[%s1 + $0x5c8] sm:$0xff]
      %v468 = vld [vmem:[%s1 + $0x5d0] sm:$0xff]
      %v469 = vld [vmem:[%s1 + $0x5d8] sm:$0xff]
      %v470 = vld [vmem:[%s1 + $0x5e0] sm:$0xff]
      %v471 = vld [vmem:[%s1 + $0x5e8] sm:$0xff]
      %v472 = vld [vmem:[%s1 + $0x5f0] sm:$0xff]
      %v473 = vld [vmem:[%s1 + $0x5f8] sm:$0xff]
      %v474 = vld [vmem:[%s1 + $0x600] sm:$0xff]
      %v475 = vld [vmem:[%s1 + $0x608] sm:$0xff]
      %v476 = vld [vmem:[%s1 + $0x610] sm:$0xff]
      %v477 = vld [vmem:[%s1 + $0x618] sm:$0xff]
      %v478 = vld [vmem:[%s1 + $0x620] sm:$0xff]
      %v479 = vld [vmem:[%s1 + $0x628] sm:$0xff]
      %v480 = vld [vmem:[%s1 + $0x630] sm:$0xff]
      %v481 = vld [vmem:[%s1 + $0x638] sm:$0xff]
      %v482 = vld [vmem:[%s1 + $0x640] sm:$0xff]
      %v483 = vld [vmem:[%s1 + $0x648] sm:$0xff]
      %v484 = vld [vmem:[%s1 + $0x650] sm:$0xff]
      %v485 = vld [vmem:[%s1 + $0x658] sm:$0xff]
      %v486 = vld [vmem:[%s1 + $0x660] sm:$0xff]
      %v487 = vld [vmem:[%s1 + $0x668] sm:$0xff]
      %v488 = vld [vmem:[%s1 + $0x670] sm:$0xff]
      %v489 = vld [vmem:[%s1 + $0x678] sm:$0xff]
      %v490 = vld [vmem:[%s1 + $0x680] sm:$0xff]
      %v491 = vld [vmem:[%s1 + $0x688] sm:$0xff]
      %v492 = vld [vmem:[%s1 + $0x690] sm:$0xff]
      %v493 = vld [vmem:[%s1 + $0x698] sm:$0xff]
      %v494 = vld [vmem:[%s1 + $0x6a0] sm:$0xff]
      %v495 = vld [vmem:[%s1 + $0x6a8] sm:$0xff]
      %v496 = vld [vmem:[%s1 + $0x6b0] sm:$0xff]
      %v497 = vld [vmem:[%s1 + $0x6b8] sm:$0xff]
      %v498 = vld [vmem:[%s1 + $0x6c0] sm:$0xff]
      %v499 = vld [vmem:[%s1 + $0x6c8] sm:$0xff]
      %v500 = vld [vmem:[%s1 + $0x6d0] sm:$0xff]
      %v501 = vld [vmem:[%s1 + $0x6d8] sm:$0xff]
      %v502 = vld [vmem:[%s1 + $0x6e0] sm:$0xff]
      %v503 = vld [vmem:[%s1 + $0x6e8] sm:$0xff]
      %v504 = vld [vmem:[%s1 + $0x6f0] sm:$0xff]
      %v505 = vld [vmem:[%s1 + $0x6f8] sm:$0xff]
      %v506 = vld [vmem:[%s1 + $0x700] sm:$0xff]
      %v507 = vld [vmem:[%s1 + $0x708] sm:$0xff]
      %v508 = vld [vmem:[%s1 + $0x710] sm:$0xff]
      %v509 = vld [vmem:[%s1 + $0x718] sm:$0xff]
      %v510 = vld [vmem:[%s1 + $0x720] sm:$0xff]
      %v511 = vld [vmem:[%s1 + $0x728] sm:$0xff]
      %v512 = vld [vmem:[%s1 + $0x730] sm:$0xff]
      %v513 = vld [vmem:[%s1 + $0x738] sm:$0xff]
      %v514 = vld [vmem:[%s1 + $0x740] sm:$0xff]
      %v515 = vld [vmem:[%s1 + $0x748] sm:$0xff]
      %v516 = vld [vmem:[%s1 + $0x750] sm:$0xff]
      %v517 = vld [vmem:[%s1 + $0x758] sm:$0xff]
      %v518 = vld [vmem:[%s1 + $0x760] sm:$0xff]
      %v519 = vld [vmem:[%s1 + $0x768] sm:$0xff]
      %v520 = vld [vmem:[%s1 + $0x770] sm:$0xff]
      %v521 = vld [vmem:[%s1 + $0x778] sm:$0xff]
      %v522 = vld [vmem:[%s1 + $0x780] sm:$0xff]
      %v523 = vld [vmem:[%s1 + $0x788] sm:$0xff]
      %v524 = vld [vmem:[%s1 + $0x790] sm:$0xff]
      %v525 = vld [vmem:[%s1 + $0x798] sm:$0xff]
      %v526 = vld [vmem:[%s1 + $0x7a0] sm:$0xff]
      %v527 = vld [vmem:[%s1 + $0x7a8] sm:$0xff]
      %v528 = vld [vmem:[%s1 + $0x7b0] sm:$0xff]
      %v529 = vld [vmem:[%s1 + $0x7b8] sm:$0xff]
      %v530 = vld [vmem:[%s1 + $0x7c0] sm:$0xff]
      %v531 = vld [vmem:[%s1 + $0x7c8] sm:$0xff]
      %v532 = vld [vmem:[%s1 + $0x7d0] sm:$0xff]
      %v533 = vld [vmem:[%s1 + $0x7d8] sm:$0xff]
      %v534 = vld [vmem:[%s1 + $0x7e0] sm:$0xff]
      %v535 = vld [vmem:[%s1 + $0x7e8] sm:$0xff]
      %v536 = vld [vmem:[%s1 + $0x7f0] sm:$0xff]
      %v537 = vld [vmem:[%s1 + $0x7f8] sm:$0xff]
      %v538 = vld [vmem:[%s1 + $0x800] sm:$0xff]
      %v539 = vld [vmem:[%s1 + $0x808] sm:$0xff]
      %v540 = vld [vmem:[%s1 + $0x810] sm:$0xff]
      %v541 = vld [vmem:[%s1 + $0x818] sm:$0xff]
      %v542 = vld [vmem:[%s1 + $0x820] sm:$0xff]
      %v543 = vld [vmem:[%s1 + $0x828] sm:$0xff]
      %v544 = vld [vmem:[%s1 + $0x830] sm:$0xff]
      %v545 = vld [vmem:[%s1 + $0x838] sm:$0xff]
      %v546 = vld [vmem:[%s1 + $0x840] sm:$0xff]
      %v547 = vld [vmem:[%s1 + $0x848] sm:$0xff]
      %v548 = vld [vmem:[%s1 + $0x850] sm:$0xff]
      %v549 = vld [vmem:[%s1 + $0x858] sm:$0xff]
      %v550 = vld [vmem:[%s1 + $0x860] sm:$0xff]
      %v551 = vld [vmem:[%s1 + $0x868] sm:$0xff]
      %v552 = vld [vmem:[%s1 + $0x870] sm:$0xff]
      %v553 = vld [vmem:[%s1 + $0x878] sm:$0xff]
      %v554 = vld [vmem:[%s1 + $0x880] sm:$0xff]
      %v555 = vld [vmem:[%s1 + $0x888] sm:$0xff]
      %v556 = vld [vmem:[%s1 + $0x890] sm:$0xff]
      %v557 = vld [vmem:[%s1 + $0x898] sm:$0xff]
      %v558 = vld [vmem:[%s1 + $0x8a0] sm:$0xff]
      %v559 = vld [vmem:[%s1 + $0x8a8] sm:$0xff]
      %v560 = vld [vmem:[%s1 + $0x8b0] sm:$0xff]
      %v561 = vld [vmem:[%s1 + $0x8b8] sm:$0xff]
      %v562 = vld [vmem:[%s1 + $0x8c0] sm:$0xff]
      %v563 = vld [vmem:[%s1 + $0x8c8] sm:$0xff]
      %v564 = vld [vmem:[%s1 + $0x8d0] sm:$0xff]
      %v565 = vld [vmem:[%s1 + $0x8d8] sm:$0xff]
      %v566 = vld [vmem:[%s1 + $0x8e0] sm:$0xff]
      %v567 = vld [vmem:[%s1 + $0x8e8] sm:$0xff]
      %v568 = vld [vmem:[%s1 + $0x8f0] sm:$0xff]
      %v569 = vld [vmem:[%s1 + $0x8f8] sm:$0xff]
      %v570 = vld [vmem:[%s1 + $0x900] sm:$0xff]
      %v571 = vld [vmem:[%s1 + $0x908] sm:$0xff]
      %v572 = vld [vmem:[%s1 + $0x910] sm:$0xff]
      %v573 = vld [vmem:[%s1 + $0x918] sm:$0xff]
      %v574 = vld [vmem:[%s1 + $0x920] sm:$0xff]
      %v575 = vld [vmem:[%s1 + $0x928] sm:$0xff]
      %v576 = vld [vmem:[%s1 + $0x930] sm:$0xff]
      %v577 = vld [vmem:[%s1 + $0x938] sm:$0xff]
      %v578 = vld [vmem:[%s1 + $0x940] sm:$0xff]
      %v579 = vld [vmem:[%s1 + $0x948] sm:$0xff]
      %v580 = vld [vmem:[%s1 + $0x950] sm:$0xff]
      %v581 = vld [vmem:[%s1 + $0x958] sm:$0xff]
      %v582 = vld [vmem:[%s1 + $0x960] sm:$0xff]
      %v583 = vld [vmem:[%s1 + $0x968] sm:$0xff]
      %v584 = vld [vmem:[%s1 + $0x970] sm:$0xff]
      %v585 = vld [vmem:[%s1 + $0x978] sm:$0xff]
      %v586 = vld [vmem:[%s1 + $0x980] sm:$0xff]
      %v587 = vld [vmem:[%s1 + $0x988] sm:$0xff]
      %v588 = vld [vmem:[%s1 + $0x990] sm:$0xff]
      %v589 = vld [vmem:[%s1 + $0x998] sm:$0xff]
      %v590 = vld [vmem:[%s1 + $0x9a0] sm:$0xff]
      %v591 = vld [vmem:[%s1 + $0x9a8] sm:$0xff]
      %v592 = vld [vmem:[%s1 + $0x9b0] sm:$0xff]
      %v593 = vld [vmem:[%s1 + $0x9b8] sm:$0xff]
      %v594 = vld [vmem:[%s1 + $0x9c0] sm:$0xff]
      %v595 = vld [vmem:[%s1 + $0x9c8] sm:$0xff]
      %v596 = vld [vmem:[%s1 + $0x9d0] sm:$0xff]
      %v597 = vld [vmem:[%s1 + $0x9d8] sm:$0xff]
      %v598 = vld [vmem:[%s1 + $0x9e0] sm:$0xff]
      %v599 = vld [vmem:[%s1 + $0x9e8] sm:$0xff]
      %v600 = vld [vmem:[%s1 + $0x9f0] sm:$0xff]
      %v601 = vld [vmem:[%s1 + $0x9f8] sm:$0xff]
      %v602 = vld [vmem:[%s1 + $0xa00] sm:$0xff]
      %v603 = vld [vmem:[%s1 + $0xa08] sm:$0xff]
      %v604 = vld [vmem:[%s1 + $0xa10] sm:$0xff]
      %v605 = vld [vmem:[%s1 + $0xa18] sm:$0xff]
      %v606 = vld [vmem:[%s1 + $0xa20] sm:$0xff]
      %v607 = vld [vmem:[%s1 + $0xa28] sm:$0xff]
      %v608 = vld [vmem:[%s1 + $0xa30] sm:$0xff]
      %v609 = vld [vmem:[%s1 + $0xa38] sm:$0xff]
      %v610 = vld [vmem:[%s1 + $0xa40] sm:$0xff]
      %v611 = vld [vmem:[%s1 + $0xa48] sm:$0xff]
      %v612 = vld [vmem:[%s1 + $0xa50] sm:$0xff]
      %v613 = vld [vmem:[%s1 + $0xa58] sm:$0xff]
      %v614 = vld [vmem:[%s1 + $0xa60] sm:$0xff]
      %v615 = vld [vmem:[%s1 + $0xa68] sm:$0xff]
      %v616 = vld [vmem:[%s1 + $0xa70] sm:$0xff]
      %v617 = vld [vmem:[%s1 + $0xa78] sm:$0xff]
      %v618 = vld [vmem:[%s1 + $0xa80] sm:$0xff]
      %v619 = vld [vmem:[%s1 + $0xa88] sm:$0xff]
      %v620 = vld [vmem:[%s1 + $0xa90] sm:$0xff]
      %v621 = vld [vmem:[%s1 + $0xa98] sm:$0xff]
      %v622 = vld [vmem:[%s1 + $0xaa0] sm:$0xff]
      %v623 = vld [vmem:[%s1 + $0xaa8] sm:$0xff]
      %v624 = vld [vmem:[%s1 + $0xab0] sm:$0xff]
      %v625 = vld [vmem:[%s1 + $0xab8] sm:$0xff]
      %v626 = vld [vmem:[%s1 + $0xac0] sm:$0xff]
      %v627 = vld [vmem:[%s1 + $0xac8] sm:$0xff]
      %v628 = vld [vmem:[%s1 + $0xad0] sm:$0xff]
      %v629 = vld [vmem:[%s1 + $0xad8] sm:$0xff]
      %v630 = vld [vmem:[%s1 + $0xae0] sm:$0xff]
      %v631 = vld [vmem:[%s1 + $0xae8] sm:$0xff]
      %v632 = vld [vmem:[%s1 + $0xaf0] sm:$0xff]
      %v633 = vld [vmem:[%s1 + $0xaf8] sm:$0xff]
      %v634 = vld [vmem:[%s1 + $0xb00] sm:$0xff]
      %v635 = vld [vmem:[%s1 + $0xb08] sm:$0xff]
      %v636 = vld [vmem:[%s1 + $0xb10] sm:$0xff]
      %v637 = vld [vmem:[%s1 + $0xb18] sm:$0xff]
      %v638 = vld [vmem:[%s1 + $0xb20] sm:$0xff]
      %v639 = vld [vmem:[%s1 + $0xb28] sm:$0xff]
      %v640 = vld [vmem:[%s1 + $0xb30] sm:$0xff]
      %v641 = vld [vmem:[%s1 + $0xb38] sm:$0xff]
      %v642 = vld [vmem:[%s1 + $0xb40] sm:$0xff]
      %v643 = vld [vmem:[%s1 + $0xb48] sm:$0xff]
      %v644 = vld [vmem:[%s1 + $0xb50] sm:$0xff]
      %v645 = vld [vmem:[%s1 + $0xb58] sm:$0xff]
      %v646 = vld [vmem:[%s1 + $0xb60] sm:$0xff]
      %v647 = vld [vmem:[%s1 + $0xb68] sm:$0xff]
      %v648 = vld [vmem:[%s1 + $0xb70] sm:$0xff]
      %v649 = vld [vmem:[%s1 + $0xb78] sm:$0xff]
      %v650 = vld [vmem:[%s1 + $0xb80] sm:$0xff]
      %v651 = vld [vmem:[%s1 + $0xb88] sm:$0xff]
      %v652 = vld [vmem:[%s1 + $0xb90] sm:$0xff]
      %v653 = vld [vmem:[%s1 + $0xb98] sm:$0xff]
      %v654 = vld [vmem:[%s1 + $0xba0] sm:$0xff]
      %v655 = vld [vmem:[%s1 + $0xba8] sm:$0xff]
      %v656 = vld [vmem:[%s1 + $0xbb0] sm:$0xff]
      %v657 = vld [vmem:[%s1 + $0xbb8] sm:$0xff]
      %v658 = vld [vmem:[%s1 + $0xbc0] sm:$0xff]
      %v659 = vld [vmem:[%s1 + $0xbc8] sm:$0xff]
      %v660 = vld [vmem:[%s1 + $0xbd0] sm:$0xff]
      %v661 = vld [vmem:[%s1 + $0xbd8] sm:$0xff]
      %v662 = vld [vmem:[%s1 + $0xbe0] sm:$0xff]
      %v663 = vld [vmem:[%s1 + $0xbe8] sm:$0xff]
      %v664 = vld [vmem:[%s1 + $0xbf0] sm:$0xff]
      %v665 = vld [vmem:[%s1 + $0xbf8] sm:$0xff]
      %v666 = vld [vmem:[%s1 + $0xc00] sm:$0xff]
      %v667 = vld [vmem:[%s1 + $0xc08] sm:$0xff]
      %v668 = vld [vmem:[%s1 + $0xc10] sm:$0xff]
      %v669 = vld [vmem:[%s1 + $0xc18] sm:$0xff]
      %v670 = vld [vmem:[%s1 + $0xc20] sm:$0xff]
      %v671 = vld [vmem:[%s1 + $0xc28] sm:$0xff]
      %v672 = vld [vmem:[%s1 + $0xc30] sm:$0xff]
      %v673 = vld [vmem:[%s1 + $0xc38] sm:$0xff]
      %v674 = vld [vmem:[%s1 + $0xc40] sm:$0xff]
      %v675 = vld [vmem:[%s1 + $0xc48] sm:$0xff]
      %v676 = vld [vmem:[%s1 + $0xc50] sm:$0xff]
      %v677 = vld [vmem:[%s1 + $0xc58] sm:$0xff]
      %v678 = vld [vmem:[%s1 + $0xc60] sm:$0xff]
      %v679 = vld [vmem:[%s1 + $0xc68] sm:$0xff]
      %v680 = vld [vmem:[%s1 + $0xc70] sm:$0xff]
      %v681 = vld [vmem:[%s1 + $0xc78] sm:$0xff]
      %v682 = vld [vmem:[%s1 + $0xc80] sm:$0xff]
      %v683 = vld [vmem:[%s1 + $0xc88] sm:$0xff]
      %v684 = vld [vmem:[%s1 + $0xc90] sm:$0xff]
      %v685 = vld [vmem:[%s1 + $0xc98] sm:$0xff]
      %v686 = vld [vmem:[%s1 + $0xca0] sm:$0xff]
      %v687 = vld [vmem:[%s1 + $0xca8] sm:$0xff]
      %v688 = vld [vmem:[%s1 + $0xcb0] sm:$0xff]
      %v689 = vld [vmem:[%s1 + $0xcb8] sm:$0xff]
      %v690 = vld [vmem:[%s1 + $0xcc0] sm:$0xff]
      %v691 = vld [vmem:[%s1 + $0xcc8] sm:$0xff]
      %v692 = vld [vmem:[%s1 + $0xcd0] sm:$0xff]
      %v693 = vld [vmem:[%s1 + $0xcd8] sm:$0xff]
      %v694 = vld [vmem:[%s1 + $0xce0] sm:$0xff]
      %v695 = vld [vmem:[%s1 + $0xce8] sm:$0xff]
      %v696 = vld [vmem:[%s1 + $0xcf0] sm:$0xff]
      %v697 = vld [vmem:[%s1 + $0xcf8] sm:$0xff]
      %v698 = vld [vmem:[%s1 + $0xd00] sm:$0xff]
      %v699 = vld [vmem:[%s1 + $0xd08] sm:$0xff]
      %v700 = vld [vmem:[%s1 + $0xd10] sm:$0xff]
      %v701 = vld [vmem:[%s1 + $0xd18] sm:$0xff]
      %v702 = vld [vmem:[%s1 + $0xd20] sm:$0xff]
      %v703 = vld [vmem:[%s1 + $0xd28] sm:$0xff]
      %v704 = vld [vmem:[%s1 + $0xd30] sm:$0xff]
      %v705 = vld [vmem:[%s1 + $0xd38] sm:$0xff]
      %v706 = vld [vmem:[%s1 + $0xd40] sm:$0xff]
      %v707 = vld [vmem:[%s1 + $0xd48] sm:$0xff]
      %v708 = vld [vmem:[%s1 + $0xd50] sm:$0xff]
      %v709 = vld [vmem:[%s1 + $0xd58] sm:$0xff]
      %v710 = vld [vmem:[%s1 + $0xd60] sm:$0xff]
      %v711 = vld [vmem:[%s1 + $0xd68] sm:$0xff]
      %v712 = vld [vmem:[%s1 + $0xd70] sm:$0xff]
      %v713 = vld [vmem:[%s1 + $0xd78] sm:$0xff]
      %v714 = vld [vmem:[%s1 + $0xd80] sm:$0xff]
      %v715 = vld [vmem:[%s1 + $0xd88] sm:$0xff]
      %v716 = vld [vmem:[%s1 + $0xd90] sm:$0xff]
      %v717 = vld [vmem:[%s1 + $0xd98] sm:$0xff]
      %v718 = vld [vmem:[%s1 + $0xda0] sm:$0xff]
      %v719 = vld [vmem:[%s1 + $0xda8] sm:$0xff]
      %v720 = vld [vmem:[%s1 + $0xdb0] sm:$0xff]
      %v721 = vld [vmem:[%s1 + $0xdb8] sm:$0xff]
      %v722 = vld [vmem:[%s1 + $0xdc0] sm:$0xff]
      %v723 = vld [vmem:[%s1 + $0xdc8] sm:$0xff]
      %v724 = vld [vmem:[%s1 + $0xdd0] sm:$0xff]
      %v725 = vld [vmem:[%s1 + $0xdd8] sm:$0xff]
      %v726 = vld [vmem:[%s1 + $0xde0] sm:$0xff]
      %v727 = vld [vmem:[%s1 + $0xde8] sm:$0xff]
      %v728 = vld [vmem:[%s1 + $0xdf0] sm:$0xff]
      %v729 = vld [vmem:[%s1 + $0xdf8] sm:$0xff]
      %v730 = vld [vmem:[%s1 + $0xe00] sm:$0xff]
      %v731 = vld [vmem:[%s1 + $0xe08] sm:$0xff]
      %v732 = vld [vmem:[%s1 + $0xe10] sm:$0xff]
      %v733 = vld [vmem:[%s1 + $0xe18] sm:$0xff]
      %v734 = vld [vmem:[%s1 + $0xe20] sm:$0xff]
      %v735 = vld [vmem:[%s1 + $0xe28] sm:$0xff]
      %v736 = vld [vmem:[%s1 + $0xe30] sm:$0xff]
      %v737 = vld [vmem:[%s1 + $0xe38] sm:$0xff]
      %v738 = vld [vmem:[%s1 + $0xe40] sm:$0xff]
      %v739 = vld [vmem:[%s1 + $0xe48] sm:$0xff]
      %v740 = vld [vmem:[%s1 + $0xe50] sm:$0xff]
      %v741 = vld [vmem:[%s1 + $0xe58] sm:$0xff]
      %v742 = vld [vmem:[%s1 + $0xe60] sm:$0xff]
      %v743 = vld [vmem:[%s1 + $0xe68] sm:$0xff]
      %v744 = vld [vmem:[%s1 + $0xe70] sm:$0xff]
      %v745 = vld [vmem:[%s1 + $0xe78] sm:$0xff]
      %v746 = vld [vmem:[%s1 + $0xe80] sm:$0xff]
      %v747 = vld [vmem:[%s1 + $0xe88] sm:$0xff]
      %v748 = vld [vmem:[%s1 + $0xe90] sm:$0xff]
      %v749 = vld [vmem:[%s1 + $0xe98] sm:$0xff]
      %v750 = vld [vmem:[%s1 + $0xea0] sm:$0xff]
      %v751 = vld [vmem:[%s1 + $0xea8] sm:$0xff]
      %v752 = vld [vmem:[%s1 + $0xeb0] sm:$0xff]
      %v753 = vld [vmem:[%s1 + $0xeb8] sm:$0xff]
      %v754 = vld [vmem:[%s1 + $0xec0] sm:$0xff]
      %v755 = vld [vmem:[%s1 + $0xec8] sm:$0xff]
      %v756 = vld [vmem:[%s1 + $0xed0] sm:$0xff]
      %v757 = vld [vmem:[%s1 + $0xed8] sm:$0xff]
      %v758 = vld [vmem:[%s1 + $0xee0] sm:$0xff]
      %v759 = vld [vmem:[%s1 + $0xee8] sm:$0xff]
      %v760 = vld [vmem:[%s1 + $0xef0] sm:$0xff]
      %v761 = vld [vmem:[%s1 + $0xef8] sm:$0xff]
      %v762 = vld [vmem:[%s1 + $0xf00] sm:$0xff]
      %v763 = vld [vmem:[%s1 + $0xf08] sm:$0xff]
      %v764 = vld [vmem:[%s1 + $0xf10] sm:$0xff]
      %v765 = vld [vmem:[%s1 + $0xf18] sm:$0xff]
      %v766 = vld [vmem:[%s1 + $0xf20] sm:$0xff]
      %v767 = vld [vmem:[%s1 + $0xf28] sm:$0xff]
      %v768 = vld [vmem:[%s1 + $0xf30] sm:$0xff]
      %v769 = vld [vmem:[%s1 + $0xf38] sm:$0xff]
      %v770 = vld [vmem:[%s1 + $0xf40] sm:$0xff]
      %v771 = vld [vmem:[%s1 + $0xf48] sm:$0xff]
      %v772 = vld [vmem:[%s1 + $0xf50] sm:$0xff]
      %v773 = vld [vmem:[%s1 + $0xf58] sm:$0xff]
      %v774 = vld [vmem:[%s1 + $0xf60] sm:$0xff]
      %v775 = vld [vmem:[%s1 + $0xf68] sm:$0xff]
      %v776 = vld [vmem:[%s1 + $0xf70] sm:$0xff]
      %v777 = vld [vmem:[%s1 + $0xf78] sm:$0xff]
      %v778 = vld [vmem:[%s1 + $0xf80] sm:$0xff]
      %v779 = vld [vmem:[%s1 + $0xf88] sm:$0xff]
      %v780 = vld [vmem:[%s1 + $0xf90] sm:$0xff]
      %v781 = vld [vmem:[%s1 + $0xf98] sm:$0xff]
      %v782 = vld [vmem:[%s1 + $0xfa0] sm:$0xff]
      %v783 = vld [vmem:[%s1 + $0xfa8] sm:$0xff]
      %v784 = vld [vmem:[%s1 + $0xfb0] sm:$0xff]
      %v785 = vld [vmem:[%s1 + $0xfb8] sm:$0xff]
      %v786 = vld [vmem:[%s1 + $0xfc0] sm:$0xff]
      %v787 = vld [vmem:[%s1 + $0xfc8] sm:$0xff]
      %v788 = vld [vmem:[%s1 + $0xfd0] sm:$0xff]
      %v789 = vld [vmem:[%s1 + $0xfd8] sm:$0xff]
      %v790 = vld [vmem:[%s1 + $0xfe0] sm:$0xff]
      %v791 = vld [vmem:[%s1 + $0xfe8] sm:$0xff]
      %v792 = vld [vmem:[%s1 + $0xff0] sm:$0xff]
      %v793 = vld [vmem:[%s1 + $0xff8] sm:$0xff]
      %v826 = vunpack.c.l.b16 %v250
      %v827 = vunpack.c.h.b16 %v250
      %v828 = vunpack.c.l.b16 %v251
      %v829 = vunpack.c.h.b16 %v251
      %v830 = vunpack.c.l.b16 %v252
      %v831 = vunpack.c.h.b16 %v252
      %v832 = vunpack.c.l.b16 %v253
      %v833 = vunpack.c.h.b16 %v253
      %v834 = vunpack.c.l.b16 %v254
      %v835 = vunpack.c.h.b16 %v254
      %v836 = vunpack.c.l.b16 %v255
      %v837 = vunpack.c.h.b16 %v255
      %v838 = vunpack.c.l.b16 %v256
      %v839 = vunpack.c.h.b16 %v256
      %v840 = vunpack.c.l.b16 %v257
      %v841 = vunpack.c.h.b16 %v257
      %v842 = vunpack.c.l.b16 %v258
      %v843 = vunpack.c.h.b16 %v258
      %v844 = vunpack.c.l.b16 %v259
      %v845 = vunpack.c.h.b16 %v259
      %v846 = vunpack.c.l.b16 %v260
      %v847 = vunpack.c.h.b16 %v260
      %v848 = vunpack.c.l.b16 %v261
      %v849 = vunpack.c.h.b16 %v261
      %v850 = vunpack.c.l.b16 %v262
      %v851 = vunpack.c.h.b16 %v262
      %v852 = vunpack.c.l.b16 %v263
      %v853 = vunpack.c.h.b16 %v263
      %v854 = vunpack.c.l.b16 %v264
      %v855 = vunpack.c.h.b16 %v264
      %v856 = vunpack.c.l.b16 %v265
      %v857 = vunpack.c.h.b16 %v265
      %v858 = vunpack.c.l.b16 %v266
      %v859 = vunpack.c.h.b16 %v266
      %v860 = vunpack.c.l.b16 %v267
      %v861 = vunpack.c.h.b16 %v267
      %v862 = vunpack.c.l.b16 %v268
      %v863 = vunpack.c.h.b16 %v268
      %v864 = vunpack.c.l.b16 %v269
      %v865 = vunpack.c.h.b16 %v269
      %v866 = vunpack.c.l.b16 %v270
      %v867 = vunpack.c.h.b16 %v270
      %v868 = vunpack.c.l.b16 %v271
      %v869 = vunpack.c.h.b16 %v271
      %v870 = vunpack.c.l.b16 %v272
      %v871 = vunpack.c.h.b16 %v272
      %v872 = vunpack.c.l.b16 %v273
      %v873 = vunpack.c.h.b16 %v273
      %v874 = vunpack.c.l.b16 %v274
      %v875 = vunpack.c.h.b16 %v274
      %v876 = vunpack.c.l.b16 %v275
      %v877 = vunpack.c.h.b16 %v275
      %v878 = vunpack.c.l.b16 %v276
      %v879 = vunpack.c.h.b16 %v276
      %v880 = vunpack.c.l.b16 %v277
      %v881 = vunpack.c.h.b16 %v277
      %v882 = vunpack.c.l.b16 %v278
      %v883 = vunpack.c.h.b16 %v278
      %v884 = vunpack.c.l.b16 %v279
      %v885 = vunpack.c.h.b16 %v279
      %v886 = vunpack.c.l.b16 %v280
      %v887 = vunpack.c.h.b16 %v280
      %v888 = vunpack.c.l.b16 %v281
      %v889 = vunpack.c.h.b16 %v281
      %v890 = vpack.c.b16 %v858, %v826
      %v891 = vpack.c.b16 %v859, %v827
      %v892 = vpack.c.b16 %v860, %v828
      %v893 = vpack.c.b16 %v861, %v829
      %v894 = vpack.c.b16 %v862, %v830
      %v895 = vpack.c.b16 %v863, %v831
      %v896 = vpack.c.b16 %v864, %v832
      %v897 = vpack.c.b16 %v865, %v833
      %v898 = vpack.c.b16 %v866, %v834
      %v899 = vpack.c.b16 %v867, %v835
      %v900 = vpack.c.b16 %v868, %v836
      %v901 = vpack.c.b16 %v869, %v837
      %v902 = vpack.c.b16 %v870, %v838
      %v903 = vpack.c.b16 %v871, %v839
      %v904 = vpack.c.b16 %v872, %v840
      %v905 = vpack.c.b16 %v873, %v841
      %v906 = vpack.c.b16 %v874, %v842
      %v907 = vpack.c.b16 %v875, %v843
      %v908 = vpack.c.b16 %v876, %v844
      %v909 = vpack.c.b16 %v877, %v845
      %v910 = vpack.c.b16 %v878, %v846
      %v911 = vpack.c.b16 %v879, %v847
      %v912 = vpack.c.b16 %v880, %v848
      %v913 = vpack.c.b16 %v881, %v849
      %v914 = vpack.c.b16 %v882, %v850
      %v915 = vpack.c.b16 %v883, %v851
      %v916 = vpack.c.b16 %v884, %v852
      %v917 = vpack.c.b16 %v885, %v853
      %v918 = vpack.c.b16 %v886, %v854
      %v919 = vpack.c.b16 %v887, %v855
      %v920 = vpack.c.b16 %v888, %v856
      %v921 = vpack.c.b16 %v889, %v857
      %v1466 = vunpack.c.l.b16 %v282
      %v1467 = vunpack.c.h.b16 %v282
      %v1468 = vunpack.c.l.b16 %v283
      %v1469 = vunpack.c.h.b16 %v283
      %v1470 = vunpack.c.l.b16 %v284
      %v1471 = vunpack.c.h.b16 %v284
      %v1472 = vunpack.c.l.b16 %v285
      %v1473 = vunpack.c.h.b16 %v285
      %v1474 = vunpack.c.l.b16 %v286
      %v1475 = vunpack.c.h.b16 %v286
      %v1476 = vunpack.c.l.b16 %v287
      %v1477 = vunpack.c.h.b16 %v287
      %v1478 = vunpack.c.l.b16 %v288
      %v1479 = vunpack.c.h.b16 %v288
      %v1480 = vunpack.c.l.b16 %v289
      %v1481 = vunpack.c.h.b16 %v289
      %v1482 = vunpack.c.l.b16 %v290
      %v1483 = vunpack.c.h.b16 %v290
      %v1484 = vunpack.c.l.b16 %v291
      %v1485 = vunpack.c.h.b16 %v291
      %v1486 = vunpack.c.l.b16 %v292
      %v1487 = vunpack.c.h.b16 %v292
      %v1488 = vunpack.c.l.b16 %v293
      %v1489 = vunpack.c.h.b16 %v293
      %v1490 = vunpack.c.l.b16 %v294
      %v1491 = vunpack.c.h.b16 %v294
      %v1492 = vunpack.c.l.b16 %v295
      %v1493 = vunpack.c.h.b16 %v295
      %v1494 = vunpack.c.l.b16 %v296
      %v1495 = vunpack.c.h.b16 %v296
      %v1496 = vunpack.c.l.b16 %v297
      %v1497 = vunpack.c.h.b16 %v297
      %v1498 = vunpack.c.l.b16 %v298
      %v1499 = vunpack.c.h.b16 %v298
      %v1500 = vunpack.c.l.b16 %v299
      %v1501 = vunpack.c.h.b16 %v299
      %v1502 = vunpack.c.l.b16 %v300
      %v1503 = vunpack.c.h.b16 %v300
      %v1504 = vunpack.c.l.b16 %v301
      %v1505 = vunpack.c.h.b16 %v301
      %v1506 = vunpack.c.l.b16 %v302
      %v1507 = vunpack.c.h.b16 %v302
      %v1508 = vunpack.c.l.b16 %v303
      %v1509 = vunpack.c.h.b16 %v303
      %v1510 = vunpack.c.l.b16 %v304
      %v1511 = vunpack.c.h.b16 %v304
      %v1512 = vunpack.c.l.b16 %v305
      %v1513 = vunpack.c.h.b16 %v305
      %v1514 = vunpack.c.l.b16 %v306
      %v1515 = vunpack.c.h.b16 %v306
      %v1516 = vunpack.c.l.b16 %v307
      %v1517 = vunpack.c.h.b16 %v307
      %v1518 = vunpack.c.l.b16 %v308
      %v1519 = vunpack.c.h.b16 %v308
      %v1520 = vunpack.c.l.b16 %v309
      %v1521 = vunpack.c.h.b16 %v309
      %v1522 = vunpack.c.l.b16 %v310
      %v1523 = vunpack.c.h.b16 %v310
      %v1524 = vunpack.c.l.b16 %v311
      %v1525 = vunpack.c.h.b16 %v311
      %v1526 = vunpack.c.l.b16 %v312
      %v1527 = vunpack.c.h.b16 %v312
      %v1528 = vunpack.c.l.b16 %v313
      %v1529 = vunpack.c.h.b16 %v313
      %v1530 = vunpack.c.l.b16 %v314
      %v1531 = vunpack.c.h.b16 %v314
      %v1532 = vunpack.c.l.b16 %v315
      %v1533 = vunpack.c.h.b16 %v315
      %v1534 = vunpack.c.l.b16 %v316
      %v1535 = vunpack.c.h.b16 %v316
      %v1536 = vunpack.c.l.b16 %v317
      %v1537 = vunpack.c.h.b16 %v317
      %v1538 = vunpack.c.l.b16 %v318
      %v1539 = vunpack.c.h.b16 %v318
      %v1540 = vunpack.c.l.b16 %v319
      %v1541 = vunpack.c.h.b16 %v319
      %v1542 = vunpack.c.l.b16 %v320
      %v1543 = vunpack.c.h.b16 %v320
      %v1544 = vunpack.c.l.b16 %v321
      %v1545 = vunpack.c.h.b16 %v321
      %v1546 = vunpack.c.l.b16 %v322
      %v1547 = vunpack.c.h.b16 %v322
      %v1548 = vunpack.c.l.b16 %v323
      %v1549 = vunpack.c.h.b16 %v323
      %v1550 = vunpack.c.l.b16 %v324
      %v1551 = vunpack.c.h.b16 %v324
      %v1552 = vunpack.c.l.b16 %v325
      %v1553 = vunpack.c.h.b16 %v325
      %v1554 = vunpack.c.l.b16 %v326
      %v1555 = vunpack.c.h.b16 %v326
      %v1556 = vunpack.c.l.b16 %v327
      %v1557 = vunpack.c.h.b16 %v327
      %v1558 = vunpack.c.l.b16 %v328
      %v1559 = vunpack.c.h.b16 %v328
      %v1560 = vunpack.c.l.b16 %v329
      %v1561 = vunpack.c.h.b16 %v329
      %v1562 = vunpack.c.l.b16 %v330
      %v1563 = vunpack.c.h.b16 %v330
      %v1564 = vunpack.c.l.b16 %v331
      %v1565 = vunpack.c.h.b16 %v331
      %v1566 = vunpack.c.l.b16 %v332
      %v1567 = vunpack.c.h.b16 %v332
      %v1568 = vunpack.c.l.b16 %v333
      %v1569 = vunpack.c.h.b16 %v333
      %v1570 = vunpack.c.l.b16 %v334
      %v1571 = vunpack.c.h.b16 %v334
      %v1572 = vunpack.c.l.b16 %v335
      %v1573 = vunpack.c.h.b16 %v335
      %v1574 = vunpack.c.l.b16 %v336
      %v1575 = vunpack.c.h.b16 %v336
      %v1576 = vunpack.c.l.b16 %v337
      %v1577 = vunpack.c.h.b16 %v337
      %v1578 = vunpack.c.l.b16 %v338
      %v1579 = vunpack.c.h.b16 %v338
      %v1580 = vunpack.c.l.b16 %v339
      %v1581 = vunpack.c.h.b16 %v339
      %v1582 = vunpack.c.l.b16 %v340
      %v1583 = vunpack.c.h.b16 %v340
      %v1584 = vunpack.c.l.b16 %v341
      %v1585 = vunpack.c.h.b16 %v341
      %v1586 = vunpack.c.l.b16 %v342
      %v1587 = vunpack.c.h.b16 %v342
      %v1588 = vunpack.c.l.b16 %v343
      %v1589 = vunpack.c.h.b16 %v343
      %v1590 = vunpack.c.l.b16 %v344
      %v1591 = vunpack.c.h.b16 %v344
      %v1592 = vunpack.c.l.b16 %v345
      %v1593 = vunpack.c.h.b16 %v345
      %v1594 = vunpack.c.l.b16 %v346
      %v1595 = vunpack.c.h.b16 %v346
      %v1596 = vunpack.c.l.b16 %v347
      %v1597 = vunpack.c.h.b16 %v347
      %v1598 = vunpack.c.l.b16 %v348
      %v1599 = vunpack.c.h.b16 %v348
      %v1600 = vunpack.c.l.b16 %v349
      %v1601 = vunpack.c.h.b16 %v349
      %v1602 = vunpack.c.l.b16 %v350
      %v1603 = vunpack.c.h.b16 %v350
      %v1604 = vunpack.c.l.b16 %v351
      %v1605 = vunpack.c.h.b16 %v351
      %v1606 = vunpack.c.l.b16 %v352
      %v1607 = vunpack.c.h.b16 %v352
      %v1608 = vunpack.c.l.b16 %v353
      %v1609 = vunpack.c.h.b16 %v353
      %v1610 = vunpack.c.l.b16 %v354
      %v1611 = vunpack.c.h.b16 %v354
      %v1612 = vunpack.c.l.b16 %v355
      %v1613 = vunpack.c.h.b16 %v355
      %v1614 = vunpack.c.l.b16 %v356
      %v1615 = vunpack.c.h.b16 %v356
      %v1616 = vunpack.c.l.b16 %v357
      %v1617 = vunpack.c.h.b16 %v357
      %v1618 = vunpack.c.l.b16 %v358
      %v1619 = vunpack.c.h.b16 %v358
      %v1620 = vunpack.c.l.b16 %v359
      %v1621 = vunpack.c.h.b16 %v359
      %v1622 = vunpack.c.l.b16 %v360
      %v1623 = vunpack.c.h.b16 %v360
      %v1624 = vunpack.c.l.b16 %v361
      %v1625 = vunpack.c.h.b16 %v361
      %v1626 = vunpack.c.l.b16 %v362
      %v1627 = vunpack.c.h.b16 %v362
      %v1628 = vunpack.c.l.b16 %v363
      %v1629 = vunpack.c.h.b16 %v363
      %v1630 = vunpack.c.l.b16 %v364
      %v1631 = vunpack.c.h.b16 %v364
      %v1632 = vunpack.c.l.b16 %v365
      %v1633 = vunpack.c.h.b16 %v365
      %v1634 = vunpack.c.l.b16 %v366
      %v1635 = vunpack.c.h.b16 %v366
      %v1636 = vunpack.c.l.b16 %v367
      %v1637 = vunpack.c.h.b16 %v367
      %v1638 = vunpack.c.l.b16 %v368
      %v1639 = vunpack.c.h.b16 %v368
      %v1640 = vunpack.c.l.b16 %v369
      %v1641 = vunpack.c.h.b16 %v369
      %v1642 = vunpack.c.l.b16 %v370
      %v1643 = vunpack.c.h.b16 %v370
      %v1644 = vunpack.c.l.b16 %v371
      %v1645 = vunpack.c.h.b16 %v371
      %v1646 = vunpack.c.l.b16 %v372
      %v1647 = vunpack.c.h.b16 %v372
      %v1648 = vunpack.c.l.b16 %v373
      %v1649 = vunpack.c.h.b16 %v373
      %v1650 = vunpack.c.l.b16 %v374
      %v1651 = vunpack.c.h.b16 %v374
      %v1652 = vunpack.c.l.b16 %v375
      %v1653 = vunpack.c.h.b16 %v375
      %v1654 = vunpack.c.l.b16 %v376
      %v1655 = vunpack.c.h.b16 %v376
      %v1656 = vunpack.c.l.b16 %v377
      %v1657 = vunpack.c.h.b16 %v377
      %v1658 = vunpack.c.l.b16 %v378
      %v1659 = vunpack.c.h.b16 %v378
      %v1660 = vunpack.c.l.b16 %v379
      %v1661 = vunpack.c.h.b16 %v379
      %v1662 = vunpack.c.l.b16 %v380
      %v1663 = vunpack.c.h.b16 %v380
      %v1664 = vunpack.c.l.b16 %v381
      %v1665 = vunpack.c.h.b16 %v381
      %v1666 = vunpack.c.l.b16 %v382
      %v1667 = vunpack.c.h.b16 %v382
      %v1668 = vunpack.c.l.b16 %v383
      %v1669 = vunpack.c.h.b16 %v383
      %v1670 = vunpack.c.l.b16 %v384
      %v1671 = vunpack.c.h.b16 %v384
      %v1672 = vunpack.c.l.b16 %v385
      %v1673 = vunpack.c.h.b16 %v385
      %v1674 = vunpack.c.l.b16 %v386
      %v1675 = vunpack.c.h.b16 %v386
      %v1676 = vunpack.c.l.b16 %v387
      %v1677 = vunpack.c.h.b16 %v387
      %v1678 = vunpack.c.l.b16 %v388
      %v1679 = vunpack.c.h.b16 %v388
      %v1680 = vunpack.c.l.b16 %v389
      %v1681 = vunpack.c.h.b16 %v389
      %v1682 = vunpack.c.l.b16 %v390
      %v1683 = vunpack.c.h.b16 %v390
      %v1684 = vunpack.c.l.b16 %v391
      %v1685 = vunpack.c.h.b16 %v391
      %v1686 = vunpack.c.l.b16 %v392
      %v1687 = vunpack.c.h.b16 %v392
      %v1688 = vunpack.c.l.b16 %v393
      %v1689 = vunpack.c.h.b16 %v393
      %v1690 = vunpack.c.l.b16 %v394
      %v1691 = vunpack.c.h.b16 %v394
      %v1692 = vunpack.c.l.b16 %v395
      %v1693 = vunpack.c.h.b16 %v395
      %v1694 = vunpack.c.l.b16 %v396
      %v1695 = vunpack.c.h.b16 %v396
      %v1696 = vunpack.c.l.b16 %v397
      %v1697 = vunpack.c.h.b16 %v397
      %v1698 = vunpack.c.l.b16 %v398
      %v1699 = vunpack.c.h.b16 %v398
      %v1700 = vunpack.c.l.b16 %v399
      %v1701 = vunpack.c.h.b16 %v399
      %v1702 = vunpack.c.l.b16 %v400
      %v1703 = vunpack.c.h.b16 %v400
      %v1704 = vunpack.c.l.b16 %v401
      %v1705 = vunpack.c.h.b16 %v401
      %v1706 = vunpack.c.l.b16 %v402
      %v1707 = vunpack.c.h.b16 %v402
      %v1708 = vunpack.c.l.b16 %v403
      %v1709 = vunpack.c.h.b16 %v403
      %v1710 = vunpack.c.l.b16 %v404
      %v1711 = vunpack.c.h.b16 %v404
      %v1712 = vunpack.c.l.b16 %v405
      %v1713 = vunpack.c.h.b16 %v405
      %v1714 = vunpack.c.l.b16 %v406
      %v1715 = vunpack.c.h.b16 %v406
      %v1716 = vunpack.c.l.b16 %v407
      %v1717 = vunpack.c.h.b16 %v407
      %v1718 = vunpack.c.l.b16 %v408
      %v1719 = vunpack.c.h.b16 %v408
      %v1720 = vunpack.c.l.b16 %v409
      %v1721 = vunpack.c.h.b16 %v409
      %v1722 = vunpack.c.l.b16 %v410
      %v1723 = vunpack.c.h.b16 %v410
      %v1724 = vunpack.c.l.b16 %v411
      %v1725 = vunpack.c.h.b16 %v411
      %v1726 = vunpack.c.l.b16 %v412
      %v1727 = vunpack.c.h.b16 %v412
      %v1728 = vunpack.c.l.b16 %v413
      %v1729 = vunpack.c.h.b16 %v413
      %v1730 = vunpack.c.l.b16 %v414
      %v1731 = vunpack.c.h.b16 %v414
      %v1732 = vunpack.c.l.b16 %v415
      %v1733 = vunpack.c.h.b16 %v415
      %v1734 = vunpack.c.l.b16 %v416
      %v1735 = vunpack.c.h.b16 %v416
      %v1736 = vunpack.c.l.b16 %v417
      %v1737 = vunpack.c.h.b16 %v417
      %v1738 = vunpack.c.l.b16 %v418
      %v1739 = vunpack.c.h.b16 %v418
      %v1740 = vunpack.c.l.b16 %v419
      %v1741 = vunpack.c.h.b16 %v419
      %v1742 = vunpack.c.l.b16 %v420
      %v1743 = vunpack.c.h.b16 %v420
      %v1744 = vunpack.c.l.b16 %v421
      %v1745 = vunpack.c.h.b16 %v421
      %v1746 = vunpack.c.l.b16 %v422
      %v1747 = vunpack.c.h.b16 %v422
      %v1748 = vunpack.c.l.b16 %v423
      %v1749 = vunpack.c.h.b16 %v423
      %v1750 = vunpack.c.l.b16 %v424
      %v1751 = vunpack.c.h.b16 %v424
      %v1752 = vunpack.c.l.b16 %v425
      %v1753 = vunpack.c.h.b16 %v425
      %v1754 = vunpack.c.l.b16 %v426
      %v1755 = vunpack.c.h.b16 %v426
      %v1756 = vunpack.c.l.b16 %v427
      %v1757 = vunpack.c.h.b16 %v427
      %v1758 = vunpack.c.l.b16 %v428
      %v1759 = vunpack.c.h.b16 %v428
      %v1760 = vunpack.c.l.b16 %v429
      %v1761 = vunpack.c.h.b16 %v429
      %v1762 = vunpack.c.l.b16 %v430
      %v1763 = vunpack.c.h.b16 %v430
      %v1764 = vunpack.c.l.b16 %v431
      %v1765 = vunpack.c.h.b16 %v431
      %v1766 = vunpack.c.l.b16 %v432
      %v1767 = vunpack.c.h.b16 %v432
      %v1768 = vunpack.c.l.b16 %v433
      %v1769 = vunpack.c.h.b16 %v433
      %v1770 = vunpack.c.l.b16 %v434
      %v1771 = vunpack.c.h.b16 %v434
      %v1772 = vunpack.c.l.b16 %v435
      %v1773 = vunpack.c.h.b16 %v435
      %v1774 = vunpack.c.l.b16 %v436
      %v1775 = vunpack.c.h.b16 %v436
      %v1776 = vunpack.c.l.b16 %v437
      %v1777 = vunpack.c.h.b16 %v437
      %v1778 = vunpack.c.l.b16 %v438
      %v1779 = vunpack.c.h.b16 %v438
      %v1780 = vunpack.c.l.b16 %v439
      %v1781 = vunpack.c.h.b16 %v439
      %v1782 = vunpack.c.l.b16 %v440
      %v1783 = vunpack.c.h.b16 %v440
      %v1784 = vunpack.c.l.b16 %v441
      %v1785 = vunpack.c.h.b16 %v441
      %v1786 = vunpack.c.l.b16 %v442
      %v1787 = vunpack.c.h.b16 %v442
      %v1788 = vunpack.c.l.b16 %v443
      %v1789 = vunpack.c.h.b16 %v443
      %v1790 = vunpack.c.l.b16 %v444
      %v1791 = vunpack.c.h.b16 %v444
      %v1792 = vunpack.c.l.b16 %v445
      %v1793 = vunpack.c.h.b16 %v445
      %v1794 = vunpack.c.l.b16 %v446
      %v1795 = vunpack.c.h.b16 %v446
      %v1796 = vunpack.c.l.b16 %v447
      %v1797 = vunpack.c.h.b16 %v447
      %v1798 = vunpack.c.l.b16 %v448
      %v1799 = vunpack.c.h.b16 %v448
      %v1800 = vunpack.c.l.b16 %v449
      %v1801 = vunpack.c.h.b16 %v449
      %v1802 = vunpack.c.l.b16 %v450
      %v1803 = vunpack.c.h.b16 %v450
      %v1804 = vunpack.c.l.b16 %v451
      %v1805 = vunpack.c.h.b16 %v451
      %v1806 = vunpack.c.l.b16 %v452
      %v1807 = vunpack.c.h.b16 %v452
      %v1808 = vunpack.c.l.b16 %v453
      %v1809 = vunpack.c.h.b16 %v453
      %v1810 = vunpack.c.l.b16 %v454
      %v1811 = vunpack.c.h.b16 %v454
      %v1812 = vunpack.c.l.b16 %v455
      %v1813 = vunpack.c.h.b16 %v455
      %v1814 = vunpack.c.l.b16 %v456
      %v1815 = vunpack.c.h.b16 %v456
      %v1816 = vunpack.c.l.b16 %v457
      %v1817 = vunpack.c.h.b16 %v457
      %v1818 = vunpack.c.l.b16 %v458
      %v1819 = vunpack.c.h.b16 %v458
      %v1820 = vunpack.c.l.b16 %v459
      %v1821 = vunpack.c.h.b16 %v459
      %v1822 = vunpack.c.l.b16 %v460
      %v1823 = vunpack.c.h.b16 %v460
      %v1824 = vunpack.c.l.b16 %v461
      %v1825 = vunpack.c.h.b16 %v461
      %v1826 = vunpack.c.l.b16 %v462
      %v1827 = vunpack.c.h.b16 %v462
      %v1828 = vunpack.c.l.b16 %v463
      %v1829 = vunpack.c.h.b16 %v463
      %v1830 = vunpack.c.l.b16 %v464
      %v1831 = vunpack.c.h.b16 %v464
      %v1832 = vunpack.c.l.b16 %v465
      %v1833 = vunpack.c.h.b16 %v465
      %v1834 = vunpack.c.l.b16 %v466
      %v1835 = vunpack.c.h.b16 %v466
      %v1836 = vunpack.c.l.b16 %v467
      %v1837 = vunpack.c.h.b16 %v467
      %v1838 = vunpack.c.l.b16 %v468
      %v1839 = vunpack.c.h.b16 %v468
      %v1840 = vunpack.c.l.b16 %v469
      %v1841 = vunpack.c.h.b16 %v469
      %v1842 = vunpack.c.l.b16 %v470
      %v1843 = vunpack.c.h.b16 %v470
      %v1844 = vunpack.c.l.b16 %v471
      %v1845 = vunpack.c.h.b16 %v471
      %v1846 = vunpack.c.l.b16 %v472
      %v1847 = vunpack.c.h.b16 %v472
      %v1848 = vunpack.c.l.b16 %v473
      %v1849 = vunpack.c.h.b16 %v473
      %v1850 = vunpack.c.l.b16 %v474
      %v1851 = vunpack.c.h.b16 %v474
      %v1852 = vunpack.c.l.b16 %v475
      %v1853 = vunpack.c.h.b16 %v475
      %v1854 = vunpack.c.l.b16 %v476
      %v1855 = vunpack.c.h.b16 %v476
      %v1856 = vunpack.c.l.b16 %v477
      %v1857 = vunpack.c.h.b16 %v477
      %v1858 = vunpack.c.l.b16 %v478
      %v1859 = vunpack.c.h.b16 %v478
      %v1860 = vunpack.c.l.b16 %v479
      %v1861 = vunpack.c.h.b16 %v479
      %v1862 = vunpack.c.l.b16 %v480
      %v1863 = vunpack.c.h.b16 %v480
      %v1864 = vunpack.c.l.b16 %v481
      %v1865 = vunpack.c.h.b16 %v481
      %v1866 = vunpack.c.l.b16 %v482
      %v1867 = vunpack.c.h.b16 %v482
      %v1868 = vunpack.c.l.b16 %v483
      %v1869 = vunpack.c.h.b16 %v483
      %v1870 = vunpack.c.l.b16 %v484
      %v1871 = vunpack.c.h.b16 %v484
      %v1872 = vunpack.c.l.b16 %v485
      %v1873 = vunpack.c.h.b16 %v485
      %v1874 = vunpack.c.l.b16 %v486
      %v1875 = vunpack.c.h.b16 %v486
      %v1876 = vunpack.c.l.b16 %v487
      %v1877 = vunpack.c.h.b16 %v487
      %v1878 = vunpack.c.l.b16 %v488
      %v1879 = vunpack.c.h.b16 %v488
      %v1880 = vunpack.c.l.b16 %v489
      %v1881 = vunpack.c.h.b16 %v489
      %v1882 = vunpack.c.l.b16 %v490
      %v1883 = vunpack.c.h.b16 %v490
      %v1884 = vunpack.c.l.b16 %v491
      %v1885 = vunpack.c.h.b16 %v491
      %v1886 = vunpack.c.l.b16 %v492
      %v1887 = vunpack.c.h.b16 %v492
      %v1888 = vunpack.c.l.b16 %v493
      %v1889 = vunpack.c.h.b16 %v493
      %v1890 = vunpack.c.l.b16 %v494
      %v1891 = vunpack.c.h.b16 %v494
      %v1892 = vunpack.c.l.b16 %v495
      %v1893 = vunpack.c.h.b16 %v495
      %v1894 = vunpack.c.l.b16 %v496
      %v1895 = vunpack.c.h.b16 %v496
      %v1896 = vunpack.c.l.b16 %v497
      %v1897 = vunpack.c.h.b16 %v497
      %v1898 = vunpack.c.l.b16 %v498
      %v1899 = vunpack.c.h.b16 %v498
      %v1900 = vunpack.c.l.b16 %v499
      %v1901 = vunpack.c.h.b16 %v499
      %v1902 = vunpack.c.l.b16 %v500
      %v1903 = vunpack.c.h.b16 %v500
      %v1904 = vunpack.c.l.b16 %v501
      %v1905 = vunpack.c.h.b16 %v501
      %v1906 = vunpack.c.l.b16 %v502
      %v1907 = vunpack.c.h.b16 %v502
      %v1908 = vunpack.c.l.b16 %v503
      %v1909 = vunpack.c.h.b16 %v503
      %v1910 = vunpack.c.l.b16 %v504
      %v1911 = vunpack.c.h.b16 %v504
      %v1912 = vunpack.c.l.b16 %v505
      %v1913 = vunpack.c.h.b16 %v505
      %v1914 = vunpack.c.l.b16 %v506
      %v1915 = vunpack.c.h.b16 %v506
      %v1916 = vunpack.c.l.b16 %v507
      %v1917 = vunpack.c.h.b16 %v507
      %v1918 = vunpack.c.l.b16 %v508
      %v1919 = vunpack.c.h.b16 %v508
      %v1920 = vunpack.c.l.b16 %v509
      %v1921 = vunpack.c.h.b16 %v509
      %v1922 = vunpack.c.l.b16 %v510
      %v1923 = vunpack.c.h.b16 %v510
      %v1924 = vunpack.c.l.b16 %v511
      %v1925 = vunpack.c.h.b16 %v511
      %v1926 = vunpack.c.l.b16 %v512
      %v1927 = vunpack.c.h.b16 %v512
      %v1928 = vunpack.c.l.b16 %v513
      %v1929 = vunpack.c.h.b16 %v513
      %v1930 = vunpack.c.l.b16 %v514
      %v1931 = vunpack.c.h.b16 %v514
      %v1932 = vunpack.c.l.b16 %v515
      %v1933 = vunpack.c.h.b16 %v515
      %v1934 = vunpack.c.l.b16 %v516
      %v1935 = vunpack.c.h.b16 %v516
      %v1936 = vunpack.c.l.b16 %v517
      %v1937 = vunpack.c.h.b16 %v517
      %v1938 = vunpack.c.l.b16 %v518
      %v1939 = vunpack.c.h.b16 %v518
      %v1940 = vunpack.c.l.b16 %v519
      %v1941 = vunpack.c.h.b16 %v519
      %v1942 = vunpack.c.l.b16 %v520
      %v1943 = vunpack.c.h.b16 %v520
      %v1944 = vunpack.c.l.b16 %v521
      %v1945 = vunpack.c.h.b16 %v521
      %v1946 = vunpack.c.l.b16 %v522
      %v1947 = vunpack.c.h.b16 %v522
      %v1948 = vunpack.c.l.b16 %v523
      %v1949 = vunpack.c.h.b16 %v523
      %v1950 = vunpack.c.l.b16 %v524
      %v1951 = vunpack.c.h.b16 %v524
      %v1952 = vunpack.c.l.b16 %v525
      %v1953 = vunpack.c.h.b16 %v525
      %v1954 = vunpack.c.l.b16 %v526
      %v1955 = vunpack.c.h.b16 %v526
      %v1956 = vunpack.c.l.b16 %v527
      %v1957 = vunpack.c.h.b16 %v527
      %v1958 = vunpack.c.l.b16 %v528
      %v1959 = vunpack.c.h.b16 %v528
      %v1960 = vunpack.c.l.b16 %v529
      %v1961 = vunpack.c.h.b16 %v529
      %v1962 = vunpack.c.l.b16 %v530
      %v1963 = vunpack.c.h.b16 %v530
      %v1964 = vunpack.c.l.b16 %v531
      %v1965 = vunpack.c.h.b16 %v531
      %v1966 = vunpack.c.l.b16 %v532
      %v1967 = vunpack.c.h.b16 %v532
      %v1968 = vunpack.c.l.b16 %v533
      %v1969 = vunpack.c.h.b16 %v533
      %v1970 = vunpack.c.l.b16 %v534
      %v1971 = vunpack.c.h.b16 %v534
      %v1972 = vunpack.c.l.b16 %v535
      %v1973 = vunpack.c.h.b16 %v535
      %v1974 = vunpack.c.l.b16 %v536
      %v1975 = vunpack.c.h.b16 %v536
      %v1976 = vunpack.c.l.b16 %v537
      %v1977 = vunpack.c.h.b16 %v537
      %v1978 = vunpack.c.l.b16 %v538
      %v1979 = vunpack.c.h.b16 %v538
      %v1980 = vunpack.c.l.b16 %v539
      %v1981 = vunpack.c.h.b16 %v539
      %v1982 = vunpack.c.l.b16 %v540
      %v1983 = vunpack.c.h.b16 %v540
      %v1984 = vunpack.c.l.b16 %v541
      %v1985 = vunpack.c.h.b16 %v541
      %v1986 = vunpack.c.l.b16 %v542
      %v1987 = vunpack.c.h.b16 %v542
      %v1988 = vunpack.c.l.b16 %v543
      %v1989 = vunpack.c.h.b16 %v543
      %v1990 = vunpack.c.l.b16 %v544
      %v1991 = vunpack.c.h.b16 %v544
      %v1992 = vunpack.c.l.b16 %v545
      %v1993 = vunpack.c.h.b16 %v545
      %v1994 = vunpack.c.l.b16 %v546
      %v1995 = vunpack.c.h.b16 %v546
      %v1996 = vunpack.c.l.b16 %v547
      %v1997 = vunpack.c.h.b16 %v547
      %v1998 = vunpack.c.l.b16 %v548
      %v1999 = vunpack.c.h.b16 %v548
      %v2000 = vunpack.c.l.b16 %v549
      %v2001 = vunpack.c.h.b16 %v549
      %v2002 = vunpack.c.l.b16 %v550
      %v2003 = vunpack.c.h.b16 %v550
      %v2004 = vunpack.c.l.b16 %v551
      %v2005 = vunpack.c.h.b16 %v551
      %v2006 = vunpack.c.l.b16 %v552
      %v2007 = vunpack.c.h.b16 %v552
      %v2008 = vunpack.c.l.b16 %v553
      %v2009 = vunpack.c.h.b16 %v553
      %v2010 = vunpack.c.l.b16 %v554
      %v2011 = vunpack.c.h.b16 %v554
      %v2012 = vunpack.c.l.b16 %v555
      %v2013 = vunpack.c.h.b16 %v555
      %v2014 = vunpack.c.l.b16 %v556
      %v2015 = vunpack.c.h.b16 %v556
      %v2016 = vunpack.c.l.b16 %v557
      %v2017 = vunpack.c.h.b16 %v557
      %v2018 = vunpack.c.l.b16 %v558
      %v2019 = vunpack.c.h.b16 %v558
      %v2020 = vunpack.c.l.b16 %v559
      %v2021 = vunpack.c.h.b16 %v559
      %v2022 = vunpack.c.l.b16 %v560
      %v2023 = vunpack.c.h.b16 %v560
      %v2024 = vunpack.c.l.b16 %v561
      %v2025 = vunpack.c.h.b16 %v561
      %v2026 = vunpack.c.l.b16 %v562
      %v2027 = vunpack.c.h.b16 %v562
      %v2028 = vunpack.c.l.b16 %v563
      %v2029 = vunpack.c.h.b16 %v563
      %v2030 = vunpack.c.l.b16 %v564
      %v2031 = vunpack.c.h.b16 %v564
      %v2032 = vunpack.c.l.b16 %v565
      %v2033 = vunpack.c.h.b16 %v565
      %v2034 = vunpack.c.l.b16 %v566
      %v2035 = vunpack.c.h.b16 %v566
      %v2036 = vunpack.c.l.b16 %v567
      %v2037 = vunpack.c.h.b16 %v567
      %v2038 = vunpack.c.l.b16 %v568
      %v2039 = vunpack.c.h.b16 %v568
      %v2040 = vunpack.c.l.b16 %v569
      %v2041 = vunpack.c.h.b16 %v569
      %v2042 = vunpack.c.l.b16 %v570
      %v2043 = vunpack.c.h.b16 %v570
      %v2044 = vunpack.c.l.b16 %v571
      %v2045 = vunpack.c.h.b16 %v571
      %v2046 = vunpack.c.l.b16 %v572
      %v2047 = vunpack.c.h.b16 %v572
      %v2048 = vunpack.c.l.b16 %v573
      %v2049 = vunpack.c.h.b16 %v573
      %v2050 = vunpack.c.l.b16 %v574
      %v2051 = vunpack.c.h.b16 %v574
      %v2052 = vunpack.c.l.b16 %v575
      %v2053 = vunpack.c.h.b16 %v575
      %v2054 = vunpack.c.l.b16 %v576
      %v2055 = vunpack.c.h.b16 %v576
      %v2056 = vunpack.c.l.b16 %v577
      %v2057 = vunpack.c.h.b16 %v577
      %v2058 = vunpack.c.l.b16 %v578
      %v2059 = vunpack.c.h.b16 %v578
      %v2060 = vunpack.c.l.b16 %v579
      %v2061 = vunpack.c.h.b16 %v579
      %v2062 = vunpack.c.l.b16 %v580
      %v2063 = vunpack.c.h.b16 %v580
      %v2064 = vunpack.c.l.b16 %v581
      %v2065 = vunpack.c.h.b16 %v581
      %v2066 = vunpack.c.l.b16 %v582
      %v2067 = vunpack.c.h.b16 %v582
      %v2068 = vunpack.c.l.b16 %v583
      %v2069 = vunpack.c.h.b16 %v583
      %v2070 = vunpack.c.l.b16 %v584
      %v2071 = vunpack.c.h.b16 %v584
      %v2072 = vunpack.c.l.b16 %v585
      %v2073 = vunpack.c.h.b16 %v585
      %v2074 = vunpack.c.l.b16 %v586
      %v2075 = vunpack.c.h.b16 %v586
      %v2076 = vunpack.c.l.b16 %v587
      %v2077 = vunpack.c.h.b16 %v587
      %v2078 = vunpack.c.l.b16 %v588
      %v2079 = vunpack.c.h.b16 %v588
      %v2080 = vunpack.c.l.b16 %v589
      %v2081 = vunpack.c.h.b16 %v589
      %v2082 = vunpack.c.l.b16 %v590
      %v2083 = vunpack.c.h.b16 %v590
      %v2084 = vunpack.c.l.b16 %v591
      %v2085 = vunpack.c.h.b16 %v591
      %v2086 = vunpack.c.l.b16 %v592
      %v2087 = vunpack.c.h.b16 %v592
      %v2088 = vunpack.c.l.b16 %v593
      %v2089 = vunpack.c.h.b16 %v593
      %v2090 = vunpack.c.l.b16 %v594
      %v2091 = vunpack.c.h.b16 %v594
      %v2092 = vunpack.c.l.b16 %v595
      %v2093 = vunpack.c.h.b16 %v595
      %v2094 = vunpack.c.l.b16 %v596
      %v2095 = vunpack.c.h.b16 %v596
      %v2096 = vunpack.c.l.b16 %v597
      %v2097 = vunpack.c.h.b16 %v597
      %v2098 = vunpack.c.l.b16 %v598
      %v2099 = vunpack.c.h.b16 %v598
      %v2100 = vunpack.c.l.b16 %v599
      %v2101 = vunpack.c.h.b16 %v599
      %v2102 = vunpack.c.l.b16 %v600
      %v2103 = vunpack.c.h.b16 %v600
      %v2104 = vunpack.c.l.b16 %v601
      %v2105 = vunpack.c.h.b16 %v601
      %v2106 = vunpack.c.l.b16 %v602
      %v2107 = vunpack.c.h.b16 %v602
      %v2108 = vunpack.c.l.b16 %v603
      %v2109 = vunpack.c.h.b16 %v603
      %v2110 = vunpack.c.l.b16 %v604
      %v2111 = vunpack.c.h.b16 %v604
      %v2112 = vunpack.c.l.b16 %v605
      %v2113 = vunpack.c.h.b16 %v605
      %v2114 = vunpack.c.l.b16 %v606
      %v2115 = vunpack.c.h.b16 %v606
      %v2116 = vunpack.c.l.b16 %v607
      %v2117 = vunpack.c.h.b16 %v607
      %v2118 = vunpack.c.l.b16 %v608
      %v2119 = vunpack.c.h.b16 %v608
      %v2120 = vunpack.c.l.b16 %v609
      %v2121 = vunpack.c.h.b16 %v609
      %v2122 = vunpack.c.l.b16 %v610
      %v2123 = vunpack.c.h.b16 %v610
      %v2124 = vunpack.c.l.b16 %v611
      %v2125 = vunpack.c.h.b16 %v611
      %v2126 = vunpack.c.l.b16 %v612
      %v2127 = vunpack.c.h.b16 %v612
      %v2128 = vunpack.c.l.b16 %v613
      %v2129 = vunpack.c.h.b16 %v613
      %v2130 = vunpack.c.l.b16 %v614
      %v2131 = vunpack.c.h.b16 %v614
      %v2132 = vunpack.c.l.b16 %v615
      %v2133 = vunpack.c.h.b16 %v615
      %v2134 = vunpack.c.l.b16 %v616
      %v2135 = vunpack.c.h.b16 %v616
      %v2136 = vunpack.c.l.b16 %v617
      %v2137 = vunpack.c.h.b16 %v617
      %v2138 = vunpack.c.l.b16 %v618
      %v2139 = vunpack.c.h.b16 %v618
      %v2140 = vunpack.c.l.b16 %v619
      %v2141 = vunpack.c.h.b16 %v619
      %v2142 = vunpack.c.l.b16 %v620
      %v2143 = vunpack.c.h.b16 %v620
      %v2144 = vunpack.c.l.b16 %v621
      %v2145 = vunpack.c.h.b16 %v621
      %v2146 = vunpack.c.l.b16 %v622
      %v2147 = vunpack.c.h.b16 %v622
      %v2148 = vunpack.c.l.b16 %v623
      %v2149 = vunpack.c.h.b16 %v623
      %v2150 = vunpack.c.l.b16 %v624
      %v2151 = vunpack.c.h.b16 %v624
      %v2152 = vunpack.c.l.b16 %v625
      %v2153 = vunpack.c.h.b16 %v625
      %v2154 = vunpack.c.l.b16 %v626
      %v2155 = vunpack.c.h.b16 %v626
      %v2156 = vunpack.c.l.b16 %v627
      %v2157 = vunpack.c.h.b16 %v627
      %v2158 = vunpack.c.l.b16 %v628
      %v2159 = vunpack.c.h.b16 %v628
      %v2160 = vunpack.c.l.b16 %v629
      %v2161 = vunpack.c.h.b16 %v629
      %v2162 = vunpack.c.l.b16 %v630
      %v2163 = vunpack.c.h.b16 %v630
      %v2164 = vunpack.c.l.b16 %v631
      %v2165 = vunpack.c.h.b16 %v631
      %v2166 = vunpack.c.l.b16 %v632
      %v2167 = vunpack.c.h.b16 %v632
      %v2168 = vunpack.c.l.b16 %v633
      %v2169 = vunpack.c.h.b16 %v633
      %v2170 = vunpack.c.l.b16 %v634
      %v2171 = vunpack.c.h.b16 %v634
      %v2172 = vunpack.c.l.b16 %v635
      %v2173 = vunpack.c.h.b16 %v635
      %v2174 = vunpack.c.l.b16 %v636
      %v2175 = vunpack.c.h.b16 %v636
      %v2176 = vunpack.c.l.b16 %v637
      %v2177 = vunpack.c.h.b16 %v637
      %v2178 = vunpack.c.l.b16 %v638
      %v2179 = vunpack.c.h.b16 %v638
      %v2180 = vunpack.c.l.b16 %v639
      %v2181 = vunpack.c.h.b16 %v639
      %v2182 = vunpack.c.l.b16 %v640
      %v2183 = vunpack.c.h.b16 %v640
      %v2184 = vunpack.c.l.b16 %v641
      %v2185 = vunpack.c.h.b16 %v641
      %v2186 = vunpack.c.l.b16 %v642
      %v2187 = vunpack.c.h.b16 %v642
      %v2188 = vunpack.c.l.b16 %v643
      %v2189 = vunpack.c.h.b16 %v643
      %v2190 = vunpack.c.l.b16 %v644
      %v2191 = vunpack.c.h.b16 %v644
      %v2192 = vunpack.c.l.b16 %v645
      %v2193 = vunpack.c.h.b16 %v645
      %v2194 = vunpack.c.l.b16 %v646
      %v2195 = vunpack.c.h.b16 %v646
      %v2196 = vunpack.c.l.b16 %v647
      %v2197 = vunpack.c.h.b16 %v647
      %v2198 = vunpack.c.l.b16 %v648
      %v2199 = vunpack.c.h.b16 %v648
      %v2200 = vunpack.c.l.b16 %v649
      %v2201 = vunpack.c.h.b16 %v649
      %v2202 = vunpack.c.l.b16 %v650
      %v2203 = vunpack.c.h.b16 %v650
      %v2204 = vunpack.c.l.b16 %v651
      %v2205 = vunpack.c.h.b16 %v651
      %v2206 = vunpack.c.l.b16 %v652
      %v2207 = vunpack.c.h.b16 %v652
      %v2208 = vunpack.c.l.b16 %v653
      %v2209 = vunpack.c.h.b16 %v653
      %v2210 = vunpack.c.l.b16 %v654
      %v2211 = vunpack.c.h.b16 %v654
      %v2212 = vunpack.c.l.b16 %v655
      %v2213 = vunpack.c.h.b16 %v655
      %v2214 = vunpack.c.l.b16 %v656
      %v2215 = vunpack.c.h.b16 %v656
      %v2216 = vunpack.c.l.b16 %v657
      %v2217 = vunpack.c.h.b16 %v657
      %v2218 = vunpack.c.l.b16 %v658
      %v2219 = vunpack.c.h.b16 %v658
      %v2220 = vunpack.c.l.b16 %v659
      %v2221 = vunpack.c.h.b16 %v659
      %v2222 = vunpack.c.l.b16 %v660
      %v2223 = vunpack.c.h.b16 %v660
      %v2224 = vunpack.c.l.b16 %v661
      %v2225 = vunpack.c.h.b16 %v661
      %v2226 = vunpack.c.l.b16 %v662
      %v2227 = vunpack.c.h.b16 %v662
      %v2228 = vunpack.c.l.b16 %v663
      %v2229 = vunpack.c.h.b16 %v663
      %v2230 = vunpack.c.l.b16 %v664
      %v2231 = vunpack.c.h.b16 %v664
      %v2232 = vunpack.c.l.b16 %v665
      %v2233 = vunpack.c.h.b16 %v665
      %v2234 = vunpack.c.l.b16 %v666
      %v2235 = vunpack.c.h.b16 %v666
      %v2236 = vunpack.c.l.b16 %v667
      %v2237 = vunpack.c.h.b16 %v667
      %v2238 = vunpack.c.l.b16 %v668
      %v2239 = vunpack.c.h.b16 %v668
      %v2240 = vunpack.c.l.b16 %v669
      %v2241 = vunpack.c.h.b16 %v669
      %v2242 = vunpack.c.l.b16 %v670
      %v2243 = vunpack.c.h.b16 %v670
      %v2244 = vunpack.c.l.b16 %v671
      %v2245 = vunpack.c.h.b16 %v671
      %v2246 = vunpack.c.l.b16 %v672
      %v2247 = vunpack.c.h.b16 %v672
      %v2248 = vunpack.c.l.b16 %v673
      %v2249 = vunpack.c.h.b16 %v673
      %v2250 = vunpack.c.l.b16 %v674
      %v2251 = vunpack.c.h.b16 %v674
      %v2252 = vunpack.c.l.b16 %v675
      %v2253 = vunpack.c.h.b16 %v675
      %v2254 = vunpack.c.l.b16 %v676
      %v2255 = vunpack.c.h.b16 %v676
      %v2256 = vunpack.c.l.b16 %v677
      %v2257 = vunpack.c.h.b16 %v677
      %v2258 = vunpack.c.l.b16 %v678
      %v2259 = vunpack.c.h.b16 %v678
      %v2260 = vunpack.c.l.b16 %v679
      %v2261 = vunpack.c.h.b16 %v679
      %v2262 = vunpack.c.l.b16 %v680
      %v2263 = vunpack.c.h.b16 %v680
      %v2264 = vunpack.c.l.b16 %v681
      %v2265 = vunpack.c.h.b16 %v681
      %v2266 = vunpack.c.l.b16 %v682
      %v2267 = vunpack.c.h.b16 %v682
      %v2268 = vunpack.c.l.b16 %v683
      %v2269 = vunpack.c.h.b16 %v683
      %v2270 = vunpack.c.l.b16 %v684
      %v2271 = vunpack.c.h.b16 %v684
      %v2272 = vunpack.c.l.b16 %v685
      %v2273 = vunpack.c.h.b16 %v685
      %v2274 = vunpack.c.l.b16 %v686
      %v2275 = vunpack.c.h.b16 %v686
      %v2276 = vunpack.c.l.b16 %v687
      %v2277 = vunpack.c.h.b16 %v687
      %v2278 = vunpack.c.l.b16 %v688
      %v2279 = vunpack.c.h.b16 %v688
      %v2280 = vunpack.c.l.b16 %v689
      %v2281 = vunpack.c.h.b16 %v689
      %v2282 = vunpack.c.l.b16 %v690
      %v2283 = vunpack.c.h.b16 %v690
      %v2284 = vunpack.c.l.b16 %v691
      %v2285 = vunpack.c.h.b16 %v691
      %v2286 = vunpack.c.l.b16 %v692
      %v2287 = vunpack.c.h.b16 %v692
      %v2288 = vunpack.c.l.b16 %v693
      %v2289 = vunpack.c.h.b16 %v693
      %v2290 = vunpack.c.l.b16 %v694
      %v2291 = vunpack.c.h.b16 %v694
      %v2292 = vunpack.c.l.b16 %v695
      %v2293 = vunpack.c.h.b16 %v695
      %v2294 = vunpack.c.l.b16 %v696
      %v2295 = vunpack.c.h.b16 %v696
      %v2296 = vunpack.c.l.b16 %v697
      %v2297 = vunpack.c.h.b16 %v697
      %v2298 = vunpack.c.l.b16 %v698
      %v2299 = vunpack.c.h.b16 %v698
      %v2300 = vunpack.c.l.b16 %v699
      %v2301 = vunpack.c.h.b16 %v699
      %v2302 = vunpack.c.l.b16 %v700
      %v2303 = vunpack.c.h.b16 %v700
      %v2304 = vunpack.c.l.b16 %v701
      %v2305 = vunpack.c.h.b16 %v701
      %v2306 = vunpack.c.l.b16 %v702
      %v2307 = vunpack.c.h.b16 %v702
      %v2308 = vunpack.c.l.b16 %v703
      %v2309 = vunpack.c.h.b16 %v703
      %v2310 = vunpack.c.l.b16 %v704
      %v2311 = vunpack.c.h.b16 %v704
      %v2312 = vunpack.c.l.b16 %v705
      %v2313 = vunpack.c.h.b16 %v705
      %v2314 = vunpack.c.l.b16 %v706
      %v2315 = vunpack.c.h.b16 %v706
      %v2316 = vunpack.c.l.b16 %v707
      %v2317 = vunpack.c.h.b16 %v707
      %v2318 = vunpack.c.l.b16 %v708
      %v2319 = vunpack.c.h.b16 %v708
      %v2320 = vunpack.c.l.b16 %v709
      %v2321 = vunpack.c.h.b16 %v709
      %v2322 = vunpack.c.l.b16 %v710
      %v2323 = vunpack.c.h.b16 %v710
      %v2324 = vunpack.c.l.b16 %v711
      %v2325 = vunpack.c.h.b16 %v711
      %v2326 = vunpack.c.l.b16 %v712
      %v2327 = vunpack.c.h.b16 %v712
      %v2328 = vunpack.c.l.b16 %v713
      %v2329 = vunpack.c.h.b16 %v713
      %v2330 = vunpack.c.l.b16 %v714
      %v2331 = vunpack.c.h.b16 %v714
      %v2332 = vunpack.c.l.b16 %v715
      %v2333 = vunpack.c.h.b16 %v715
      %v2334 = vunpack.c.l.b16 %v716
      %v2335 = vunpack.c.h.b16 %v716
      %v2336 = vunpack.c.l.b16 %v717
      %v2337 = vunpack.c.h.b16 %v717
      %v2338 = vunpack.c.l.b16 %v718
      %v2339 = vunpack.c.h.b16 %v718
      %v2340 = vunpack.c.l.b16 %v719
      %v2341 = vunpack.c.h.b16 %v719
      %v2342 = vunpack.c.l.b16 %v720
      %v2343 = vunpack.c.h.b16 %v720
      %v2344 = vunpack.c.l.b16 %v721
      %v2345 = vunpack.c.h.b16 %v721
      %v2346 = vunpack.c.l.b16 %v722
      %v2347 = vunpack.c.h.b16 %v722
      %v2348 = vunpack.c.l.b16 %v723
      %v2349 = vunpack.c.h.b16 %v723
      %v2350 = vunpack.c.l.b16 %v724
      %v2351 = vunpack.c.h.b16 %v724
      %v2352 = vunpack.c.l.b16 %v725
      %v2353 = vunpack.c.h.b16 %v725
      %v2354 = vunpack.c.l.b16 %v726
      %v2355 = vunpack.c.h.b16 %v726
      %v2356 = vunpack.c.l.b16 %v727
      %v2357 = vunpack.c.h.b16 %v727
      %v2358 = vunpack.c.l.b16 %v728
      %v2359 = vunpack.c.h.b16 %v728
      %v2360 = vunpack.c.l.b16 %v729
      %v2361 = vunpack.c.h.b16 %v729
      %v2362 = vunpack.c.l.b16 %v730
      %v2363 = vunpack.c.h.b16 %v730
      %v2364 = vunpack.c.l.b16 %v731
      %v2365 = vunpack.c.h.b16 %v731
      %v2366 = vunpack.c.l.b16 %v732
      %v2367 = vunpack.c.h.b16 %v732
      %v2368 = vunpack.c.l.b16 %v733
      %v2369 = vunpack.c.h.b16 %v733
      %v2370 = vunpack.c.l.b16 %v734
      %v2371 = vunpack.c.h.b16 %v734
      %v2372 = vunpack.c.l.b16 %v735
      %v2373 = vunpack.c.h.b16 %v735
      %v2374 = vunpack.c.l.b16 %v736
      %v2375 = vunpack.c.h.b16 %v736
      %v2376 = vunpack.c.l.b16 %v737
      %v2377 = vunpack.c.h.b16 %v737
      %v2378 = vunpack.c.l.b16 %v738
      %v2379 = vunpack.c.h.b16 %v738
      %v2380 = vunpack.c.l.b16 %v739
      %v2381 = vunpack.c.h.b16 %v739
      %v2382 = vunpack.c.l.b16 %v740
      %v2383 = vunpack.c.h.b16 %v740
      %v2384 = vunpack.c.l.b16 %v741
      %v2385 = vunpack.c.h.b16 %v741
      %v2386 = vunpack.c.l.b16 %v742
      %v2387 = vunpack.c.h.b16 %v742
      %v2388 = vunpack.c.l.b16 %v743
      %v2389 = vunpack.c.h.b16 %v743
      %v2390 = vunpack.c.l.b16 %v744
      %v2391 = vunpack.c.h.b16 %v744
      %v2392 = vunpack.c.l.b16 %v745
      %v2393 = vunpack.c.h.b16 %v745
      %v2394 = vunpack.c.l.b16 %v746
      %v2395 = vunpack.c.h.b16 %v746
      %v2396 = vunpack.c.l.b16 %v747
      %v2397 = vunpack.c.h.b16 %v747
      %v2398 = vunpack.c.l.b16 %v748
      %v2399 = vunpack.c.h.b16 %v748
      %v2400 = vunpack.c.l.b16 %v749
      %v2401 = vunpack.c.h.b16 %v749
      %v2402 = vunpack.c.l.b16 %v750
      %v2403 = vunpack.c.h.b16 %v750
      %v2404 = vunpack.c.l.b16 %v751
      %v2405 = vunpack.c.h.b16 %v751
      %v2406 = vunpack.c.l.b16 %v752
      %v2407 = vunpack.c.h.b16 %v752
      %v2408 = vunpack.c.l.b16 %v753
      %v2409 = vunpack.c.h.b16 %v753
      %v2410 = vunpack.c.l.b16 %v754
      %v2411 = vunpack.c.h.b16 %v754
      %v2412 = vunpack.c.l.b16 %v755
      %v2413 = vunpack.c.h.b16 %v755
      %v2414 = vunpack.c.l.b16 %v756
      %v2415 = vunpack.c.h.b16 %v756
      %v2416 = vunpack.c.l.b16 %v757
      %v2417 = vunpack.c.h.b16 %v757
      %v2418 = vunpack.c.l.b16 %v758
      %v2419 = vunpack.c.h.b16 %v758
      %v2420 = vunpack.c.l.b16 %v759
      %v2421 = vunpack.c.h.b16 %v759
      %v2422 = vunpack.c.l.b16 %v760
      %v2423 = vunpack.c.h.b16 %v760
      %v2424 = vunpack.c.l.b16 %v761
      %v2425 = vunpack.c.h.b16 %v761
      %v2426 = vunpack.c.l.b16 %v762
      %v2427 = vunpack.c.h.b16 %v762
      %v2428 = vunpack.c.l.b16 %v763
      %v2429 = vunpack.c.h.b16 %v763
      %v2430 = vunpack.c.l.b16 %v764
      %v2431 = vunpack.c.h.b16 %v764
      %v2432 = vunpack.c.l.b16 %v765
      %v2433 = vunpack.c.h.b16 %v765
      %v2434 = vunpack.c.l.b16 %v766
      %v2435 = vunpack.c.h.b16 %v766
      %v2436 = vunpack.c.l.b16 %v767
      %v2437 = vunpack.c.h.b16 %v767
      %v2438 = vunpack.c.l.b16 %v768
      %v2439 = vunpack.c.h.b16 %v768
      %v2440 = vunpack.c.l.b16 %v769
      %v2441 = vunpack.c.h.b16 %v769
      %v2442 = vunpack.c.l.b16 %v770
      %v2443 = vunpack.c.h.b16 %v770
      %v2444 = vunpack.c.l.b16 %v771
      %v2445 = vunpack.c.h.b16 %v771
      %v2446 = vunpack.c.l.b16 %v772
      %v2447 = vunpack.c.h.b16 %v772
      %v2448 = vunpack.c.l.b16 %v773
      %v2449 = vunpack.c.h.b16 %v773
      %v2450 = vunpack.c.l.b16 %v774
      %v2451 = vunpack.c.h.b16 %v774
      %v2452 = vunpack.c.l.b16 %v775
      %v2453 = vunpack.c.h.b16 %v775
      %v2454 = vunpack.c.l.b16 %v776
      %v2455 = vunpack.c.h.b16 %v776
      %v2456 = vunpack.c.l.b16 %v777
      %v2457 = vunpack.c.h.b16 %v777
      %v2458 = vunpack.c.l.b16 %v778
      %v2459 = vunpack.c.h.b16 %v778
      %v2460 = vunpack.c.l.b16 %v779
      %v2461 = vunpack.c.h.b16 %v779
      %v2462 = vunpack.c.l.b16 %v780
      %v2463 = vunpack.c.h.b16 %v780
      %v2464 = vunpack.c.l.b16 %v781
      %v2465 = vunpack.c.h.b16 %v781
      %v2466 = vunpack.c.l.b16 %v782
      %v2467 = vunpack.c.h.b16 %v782
      %v2468 = vunpack.c.l.b16 %v783
      %v2469 = vunpack.c.h.b16 %v783
      %v2470 = vunpack.c.l.b16 %v784
      %v2471 = vunpack.c.h.b16 %v784
      %v2472 = vunpack.c.l.b16 %v785
      %v2473 = vunpack.c.h.b16 %v785
      %v2474 = vunpack.c.l.b16 %v786
      %v2475 = vunpack.c.h.b16 %v786
      %v2476 = vunpack.c.l.b16 %v787
      %v2477 = vunpack.c.h.b16 %v787
      %v2478 = vunpack.c.l.b16 %v788
      %v2479 = vunpack.c.h.b16 %v788
      %v2480 = vunpack.c.l.b16 %v789
      %v2481 = vunpack.c.h.b16 %v789
      %v2482 = vunpack.c.l.b16 %v790
      %v2483 = vunpack.c.h.b16 %v790
      %v2484 = vunpack.c.l.b16 %v791
      %v2485 = vunpack.c.h.b16 %v791
      %v2486 = vunpack.c.l.b16 %v792
      %v2487 = vunpack.c.h.b16 %v792
      %v2488 = vunpack.c.l.b16 %v793
      %v2489 = vunpack.c.h.b16 %v793
      %v2490 = vpack.c.b16 %v1468, %v1466
      %v2491 = vpack.c.b16 %v1469, %v1467
      %v2492 = vpack.c.b16 %v1472, %v1470
      %v2493 = vpack.c.b16 %v1473, %v1471
      %v2494 = vpack.c.b16 %v1476, %v1474
      %v2495 = vpack.c.b16 %v1477, %v1475
      %v2496 = vpack.c.b16 %v1480, %v1478
      %v2497 = vpack.c.b16 %v1481, %v1479
      %v2498 = vpack.c.b16 %v1484, %v1482
      %v2499 = vpack.c.b16 %v1485, %v1483
      %v2500 = vpack.c.b16 %v1488, %v1486
      %v2501 = vpack.c.b16 %v1489, %v1487
      %v2502 = vpack.c.b16 %v1492, %v1490
      %v2503 = vpack.c.b16 %v1493, %v1491
      %v2504 = vpack.c.b16 %v1496, %v1494
      %v2505 = vpack.c.b16 %v1497, %v1495
      %v2506 = vpack.c.b16 %v1500, %v1498
      %v2507 = vpack.c.b16 %v1501, %v1499
      %v2508 = vpack.c.b16 %v1504, %v1502
      %v2509 = vpack.c.b16 %v1505, %v1503
      %v2510 = vpack.c.b16 %v1508, %v1506
      %v2511 = vpack.c.b16 %v1509, %v1507
      %v2512 = vpack.c.b16 %v1512, %v1510
      %v2513 = vpack.c.b16 %v1513, %v1511
      %v2514 = vpack.c.b16 %v1516, %v1514
      %v2515 = vpack.c.b16 %v1517, %v1515
      %v2516 = vpack.c.b16 %v1520, %v1518
      %v2517 = vpack.c.b16 %v1521, %v1519
      %v2518 = vpack.c.b16 %v1524, %v1522
      %v2519 = vpack.c.b16 %v1525, %v1523
      %v2520 = vpack.c.b16 %v1528, %v1526
      %v2521 = vpack.c.b16 %v1529, %v1527
      %v2522 = vpack.c.b16 %v1532, %v1530
      %v2523 = vpack.c.b16 %v1533, %v1531
      %v2524 = vpack.c.b16 %v1536, %v1534
      %v2525 = vpack.c.b16 %v1537, %v1535
      %v2526 = vpack.c.b16 %v1540, %v1538
      %v2527 = vpack.c.b16 %v1541, %v1539
      %v2528 = vpack.c.b16 %v1544, %v1542
      %v2529 = vpack.c.b16 %v1545, %v1543
      %v2530 = vpack.c.b16 %v1548, %v1546
      %v2531 = vpack.c.b16 %v1549, %v1547
      %v2532 = vpack.c.b16 %v1552, %v1550
      %v2533 = vpack.c.b16 %v1553, %v1551
      %v2534 = vpack.c.b16 %v1556, %v1554
      %v2535 = vpack.c.b16 %v1557, %v1555
      %v2536 = vpack.c.b16 %v1560, %v1558
      %v2537 = vpack.c.b16 %v1561, %v1559
      %v2538 = vpack.c.b16 %v1564, %v1562
      %v2539 = vpack.c.b16 %v1565, %v1563
      %v2540 = vpack.c.b16 %v1568, %v1566
      %v2541 = vpack.c.b16 %v1569, %v1567
      %v2542 = vpack.c.b16 %v1572, %v1570
      %v2543 = vpack.c.b16 %v1573, %v1571
      %v2544 = vpack.c.b16 %v1576, %v1574
      %v2545 = vpack.c.b16 %v1577, %v1575
      %v2546 = vpack.c.b16 %v1580, %v1578
      %v2547 = vpack.c.b16 %v1581, %v1579
      %v2548 = vpack.c.b16 %v1584, %v1582
      %v2549 = vpack.c.b16 %v1585, %v1583
      %v2550 = vpack.c.b16 %v1588, %v1586
      %v2551 = vpack.c.b16 %v1589, %v1587
      %v2552 = vpack.c.b16 %v1592, %v1590
      %v2553 = vpack.c.b16 %v1593, %v1591
      %v2554 = vpack.c.b16 %v1596, %v1594
      %v2555 = vpack.c.b16 %v1597, %v1595
      %v2556 = vpack.c.b16 %v1600, %v1598
      %v2557 = vpack.c.b16 %v1601, %v1599
      %v2558 = vpack.c.b16 %v1604, %v1602
      %v2559 = vpack.c.b16 %v1605, %v1603
      %v2560 = vpack.c.b16 %v1608, %v1606
      %v2561 = vpack.c.b16 %v1609, %v1607
      %v2562 = vpack.c.b16 %v1612, %v1610
      %v2563 = vpack.c.b16 %v1613, %v1611
      %v2564 = vpack.c.b16 %v1616, %v1614
      %v2565 = vpack.c.b16 %v1617, %v1615
      %v2566 = vpack.c.b16 %v1620, %v1618
      %v2567 = vpack.c.b16 %v1621, %v1619
      %v2568 = vpack.c.b16 %v1624, %v1622
      %v2569 = vpack.c.b16 %v1625, %v1623
      %v2570 = vpack.c.b16 %v1628, %v1626
      %v2571 = vpack.c.b16 %v1629, %v1627
      %v2572 = vpack.c.b16 %v1632, %v1630
      %v2573 = vpack.c.b16 %v1633, %v1631
      %v2574 = vpack.c.b16 %v1636, %v1634
      %v2575 = vpack.c.b16 %v1637, %v1635
      %v2576 = vpack.c.b16 %v1640, %v1638
      %v2577 = vpack.c.b16 %v1641, %v1639
      %v2578 = vpack.c.b16 %v1644, %v1642
      %v2579 = vpack.c.b16 %v1645, %v1643
      %v2580 = vpack.c.b16 %v1648, %v1646
      %v2581 = vpack.c.b16 %v1649, %v1647
      %v2582 = vpack.c.b16 %v1652, %v1650
      %v2583 = vpack.c.b16 %v1653, %v1651
      %v2584 = vpack.c.b16 %v1656, %v1654
      %v2585 = vpack.c.b16 %v1657, %v1655
      %v2586 = vpack.c.b16 %v1660, %v1658
      %v2587 = vpack.c.b16 %v1661, %v1659
      %v2588 = vpack.c.b16 %v1664, %v1662
      %v2589 = vpack.c.b16 %v1665, %v1663
      %v2590 = vpack.c.b16 %v1668, %v1666
      %v2591 = vpack.c.b16 %v1669, %v1667
      %v2592 = vpack.c.b16 %v1672, %v1670
      %v2593 = vpack.c.b16 %v1673, %v1671
      %v2594 = vpack.c.b16 %v1676, %v1674
      %v2595 = vpack.c.b16 %v1677, %v1675
      %v2596 = vpack.c.b16 %v1680, %v1678
      %v2597 = vpack.c.b16 %v1681, %v1679
      %v2598 = vpack.c.b16 %v1684, %v1682
      %v2599 = vpack.c.b16 %v1685, %v1683
      %v2600 = vpack.c.b16 %v1688, %v1686
      %v2601 = vpack.c.b16 %v1689, %v1687
      %v2602 = vpack.c.b16 %v1692, %v1690
      %v2603 = vpack.c.b16 %v1693, %v1691
      %v2604 = vpack.c.b16 %v1696, %v1694
      %v2605 = vpack.c.b16 %v1697, %v1695
      %v2606 = vpack.c.b16 %v1700, %v1698
      %v2607 = vpack.c.b16 %v1701, %v1699
      %v2608 = vpack.c.b16 %v1704, %v1702
      %v2609 = vpack.c.b16 %v1705, %v1703
      %v2610 = vpack.c.b16 %v1708, %v1706
      %v2611 = vpack.c.b16 %v1709, %v1707
      %v2612 = vpack.c.b16 %v1712, %v1710
      %v2613 = vpack.c.b16 %v1713, %v1711
      %v2614 = vpack.c.b16 %v1716, %v1714
      %v2615 = vpack.c.b16 %v1717, %v1715
      %v2616 = vpack.c.b16 %v1720, %v1718
      %v2617 = vpack.c.b16 %v1721, %v1719
      %v2618 = vpack.c.b16 %v1724, %v1722
      %v2619 = vpack.c.b16 %v1725, %v1723
      %v2620 = vpack.c.b16 %v1728, %v1726
      %v2621 = vpack.c.b16 %v1729, %v1727
      %v2622 = vpack.c.b16 %v1732, %v1730
      %v2623 = vpack.c.b16 %v1733, %v1731
      %v2624 = vpack.c.b16 %v1736, %v1734
      %v2625 = vpack.c.b16 %v1737, %v1735
      %v2626 = vpack.c.b16 %v1740, %v1738
      %v2627 = vpack.c.b16 %v1741, %v1739
      %v2628 = vpack.c.b16 %v1744, %v1742
      %v2629 = vpack.c.b16 %v1745, %v1743
      %v2630 = vpack.c.b16 %v1748, %v1746
      %v2631 = vpack.c.b16 %v1749, %v1747
      %v2632 = vpack.c.b16 %v1752, %v1750
      %v2633 = vpack.c.b16 %v1753, %v1751
      %v2634 = vpack.c.b16 %v1756, %v1754
      %v2635 = vpack.c.b16 %v1757, %v1755
      %v2636 = vpack.c.b16 %v1760, %v1758
      %v2637 = vpack.c.b16 %v1761, %v1759
      %v2638 = vpack.c.b16 %v1764, %v1762
      %v2639 = vpack.c.b16 %v1765, %v1763
      %v2640 = vpack.c.b16 %v1768, %v1766
      %v2641 = vpack.c.b16 %v1769, %v1767
      %v2642 = vpack.c.b16 %v1772, %v1770
      %v2643 = vpack.c.b16 %v1773, %v1771
      %v2644 = vpack.c.b16 %v1776, %v1774
      %v2645 = vpack.c.b16 %v1777, %v1775
      %v2646 = vpack.c.b16 %v1780, %v1778
      %v2647 = vpack.c.b16 %v1781, %v1779
      %v2648 = vpack.c.b16 %v1784, %v1782
      %v2649 = vpack.c.b16 %v1785, %v1783
      %v2650 = vpack.c.b16 %v1788, %v1786
      %v2651 = vpack.c.b16 %v1789, %v1787
      %v2652 = vpack.c.b16 %v1792, %v1790
      %v2653 = vpack.c.b16 %v1793, %v1791
      %v2654 = vpack.c.b16 %v1796, %v1794
      %v2655 = vpack.c.b16 %v1797, %v1795
      %v2656 = vpack.c.b16 %v1800, %v1798
      %v2657 = vpack.c.b16 %v1801, %v1799
      %v2658 = vpack.c.b16 %v1804, %v1802
      %v2659 = vpack.c.b16 %v1805, %v1803
      %v2660 = vpack.c.b16 %v1808, %v1806
      %v2661 = vpack.c.b16 %v1809, %v1807
      %v2662 = vpack.c.b16 %v1812, %v1810
      %v2663 = vpack.c.b16 %v1813, %v1811
      %v2664 = vpack.c.b16 %v1816, %v1814
      %v2665 = vpack.c.b16 %v1817, %v1815
      %v2666 = vpack.c.b16 %v1820, %v1818
      %v2667 = vpack.c.b16 %v1821, %v1819
      %v2668 = vpack.c.b16 %v1824, %v1822
      %v2669 = vpack.c.b16 %v1825, %v1823
      %v2670 = vpack.c.b16 %v1828, %v1826
      %v2671 = vpack.c.b16 %v1829, %v1827
      %v2672 = vpack.c.b16 %v1832, %v1830
      %v2673 = vpack.c.b16 %v1833, %v1831
      %v2674 = vpack.c.b16 %v1836, %v1834
      %v2675 = vpack.c.b16 %v1837, %v1835
      %v2676 = vpack.c.b16 %v1840, %v1838
      %v2677 = vpack.c.b16 %v1841, %v1839
      %v2678 = vpack.c.b16 %v1844, %v1842
      %v2679 = vpack.c.b16 %v1845, %v1843
      %v2680 = vpack.c.b16 %v1848, %v1846
      %v2681 = vpack.c.b16 %v1849, %v1847
      %v2682 = vpack.c.b16 %v1852, %v1850
      %v2683 = vpack.c.b16 %v1853, %v1851
      %v2684 = vpack.c.b16 %v1856, %v1854
      %v2685 = vpack.c.b16 %v1857, %v1855
      %v2686 = vpack.c.b16 %v1860, %v1858
      %v2687 = vpack.c.b16 %v1861, %v1859
      %v2688 = vpack.c.b16 %v1864, %v1862
      %v2689 = vpack.c.b16 %v1865, %v1863
      %v2690 = vpack.c.b16 %v1868, %v1866
      %v2691 = vpack.c.b16 %v1869, %v1867
      %v2692 = vpack.c.b16 %v1872, %v1870
      %v2693 = vpack.c.b16 %v1873, %v1871
      %v2694 = vpack.c.b16 %v1876, %v1874
      %v2695 = vpack.c.b16 %v1877, %v1875
      %v2696 = vpack.c.b16 %v1880, %v1878
      %v2697 = vpack.c.b16 %v1881, %v1879
      %v2698 = vpack.c.b16 %v1884, %v1882
      %v2699 = vpack.c.b16 %v1885, %v1883
      %v2700 = vpack.c.b16 %v1888, %v1886
      %v2701 = vpack.c.b16 %v1889, %v1887
      %v2702 = vpack.c.b16 %v1892, %v1890
      %v2703 = vpack.c.b16 %v1893, %v1891
      %v2704 = vpack.c.b16 %v1896, %v1894
      %v2705 = vpack.c.b16 %v1897, %v1895
      %v2706 = vpack.c.b16 %v1900, %v1898
      %v2707 = vpack.c.b16 %v1901, %v1899
      %v2708 = vpack.c.b16 %v1904, %v1902
      %v2709 = vpack.c.b16 %v1905, %v1903
      %v2710 = vpack.c.b16 %v1908, %v1906
      %v2711 = vpack.c.b16 %v1909, %v1907
      %v2712 = vpack.c.b16 %v1912, %v1910
      %v2713 = vpack.c.b16 %v1913, %v1911
      %v2714 = vpack.c.b16 %v1916, %v1914
      %v2715 = vpack.c.b16 %v1917, %v1915
      %v2716 = vpack.c.b16 %v1920, %v1918
      %v2717 = vpack.c.b16 %v1921, %v1919
      %v2718 = vpack.c.b16 %v1924, %v1922
      %v2719 = vpack.c.b16 %v1925, %v1923
      %v2720 = vpack.c.b16 %v1928, %v1926
      %v2721 = vpack.c.b16 %v1929, %v1927
      %v2722 = vpack.c.b16 %v1932, %v1930
      %v2723 = vpack.c.b16 %v1933, %v1931
      %v2724 = vpack.c.b16 %v1936, %v1934
      %v2725 = vpack.c.b16 %v1937, %v1935
      %v2726 = vpack.c.b16 %v1940, %v1938
      %v2727 = vpack.c.b16 %v1941, %v1939
      %v2728 = vpack.c.b16 %v1944, %v1942
      %v2729 = vpack.c.b16 %v1945, %v1943
      %v2730 = vpack.c.b16 %v1948, %v1946
      %v2731 = vpack.c.b16 %v1949, %v1947
      %v2732 = vpack.c.b16 %v1952, %v1950
      %v2733 = vpack.c.b16 %v1953, %v1951
      %v2734 = vpack.c.b16 %v1956, %v1954
      %v2735 = vpack.c.b16 %v1957, %v1955
      %v2736 = vpack.c.b16 %v1960, %v1958
      %v2737 = vpack.c.b16 %v1961, %v1959
      %v2738 = vpack.c.b16 %v1964, %v1962
      %v2739 = vpack.c.b16 %v1965, %v1963
      %v2740 = vpack.c.b16 %v1968, %v1966
      %v2741 = vpack.c.b16 %v1969, %v1967
      %v2742 = vpack.c.b16 %v1972, %v1970
      %v2743 = vpack.c.b16 %v1973, %v1971
      %v2744 = vpack.c.b16 %v1976, %v1974
      %v2745 = vpack.c.b16 %v1977, %v1975
      %v2746 = vpack.c.b16 %v1980, %v1978
      %v2747 = vpack.c.b16 %v1981, %v1979
      %v2748 = vpack.c.b16 %v1984, %v1982
      %v2749 = vpack.c.b16 %v1985, %v1983
      %v2750 = vpack.c.b16 %v1988, %v1986
      %v2751 = vpack.c.b16 %v1989, %v1987
      %v2752 = vpack.c.b16 %v1992, %v1990
      %v2753 = vpack.c.b16 %v1993, %v1991
      %v2754 = vpack.c.b16 %v1996, %v1994
      %v2755 = vpack.c.b16 %v1997, %v1995
      %v2756 = vpack.c.b16 %v2000, %v1998
      %v2757 = vpack.c.b16 %v2001, %v1999
      %v2758 = vpack.c.b16 %v2004, %v2002
      %v2759 = vpack.c.b16 %v2005, %v2003
      %v2760 = vpack.c.b16 %v2008, %v2006
      %v2761 = vpack.c.b16 %v2009, %v2007
      %v2762 = vpack.c.b16 %v2012, %v2010
      %v2763 = vpack.c.b16 %v2013, %v2011
      %v2764 = vpack.c.b16 %v2016, %v2014
      %v2765 = vpack.c.b16 %v2017, %v2015
      %v2766 = vpack.c.b16 %v2020, %v2018
      %v2767 = vpack.c.b16 %v2021, %v2019
      %v2768 = vpack.c.b16 %v2024, %v2022
      %v2769 = vpack.c.b16 %v2025, %v2023
      %v2770 = vpack.c.b16 %v2028, %v2026
      %v2771 = vpack.c.b16 %v2029, %v2027
      %v2772 = vpack.c.b16 %v2032, %v2030
      %v2773 = vpack.c.b16 %v2033, %v2031
      %v2774 = vpack.c.b16 %v2036, %v2034
      %v2775 = vpack.c.b16 %v2037, %v2035
      %v2776 = vpack.c.b16 %v2040, %v2038
      %v2777 = vpack.c.b16 %v2041, %v2039
      %v2778 = vpack.c.b16 %v2044, %v2042
      %v2779 = vpack.c.b16 %v2045, %v2043
      %v2780 = vpack.c.b16 %v2048, %v2046
      %v2781 = vpack.c.b16 %v2049, %v2047
      %v2782 = vpack.c.b16 %v2052, %v2050
      %v2783 = vpack.c.b16 %v2053, %v2051
      %v2784 = vpack.c.b16 %v2056, %v2054
      %v2785 = vpack.c.b16 %v2057, %v2055
      %v2786 = vpack.c.b16 %v2060, %v2058
      %v2787 = vpack.c.b16 %v2061, %v2059
      %v2788 = vpack.c.b16 %v2064, %v2062
      %v2789 = vpack.c.b16 %v2065, %v2063
      %v2790 = vpack.c.b16 %v2068, %v2066
      %v2791 = vpack.c.b16 %v2069, %v2067
      %v2792 = vpack.c.b16 %v2072, %v2070
      %v2793 = vpack.c.b16 %v2073, %v2071
      %v2794 = vpack.c.b16 %v2076, %v2074
      %v2795 = vpack.c.b16 %v2077, %v2075
      %v2796 = vpack.c.b16 %v2080, %v2078
      %v2797 = vpack.c.b16 %v2081, %v2079
      %v2798 = vpack.c.b16 %v2084, %v2082
      %v2799 = vpack.c.b16 %v2085, %v2083
      %v2800 = vpack.c.b16 %v2088, %v2086
      %v2801 = vpack.c.b16 %v2089, %v2087
      %v2802 = vpack.c.b16 %v2092, %v2090
      %v2803 = vpack.c.b16 %v2093, %v2091
      %v2804 = vpack.c.b16 %v2096, %v2094
      %v2805 = vpack.c.b16 %v2097, %v2095
      %v2806 = vpack.c.b16 %v2100, %v2098
      %v2807 = vpack.c.b16 %v2101, %v2099
      %v2808 = vpack.c.b16 %v2104, %v2102
      %v2809 = vpack.c.b16 %v2105, %v2103
      %v2810 = vpack.c.b16 %v2108, %v2106
      %v2811 = vpack.c.b16 %v2109, %v2107
      %v2812 = vpack.c.b16 %v2112, %v2110
      %v2813 = vpack.c.b16 %v2113, %v2111
      %v2814 = vpack.c.b16 %v2116, %v2114
      %v2815 = vpack.c.b16 %v2117, %v2115
      %v2816 = vpack.c.b16 %v2120, %v2118
      %v2817 = vpack.c.b16 %v2121, %v2119
      %v2818 = vpack.c.b16 %v2124, %v2122
      %v2819 = vpack.c.b16 %v2125, %v2123
      %v2820 = vpack.c.b16 %v2128, %v2126
      %v2821 = vpack.c.b16 %v2129, %v2127
      %v2822 = vpack.c.b16 %v2132, %v2130
      %v2823 = vpack.c.b16 %v2133, %v2131
      %v2824 = vpack.c.b16 %v2136, %v2134
      %v2825 = vpack.c.b16 %v2137, %v2135
      %v2826 = vpack.c.b16 %v2140, %v2138
      %v2827 = vpack.c.b16 %v2141, %v2139
      %v2828 = vpack.c.b16 %v2144, %v2142
      %v2829 = vpack.c.b16 %v2145, %v2143
      %v2830 = vpack.c.b16 %v2148, %v2146
      %v2831 = vpack.c.b16 %v2149, %v2147
      %v2832 = vpack.c.b16 %v2152, %v2150
      %v2833 = vpack.c.b16 %v2153, %v2151
      %v2834 = vpack.c.b16 %v2156, %v2154
      %v2835 = vpack.c.b16 %v2157, %v2155
      %v2836 = vpack.c.b16 %v2160, %v2158
      %v2837 = vpack.c.b16 %v2161, %v2159
      %v2838 = vpack.c.b16 %v2164, %v2162
      %v2839 = vpack.c.b16 %v2165, %v2163
      %v2840 = vpack.c.b16 %v2168, %v2166
      %v2841 = vpack.c.b16 %v2169, %v2167
      %v2842 = vpack.c.b16 %v2172, %v2170
      %v2843 = vpack.c.b16 %v2173, %v2171
      %v2844 = vpack.c.b16 %v2176, %v2174
      %v2845 = vpack.c.b16 %v2177, %v2175
      %v2846 = vpack.c.b16 %v2180, %v2178
      %v2847 = vpack.c.b16 %v2181, %v2179
      %v2848 = vpack.c.b16 %v2184, %v2182
      %v2849 = vpack.c.b16 %v2185, %v2183
      %v2850 = vpack.c.b16 %v2188, %v2186
      %v2851 = vpack.c.b16 %v2189, %v2187
      %v2852 = vpack.c.b16 %v2192, %v2190
      %v2853 = vpack.c.b16 %v2193, %v2191
      %v2854 = vpack.c.b16 %v2196, %v2194
      %v2855 = vpack.c.b16 %v2197, %v2195
      %v2856 = vpack.c.b16 %v2200, %v2198
      %v2857 = vpack.c.b16 %v2201, %v2199
      %v2858 = vpack.c.b16 %v2204, %v2202
      %v2859 = vpack.c.b16 %v2205, %v2203
      %v2860 = vpack.c.b16 %v2208, %v2206
      %v2861 = vpack.c.b16 %v2209, %v2207
      %v2862 = vpack.c.b16 %v2212, %v2210
      %v2863 = vpack.c.b16 %v2213, %v2211
      %v2864 = vpack.c.b16 %v2216, %v2214
      %v2865 = vpack.c.b16 %v2217, %v2215
      %v2866 = vpack.c.b16 %v2220, %v2218
      %v2867 = vpack.c.b16 %v2221, %v2219
      %v2868 = vpack.c.b16 %v2224, %v2222
      %v2869 = vpack.c.b16 %v2225, %v2223
      %v2870 = vpack.c.b16 %v2228, %v2226
      %v2871 = vpack.c.b16 %v2229, %v2227
      %v2872 = vpack.c.b16 %v2232, %v2230
      %v2873 = vpack.c.b16 %v2233, %v2231
      %v2874 = vpack.c.b16 %v2236, %v2234
      %v2875 = vpack.c.b16 %v2237, %v2235
      %v2876 = vpack.c.b16 %v2240, %v2238
      %v2877 = vpack.c.b16 %v2241, %v2239
      %v2878 = vpack.c.b16 %v2244, %v2242
      %v2879 = vpack.c.b16 %v2245, %v2243
      %v2880 = vpack.c.b16 %v2248, %v2246
      %v2881 = vpack.c.b16 %v2249, %v2247
      %v2882 = vpack.c.b16 %v2252, %v2250
      %v2883 = vpack.c.b16 %v2253, %v2251
      %v2884 = vpack.c.b16 %v2256, %v2254
      %v2885 = vpack.c.b16 %v2257, %v2255
      %v2886 = vpack.c.b16 %v2260, %v2258
      %v2887 = vpack.c.b16 %v2261, %v2259
      %v2888 = vpack.c.b16 %v2264, %v2262
      %v2889 = vpack.c.b16 %v2265, %v2263
      %v2890 = vpack.c.b16 %v2268, %v2266
      %v2891 = vpack.c.b16 %v2269, %v2267
      %v2892 = vpack.c.b16 %v2272, %v2270
      %v2893 = vpack.c.b16 %v2273, %v2271
      %v2894 = vpack.c.b16 %v2276, %v2274
      %v2895 = vpack.c.b16 %v2277, %v2275
      %v2896 = vpack.c.b16 %v2280, %v2278
      %v2897 = vpack.c.b16 %v2281, %v2279
      %v2898 = vpack.c.b16 %v2284, %v2282
      %v2899 = vpack.c.b16 %v2285, %v2283
      %v2900 = vpack.c.b16 %v2288, %v2286
      %v2901 = vpack.c.b16 %v2289, %v2287
      %v2902 = vpack.c.b16 %v2292, %v2290
      %v2903 = vpack.c.b16 %v2293, %v2291
      %v2904 = vpack.c.b16 %v2296, %v2294
      %v2905 = vpack.c.b16 %v2297, %v2295
      %v2906 = vpack.c.b16 %v2300, %v2298
      %v2907 = vpack.c.b16 %v2301, %v2299
      %v2908 = vpack.c.b16 %v2304, %v2302
      %v2909 = vpack.c.b16 %v2305, %v2303
      %v2910 = vpack.c.b16 %v2308, %v2306
      %v2911 = vpack.c.b16 %v2309, %v2307
      %v2912 = vpack.c.b16 %v2312, %v2310
      %v2913 = vpack.c.b16 %v2313, %v2311
      %v2914 = vpack.c.b16 %v2316, %v2314
      %v2915 = vpack.c.b16 %v2317, %v2315
      %v2916 = vpack.c.b16 %v2320, %v2318
      %v2917 = vpack.c.b16 %v2321, %v2319
      %v2918 = vpack.c.b16 %v2324, %v2322
      %v2919 = vpack.c.b16 %v2325, %v2323
      %v2920 = vpack.c.b16 %v2328, %v2326
      %v2921 = vpack.c.b16 %v2329, %v2327
      %v2922 = vpack.c.b16 %v2332, %v2330
      %v2923 = vpack.c.b16 %v2333, %v2331
      %v2924 = vpack.c.b16 %v2336, %v2334
      %v2925 = vpack.c.b16 %v2337, %v2335
      %v2926 = vpack.c.b16 %v2340, %v2338
      %v2927 = vpack.c.b16 %v2341, %v2339
      %v2928 = vpack.c.b16 %v2344, %v2342
      %v2929 = vpack.c.b16 %v2345, %v2343
      %v2930 = vpack.c.b16 %v2348, %v2346
      %v2931 = vpack.c.b16 %v2349, %v2347
      %v2932 = vpack.c.b16 %v2352, %v2350
      %v2933 = vpack.c.b16 %v2353, %v2351
      %v2934 = vpack.c.b16 %v2356, %v2354
      %v2935 = vpack.c.b16 %v2357, %v2355
      %v2936 = vpack.c.b16 %v2360, %v2358
      %v2937 = vpack.c.b16 %v2361, %v2359
      %v2938 = vpack.c.b16 %v2364, %v2362
      %v2939 = vpack.c.b16 %v2365, %v2363
      %v2940 = vpack.c.b16 %v2368, %v2366
      %v2941 = vpack.c.b16 %v2369, %v2367
      %v2942 = vpack.c.b16 %v2372, %v2370
      %v2943 = vpack.c.b16 %v2373, %v2371
      %v2944 = vpack.c.b16 %v2376, %v2374
      %v2945 = vpack.c.b16 %v2377, %v2375
      %v2946 = vpack.c.b16 %v2380, %v2378
      %v2947 = vpack.c.b16 %v2381, %v2379
      %v2948 = vpack.c.b16 %v2384, %v2382
      %v2949 = vpack.c.b16 %v2385, %v2383
      %v2950 = vpack.c.b16 %v2388, %v2386
      %v2951 = vpack.c.b16 %v2389, %v2387
      %v2952 = vpack.c.b16 %v2392, %v2390
      %v2953 = vpack.c.b16 %v2393, %v2391
      %v2954 = vpack.c.b16 %v2396, %v2394
      %v2955 = vpack.c.b16 %v2397, %v2395
      %v2956 = vpack.c.b16 %v2400, %v2398
      %v2957 = vpack.c.b16 %v2401, %v2399
      %v2958 = vpack.c.b16 %v2404, %v2402
      %v2959 = vpack.c.b16 %v2405, %v2403
      %v2960 = vpack.c.b16 %v2408, %v2406
      %v2961 = vpack.c.b16 %v2409, %v2407
      %v2962 = vpack.c.b16 %v2412, %v2410
      %v2963 = vpack.c.b16 %v2413, %v2411
      %v2964 = vpack.c.b16 %v2416, %v2414
      %v2965 = vpack.c.b16 %v2417, %v2415
      %v2966 = vpack.c.b16 %v2420, %v2418
      %v2967 = vpack.c.b16 %v2421, %v2419
      %v2968 = vpack.c.b16 %v2424, %v2422
      %v2969 = vpack.c.b16 %v2425, %v2423
      %v2970 = vpack.c.b16 %v2428, %v2426
      %v2971 = vpack.c.b16 %v2429, %v2427
      %v2972 = vpack.c.b16 %v2432, %v2430
      %v2973 = vpack.c.b16 %v2433, %v2431
      %v2974 = vpack.c.b16 %v2436, %v2434
      %v2975 = vpack.c.b16 %v2437, %v2435
      %v2976 = vpack.c.b16 %v2440, %v2438
      %v2977 = vpack.c.b16 %v2441, %v2439
      %v2978 = vpack.c.b16 %v2444, %v2442
      %v2979 = vpack.c.b16 %v2445, %v2443
      %v2980 = vpack.c.b16 %v2448, %v2446
      %v2981 = vpack.c.b16 %v2449, %v2447
      %v2982 = vpack.c.b16 %v2452, %v2450
      %v2983 = vpack.c.b16 %v2453, %v2451
      %v2984 = vpack.c.b16 %v2456, %v2454
      %v2985 = vpack.c.b16 %v2457, %v2455
      %v2986 = vpack.c.b16 %v2460, %v2458
      %v2987 = vpack.c.b16 %v2461, %v2459
      %v2988 = vpack.c.b16 %v2464, %v2462
      %v2989 = vpack.c.b16 %v2465, %v2463
      %v2990 = vpack.c.b16 %v2468, %v2466
      %v2991 = vpack.c.b16 %v2469, %v2467
      %v2992 = vpack.c.b16 %v2472, %v2470
      %v2993 = vpack.c.b16 %v2473, %v2471
      %v2994 = vpack.c.b16 %v2476, %v2474
      %v2995 = vpack.c.b16 %v2477, %v2475
      %v2996 = vpack.c.b16 %v2480, %v2478
      %v2997 = vpack.c.b16 %v2481, %v2479
      %v2998 = vpack.c.b16 %v2484, %v2482
      %v2999 = vpack.c.b16 %v2485, %v2483
      %v3000 = vpack.c.b16 %v2488, %v2486
      %v3001 = vpack.c.b16 %v2489, %v2487
      %3514 = vmatpush.bf16.msra.mxu0 %v2504
      %3515 = vmatpush.bf16.msra.mxu0 %v2502
      %3516 = vmatpush.bf16.msra.mxu0 %v2500
      %3517 = vmatpush.bf16.msra.mxu0 %v2498
      %3518 = vmatpush.bf16.msra.mxu0 %v2496
      %3519 = vmatpush.bf16.msra.mxu0 %v2494
      %3520 = vmatpush.bf16.msra.mxu0 %v2492
      %3521 = vmatpush.bf16.msra.mxu0 %v2490
      %3522 = vmatmul.bf16.gmra.mxu0 %v890
      %v3523 = vpop.f32.mrf.mxu0
      %v3524 = vadd.f32 0.0, %v3523
      %v3525 = vpop.f32.mrf.mxu0
      %v3526 = vadd.f32 0.0, %v3525
      %3527 = vdwg.mxu0
      %3528 = vmatpush.bf16.msra.mxu0 %v2520
      %3529 = vmatpush.bf16.msra.mxu0 %v2518
      %3530 = vmatpush.bf16.msra.mxu0 %v2516
      %3531 = vmatpush.bf16.msra.mxu0 %v2514
      %3532 = vmatpush.bf16.msra.mxu0 %v2512
      %3533 = vmatpush.bf16.msra.mxu0 %v2510
      %3534 = vmatpush.bf16.msra.mxu0 %v2508
      %3535 = vmatpush.bf16.msra.mxu0 %v2506
      %3536 = vmatmul.bf16.gmra.mxu0 %v891
      %v3537 = vpop.f32.mrf.mxu0
      %v3538 = vadd.f32 %v3524, %v3537
      %v3539 = vpop.f32.mrf.mxu0
      %v3540 = vadd.f32 %v3526, %v3539
      %3541 = vdwg.mxu0
      %3542 = vmatpush.bf16.msra.mxu0 %v2536
      %3543 = vmatpush.bf16.msra.mxu0 %v2534
      %3544 = vmatpush.bf16.msra.mxu0 %v2532
      %3545 = vmatpush.bf16.msra.mxu0 %v2530
      %3546 = vmatpush.bf16.msra.mxu0 %v2528
      %3547 = vmatpush.bf16.msra.mxu0 %v2526
      %3548 = vmatpush.bf16.msra.mxu0 %v2524
      %3549 = vmatpush.bf16.msra.mxu0 %v2522
      %3550 = vmatmul.bf16.gmra.mxu0 %v892
      %v3551 = vpop.f32.mrf.mxu0
      %v3552 = vadd.f32 %v3538, %v3551
      %v3553 = vpop.f32.mrf.mxu0
      %v3554 = vadd.f32 %v3540, %v3553
      %3555 = vdwg.mxu0
      %3556 = vmatpush.bf16.msra.mxu0 %v2552
      %3557 = vmatpush.bf16.msra.mxu0 %v2550
      %3558 = vmatpush.bf16.msra.mxu0 %v2548
      %3559 = vmatpush.bf16.msra.mxu0 %v2546
      %3560 = vmatpush.bf16.msra.mxu0 %v2544
      %3561 = vmatpush.bf16.msra.mxu0 %v2542
      %3562 = vmatpush.bf16.msra.mxu0 %v2540
      %3563 = vmatpush.bf16.msra.mxu0 %v2538
      %3564 = vmatmul.bf16.gmra.mxu0 %v893
      %v3565 = vpop.f32.mrf.mxu0
      %v3566 = vadd.f32 %v3552, %v3565
      %v3567 = vpop.f32.mrf.mxu0
      %v3568 = vadd.f32 %v3554, %v3567
      %3569 = vdwg.mxu0
      %3570 = vmatpush.bf16.msra.mxu0 %v2568
      %3571 = vmatpush.bf16.msra.mxu0 %v2566
      %3572 = vmatpush.bf16.msra.mxu0 %v2564
      %3573 = vmatpush.bf16.msra.mxu0 %v2562
      %3574 = vmatpush.bf16.msra.mxu0 %v2560
      %3575 = vmatpush.bf16.msra.mxu0 %v2558
      %3576 = vmatpush.bf16.msra.mxu0 %v2556
      %3577 = vmatpush.bf16.msra.mxu0 %v2554
      %3578 = vmatmul.bf16.gmra.mxu0 %v894
      %v3579 = vpop.f32.mrf.mxu0
      %v3580 = vadd.f32 %v3566, %v3579
      %v3581 = vpop.f32.mrf.mxu0
      %v3582 = vadd.f32 %v3568, %v3581
      %3583 = vdwg.mxu0
      %3584 = vmatpush.bf16.msra.mxu0 %v2584
      %3585 = vmatpush.bf16.msra.mxu0 %v2582
      %3586 = vmatpush.bf16.msra.mxu0 %v2580
      %3587 = vmatpush.bf16.msra.mxu0 %v2578
      %3588 = vmatpush.bf16.msra.mxu0 %v2576
      %3589 = vmatpush.bf16.msra.mxu0 %v2574
      %3590 = vmatpush.bf16.msra.mxu0 %v2572
      %3591 = vmatpush.bf16.msra.mxu0 %v2570
      %3592 = vmatmul.bf16.gmra.mxu0 %v895
      %v3593 = vpop.f32.mrf.mxu0
      %v3594 = vadd.f32 %v3580, %v3593
      %v3595 = vpop.f32.mrf.mxu0
      %v3596 = vadd.f32 %v3582, %v3595
      %3597 = vdwg.mxu0
      %3598 = vmatpush.bf16.msra.mxu0 %v2600
      %3599 = vmatpush.bf16.msra.mxu0 %v2598
      %3600 = vmatpush.bf16.msra.mxu0 %v2596
      %3601 = vmatpush.bf16.msra.mxu0 %v2594
      %3602 = vmatpush.bf16.msra.mxu0 %v2592
      %3603 = vmatpush.bf16.msra.mxu0 %v2590
      %3604 = vmatpush.bf16.msra.mxu0 %v2588
      %3605 = vmatpush.bf16.msra.mxu0 %v2586
      %3606 = vmatmul.bf16.gmra.mxu0 %v896
      %v3607 = vpop.f32.mrf.mxu0
      %v3608 = vadd.f32 %v3594, %v3607
      %v3609 = vpop.f32.mrf.mxu0
      %v3610 = vadd.f32 %v3596, %v3609
      %3611 = vdwg.mxu0
      %3612 = vmatpush.bf16.msra.mxu0 %v2616
      %3613 = vmatpush.bf16.msra.mxu0 %v2614
      %3614 = vmatpush.bf16.msra.mxu0 %v2612
      %3615 = vmatpush.bf16.msra.mxu0 %v2610
      %3616 = vmatpush.bf16.msra.mxu0 %v2608
      %3617 = vmatpush.bf16.msra.mxu0 %v2606
      %3618 = vmatpush.bf16.msra.mxu0 %v2604
      %3619 = vmatpush.bf16.msra.mxu0 %v2602
      %3620 = vmatmul.bf16.gmra.mxu0 %v897
      %v3621 = vpop.f32.mrf.mxu0
      %v3622 = vadd.f32 %v3608, %v3621
      %v3623 = vpop.f32.mrf.mxu0
      %v3624 = vadd.f32 %v3610, %v3623
      %3625 = vdwg.mxu0
      %3626 = vmatpush.bf16.msra.mxu0 %v2632
      %3627 = vmatpush.bf16.msra.mxu0 %v2630
      %3628 = vmatpush.bf16.msra.mxu0 %v2628
      %3629 = vmatpush.bf16.msra.mxu0 %v2626
      %3630 = vmatpush.bf16.msra.mxu0 %v2624
      %3631 = vmatpush.bf16.msra.mxu0 %v2622
      %3632 = vmatpush.bf16.msra.mxu0 %v2620
      %3633 = vmatpush.bf16.msra.mxu0 %v2618
      %3634 = vmatmul.bf16.gmra.mxu0 %v898
      %v3635 = vpop.f32.mrf.mxu0
      %v3636 = vadd.f32 %v3622, %v3635
      %v3637 = vpop.f32.mrf.mxu0
      %v3638 = vadd.f32 %v3624, %v3637
      %3639 = vdwg.mxu0
      %3640 = vmatpush.bf16.msra.mxu0 %v2648
      %3641 = vmatpush.bf16.msra.mxu0 %v2646
      %3642 = vmatpush.bf16.msra.mxu0 %v2644
      %3643 = vmatpush.bf16.msra.mxu0 %v2642
      %3644 = vmatpush.bf16.msra.mxu0 %v2640
      %3645 = vmatpush.bf16.msra.mxu0 %v2638
      %3646 = vmatpush.bf16.msra.mxu0 %v2636
      %3647 = vmatpush.bf16.msra.mxu0 %v2634
      %3648 = vmatmul.bf16.gmra.mxu0 %v899
      %v3649 = vpop.f32.mrf.mxu0
      %v3650 = vadd.f32 %v3636, %v3649
      %v3651 = vpop.f32.mrf.mxu0
      %v3652 = vadd.f32 %v3638, %v3651
      %3653 = vdwg.mxu0
      %3654 = vmatpush.bf16.msra.mxu0 %v2664
      %3655 = vmatpush.bf16.msra.mxu0 %v2662
      %3656 = vmatpush.bf16.msra.mxu0 %v2660
      %3657 = vmatpush.bf16.msra.mxu0 %v2658
      %3658 = vmatpush.bf16.msra.mxu0 %v2656
      %3659 = vmatpush.bf16.msra.mxu0 %v2654
      %3660 = vmatpush.bf16.msra.mxu0 %v2652
      %3661 = vmatpush.bf16.msra.mxu0 %v2650
      %3662 = vmatmul.bf16.gmra.mxu0 %v900
      %v3663 = vpop.f32.mrf.mxu0
      %v3664 = vadd.f32 %v3650, %v3663
      %v3665 = vpop.f32.mrf.mxu0
      %v3666 = vadd.f32 %v3652, %v3665
      %3667 = vdwg.mxu0
      %3668 = vmatpush.bf16.msra.mxu0 %v2680
      %3669 = vmatpush.bf16.msra.mxu0 %v2678
      %3670 = vmatpush.bf16.msra.mxu0 %v2676
      %3671 = vmatpush.bf16.msra.mxu0 %v2674
      %3672 = vmatpush.bf16.msra.mxu0 %v2672
      %3673 = vmatpush.bf16.msra.mxu0 %v2670
      %3674 = vmatpush.bf16.msra.mxu0 %v2668
      %3675 = vmatpush.bf16.msra.mxu0 %v2666
      %3676 = vmatmul.bf16.gmra.mxu0 %v901
      %v3677 = vpop.f32.mrf.mxu0
      %v3678 = vadd.f32 %v3664, %v3677
      %v3679 = vpop.f32.mrf.mxu0
      %v3680 = vadd.f32 %v3666, %v3679
      %3681 = vdwg.mxu0
      %3682 = vmatpush.bf16.msra.mxu0 %v2696
      %3683 = vmatpush.bf16.msra.mxu0 %v2694
      %3684 = vmatpush.bf16.msra.mxu0 %v2692
      %3685 = vmatpush.bf16.msra.mxu0 %v2690
      %3686 = vmatpush.bf16.msra.mxu0 %v2688
      %3687 = vmatpush.bf16.msra.mxu0 %v2686
      %3688 = vmatpush.bf16.msra.mxu0 %v2684
      %3689 = vmatpush.bf16.msra.mxu0 %v2682
      %3690 = vmatmul.bf16.gmra.mxu0 %v902
      %v3691 = vpop.f32.mrf.mxu0
      %v3692 = vadd.f32 %v3678, %v3691
      %v3693 = vpop.f32.mrf.mxu0
      %v3694 = vadd.f32 %v3680, %v3693
      %3695 = vdwg.mxu0
      %3696 = vmatpush.bf16.msra.mxu0 %v2712
      %3697 = vmatpush.bf16.msra.mxu0 %v2710
      %3698 = vmatpush.bf16.msra.mxu0 %v2708
      %3699 = vmatpush.bf16.msra.mxu0 %v2706
      %3700 = vmatpush.bf16.msra.mxu0 %v2704
      %3701 = vmatpush.bf16.msra.mxu0 %v2702
      %3702 = vmatpush.bf16.msra.mxu0 %v2700
      %3703 = vmatpush.bf16.msra.mxu0 %v2698
      %3704 = vmatmul.bf16.gmra.mxu0 %v903
      %v3705 = vpop.f32.mrf.mxu0
      %v3706 = vadd.f32 %v3692, %v3705
      %v3707 = vpop.f32.mrf.mxu0
      %v3708 = vadd.f32 %v3694, %v3707
      %3709 = vdwg.mxu0
      %3710 = vmatpush.bf16.msra.mxu0 %v2728
      %3711 = vmatpush.bf16.msra.mxu0 %v2726
      %3712 = vmatpush.bf16.msra.mxu0 %v2724
      %3713 = vmatpush.bf16.msra.mxu0 %v2722
      %3714 = vmatpush.bf16.msra.mxu0 %v2720
      %3715 = vmatpush.bf16.msra.mxu0 %v2718
      %3716 = vmatpush.bf16.msra.mxu0 %v2716
      %3717 = vmatpush.bf16.msra.mxu0 %v2714
      %3718 = vmatmul.bf16.gmra.mxu0 %v904
      %v3719 = vpop.f32.mrf.mxu0
      %v3720 = vadd.f32 %v3706, %v3719
      %v3721 = vpop.f32.mrf.mxu0
      %v3722 = vadd.f32 %v3708, %v3721
      %3723 = vdwg.mxu0
      %3724 = vmatpush.bf16.msra.mxu0 %v2744
      %3725 = vmatpush.bf16.msra.mxu0 %v2742
      %3726 = vmatpush.bf16.msra.mxu0 %v2740
      %3727 = vmatpush.bf16.msra.mxu0 %v2738
      %3728 = vmatpush.bf16.msra.mxu0 %v2736
      %3729 = vmatpush.bf16.msra.mxu0 %v2734
      %3730 = vmatpush.bf16.msra.mxu0 %v2732
      %3731 = vmatpush.bf16.msra.mxu0 %v2730
      %3732 = vmatmul.bf16.gmra.mxu0 %v905
      %v3733 = vpop.f32.mrf.mxu0
      %v3734 = vadd.f32 %v3720, %v3733
      %v3735 = vpop.f32.mrf.mxu0
      %v3736 = vadd.f32 %v3722, %v3735
      %3737 = vdwg.mxu0
      %3738 = vmatpush.bf16.msra.mxu0 %v2760
      %3739 = vmatpush.bf16.msra.mxu0 %v2758
      %3740 = vmatpush.bf16.msra.mxu0 %v2756
      %3741 = vmatpush.bf16.msra.mxu0 %v2754
      %3742 = vmatpush.bf16.msra.mxu0 %v2752
      %3743 = vmatpush.bf16.msra.mxu0 %v2750
      %3744 = vmatpush.bf16.msra.mxu0 %v2748
      %3745 = vmatpush.bf16.msra.mxu0 %v2746
      %3746 = vmatmul.bf16.gmra.mxu0 %v906
      %v3747 = vpop.f32.mrf.mxu0
      %v3748 = vadd.f32 %v3734, %v3747
      %v3749 = vpop.f32.mrf.mxu0
      %v3750 = vadd.f32 %v3736, %v3749
      %3751 = vdwg.mxu0
      %3752 = vmatpush.bf16.msra.mxu0 %v2776
      %3753 = vmatpush.bf16.msra.mxu0 %v2774
      %3754 = vmatpush.bf16.msra.mxu0 %v2772
      %3755 = vmatpush.bf16.msra.mxu0 %v2770
      %3756 = vmatpush.bf16.msra.mxu0 %v2768
      %3757 = vmatpush.bf16.msra.mxu0 %v2766
      %3758 = vmatpush.bf16.msra.mxu0 %v2764
      %3759 = vmatpush.bf16.msra.mxu0 %v2762
      %3760 = vmatmul.bf16.gmra.mxu0 %v907
      %v3761 = vpop.f32.mrf.mxu0
      %v3762 = vadd.f32 %v3748, %v3761
      %v3763 = vpop.f32.mrf.mxu0
      %v3764 = vadd.f32 %v3750, %v3763
      %3765 = vdwg.mxu0
      %3766 = vmatpush.bf16.msra.mxu0 %v2792
      %3767 = vmatpush.bf16.msra.mxu0 %v2790
      %3768 = vmatpush.bf16.msra.mxu0 %v2788
      %3769 = vmatpush.bf16.msra.mxu0 %v2786
      %3770 = vmatpush.bf16.msra.mxu0 %v2784
      %3771 = vmatpush.bf16.msra.mxu0 %v2782
      %3772 = vmatpush.bf16.msra.mxu0 %v2780
      %3773 = vmatpush.bf16.msra.mxu0 %v2778
      %3774 = vmatmul.bf16.gmra.mxu0 %v908
      %v3775 = vpop.f32.mrf.mxu0
      %v3776 = vadd.f32 %v3762, %v3775
      %v3777 = vpop.f32.mrf.mxu0
      %v3778 = vadd.f32 %v3764, %v3777
      %3779 = vdwg.mxu0
      %3780 = vmatpush.bf16.msra.mxu0 %v2808
      %3781 = vmatpush.bf16.msra.mxu0 %v2806
      %3782 = vmatpush.bf16.msra.mxu0 %v2804
      %3783 = vmatpush.bf16.msra.mxu0 %v2802
      %3784 = vmatpush.bf16.msra.mxu0 %v2800
      %3785 = vmatpush.bf16.msra.mxu0 %v2798
      %3786 = vmatpush.bf16.msra.mxu0 %v2796
      %3787 = vmatpush.bf16.msra.mxu0 %v2794
      %3788 = vmatmul.bf16.gmra.mxu0 %v909
      %v3789 = vpop.f32.mrf.mxu0
      %v3790 = vadd.f32 %v3776, %v3789
      %v3791 = vpop.f32.mrf.mxu0
      %v3792 = vadd.f32 %v3778, %v3791
      %3793 = vdwg.mxu0
      %3794 = vmatpush.bf16.msra.mxu0 %v2824
      %3795 = vmatpush.bf16.msra.mxu0 %v2822
      %3796 = vmatpush.bf16.msra.mxu0 %v2820
      %3797 = vmatpush.bf16.msra.mxu0 %v2818
      %3798 = vmatpush.bf16.msra.mxu0 %v2816
      %3799 = vmatpush.bf16.msra.mxu0 %v2814
      %3800 = vmatpush.bf16.msra.mxu0 %v2812
      %3801 = vmatpush.bf16.msra.mxu0 %v2810
      %3802 = vmatmul.bf16.gmra.mxu0 %v910
      %v3803 = vpop.f32.mrf.mxu0
      %v3804 = vadd.f32 %v3790, %v3803
      %v3805 = vpop.f32.mrf.mxu0
      %v3806 = vadd.f32 %v3792, %v3805
      %3807 = vdwg.mxu0
      %3808 = vmatpush.bf16.msra.mxu0 %v2840
      %3809 = vmatpush.bf16.msra.mxu0 %v2838
      %3810 = vmatpush.bf16.msra.mxu0 %v2836
      %3811 = vmatpush.bf16.msra.mxu0 %v2834
      %3812 = vmatpush.bf16.msra.mxu0 %v2832
      %3813 = vmatpush.bf16.msra.mxu0 %v2830
      %3814 = vmatpush.bf16.msra.mxu0 %v2828
      %3815 = vmatpush.bf16.msra.mxu0 %v2826
      %3816 = vmatmul.bf16.gmra.mxu0 %v911
      %v3817 = vpop.f32.mrf.mxu0
      %v3818 = vadd.f32 %v3804, %v3817
      %v3819 = vpop.f32.mrf.mxu0
      %v3820 = vadd.f32 %v3806, %v3819
      %3821 = vdwg.mxu0
      %3822 = vmatpush.bf16.msra.mxu0 %v2856
      %3823 = vmatpush.bf16.msra.mxu0 %v2854
      %3824 = vmatpush.bf16.msra.mxu0 %v2852
      %3825 = vmatpush.bf16.msra.mxu0 %v2850
      %3826 = vmatpush.bf16.msra.mxu0 %v2848
      %3827 = vmatpush.bf16.msra.mxu0 %v2846
      %3828 = vmatpush.bf16.msra.mxu0 %v2844
      %3829 = vmatpush.bf16.msra.mxu0 %v2842
      %3830 = vmatmul.bf16.gmra.mxu0 %v912
      %v3831 = vpop.f32.mrf.mxu0
      %v3832 = vadd.f32 %v3818, %v3831
      %v3833 = vpop.f32.mrf.mxu0
      %v3834 = vadd.f32 %v3820, %v3833
      %3835 = vdwg.mxu0
      %3836 = vmatpush.bf16.msra.mxu0 %v2872
      %3837 = vmatpush.bf16.msra.mxu0 %v2870
      %3838 = vmatpush.bf16.msra.mxu0 %v2868
      %3839 = vmatpush.bf16.msra.mxu0 %v2866
      %3840 = vmatpush.bf16.msra.mxu0 %v2864
      %3841 = vmatpush.bf16.msra.mxu0 %v2862
      %3842 = vmatpush.bf16.msra.mxu0 %v2860
      %3843 = vmatpush.bf16.msra.mxu0 %v2858
      %3844 = vmatmul.bf16.gmra.mxu0 %v913
      %v3845 = vpop.f32.mrf.mxu0
      %v3846 = vadd.f32 %v3832, %v3845
      %v3847 = vpop.f32.mrf.mxu0
      %v3848 = vadd.f32 %v3834, %v3847
      %3849 = vdwg.mxu0
      %3850 = vmatpush.bf16.msra.mxu0 %v2888
      %3851 = vmatpush.bf16.msra.mxu0 %v2886
      %3852 = vmatpush.bf16.msra.mxu0 %v2884
      %3853 = vmatpush.bf16.msra.mxu0 %v2882
      %3854 = vmatpush.bf16.msra.mxu0 %v2880
      %3855 = vmatpush.bf16.msra.mxu0 %v2878
      %3856 = vmatpush.bf16.msra.mxu0 %v2876
      %3857 = vmatpush.bf16.msra.mxu0 %v2874
      %3858 = vmatmul.bf16.gmra.mxu0 %v914
      %v3859 = vpop.f32.mrf.mxu0
      %v3860 = vadd.f32 %v3846, %v3859
      %v3861 = vpop.f32.mrf.mxu0
      %v3862 = vadd.f32 %v3848, %v3861
      %3863 = vdwg.mxu0
      %3864 = vmatpush.bf16.msra.mxu0 %v2904
      %3865 = vmatpush.bf16.msra.mxu0 %v2902
      %3866 = vmatpush.bf16.msra.mxu0 %v2900
      %3867 = vmatpush.bf16.msra.mxu0 %v2898
      %3868 = vmatpush.bf16.msra.mxu0 %v2896
      %3869 = vmatpush.bf16.msra.mxu0 %v2894
      %3870 = vmatpush.bf16.msra.mxu0 %v2892
      %3871 = vmatpush.bf16.msra.mxu0 %v2890
      %3872 = vmatmul.bf16.gmra.mxu0 %v915
      %v3873 = vpop.f32.mrf.mxu0
      %v3874 = vadd.f32 %v3860, %v3873
      %v3875 = vpop.f32.mrf.mxu0
      %v3876 = vadd.f32 %v3862, %v3875
      %3877 = vdwg.mxu0
      %3878 = vmatpush.bf16.msra.mxu0 %v2920
      %3879 = vmatpush.bf16.msra.mxu0 %v2918
      %3880 = vmatpush.bf16.msra.mxu0 %v2916
      %3881 = vmatpush.bf16.msra.mxu0 %v2914
      %3882 = vmatpush.bf16.msra.mxu0 %v2912
      %3883 = vmatpush.bf16.msra.mxu0 %v2910
      %3884 = vmatpush.bf16.msra.mxu0 %v2908
      %3885 = vmatpush.bf16.msra.mxu0 %v2906
      %3886 = vmatmul.bf16.gmra.mxu0 %v916
      %v3887 = vpop.f32.mrf.mxu0
      %v3888 = vadd.f32 %v3874, %v3887
      %v3889 = vpop.f32.mrf.mxu0
      %v3890 = vadd.f32 %v3876, %v3889
      %3891 = vdwg.mxu0
      %3892 = vmatpush.bf16.msra.mxu0 %v2936
      %3893 = vmatpush.bf16.msra.mxu0 %v2934
      %3894 = vmatpush.bf16.msra.mxu0 %v2932
      %3895 = vmatpush.bf16.msra.mxu0 %v2930
      %3896 = vmatpush.bf16.msra.mxu0 %v2928
      %3897 = vmatpush.bf16.msra.mxu0 %v2926
      %3898 = vmatpush.bf16.msra.mxu0 %v2924
      %3899 = vmatpush.bf16.msra.mxu0 %v2922
      %3900 = vmatmul.bf16.gmra.mxu0 %v917
      %v3901 = vpop.f32.mrf.mxu0
      %v3902 = vadd.f32 %v3888, %v3901
      %v3903 = vpop.f32.mrf.mxu0
      %v3904 = vadd.f32 %v3890, %v3903
      %3905 = vdwg.mxu0
      %3906 = vmatpush.bf16.msra.mxu0 %v2952
      %3907 = vmatpush.bf16.msra.mxu0 %v2950
      %3908 = vmatpush.bf16.msra.mxu0 %v2948
      %3909 = vmatpush.bf16.msra.mxu0 %v2946
      %3910 = vmatpush.bf16.msra.mxu0 %v2944
      %3911 = vmatpush.bf16.msra.mxu0 %v2942
      %3912 = vmatpush.bf16.msra.mxu0 %v2940
      %3913 = vmatpush.bf16.msra.mxu0 %v2938
      %3914 = vmatmul.bf16.gmra.mxu0 %v918
      %v3915 = vpop.f32.mrf.mxu0
      %v3916 = vadd.f32 %v3902, %v3915
      %v3917 = vpop.f32.mrf.mxu0
      %v3918 = vadd.f32 %v3904, %v3917
      %3919 = vdwg.mxu0
      %3920 = vmatpush.bf16.msra.mxu0 %v2968
      %3921 = vmatpush.bf16.msra.mxu0 %v2966
      %3922 = vmatpush.bf16.msra.mxu0 %v2964
      %3923 = vmatpush.bf16.msra.mxu0 %v2962
      %3924 = vmatpush.bf16.msra.mxu0 %v2960
      %3925 = vmatpush.bf16.msra.mxu0 %v2958
      %3926 = vmatpush.bf16.msra.mxu0 %v2956
      %3927 = vmatpush.bf16.msra.mxu0 %v2954
      %3928 = vmatmul.bf16.gmra.mxu0 %v919
      %v3929 = vpop.f32.mrf.mxu0
      %v3930 = vadd.f32 %v3916, %v3929
      %v3931 = vpop.f32.mrf.mxu0
      %v3932 = vadd.f32 %v3918, %v3931
      %3933 = vdwg.mxu0
      %3934 = vmatpush.bf16.msra.mxu0 %v2984
      %3935 = vmatpush.bf16.msra.mxu0 %v2982
      %3936 = vmatpush.bf16.msra.mxu0 %v2980
      %3937 = vmatpush.bf16.msra.mxu0 %v2978
      %3938 = vmatpush.bf16.msra.mxu0 %v2976
      %3939 = vmatpush.bf16.msra.mxu0 %v2974
      %3940 = vmatpush.bf16.msra.mxu0 %v2972
      %3941 = vmatpush.bf16.msra.mxu0 %v2970
      %3942 = vmatmul.bf16.gmra.mxu0 %v920
      %v3943 = vpop.f32.mrf.mxu0
      %v3944 = vadd.f32 %v3930, %v3943
      %v3945 = vpop.f32.mrf.mxu0
      %v3946 = vadd.f32 %v3932, %v3945
      %3947 = vdwg.mxu0
      %3948 = vmatpush.bf16.msra.mxu0 %v3000
      %3949 = vmatpush.bf16.msra.mxu0 %v2998
      %3950 = vmatpush.bf16.msra.mxu0 %v2996
      %3951 = vmatpush.bf16.msra.mxu0 %v2994
      %3952 = vmatpush.bf16.msra.mxu0 %v2992
      %3953 = vmatpush.bf16.msra.mxu0 %v2990
      %3954 = vmatpush.bf16.msra.mxu0 %v2988
      %3955 = vmatpush.bf16.msra.mxu0 %v2986
      %3956 = vmatmul.bf16.gmra.mxu0 %v921
      %v3957 = vpop.f32.mrf.mxu0
      %v3958 = vadd.f32 %v3944, %v3957
      %v3959 = vpop.f32.mrf.mxu0
      %v3960 = vadd.f32 %v3946, %v3959
      %3961 = vdwg.mxu0
      %3962 = vmatpush.bf16.msra.mxu0 %v2505
      %3963 = vmatpush.bf16.msra.mxu0 %v2503
      %3964 = vmatpush.bf16.msra.mxu0 %v2501
      %3965 = vmatpush.bf16.msra.mxu0 %v2499
      %3966 = vmatpush.bf16.msra.mxu0 %v2497
      %3967 = vmatpush.bf16.msra.mxu0 %v2495
      %3968 = vmatpush.bf16.msra.mxu0 %v2493
      %3969 = vmatpush.bf16.msra.mxu0 %v2491
      %3970 = vmatmul.bf16.gmra.mxu0 %v890
      %v3971 = vpop.f32.mrf.mxu0
      %v3972 = vadd.f32 0.0, %v3971
      %v3973 = vpop.f32.mrf.mxu0
      %v3974 = vadd.f32 0.0, %v3973
      %3975 = vdwg.mxu0
      %3976 = vmatpush.bf16.msra.mxu0 %v2521
      %3977 = vmatpush.bf16.msra.mxu0 %v2519
      %3978 = vmatpush.bf16.msra.mxu0 %v2517
      %3979 = vmatpush.bf16.msra.mxu0 %v2515
      %3980 = vmatpush.bf16.msra.mxu0 %v2513
      %3981 = vmatpush.bf16.msra.mxu0 %v2511
      %3982 = vmatpush.bf16.msra.mxu0 %v2509
      %3983 = vmatpush.bf16.msra.mxu0 %v2507
      %3984 = vmatmul.bf16.gmra.mxu0 %v891
      %v3985 = vpop.f32.mrf.mxu0
      %v3986 = vadd.f32 %v3972, %v3985
      %v3987 = vpop.f32.mrf.mxu0
      %v3988 = vadd.f32 %v3974, %v3987
      %3989 = vdwg.mxu0
      %3990 = vmatpush.bf16.msra.mxu0 %v2537
      %3991 = vmatpush.bf16.msra.mxu0 %v2535
      %3992 = vmatpush.bf16.msra.mxu0 %v2533
      %3993 = vmatpush.bf16.msra.mxu0 %v2531
      %3994 = vmatpush.bf16.msra.mxu0 %v2529
      %3995 = vmatpush.bf16.msra.mxu0 %v2527
      %3996 = vmatpush.bf16.msra.mxu0 %v2525
      %3997 = vmatpush.bf16.msra.mxu0 %v2523
      %3998 = vmatmul.bf16.gmra.mxu0 %v892
      %v3999 = vpop.f32.mrf.mxu0
      %v4000 = vadd.f32 %v3986, %v3999
      %v4001 = vpop.f32.mrf.mxu0
      %v4002 = vadd.f32 %v3988, %v4001
      %4003 = vdwg.mxu0
      %4004 = vmatpush.bf16.msra.mxu0 %v2553
      %4005 = vmatpush.bf16.msra.mxu0 %v2551
      %4006 = vmatpush.bf16.msra.mxu0 %v2549
      %4007 = vmatpush.bf16.msra.mxu0 %v2547
      %4008 = vmatpush.bf16.msra.mxu0 %v2545
      %4009 = vmatpush.bf16.msra.mxu0 %v2543
      %4010 = vmatpush.bf16.msra.mxu0 %v2541
      %4011 = vmatpush.bf16.msra.mxu0 %v2539
      %4012 = vmatmul.bf16.gmra.mxu0 %v893
      %v4013 = vpop.f32.mrf.mxu0
      %v4014 = vadd.f32 %v4000, %v4013
      %v4015 = vpop.f32.mrf.mxu0
      %v4016 = vadd.f32 %v4002, %v4015
      %4017 = vdwg.mxu0
      %4018 = vmatpush.bf16.msra.mxu0 %v2569
      %4019 = vmatpush.bf16.msra.mxu0 %v2567
      %4020 = vmatpush.bf16.msra.mxu0 %v2565
      %4021 = vmatpush.bf16.msra.mxu0 %v2563
      %4022 = vmatpush.bf16.msra.mxu0 %v2561
      %4023 = vmatpush.bf16.msra.mxu0 %v2559
      %4024 = vmatpush.bf16.msra.mxu0 %v2557
      %4025 = vmatpush.bf16.msra.mxu0 %v2555
      %4026 = vmatmul.bf16.gmra.mxu0 %v894
      %v4027 = vpop.f32.mrf.mxu0
      %v4028 = vadd.f32 %v4014, %v4027
      %v4029 = vpop.f32.mrf.mxu0
      %v4030 = vadd.f32 %v4016, %v4029
      %4031 = vdwg.mxu0
      %4032 = vmatpush.bf16.msra.mxu0 %v2585
      %4033 = vmatpush.bf16.msra.mxu0 %v2583
      %4034 = vmatpush.bf16.msra.mxu0 %v2581
      %4035 = vmatpush.bf16.msra.mxu0 %v2579
      %4036 = vmatpush.bf16.msra.mxu0 %v2577
      %4037 = vmatpush.bf16.msra.mxu0 %v2575
      %4038 = vmatpush.bf16.msra.mxu0 %v2573
      %4039 = vmatpush.bf16.msra.mxu0 %v2571
      %4040 = vmatmul.bf16.gmra.mxu0 %v895
      %v4041 = vpop.f32.mrf.mxu0
      %v4042 = vadd.f32 %v4028, %v4041
      %v4043 = vpop.f32.mrf.mxu0
      %v4044 = vadd.f32 %v4030, %v4043
      %4045 = vdwg.mxu0
      %4046 = vmatpush.bf16.msra.mxu0 %v2601
      %4047 = vmatpush.bf16.msra.mxu0 %v2599
      %4048 = vmatpush.bf16.msra.mxu0 %v2597
      %4049 = vmatpush.bf16.msra.mxu0 %v2595
      %4050 = vmatpush.bf16.msra.mxu0 %v2593
      %4051 = vmatpush.bf16.msra.mxu0 %v2591
      %4052 = vmatpush.bf16.msra.mxu0 %v2589
      %4053 = vmatpush.bf16.msra.mxu0 %v2587
      %4054 = vmatmul.bf16.gmra.mxu0 %v896
      %v4055 = vpop.f32.mrf.mxu0
      %v4056 = vadd.f32 %v4042, %v4055
      %v4057 = vpop.f32.mrf.mxu0
      %v4058 = vadd.f32 %v4044, %v4057
      %4059 = vdwg.mxu0
      %4060 = vmatpush.bf16.msra.mxu0 %v2617
      %4061 = vmatpush.bf16.msra.mxu0 %v2615
      %4062 = vmatpush.bf16.msra.mxu0 %v2613
      %4063 = vmatpush.bf16.msra.mxu0 %v2611
      %4064 = vmatpush.bf16.msra.mxu0 %v2609
      %4065 = vmatpush.bf16.msra.mxu0 %v2607
      %4066 = vmatpush.bf16.msra.mxu0 %v2605
      %4067 = vmatpush.bf16.msra.mxu0 %v2603
      %4068 = vmatmul.bf16.gmra.mxu0 %v897
      %v4069 = vpop.f32.mrf.mxu0
      %v4070 = vadd.f32 %v4056, %v4069
      %v4071 = vpop.f32.mrf.mxu0
      %v4072 = vadd.f32 %v4058, %v4071
      %4073 = vdwg.mxu0
      %4074 = vmatpush.bf16.msra.mxu0 %v2633
      %4075 = vmatpush.bf16.msra.mxu0 %v2631
      %4076 = vmatpush.bf16.msra.mxu0 %v2629
      %4077 = vmatpush.bf16.msra.mxu0 %v2627
      %4078 = vmatpush.bf16.msra.mxu0 %v2625
      %4079 = vmatpush.bf16.msra.mxu0 %v2623
      %4080 = vmatpush.bf16.msra.mxu0 %v2621
      %4081 = vmatpush.bf16.msra.mxu0 %v2619
      %4082 = vmatmul.bf16.gmra.mxu0 %v898
      %v4083 = vpop.f32.mrf.mxu0
      %v4084 = vadd.f32 %v4070, %v4083
      %v4085 = vpop.f32.mrf.mxu0
      %v4086 = vadd.f32 %v4072, %v4085
      %4087 = vdwg.mxu0
      %4088 = vmatpush.bf16.msra.mxu0 %v2649
      %4089 = vmatpush.bf16.msra.mxu0 %v2647
      %4090 = vmatpush.bf16.msra.mxu0 %v2645
      %4091 = vmatpush.bf16.msra.mxu0 %v2643
      %4092 = vmatpush.bf16.msra.mxu0 %v2641
      %4093 = vmatpush.bf16.msra.mxu0 %v2639
      %4094 = vmatpush.bf16.msra.mxu0 %v2637
      %4095 = vmatpush.bf16.msra.mxu0 %v2635
      %4096 = vmatmul.bf16.gmra.mxu0 %v899
      %v4097 = vpop.f32.mrf.mxu0
      %v4098 = vadd.f32 %v4084, %v4097
      %v4099 = vpop.f32.mrf.mxu0
      %v4100 = vadd.f32 %v4086, %v4099
      %4101 = vdwg.mxu0
      %4102 = vmatpush.bf16.msra.mxu0 %v2665
      %4103 = vmatpush.bf16.msra.mxu0 %v2663
      %4104 = vmatpush.bf16.msra.mxu0 %v2661
      %4105 = vmatpush.bf16.msra.mxu0 %v2659
      %4106 = vmatpush.bf16.msra.mxu0 %v2657
      %4107 = vmatpush.bf16.msra.mxu0 %v2655
      %4108 = vmatpush.bf16.msra.mxu0 %v2653
      %4109 = vmatpush.bf16.msra.mxu0 %v2651
      %4110 = vmatmul.bf16.gmra.mxu0 %v900
      %v4111 = vpop.f32.mrf.mxu0
      %v4112 = vadd.f32 %v4098, %v4111
      %v4113 = vpop.f32.mrf.mxu0
      %v4114 = vadd.f32 %v4100, %v4113
      %4115 = vdwg.mxu0
      %4116 = vmatpush.bf16.msra.mxu0 %v2681
      %4117 = vmatpush.bf16.msra.mxu0 %v2679
      %4118 = vmatpush.bf16.msra.mxu0 %v2677
      %4119 = vmatpush.bf16.msra.mxu0 %v2675
      %4120 = vmatpush.bf16.msra.mxu0 %v2673
      %4121 = vmatpush.bf16.msra.mxu0 %v2671
      %4122 = vmatpush.bf16.msra.mxu0 %v2669
      %4123 = vmatpush.bf16.msra.mxu0 %v2667
      %4124 = vmatmul.bf16.gmra.mxu0 %v901
      %v4125 = vpop.f32.mrf.mxu0
      %v4126 = vadd.f32 %v4112, %v4125
      %v4127 = vpop.f32.mrf.mxu0
      %v4128 = vadd.f32 %v4114, %v4127
      %4129 = vdwg.mxu0
      %4130 = vmatpush.bf16.msra.mxu0 %v2697
      %4131 = vmatpush.bf16.msra.mxu0 %v2695
      %4132 = vmatpush.bf16.msra.mxu0 %v2693
      %4133 = vmatpush.bf16.msra.mxu0 %v2691
      %4134 = vmatpush.bf16.msra.mxu0 %v2689
      %4135 = vmatpush.bf16.msra.mxu0 %v2687
      %4136 = vmatpush.bf16.msra.mxu0 %v2685
      %4137 = vmatpush.bf16.msra.mxu0 %v2683
      %4138 = vmatmul.bf16.gmra.mxu0 %v902
      %v4139 = vpop.f32.mrf.mxu0
      %v4140 = vadd.f32 %v4126, %v4139
      %v4141 = vpop.f32.mrf.mxu0
      %v4142 = vadd.f32 %v4128, %v4141
      %4143 = vdwg.mxu0
      %4144 = vmatpush.bf16.msra.mxu0 %v2713
      %4145 = vmatpush.bf16.msra.mxu0 %v2711
      %4146 = vmatpush.bf16.msra.mxu0 %v2709
      %4147 = vmatpush.bf16.msra.mxu0 %v2707
      %4148 = vmatpush.bf16.msra.mxu0 %v2705
      %4149 = vmatpush.bf16.msra.mxu0 %v2703
      %4150 = vmatpush.bf16.msra.mxu0 %v2701
      %4151 = vmatpush.bf16.msra.mxu0 %v2699
      %4152 = vmatmul.bf16.gmra.mxu0 %v903
      %v4153 = vpop.f32.mrf.mxu0
      %v4154 = vadd.f32 %v4140, %v4153
      %v4155 = vpop.f32.mrf.mxu0
      %v4156 = vadd.f32 %v4142, %v4155
      %4157 = vdwg.mxu0
      %4158 = vmatpush.bf16.msra.mxu0 %v2729
      %4159 = vmatpush.bf16.msra.mxu0 %v2727
      %4160 = vmatpush.bf16.msra.mxu0 %v2725
      %4161 = vmatpush.bf16.msra.mxu0 %v2723
      %4162 = vmatpush.bf16.msra.mxu0 %v2721
      %4163 = vmatpush.bf16.msra.mxu0 %v2719
      %4164 = vmatpush.bf16.msra.mxu0 %v2717
      %4165 = vmatpush.bf16.msra.mxu0 %v2715
      %4166 = vmatmul.bf16.gmra.mxu0 %v904
      %v4167 = vpop.f32.mrf.mxu0
      %v4168 = vadd.f32 %v4154, %v4167
      %v4169 = vpop.f32.mrf.mxu0
      %v4170 = vadd.f32 %v4156, %v4169
      %4171 = vdwg.mxu0
      %4172 = vmatpush.bf16.msra.mxu0 %v2745
      %4173 = vmatpush.bf16.msra.mxu0 %v2743
      %4174 = vmatpush.bf16.msra.mxu0 %v2741
      %4175 = vmatpush.bf16.msra.mxu0 %v2739
      %4176 = vmatpush.bf16.msra.mxu0 %v2737
      %4177 = vmatpush.bf16.msra.mxu0 %v2735
      %4178 = vmatpush.bf16.msra.mxu0 %v2733
      %4179 = vmatpush.bf16.msra.mxu0 %v2731
      %4180 = vmatmul.bf16.gmra.mxu0 %v905
      %v4181 = vpop.f32.mrf.mxu0
      %v4182 = vadd.f32 %v4168, %v4181
      %v4183 = vpop.f32.mrf.mxu0
      %v4184 = vadd.f32 %v4170, %v4183
      %4185 = vdwg.mxu0
      %4186 = vmatpush.bf16.msra.mxu0 %v2761
      %4187 = vmatpush.bf16.msra.mxu0 %v2759
      %4188 = vmatpush.bf16.msra.mxu0 %v2757
      %4189 = vmatpush.bf16.msra.mxu0 %v2755
      %4190 = vmatpush.bf16.msra.mxu0 %v2753
      %4191 = vmatpush.bf16.msra.mxu0 %v2751
      %4192 = vmatpush.bf16.msra.mxu0 %v2749
      %4193 = vmatpush.bf16.msra.mxu0 %v2747
      %4194 = vmatmul.bf16.gmra.mxu0 %v906
      %v4195 = vpop.f32.mrf.mxu0
      %v4196 = vadd.f32 %v4182, %v4195
      %v4197 = vpop.f32.mrf.mxu0
      %v4198 = vadd.f32 %v4184, %v4197
      %4199 = vdwg.mxu0
      %4200 = vmatpush.bf16.msra.mxu0 %v2777
      %4201 = vmatpush.bf16.msra.mxu0 %v2775
      %4202 = vmatpush.bf16.msra.mxu0 %v2773
      %4203 = vmatpush.bf16.msra.mxu0 %v2771
      %4204 = vmatpush.bf16.msra.mxu0 %v2769
      %4205 = vmatpush.bf16.msra.mxu0 %v2767
      %4206 = vmatpush.bf16.msra.mxu0 %v2765
      %4207 = vmatpush.bf16.msra.mxu0 %v2763
      %4208 = vmatmul.bf16.gmra.mxu0 %v907
      %v4209 = vpop.f32.mrf.mxu0
      %v4210 = vadd.f32 %v4196, %v4209
      %v4211 = vpop.f32.mrf.mxu0
      %v4212 = vadd.f32 %v4198, %v4211
      %4213 = vdwg.mxu0
      %4214 = vmatpush.bf16.msra.mxu0 %v2793
      %4215 = vmatpush.bf16.msra.mxu0 %v2791
      %4216 = vmatpush.bf16.msra.mxu0 %v2789
      %4217 = vmatpush.bf16.msra.mxu0 %v2787
      %4218 = vmatpush.bf16.msra.mxu0 %v2785
      %4219 = vmatpush.bf16.msra.mxu0 %v2783
      %4220 = vmatpush.bf16.msra.mxu0 %v2781
      %4221 = vmatpush.bf16.msra.mxu0 %v2779
      %4222 = vmatmul.bf16.gmra.mxu0 %v908
      %v4223 = vpop.f32.mrf.mxu0
      %v4224 = vadd.f32 %v4210, %v4223
      %v4225 = vpop.f32.mrf.mxu0
      %v4226 = vadd.f32 %v4212, %v4225
      %4227 = vdwg.mxu0
      %4228 = vmatpush.bf16.msra.mxu0 %v2809
      %4229 = vmatpush.bf16.msra.mxu0 %v2807
      %4230 = vmatpush.bf16.msra.mxu0 %v2805
      %4231 = vmatpush.bf16.msra.mxu0 %v2803
      %4232 = vmatpush.bf16.msra.mxu0 %v2801
      %4233 = vmatpush.bf16.msra.mxu0 %v2799
      %4234 = vmatpush.bf16.msra.mxu0 %v2797
      %4235 = vmatpush.bf16.msra.mxu0 %v2795
      %4236 = vmatmul.bf16.gmra.mxu0 %v909
      %v4237 = vpop.f32.mrf.mxu0
      %v4238 = vadd.f32 %v4224, %v4237
      %v4239 = vpop.f32.mrf.mxu0
      %v4240 = vadd.f32 %v4226, %v4239
      %4241 = vdwg.mxu0
      %4242 = vmatpush.bf16.msra.mxu0 %v2825
      %4243 = vmatpush.bf16.msra.mxu0 %v2823
      %4244 = vmatpush.bf16.msra.mxu0 %v2821
      %4245 = vmatpush.bf16.msra.mxu0 %v2819
      %4246 = vmatpush.bf16.msra.mxu0 %v2817
      %4247 = vmatpush.bf16.msra.mxu0 %v2815
      %4248 = vmatpush.bf16.msra.mxu0 %v2813
      %4249 = vmatpush.bf16.msra.mxu0 %v2811
      %4250 = vmatmul.bf16.gmra.mxu0 %v910
      %v4251 = vpop.f32.mrf.mxu0
      %v4252 = vadd.f32 %v4238, %v4251
      %v4253 = vpop.f32.mrf.mxu0
      %v4254 = vadd.f32 %v4240, %v4253
      %4255 = vdwg.mxu0
      %4256 = vmatpush.bf16.msra.mxu0 %v2841
      %4257 = vmatpush.bf16.msra.mxu0 %v2839
      %4258 = vmatpush.bf16.msra.mxu0 %v2837
      %4259 = vmatpush.bf16.msra.mxu0 %v2835
      %4260 = vmatpush.bf16.msra.mxu0 %v2833
      %4261 = vmatpush.bf16.msra.mxu0 %v2831
      %4262 = vmatpush.bf16.msra.mxu0 %v2829
      %4263 = vmatpush.bf16.msra.mxu0 %v2827
      %4264 = vmatmul.bf16.gmra.mxu0 %v911
      %v4265 = vpop.f32.mrf.mxu0
      %v4266 = vadd.f32 %v4252, %v4265
      %v4267 = vpop.f32.mrf.mxu0
      %v4268 = vadd.f32 %v4254, %v4267
      %4269 = vdwg.mxu0
      %4270 = vmatpush.bf16.msra.mxu0 %v2857
      %4271 = vmatpush.bf16.msra.mxu0 %v2855
      %4272 = vmatpush.bf16.msra.mxu0 %v2853
      %4273 = vmatpush.bf16.msra.mxu0 %v2851
      %4274 = vmatpush.bf16.msra.mxu0 %v2849
      %4275 = vmatpush.bf16.msra.mxu0 %v2847
      %4276 = vmatpush.bf16.msra.mxu0 %v2845
      %4277 = vmatpush.bf16.msra.mxu0 %v2843
      %4278 = vmatmul.bf16.gmra.mxu0 %v912
      %v4279 = vpop.f32.mrf.mxu0
      %v4280 = vadd.f32 %v4266, %v4279
      %v4281 = vpop.f32.mrf.mxu0
      %v4282 = vadd.f32 %v4268, %v4281
      %4283 = vdwg.mxu0
      %4284 = vmatpush.bf16.msra.mxu0 %v2873
      %4285 = vmatpush.bf16.msra.mxu0 %v2871
      %4286 = vmatpush.bf16.msra.mxu0 %v2869
      %4287 = vmatpush.bf16.msra.mxu0 %v2867
      %4288 = vmatpush.bf16.msra.mxu0 %v2865
      %4289 = vmatpush.bf16.msra.mxu0 %v2863
      %4290 = vmatpush.bf16.msra.mxu0 %v2861
      %4291 = vmatpush.bf16.msra.mxu0 %v2859
      %4292 = vmatmul.bf16.gmra.mxu0 %v913
      %v4293 = vpop.f32.mrf.mxu0
      %v4294 = vadd.f32 %v4280, %v4293
      %v4295 = vpop.f32.mrf.mxu0
      %v4296 = vadd.f32 %v4282, %v4295
      %4297 = vdwg.mxu0
      %4298 = vmatpush.bf16.msra.mxu0 %v2889
      %4299 = vmatpush.bf16.msra.mxu0 %v2887
      %4300 = vmatpush.bf16.msra.mxu0 %v2885
      %4301 = vmatpush.bf16.msra.mxu0 %v2883
      %4302 = vmatpush.bf16.msra.mxu0 %v2881
      %4303 = vmatpush.bf16.msra.mxu0 %v2879
      %4304 = vmatpush.bf16.msra.mxu0 %v2877
      %4305 = vmatpush.bf16.msra.mxu0 %v2875
      %4306 = vmatmul.bf16.gmra.mxu0 %v914
      %v4307 = vpop.f32.mrf.mxu0
      %v4308 = vadd.f32 %v4294, %v4307
      %v4309 = vpop.f32.mrf.mxu0
      %v4310 = vadd.f32 %v4296, %v4309
      %4311 = vdwg.mxu0
      %4312 = vmatpush.bf16.msra.mxu0 %v2905
      %4313 = vmatpush.bf16.msra.mxu0 %v2903
      %4314 = vmatpush.bf16.msra.mxu0 %v2901
      %4315 = vmatpush.bf16.msra.mxu0 %v2899
      %4316 = vmatpush.bf16.msra.mxu0 %v2897
      %4317 = vmatpush.bf16.msra.mxu0 %v2895
      %4318 = vmatpush.bf16.msra.mxu0 %v2893
      %4319 = vmatpush.bf16.msra.mxu0 %v2891
      %4320 = vmatmul.bf16.gmra.mxu0 %v915
      %v4321 = vpop.f32.mrf.mxu0
      %v4322 = vadd.f32 %v4308, %v4321
      %v4323 = vpop.f32.mrf.mxu0
      %v4324 = vadd.f32 %v4310, %v4323
      %4325 = vdwg.mxu0
      %4326 = vmatpush.bf16.msra.mxu0 %v2921
      %4327 = vmatpush.bf16.msra.mxu0 %v2919
      %4328 = vmatpush.bf16.msra.mxu0 %v2917
      %4329 = vmatpush.bf16.msra.mxu0 %v2915
      %4330 = vmatpush.bf16.msra.mxu0 %v2913
      %4331 = vmatpush.bf16.msra.mxu0 %v2911
      %4332 = vmatpush.bf16.msra.mxu0 %v2909
      %4333 = vmatpush.bf16.msra.mxu0 %v2907
      %4334 = vmatmul.bf16.gmra.mxu0 %v916
      %v4335 = vpop.f32.mrf.mxu0
      %v4336 = vadd.f32 %v4322, %v4335
      %v4337 = vpop.f32.mrf.mxu0
      %v4338 = vadd.f32 %v4324, %v4337
      %4339 = vdwg.mxu0
      %4340 = vmatpush.bf16.msra.mxu0 %v2937
      %4341 = vmatpush.bf16.msra.mxu0 %v2935
      %4342 = vmatpush.bf16.msra.mxu0 %v2933
      %4343 = vmatpush.bf16.msra.mxu0 %v2931
      %4344 = vmatpush.bf16.msra.mxu0 %v2929
      %4345 = vmatpush.bf16.msra.mxu0 %v2927
      %4346 = vmatpush.bf16.msra.mxu0 %v2925
      %4347 = vmatpush.bf16.msra.mxu0 %v2923
      %4348 = vmatmul.bf16.gmra.mxu0 %v917
      %v4349 = vpop.f32.mrf.mxu0
      %v4350 = vadd.f32 %v4336, %v4349
      %v4351 = vpop.f32.mrf.mxu0
      %v4352 = vadd.f32 %v4338, %v4351
      %4353 = vdwg.mxu0
      %4354 = vmatpush.bf16.msra.mxu0 %v2953
      %4355 = vmatpush.bf16.msra.mxu0 %v2951
      %4356 = vmatpush.bf16.msra.mxu0 %v2949
      %4357 = vmatpush.bf16.msra.mxu0 %v2947
      %4358 = vmatpush.bf16.msra.mxu0 %v2945
      %4359 = vmatpush.bf16.msra.mxu0 %v2943
      %4360 = vmatpush.bf16.msra.mxu0 %v2941
      %4361 = vmatpush.bf16.msra.mxu0 %v2939
      %4362 = vmatmul.bf16.gmra.mxu0 %v918
      %v4363 = vpop.f32.mrf.mxu0
      %v4364 = vadd.f32 %v4350, %v4363
      %v4365 = vpop.f32.mrf.mxu0
      %v4366 = vadd.f32 %v4352, %v4365
      %4367 = vdwg.mxu0
      %4368 = vmatpush.bf16.msra.mxu0 %v2969
      %4369 = vmatpush.bf16.msra.mxu0 %v2967
      %4370 = vmatpush.bf16.msra.mxu0 %v2965
      %4371 = vmatpush.bf16.msra.mxu0 %v2963
      %4372 = vmatpush.bf16.msra.mxu0 %v2961
      %4373 = vmatpush.bf16.msra.mxu0 %v2959
      %4374 = vmatpush.bf16.msra.mxu0 %v2957
      %4375 = vmatpush.bf16.msra.mxu0 %v2955
      %4376 = vmatmul.bf16.gmra.mxu0 %v919
      %v4377 = vpop.f32.mrf.mxu0
      %v4378 = vadd.f32 %v4364, %v4377
      %v4379 = vpop.f32.mrf.mxu0
      %v4380 = vadd.f32 %v4366, %v4379
      %4381 = vdwg.mxu0
      %4382 = vmatpush.bf16.msra.mxu0 %v2985
      %4383 = vmatpush.bf16.msra.mxu0 %v2983
      %4384 = vmatpush.bf16.msra.mxu0 %v2981
      %4385 = vmatpush.bf16.msra.mxu0 %v2979
      %4386 = vmatpush.bf16.msra.mxu0 %v2977
      %4387 = vmatpush.bf16.msra.mxu0 %v2975
      %4388 = vmatpush.bf16.msra.mxu0 %v2973
      %4389 = vmatpush.bf16.msra.mxu0 %v2971
      %4390 = vmatmul.bf16.gmra.mxu0 %v920
      %v4391 = vpop.f32.mrf.mxu0
      %v4392 = vadd.f32 %v4378, %v4391
      %v4393 = vpop.f32.mrf.mxu0
      %v4394 = vadd.f32 %v4380, %v4393
      %4395 = vdwg.mxu0
      %4396 = vmatpush.bf16.msra.mxu0 %v3001
      %4397 = vmatpush.bf16.msra.mxu0 %v2999
      %4398 = vmatpush.bf16.msra.mxu0 %v2997
      %4399 = vmatpush.bf16.msra.mxu0 %v2995
      %4400 = vmatpush.bf16.msra.mxu0 %v2993
      %4401 = vmatpush.bf16.msra.mxu0 %v2991
      %4402 = vmatpush.bf16.msra.mxu0 %v2989
      %4403 = vmatpush.bf16.msra.mxu0 %v2987
      %4404 = vmatmul.bf16.gmra.mxu0 %v921
      %v4405 = vpop.f32.mrf.mxu0
      %v4406 = vadd.f32 %v4392, %v4405
      %v4407 = vpop.f32.mrf.mxu0
      %v4408 = vadd.f32 %v4394, %v4407
      %4409 = vdwg.mxu0
      %v4410 = vadd.f32 %v3958, %v3960
      %v4411 = vrot.slane %v4410, 4
      %v4412 = vadd.f32 %v4410, %v4411
      %v4413 = vrot.slane %v4412, 2
      %v4414 = vadd.f32 %v4412, %v4413
      %v4415 = vrot.slane %v4414, 1
      %v4416 = vadd.f32 %v4414, %v4415
      %v4417 = vadd.f32 %v4406, %v4408
      %v4418 = vrot.slane %v4417, 4
      %v4419 = vadd.f32 %v4417, %v4418
      %v4420 = vrot.slane %v4419, 2
      %v4421 = vadd.f32 %v4419, %v4420
      %v4422 = vrot.slane %v4421, 1
      %v4423 = vadd.f32 %v4421, %v4422
      %v4424 = vrcp.pop 16.0
      %v4425 = vmul.f32 16.0, %v4424
      %v4426 = vsub.f32 1.0, %v4425
      %v4427 = vmul.f32 %v4424, %v4426
      %v4428 = vadd.f32 %v4424, %v4427
      %vm4429 = vweird.f32 %v4424
      %v4430 = vsel %vm4429, %v4424, %v4428
      %v4431 = vmul.f32 %v4416, %v4430
      %v4432 = vmul.f32 %v4423, %v4430
      %v4433 = vsub.f32 %v3958, %v4431
      %v4434 = vsub.f32 %v4406, %v4432
      %v4435 = vsub.f32 %v3960, %v4431
      %v4436 = vsub.f32 %v4408, %v4432
      %v4437 = vmul.f32 %v4433, %v4433
      %v4438 = vmul.f32 %v4434, %v4434
      %v4439 = vmul.f32 %v4435, %v4435
      %v4440 = vmul.f32 %v4436, %v4436
      %v4441 = vadd.f32 %v4437, %v4439
      %v4442 = vrot.slane %v4441, 4
      %v4443 = vadd.f32 %v4441, %v4442
      %v4444 = vrot.slane %v4443, 2
      %v4445 = vadd.f32 %v4443, %v4444
      %v4446 = vrot.slane %v4445, 1
      %v4447 = vadd.f32 %v4445, %v4446
      %v4448 = vadd.f32 %v4438, %v4440
      %v4449 = vrot.slane %v4448, 4
      %v4450 = vadd.f32 %v4448, %v4449
      %v4451 = vrot.slane %v4450, 2
      %v4452 = vadd.f32 %v4450, %v4451
      %v4453 = vrot.slane %v4452, 1
      %v4454 = vadd.f32 %v4452, %v4453
      %v4455 = vmul.f32 %v4447, %v4430
      %v4456 = vmul.f32 %v4454, %v4430
      %v4457 = vld [vmem:[%s2] sm:$0x3]
      %v4458 = vadd.f32 %v4455, 1e-05
      %v4459 = vadd.f32 %v4456, 1e-05
      %v4460 = vrsqrt.pop %v4458
      %v4461 = vmul.f32 %v4460, %v4458
      %v4462 = vmul.f32 %v4461, %v4460
      %v4463 = vmul.f32 0.5, %v4462
      %v4464 = vsub.f32 1.5, %v4463
      %v4465 = vmul.f32 %v4460, %v4464
      %vm4466 = vweird.f32 %v4458
      %vm4467 = vweird.f32 %v4460
      %vm4468 = vmor %vm4466, %vm4467
      %v4469 = vsel %vm4468, %v4460, %v4465
      %v4470 = vrsqrt.pop %v4459
      %v4471 = vmul.f32 %v4470, %v4459
      %v4472 = vmul.f32 %v4471, %v4470
      %v4473 = vmul.f32 0.5, %v4472
      %v4474 = vsub.f32 1.5, %v4473
      %v4475 = vmul.f32 %v4470, %v4474
      %vm4476 = vweird.f32 %v4459
      %vm4477 = vweird.f32 %v4470
      %vm4478 = vmor %vm4476, %vm4477
      %v4479 = vsel %vm4478, %v4470, %v4475
      %v4482 = vrot.slane %v4479, 7
      %vm4483 = vcmask 1040384
      %v4484 = vsel %vm4483, %v4469, %v4482
      %v4486 = vmul.f32 %v4457, %v4484
      %v4488 = vperm.slane %v4486, 0
      %v4489 = vperm.slane %v4486, 1
      %v4492 = vmul.f32 %v4433, %v4488
      %v4493 = vmul.f32 %v4434, %v4489
      %v4494 = vmul.f32 %v4435, %v4488
      %v4495 = vmul.f32 %v4436, %v4489
      %v4496 = vld [vmem:[%s3] sm:$0x3]
      %v4498 = vperm.slane %v4496, 0
      %v4499 = vperm.slane %v4496, 1
      %v4502 = vadd.f32 %v4492, %v4498
      %v4503 = vadd.f32 %v4493, %v4499
      %v4504 = vadd.f32 %v4494, %v4498
      %v4505 = vadd.f32 %v4495, %v4499
      %v4506 = vmul.f32 %v4502, 0.2
      %v4507 = vmul.f32 %v4503, 0.2
      %v4508 = vmul.f32 %v4504, 0.2
      %v4509 = vmul.f32 %v4505, 0.2
      %v4510 = vmax.f32 %v4502, %v4506
      %v4511 = vmax.f32 %v4503, %v4507
      %v4512 = vmax.f32 %v4504, %v4508
      %v4513 = vmax.f32 %v4505, %v4509
      %v4514 = vld [vmem:[%s4] sm:$0xff]
      %v4515 = vld [vmem:[%s4 + $0x8] sm:$0xff]
      %v4516 = vld [vmem:[%s4 + $0x10] sm:$0xff]
      %v4517 = vld [vmem:[%s4 + $0x18] sm:$0xff]
      %v4518 = vmul.f32 %v4510, %v4514
      %v4519 = vmul.f32 %v4511, %v4515
      %v4520 = vmul.f32 %v4512, %v4516
      %v4521 = vmul.f32 %v4513, %v4517
      %v4522 = vadd.f32 %v4518, %v4519
      %v4523 = vadd.f32 %v4522, %v4520
      %v4524 = vadd.f32 %v4523, %v4521
      %4525 = vadd.xlane.f32.xlu0 %v4524
      %v4526 = vpop.xlane.xlu0 %4525
      %v4527 = vrot.slane %v4526, 4
      %v4528 = vadd.f32 %v4526, %v4527
      %v4529 = vrot.slane %v4528, 2
      %v4530 = vadd.f32 %v4528, %v4529
      %v4531 = vrot.slane %v4530, 1
      %v4532 = vadd.f32 %v4530, %v4531
      %s4533 = vtos %v4532
      %v4534 = vstv %s4533
      %v4535 = vld [vmem:[#allocation2] sm:$0x1]
      %v4536 = vadd.f32 %v4534, %v4535
      %v4537 = vxor.u32 %v4536, 2147483648
      %v4538 = vmul.f32 %v4537, 1.442695
      %v4539 = vpow.pop %v4538
      %v4540 = vadd.f32 %v4539, 1.0
      %v4541 = vrcp.pop %v4540
      %v4542 = vmul.f32 %v4540, %v4541
      %v4543 = vsub.f32 1.0, %v4542
      %v4544 = vmul.f32 %v4541, %v4543
      %v4545 = vadd.f32 %v4541, %v4544
      %vm4546 = vweird.f32 %v4540
      %vm4547 = vweird.f32 %v4541
      %vm4548 = vmor %vm4546, %vm4547
      %v4549 = vsel %vm4548, %v4541, %v4545
      %v4550 = vand.u32 2147483647, %v4540
      %vm4551 = vcmp.eq.f32.partialorder %v4550, 8.507059e+37
      %v4552 = vand.u32 %v4540, 2147483648
      %v4553 = vor.u32 1.1754944e-38, %v4552
      %v4554 = vsel %vm4551, %v4553, %v4549
      %v4555 = vmul.f32 1.0, %v4554
      %vm4556 = vcmask 0
      %4557 = vst.msk [vmem:[%s249] sm:$0x1] %vm4556, %v4555
      %p4558 = scmp.lt.s32.totalorder %s19, 1
      %s4559 = scalar_select %p4558, %s19, 1
      %s4560 = scalar_lea.vmem %s6, %s4559
      // Predicated region
      $region45: #{d_forward.7} parent=43 // pred_check
        %p4561 = pneg %p168
      $region46: #{d_forward.7} parent=43 // pred_check_branch
        %4563 = sbr.rel (%p4561) target = $region48
      $region47: #{d_forward.7} parent=43 // pred_region
        _
      $region48: #{d_forward.7} parent=43 // pred_fallthru
        _
    $region44: #{d_forward.7} parent=5 // pred_fallthru
      _
    %p4564 = scmp.le.s32.totalorder 2, %s14
    // Predicated region
    $region49: #{d_forward.7} parent=5 // pred_check
      %p4565 = pneg %p4564
    $region50: #{d_forward.7} parent=5 // pred_check_branch
      %4567 = sbr.rel (%p4565) target = $region52
    $region51: #{d_forward.7} parent=5 // pred_region
      %s4568 = ssub.s32 %s14, 2
      // Predicated region
      $region53: #{d_forward.7} parent=51 // pred_check
        %p4569 = pneg %p174
      $region54: #{d_forward.7} parent=51 // pred_check_branch
        %4571 = sbr.rel (%p4569) target = $region56
      $region55: #{d_forward.7} parent=51 // pred_region
        %p4572 = scmp.lt.s32.totalorder %s20, 1
        %s4573 = scalar_select %p4572, %s20, 1
        %s4574 = scalar_lea.vmem %s6, %s4573
      $region56: #{d_forward.7} parent=51 // pred_fallthru
        _
    $region52: #{d_forward.7} parent=5 // pred_fallthru
      _
  $region6: #{d_forward.7} parent=0 // loop_footer
    %s18 = sadd.s32 1, %s14
  $region7: #{d_forward.7} parent=0 // loop_footer_branch
    %13 = sbr.rel target = $region3
  $region8: #{d_forward.7} parent=0 // loop_exit
    _

</llo_original>
